<compile_context>
chip_gen: v7x
topology: tpu7x:2x2x1
jax: 0.10.0
libtpu: 0.0.40
codegen_flags: <defaults>
</compile_context>

<pallas_src>
import jax
import jax.numpy as jnp
from jax import lax
from jax.experimental import pallas as pl
from jax.experimental.pallas import tpu as pltpu

_VMEM_SPEC = pl.BlockSpec(memory_space=pltpu.MemorySpace.VMEM)


# ---------------------------------------------------------------------------
# Fused kernel: conv1 -> conv2 -> maxpool -> flatten -> fc1 -> fc2 -> logsoftmax
# ---------------------------------------------------------------------------
def _net3_fused_kernel(x_ref, t1_ref, b1t_ref, w2d_ref, b2r_ref,
                       fc1w_ref, fc1b_ref, fc2w_ref, fc2b_ref,
                       o_ref, y1_ref, flat_ref):
    batch = x_ref.shape[0]

    # ---- conv1 + ReLU ----------------------------------------------------
    # y1[b, h, w*32 + c] = relu( sum_di x[b, h+di, :] @ t1[di] + b1 )
    for b in range(batch):
        x_b = x_ref[b]                                             # (12, 12)
        acc = jnp.dot(x_b[0:10, :], t1_ref[0],
                      preferred_element_type=jnp.float32)
        acc = acc + jnp.dot(x_b[1:11, :], t1_ref[1],
                            preferred_element_type=jnp.float32)
        acc = acc + jnp.dot(x_b[2:12, :], t1_ref[2],
                            preferred_element_type=jnp.float32)
        y1_ref[b] = jnp.maximum(acc + b1t_ref[...], 0.0)           # (10, 320)

    # ---- conv2 + ReLU + 2x2 max-pool + HWC flatten -------------------------
    # For each output column w_out: K=96 slice of y1 (3 taps x 32 ch) per row
    # shift di, accumulated with the raw-size (96, 64) weight blocks.
    for b in range(batch):
        for pw in range(4):                 # pooled output column
            cols = []
            for s in range(2):              # the two conv2 columns being pooled
                w_out = 2 * pw + s
                lo = w_out * 32
                acc = jnp.dot(y1_ref[b, 0:8, lo:lo + 96], w2d_ref[0],
                              preferred_element_type=jnp.float32)
                acc = acc + jnp.dot(y1_ref[b, 1:9, lo:lo + 96], w2d_ref[1],
                                    preferred_element_type=jnp.float32)
                acc = acc + jnp.dot(y1_ref[b, 2:10, lo:lo + 96], w2d_ref[2],
                                    preferred_element_type=jnp.float32)
                cols.append(jnp.maximum(acc + b2r_ref[...], 0.0))  # (8, 64)
            wmax = jnp.maximum(cols[0], cols[1])                   # (8, 64)
            for ph in range(4):             # pooled output row
                blk = jnp.maximum(wmax[2 * ph:2 * ph + 1, :],
                                  wmax[2 * ph + 1:2 * ph + 2, :])  # (1, 64)
                off = ph * 256 + pw * 64    # HWC flatten index (h*4 + w)*64 + c
                flat_ref[b:b + 1, off:off + 64] = blk

    # ---- fc1 + ReLU -> fc2 -> log_softmax ---------------------------------
    flat = flat_ref[...]                                           # (B, 1024)
    h = jnp.maximum(
        jnp.dot(flat, fc1w_ref[...], preferred_element_type=jnp.float32)
        + fc1b_ref[...], 0.0)                                      # (B, 128)
    logits = (jnp.dot(h, fc2w_ref[...], preferred_element_type=jnp.float32)
              + fc2b_ref[...])                                     # (B, 10)
    m = jnp.max(logits, axis=-1, keepdims=True)
    z = logits - m
    lse = jnp.log(jnp.sum(jnp.exp(z), axis=-1, keepdims=True))
    o_ref[...] = z - lse


# ---------------------------------------------------------------------------
# One-time weight re-layout (outside the jitted forward)
# ---------------------------------------------------------------------------
def prepare_params(params):
    """PyTorch-layout params -> kernel-layout params (done once at init)."""
    w1 = params["conv1_w"].astype(jnp.float32)          # (32, 1, 3, 3)
    w2 = params["conv2_w"].astype(jnp.float32)          # (64, 32, 3, 3)

    # conv1 as 3 row-shift matmul matrices:
    #   t1[di][w_in, w_out*32 + c] = w1[c, 0, di, w_in - w_out], dj = w_in - w_out
    w_in = jnp.arange(12)[None, :, None]
    w_out = jnp.arange(10)[None, None, :]
    dj = jnp.arange(3)[:, None, None]
    sel = (w_in == w_out + dj).astype(jnp.float32)       # (3, 12, 10)
    t1 = jnp.einsum("jiw,cdj->diwc", sel, w1[:, 0]).reshape(3, 12, 320)

    # conv2 regrouped per row-tap di: w2d[di][dj*32 + c_in, c_out]
    w2d = jnp.transpose(w2, (2, 3, 1, 0)).reshape(3, 96, 64)

    # fc1 rows permuted from PyTorch CHW flatten (c*16 + h*4 + w) to the
    # kernel's HWC flatten (h*256 + w*64 + c); also pre-transposed to (in, out).
    fc1w = jnp.transpose(params["fc1_w"].reshape(128, 64, 4, 4),
                         (2, 3, 1, 0)).reshape(1024, 128)

    return {
        "t1": t1,                                                  # (3, 12, 320)
        "b1t": jnp.tile(params["conv1_b"], 10).reshape(1, 320),
        "w2d": w2d,                                                # (3, 96, 64)
        "b2r": params["conv2_b"].reshape(1, 64),
        "fc1w": fc1w,                                              # (1024, 128)
        "fc1b": params["fc1_b"].reshape(1, 128),
        "fc2w": params["fc2_w"].T,                                 # (128, 10)
        "fc2b": params["fc2_b"].reshape(1, 10),
    }


def init_params(key):
    ks = jax.random.split(key, 8)

    def u(k, shape, fan_in):
        bound = 1.0 / jnp.sqrt(jnp.float32(fan_in))
        return jax.random.uniform(k, shape, jnp.float32, -bound, bound)

    return {
        "conv1_w": u(ks[0], (32, 1, 3, 3), 1 * 9),
        "conv1_b": u(ks[1], (32,), 1 * 9),
        "conv2_w": u(ks[2], (64, 32, 3, 3), 32 * 9),
        "conv2_b": u(ks[3], (64,), 32 * 9),
        "fc1_w": u(ks[4], (128, 1024), 1024),   # PyTorch (out, in)
        "fc1_b": u(ks[5], (128,), 1024),
        "fc2_w": u(ks[6], (10, 128), 128),
        "fc2_b": u(ks[7], (10,), 128),
    }


# ---------------------------------------------------------------------------
# Forward pass: a single fused pallas_call
# ---------------------------------------------------------------------------
@jax.jit
def net3_forward(x_nchw, kp):
    batch, cin, hh, ww = x_nchw.shape
    assert (cin, hh, ww) == (1, 12, 12), "Net3 expects (B, 1, 12, 12) inputs"
    x = x_nchw.reshape(batch, 12, 12).astype(jnp.float32)

    operands = (x, kp["t1"], kp["b1t"], kp["w2d"], kp["b2r"],
                kp["fc1w"], kp["fc1b"], kp["fc2w"], kp["fc2b"])

    flops = 2 * batch * (3 * 10 * 12 * 320      # conv1 matmuls
                         + 24 * 8 * 96 * 64     # conv2 matmuls
                         + 1024 * 128           # fc1
                         + 128 * 10)            # fc2
    bytes_accessed = (sum(op.size * op.dtype.itemsize for op in operands)
                      + batch * 10 * 4)

    return pl.pallas_call(
        _net3_fused_kernel,
        out_shape=jax.ShapeDtypeStruct((batch, 10), jnp.float32),
        in_specs=[_VMEM_SPEC] * 9,
        out_specs=_VMEM_SPEC,
        scratch_shapes=[
            pltpu.VMEM((batch, 10, 320), jnp.float32),   # conv1 activation
            pltpu.VMEM((batch, 1024), jnp.float32),      # pooled + flattened
        ],
        cost_estimate=pl.CostEstimate(flops=flops,
                                      transcendentals=batch * 11,
                                      bytes_accessed=bytes_accessed),
        compiler_params=pltpu.CompilerParams(vmem_limit_bytes=32 * 1024 * 1024),
    )(*operands)


# ---------------------------------------------------------------------------
# Pure-JAX reference (independent path: lax.conv, NCHW, PyTorch flatten order)
# ---------------------------------------------------------------------------
def net3_reference(x_nchw, params):
    dn = ("NCHW", "OIHW", "NCHW")
    y = lax.conv_general_dilated(x_nchw.astype(jnp.float32), params["conv1_w"],
                                 (1, 1), "VALID", dimension_numbers=dn)
    y = jnp.maximum(y + params["conv1_b"][None, :, None, None], 0.0)
    y = lax.conv_general_dilated(y, params["conv2_w"],
                                 (1, 1), "VALID", dimension_numbers=dn)
    y = jnp.maximum(y + params["conv2_b"][None, :, None, None], 0.0)
    b, c, h, w = y.shape
    y = y.reshape(b, c, h // 2, 2, w // 2, 2).max(axis=(3, 5))
    y = y.reshape(b, c * (h // 2) * (w // 2))          # PyTorch CHW flatten
    y = jnp.maximum(y @ params["fc1_w"].T + params["fc1_b"], 0.0)
    y = y @ params["fc2_w"].T + params["fc2_b"]
    return jax.nn.log_softmax(y, axis=1)


if __name__ == "__main__":
    key = jax.random.PRNGKey(0)
    k_x, k_p = jax.random.split(key)

    params = init_params(k_p)                  # PyTorch-layout parameters
    kparams = prepare_params(params)           # kernel-layout parameters (once)
    x = jax.random.normal(k_x, (2, 1, 12, 12), dtype=jnp.float32)  # NCHW input

    out = net3_forward(x, kparams)
    out = jax.block_until_ready(out)

    ref = net3_reference(x, params)
    assert out.shape == (2, 10)
    assert jnp.allclose(out, ref, atol=1e-4, rtol=1e-4)
    # log_softmax rows must sum (in prob space) to ~1
    assert jnp.allclose(jnp.sum(jnp.exp(out), axis=1), 1.0, atol=1e-4)

    print("KERNEL_OK")
</pallas_src>

<mosaic_0001>
module attributes {stable_mosaic.version = 11 : i64} {
  func.func @_net3_fused_kernel(%arg0: memref<2x12x12xf32, #tpu.memory_space<vmem>>, %arg1: memref<3x12x320xf32, #tpu.memory_space<vmem>>, %arg2: memref<1x320xf32, #tpu.memory_space<vmem>>, %arg3: memref<3x96x64xf32, #tpu.memory_space<vmem>>, %arg4: memref<1x64xf32, #tpu.memory_space<vmem>>, %arg5: memref<1024x128xf32, #tpu.memory_space<vmem>>, %arg6: memref<1x128xf32, #tpu.memory_space<vmem>>, %arg7: memref<128x10xf32, #tpu.memory_space<vmem>>, %arg8: memref<1x10xf32, #tpu.memory_space<vmem>>, %arg9: memref<2x10xf32, #tpu.memory_space<vmem>>, %arg10: memref<2x10x320xf32, #tpu.memory_space<vmem>>, %arg11: memref<2x1024xf32, #tpu.memory_space<vmem>>) attributes {dimension_semantics = [], scalar_prefetch = 0 : i64, scratch_operands = 2 : i64, tpu.core_type = #tpu.core_type<tc>} {
    %c0 = arith.constant 0 : index
    %c0_0 = arith.constant 0 : index
    %c0_1 = arith.constant 0 : index
    %0 = vector.load %arg0[%c0, %c0_0, %c0_1] : memref<2x12x12xf32, #tpu.memory_space<vmem>>, vector<1x12x12xf32>
    %1 = vector.shape_cast %0 : vector<1x12x12xf32> to vector<12x12xf32>
    %2 = vector.extract_strided_slice %1 {offsets = [0, 0], sizes = [10, 12], strides = [1, 1]} : vector<12x12xf32> to vector<10x12xf32>
    %c0_2 = arith.constant 0 : index
    %c0_3 = arith.constant 0 : index
    %c0_4 = arith.constant 0 : index
    %3 = vector.load %arg1[%c0_2, %c0_3, %c0_4] : memref<3x12x320xf32, #tpu.memory_space<vmem>>, vector<1x12x320xf32>
    %4 = vector.shape_cast %3 : vector<1x12x320xf32> to vector<12x320xf32>
    %cst = arith.constant dense<0.000000e+00> : vector<10x320xf32>
    %5 = tpu.matmul %2, %4, %cst {dimension_numbers = #tpu.dot_dimension_numbers<[1], [0], [0], [1], [0, 0, 1, 1], [], []>} : vector<10x12xf32>, vector<12x320xf32>, vector<10x320xf32> -> vector<10x320xf32>
    %6 = vector.extract_strided_slice %1 {offsets = [1, 0], sizes = [10, 12], strides = [1, 1]} : vector<12x12xf32> to vector<10x12xf32>
    %c1 = arith.constant 1 : index
    %c0_5 = arith.constant 0 : index
    %c0_6 = arith.constant 0 : index
    %7 = vector.load %arg1[%c1, %c0_5, %c0_6] : memref<3x12x320xf32, #tpu.memory_space<vmem>>, vector<1x12x320xf32>
    %8 = vector.shape_cast %7 : vector<1x12x320xf32> to vector<12x320xf32>
    %cst_7 = arith.constant dense<0.000000e+00> : vector<10x320xf32>
    %9 = tpu.matmul %6, %8, %cst_7 {dimension_numbers = #tpu.dot_dimension_numbers<[1], [0], [0], [1], [0, 0, 1, 1], [], []>} : vector<10x12xf32>, vector<12x320xf32>, vector<10x320xf32> -> vector<10x320xf32>
    %10 = arith.addf %5, %9 : vector<10x320xf32>
    %11 = vector.extract_strided_slice %1 {offsets = [2, 0], sizes = [10, 12], strides = [1, 1]} : vector<12x12xf32> to vector<10x12xf32>
    %c2 = arith.constant 2 : index
    %c0_8 = arith.constant 0 : index
    %c0_9 = arith.constant 0 : index
    %12 = vector.load %arg1[%c2, %c0_8, %c0_9] : memref<3x12x320xf32, #tpu.memory_space<vmem>>, vector<1x12x320xf32>
    %13 = vector.shape_cast %12 : vector<1x12x320xf32> to vector<12x320xf32>
    %cst_10 = arith.constant dense<0.000000e+00> : vector<10x320xf32>
    %14 = tpu.matmul %11, %13, %cst_10 {dimension_numbers = #tpu.dot_dimension_numbers<[1], [0], [0], [1], [0, 0, 1, 1], [], []>} : vector<10x12xf32>, vector<12x320xf32>, vector<10x320xf32> -> vector<10x320xf32>
    %15 = arith.addf %10, %14 : vector<10x320xf32>
    %c0_11 = arith.constant 0 : index
    %c0_12 = arith.constant 0 : index
    %16 = vector.load %arg2[%c0_11, %c0_12] : memref<1x320xf32, #tpu.memory_space<vmem>>, vector<1x320xf32>
    %17 = vector.broadcast %16 : vector<1x320xf32> to vector<10x320xf32>
    %18 = arith.addf %15, %17 : vector<10x320xf32>
    %cst_13 = arith.constant 0.000000e+00 : f32
    %19 = vector.broadcast %cst_13 : f32 to vector<10x320xf32>
    %20 = arith.maximumf %18, %19 : vector<10x320xf32>
    %c0_14 = arith.constant 0 : index
    %c0_15 = arith.constant 0 : index
    %c0_16 = arith.constant 0 : index
    %21 = vector.load %arg10[%c0_14, %c0_15, %c0_16] : memref<2x10x320xf32, #tpu.memory_space<vmem>>, vector<1x10x320xf32>
    %22 = vector.shape_cast %21 : vector<1x10x320xf32> to vector<10x320xf32>
    %23 = vector.shape_cast %20 : vector<10x320xf32> to vector<1x10x320xf32>
    tpu.vector_store %arg10[%c0_14, %c0_15, %c0_16], %23 {strides = array<i32>} : memref<2x10x320xf32, #tpu.memory_space<vmem>>, vector<1x10x320xf32>,
    %c1_17 = arith.constant 1 : index
    %c0_18 = arith.constant 0 : index
    %c0_19 = arith.constant 0 : index
    %24 = vector.load %arg0[%c1_17, %c0_18, %c0_19] : memref<2x12x12xf32, #tpu.memory_space<vmem>>, vector<1x12x12xf32>
    %25 = vector.shape_cast %24 : vector<1x12x12xf32> to vector<12x12xf32>
    %26 = vector.extract_strided_slice %25 {offsets = [0, 0], sizes = [10, 12], strides = [1, 1]} : vector<12x12xf32> to vector<10x12xf32>
    %c0_20 = arith.constant 0 : index
    %c0_21 = arith.constant 0 : index
    %c0_22 = arith.constant 0 : index
    %27 = vector.load %arg1[%c0_20, %c0_21, %c0_22] : memref<3x12x320xf32, #tpu.memory_space<vmem>>, vector<1x12x320xf32>
    %28 = vector.shape_cast %27 : vector<1x12x320xf32> to vector<12x320xf32>
    %cst_23 = arith.constant dense<0.000000e+00> : vector<10x320xf32>
    %29 = tpu.matmul %26, %28, %cst_23 {dimension_numbers = #tpu.dot_dimension_numbers<[1], [0], [0], [1], [0, 0, 1, 1], [], []>} : vector<10x12xf32>, vector<12x320xf32>, vector<10x320xf32> -> vector<10x320xf32>
    %30 = vector.extract_strided_slice %25 {offsets = [1, 0], sizes = [10, 12], strides = [1, 1]} : vector<12x12xf32> to vector<10x12xf32>
    %c1_24 = arith.constant 1 : index
    %c0_25 = arith.constant 0 : index
    %c0_26 = arith.constant 0 : index
    %31 = vector.load %arg1[%c1_24, %c0_25, %c0_26] : memref<3x12x320xf32, #tpu.memory_space<vmem>>, vector<1x12x320xf32>
    %32 = vector.shape_cast %31 : vector<1x12x320xf32> to vector<12x320xf32>
    %cst_27 = arith.constant dense<0.000000e+00> : vector<10x320xf32>
    %33 = tpu.matmul %30, %32, %cst_27 {dimension_numbers = #tpu.dot_dimension_numbers<[1], [0], [0], [1], [0, 0, 1, 1], [], []>} : vector<10x12xf32>, vector<12x320xf32>, vector<10x320xf32> -> vector<10x320xf32>
    %34 = arith.addf %29, %33 : vector<10x320xf32>
    %35 = vector.extract_strided_slice %25 {offsets = [2, 0], sizes = [10, 12], strides = [1, 1]} : vector<12x12xf32> to vector<10x12xf32>
    %c2_28 = arith.constant 2 : index
    %c0_29 = arith.constant 0 : index
    %c0_30 = arith.constant 0 : index
    %36 = vector.load %arg1[%c2_28, %c0_29, %c0_30] : memref<3x12x320xf32, #tpu.memory_space<vmem>>, vector<1x12x320xf32>
    %37 = vector.shape_cast %36 : vector<1x12x320xf32> to vector<12x320xf32>
    %cst_31 = arith.constant dense<0.000000e+00> : vector<10x320xf32>
    %38 = tpu.matmul %35, %37, %cst_31 {dimension_numbers = #tpu.dot_dimension_numbers<[1], [0], [0], [1], [0, 0, 1, 1], [], []>} : vector<10x12xf32>, vector<12x320xf32>, vector<10x320xf32> -> vector<10x320xf32>
    %39 = arith.addf %34, %38 : vector<10x320xf32>
    %c0_32 = arith.constant 0 : index
    %c0_33 = arith.constant 0 : index
    %40 = vector.load %arg2[%c0_32, %c0_33] : memref<1x320xf32, #tpu.memory_space<vmem>>, vector<1x320xf32>
    %41 = vector.broadcast %40 : vector<1x320xf32> to vector<10x320xf32>
    %42 = arith.addf %39, %41 : vector<10x320xf32>
    %cst_34 = arith.constant 0.000000e+00 : f32
    %43 = vector.broadcast %cst_34 : f32 to vector<10x320xf32>
    %44 = arith.maximumf %42, %43 : vector<10x320xf32>
    %c1_35 = arith.constant 1 : index
    %c0_36 = arith.constant 0 : index
    %c0_37 = arith.constant 0 : index
    %45 = vector.load %arg10[%c1_35, %c0_36, %c0_37] : memref<2x10x320xf32, #tpu.memory_space<vmem>>, vector<1x10x320xf32>
    %46 = vector.shape_cast %45 : vector<1x10x320xf32> to vector<10x320xf32>
    %47 = vector.shape_cast %44 : vector<10x320xf32> to vector<1x10x320xf32>
    tpu.vector_store %arg10[%c1_35, %c0_36, %c0_37], %47 {strides = array<i32>} : memref<2x10x320xf32, #tpu.memory_space<vmem>>, vector<1x10x320xf32>,
    %c0_38 = arith.constant 0 : index
    %c0_39 = arith.constant 0 : index
    %c0_40 = arith.constant 0 : index
    %48 = vector.load %arg10[%c0_38, %c0_39, %c0_40] : memref<2x10x320xf32, #tpu.memory_space<vmem>>, vector<1x8x96xf32>
    %49 = vector.shape_cast %48 : vector<1x8x96xf32> to vector<8x96xf32>
    %c0_41 = arith.constant 0 : index
    %c0_42 = arith.constant 0 : index
    %c0_43 = arith.constant 0 : index
    %50 = vector.load %arg3[%c0_41, %c0_42, %c0_43] : memref<3x96x64xf32, #tpu.memory_space<vmem>>, vector<1x96x64xf32>
    %51 = vector.shape_cast %50 : vector<1x96x64xf32> to vector<96x64xf32>
    %cst_44 = arith.constant dense<0.000000e+00> : vector<8x64xf32>
    %52 = tpu.matmul %49, %51, %cst_44 {dimension_numbers = #tpu.dot_dimension_numbers<[1], [0], [0], [1], [0, 0, 1, 1], [], []>} : vector<8x96xf32>, vector<96x64xf32>, vector<8x64xf32> -> vector<8x64xf32>
    %c0_45 = arith.constant 0 : index
    %c1_46 = arith.constant 1 : index
    %c0_47 = arith.constant 0 : index
    %53 = vector.load %arg10[%c0_45, %c1_46, %c0_47] : memref<2x10x320xf32, #tpu.memory_space<vmem>>, vector<1x8x96xf32>
    %54 = vector.shape_cast %53 : vector<1x8x96xf32> to vector<8x96xf32>
    %c1_48 = arith.constant 1 : index
    %c0_49 = arith.constant 0 : index
    %c0_50 = arith.constant 0 : index
    %55 = vector.load %arg3[%c1_48, %c0_49, %c0_50] : memref<3x96x64xf32, #tpu.memory_space<vmem>>, vector<1x96x64xf32>
    %56 = vector.shape_cast %55 : vector<1x96x64xf32> to vector<96x64xf32>
    %cst_51 = arith.constant dense<0.000000e+00> : vector<8x64xf32>
    %57 = tpu.matmul %54, %56, %cst_51 {dimension_numbers = #tpu.dot_dimension_numbers<[1], [0], [0], [1], [0, 0, 1, 1], [], []>} : vector<8x96xf32>, vector<96x64xf32>, vector<8x64xf32> -> vector<8x64xf32>
    %58 = arith.addf %52, %57 : vector<8x64xf32>
    %c0_52 = arith.constant 0 : index
    %c2_53 = arith.constant 2 : index
    %c0_54 = arith.constant 0 : index
    %59 = vector.load %arg10[%c0_52, %c2_53, %c0_54] : memref<2x10x320xf32, #tpu.memory_space<vmem>>, vector<1x8x96xf32>
    %60 = vector.shape_cast %59 : vector<1x8x96xf32> to vector<8x96xf32>
    %c2_55 = arith.constant 2 : index
    %c0_56 = arith.constant 0 : index
    %c0_57 = arith.constant 0 : index
    %61 = vector.load %arg3[%c2_55, %c0_56, %c0_57] : memref<3x96x64xf32, #tpu.memory_space<vmem>>, vector<1x96x64xf32>
    %62 = vector.shape_cast %61 : vector<1x96x64xf32> to vector<96x64xf32>
    %cst_58 = arith.constant dense<0.000000e+00> : vector<8x64xf32>
    %63 = tpu.matmul %60, %62, %cst_58 {dimension_numbers = #tpu.dot_dimension_numbers<[1], [0], [0], [1], [0, 0, 1, 1], [], []>} : vector<8x96xf32>, vector<96x64xf32>, vector<8x64xf32> -> vector<8x64xf32>
    %64 = arith.addf %58, %63 : vector<8x64xf32>
    %c0_59 = arith.constant 0 : index
    %c0_60 = arith.constant 0 : index
    %65 = vector.load %arg4[%c0_59, %c0_60] : memref<1x64xf32, #tpu.memory_space<vmem>>, vector<1x64xf32>
    %66 = vector.broadcast %65 : vector<1x64xf32> to vector<8x64xf32>
    %67 = arith.addf %64, %66 : vector<8x64xf32>
    %cst_61 = arith.constant 0.000000e+00 : f32
    %68 = vector.broadcast %cst_61 : f32 to vector<8x64xf32>
    %69 = arith.maximumf %67, %68 : vector<8x64xf32>
    %c0_62 = arith.constant 0 : index
    %c0_63 = arith.constant 0 : index
    %c32 = arith.constant 32 : index
    %70 = vector.load %arg10[%c0_62, %c0_63, %c32] : memref<2x10x320xf32, #tpu.memory_space<vmem>>, vector<1x8x96xf32>
    %71 = vector.shape_cast %70 : vector<1x8x96xf32> to vector<8x96xf32>
    %c0_64 = arith.constant 0 : index
    %c0_65 = arith.constant 0 : index
    %c0_66 = arith.constant 0 : index
    %72 = vector.load %arg3[%c0_64, %c0_65, %c0_66] : memref<3x96x64xf32, #tpu.memory_space<vmem>>, vector<1x96x64xf32>
    %73 = vector.shape_cast %72 : vector<1x96x64xf32> to vector<96x64xf32>
    %cst_67 = arith.constant dense<0.000000e+00> : vector<8x64xf32>
    %74 = tpu.matmul %71, %73, %cst_67 {dimension_numbers = #tpu.dot_dimension_numbers<[1], [0], [0], [1], [0, 0, 1, 1], [], []>} : vector<8x96xf32>, vector<96x64xf32>, vector<8x64xf32> -> vector<8x64xf32>
    %c0_68 = arith.constant 0 : index
    %c1_69 = arith.constant 1 : index
    %c32_70 = arith.constant 32 : index
    %75 = vector.load %arg10[%c0_68, %c1_69, %c32_70] : memref<2x10x320xf32, #tpu.memory_space<vmem>>, vector<1x8x96xf32>
    %76 = vector.shape_cast %75 : vector<1x8x96xf32> to vector<8x96xf32>
    %c1_71 = arith.constant 1 : index
    %c0_72 = arith.constant 0 : index
    %c0_73 = arith.constant 0 : index
    %77 = vector.load %arg3[%c1_71, %c0_72, %c0_73] : memref<3x96x64xf32, #tpu.memory_space<vmem>>, vector<1x96x64xf32>
    %78 = vector.shape_cast %77 : vector<1x96x64xf32> to vector<96x64xf32>
    %cst_74 = arith.constant dense<0.000000e+00> : vector<8x64xf32>
    %79 = tpu.matmul %76, %78, %cst_74 {dimension_numbers = #tpu.dot_dimension_numbers<[1], [0], [0], [1], [0, 0, 1, 1], [], []>} : vector<8x96xf32>, vector<96x64xf32>, vector<8x64xf32> -> vector<8x64xf32>
    %80 = arith.addf %74, %79 : vector<8x64xf32>
    %c0_75 = arith.constant 0 : index
    %c2_76 = arith.constant 2 : index
    %c32_77 = arith.constant 32 : index
    %81 = vector.load %arg10[%c0_75, %c2_76, %c32_77] : memref<2x10x320xf32, #tpu.memory_space<vmem>>, vector<1x8x96xf32>
    %82 = vector.shape_cast %81 : vector<1x8x96xf32> to vector<8x96xf32>
    %c2_78 = arith.constant 2 : index
    %c0_79 = arith.constant 0 : index
    %c0_80 = arith.constant 0 : index
    %83 = vector.load %arg3[%c2_78, %c0_79, %c0_80] : memref<3x96x64xf32, #tpu.memory_space<vmem>>, vector<1x96x64xf32>
    %84 = vector.shape_cast %83 : vector<1x96x64xf32> to vector<96x64xf32>
    %cst_81 = arith.constant dense<0.000000e+00> : vector<8x64xf32>
    %85 = tpu.matmul %82, %84, %cst_81 {dimension_numbers = #tpu.dot_dimension_numbers<[1], [0], [0], [1], [0, 0, 1, 1], [], []>} : vector<8x96xf32>, vector<96x64xf32>, vector<8x64xf32> -> vector<8x64xf32>
    %86 = arith.addf %80, %85 : vector<8x64xf32>
    %c0_82 = arith.constant 0 : index
    %c0_83 = arith.constant 0 : index
    %87 = vector.load %arg4[%c0_82, %c0_83] : memref<1x64xf32, #tpu.memory_space<vmem>>, vector<1x64xf32>
    %88 = vector.broadcast %87 : vector<1x64xf32> to vector<8x64xf32>
    %89 = arith.addf %86, %88 : vector<8x64xf32>
    %cst_84 = arith.constant 0.000000e+00 : f32
    %90 = vector.broadcast %cst_84 : f32 to vector<8x64xf32>
    %91 = arith.maximumf %89, %90 : vector<8x64xf32>
    %92 = arith.maximumf %69, %91 : vector<8x64xf32>
    %93 = vector.extract_strided_slice %92 {offsets = [0, 0], sizes = [1, 64], strides = [1, 1]} : vector<8x64xf32> to vector<1x64xf32>
    %94 = vector.extract_strided_slice %92 {offsets = [1, 0], sizes = [1, 64], strides = [1, 1]} : vector<8x64xf32> to vector<1x64xf32>
    %95 = arith.maximumf %93, %94 : vector<1x64xf32>
    %c0_85 = arith.constant 0 : index
    %c0_86 = arith.constant 0 : index
    %96 = vector.load %arg11[%c0_85, %c0_86] : memref<2x1024xf32, #tpu.memory_space<vmem>>, vector<1x64xf32>
    tpu.vector_store %arg11[%c0_85, %c0_86], %95 {strides = array<i32>} : memref<2x1024xf32, #tpu.memory_space<vmem>>, vector<1x64xf32>,
    %97 = vector.extract_strided_slice %92 {offsets = [2, 0], sizes = [1, 64], strides = [1, 1]} : vector<8x64xf32> to vector<1x64xf32>
    %98 = vector.extract_strided_slice %92 {offsets = [3, 0], sizes = [1, 64], strides = [1, 1]} : vector<8x64xf32> to vector<1x64xf32>
    %99 = arith.maximumf %97, %98 : vector<1x64xf32>
    %c0_87 = arith.constant 0 : index
    %c256 = arith.constant 256 : index
    %100 = vector.load %arg11[%c0_87, %c256] : memref<2x1024xf32, #tpu.memory_space<vmem>>, vector<1x64xf32>
    tpu.vector_store %arg11[%c0_87, %c256], %99 {strides = array<i32>} : memref<2x1024xf32, #tpu.memory_space<vmem>>, vector<1x64xf32>,
    %101 = vector.extract_strided_slice %92 {offsets = [4, 0], sizes = [1, 64], strides = [1, 1]} : vector<8x64xf32> to vector<1x64xf32>
    %102 = vector.extract_strided_slice %92 {offsets = [5, 0], sizes = [1, 64], strides = [1, 1]} : vector<8x64xf32> to vector<1x64xf32>
    %103 = arith.maximumf %101, %102 : vector<1x64xf32>
    %c0_88 = arith.constant 0 : index
    %c512 = arith.constant 512 : index
    %104 = vector.load %arg11[%c0_88, %c512] : memref<2x1024xf32, #tpu.memory_space<vmem>>, vector<1x64xf32>
    tpu.vector_store %arg11[%c0_88, %c512], %103 {strides = array<i32>} : memref<2x1024xf32, #tpu.memory_space<vmem>>, vector<1x64xf32>,
    %105 = vector.extract_strided_slice %92 {offsets = [6, 0], sizes = [1, 64], strides = [1, 1]} : vector<8x64xf32> to vector<1x64xf32>
    %106 = vector.extract_strided_slice %92 {offsets = [7, 0], sizes = [1, 64], strides = [1, 1]} : vector<8x64xf32> to vector<1x64xf32>
    %107 = arith.maximumf %105, %106 : vector<1x64xf32>
    %c0_89 = arith.constant 0 : index
    %c768 = arith.constant 768 : index
    %108 = vector.load %arg11[%c0_89, %c768] : memref<2x1024xf32, #tpu.memory_space<vmem>>, vector<1x64xf32>
    tpu.vector_store %arg11[%c0_89, %c768], %107 {strides = array<i32>} : memref<2x1024xf32, #tpu.memory_space<vmem>>, vector<1x64xf32>,
    %c0_90 = arith.constant 0 : index
    %c0_91 = arith.constant 0 : index
    %c64 = arith.constant 64 : index
    %109 = vector.load %arg10[%c0_90, %c0_91, %c64] : memref<2x10x320xf32, #tpu.memory_space<vmem>>, vector<1x8x96xf32>
    %110 = vector.shape_cast %109 : vector<1x8x96xf32> to vector<8x96xf32>
    %c0_92 = arith.constant 0 : index
    %c0_93 = arith.constant 0 : index
    %c0_94 = arith.constant 0 : index
    %111 = vector.load %arg3[%c0_92, %c0_93, %c0_94] : memref<3x96x64xf32, #tpu.memory_space<vmem>>, vector<1x96x64xf32>
    %112 = vector.shape_cast %111 : vector<1x96x64xf32> to vector<96x64xf32>
    %cst_95 = arith.constant dense<0.000000e+00> : vector<8x64xf32>
    %113 = tpu.matmul %110, %112, %cst_95 {dimension_numbers = #tpu.dot_dimension_numbers<[1], [0], [0], [1], [0, 0, 1, 1], [], []>} : vector<8x96xf32>, vector<96x64xf32>, vector<8x64xf32> -> vector<8x64xf32>
    %c0_96 = arith.constant 0 : index
    %c1_97 = arith.constant 1 : index
    %c64_98 = arith.constant 64 : index
    %114 = vector.load %arg10[%c0_96, %c1_97, %c64_98] : memref<2x10x320xf32, #tpu.memory_space<vmem>>, vector<1x8x96xf32>
    %115 = vector.shape_cast %114 : vector<1x8x96xf32> to vector<8x96xf32>
    %c1_99 = arith.constant 1 : index
    %c0_100 = arith.constant 0 : index
    %c0_101 = arith.constant 0 : index
    %116 = vector.load %arg3[%c1_99, %c0_100, %c0_101] : memref<3x96x64xf32, #tpu.memory_space<vmem>>, vector<1x96x64xf32>
    %117 = vector.shape_cast %116 : vector<1x96x64xf32> to vector<96x64xf32>
    %cst_102 = arith.constant dense<0.000000e+00> : vector<8x64xf32>
    %118 = tpu.matmul %115, %117, %cst_102 {dimension_numbers = #tpu.dot_dimension_numbers<[1], [0], [0], [1], [0, 0, 1, 1], [], []>} : vector<8x96xf32>, vector<96x64xf32>, vector<8x64xf32> -> vector<8x64xf32>
    %119 = arith.addf %113, %118 : vector<8x64xf32>
    %c0_103 = arith.constant 0 : index
    %c2_104 = arith.constant 2 : index
    %c64_105 = arith.constant 64 : index
    %120 = vector.load %arg10[%c0_103, %c2_104, %c64_105] : memref<2x10x320xf32, #tpu.memory_space<vmem>>, vector<1x8x96xf32>
    %121 = vector.shape_cast %120 : vector<1x8x96xf32> to vector<8x96xf32>
    %c2_106 = arith.constant 2 : index
    %c0_107 = arith.constant 0 : index
    %c0_108 = arith.constant 0 : index
    %122 = vector.load %arg3[%c2_106, %c0_107, %c0_108] : memref<3x96x64xf32, #tpu.memory_space<vmem>>, vector<1x96x64xf32>
    %123 = vector.shape_cast %122 : vector<1x96x64xf32> to vector<96x64xf32>
    %cst_109 = arith.constant dense<0.000000e+00> : vector<8x64xf32>
    %124 = tpu.matmul %121, %123, %cst_109 {dimension_numbers = #tpu.dot_dimension_numbers<[1], [0], [0], [1], [0, 0, 1, 1], [], []>} : vector<8x96xf32>, vector<96x64xf32>, vector<8x64xf32> -> vector<8x64xf32>
    %125 = arith.addf %119, %124 : vector<8x64xf32>
    %c0_110 = arith.constant 0 : index
    %c0_111 = arith.constant 0 : index
    %126 = vector.load %arg4[%c0_110, %c0_111] : memref<1x64xf32, #tpu.memory_space<vmem>>, vector<1x64xf32>
    %127 = vector.broadcast %126 : vector<1x64xf32> to vector<8x64xf32>
    %128 = arith.addf %125, %127 : vector<8x64xf32>
    %cst_112 = arith.constant 0.000000e+00 : f32
    %129 = vector.broadcast %cst_112 : f32 to vector<8x64xf32>
    %130 = arith.maximumf %128, %129 : vector<8x64xf32>
    %c0_113 = arith.constant 0 : index
    %c0_114 = arith.constant 0 : index
    %c96 = arith.constant 96 : index
    %131 = vector.load %arg10[%c0_113, %c0_114, %c96] : memref<2x10x320xf32, #tpu.memory_space<vmem>>, vector<1x8x96xf32>
    %132 = vector.shape_cast %131 : vector<1x8x96xf32> to vector<8x96xf32>
    %c0_115 = arith.constant 0 : index
    %c0_116 = arith.constant 0 : index
    %c0_117 = arith.constant 0 : index
    %133 = vector.load %arg3[%c0_115, %c0_116, %c0_117] : memref<3x96x64xf32, #tpu.memory_space<vmem>>, vector<1x96x64xf32>
    %134 = vector.shape_cast %133 : vector<1x96x64xf32> to vector<96x64xf32>
    %cst_118 = arith.constant dense<0.000000e+00> : vector<8x64xf32>
    %135 = tpu.matmul %132, %134, %cst_118 {dimension_numbers = #tpu.dot_dimension_numbers<[1], [0], [0], [1], [0, 0, 1, 1], [], []>} : vector<8x96xf32>, vector<96x64xf32>, vector<8x64xf32> -> vector<8x64xf32>
    %c0_119 = arith.constant 0 : index
    %c1_120 = arith.constant 1 : index
    %c96_121 = arith.constant 96 : index
    %136 = vector.load %arg10[%c0_119, %c1_120, %c96_121] : memref<2x10x320xf32, #tpu.memory_space<vmem>>, vector<1x8x96xf32>
    %137 = vector.shape_cast %136 : vector<1x8x96xf32> to vector<8x96xf32>
    %c1_122 = arith.constant 1 : index
    %c0_123 = arith.constant 0 : index
    %c0_124 = arith.constant 0 : index
    %138 = vector.load %arg3[%c1_122, %c0_123, %c0_124] : memref<3x96x64xf32, #tpu.memory_space<vmem>>, vector<1x96x64xf32>
    %139 = vector.shape_cast %138 : vector<1x96x64xf32> to vector<96x64xf32>
    %cst_125 = arith.constant dense<0.000000e+00> : vector<8x64xf32>
    %140 = tpu.matmul %137, %139, %cst_125 {dimension_numbers = #tpu.dot_dimension_numbers<[1], [0], [0], [1], [0, 0, 1, 1], [], []>} : vector<8x96xf32>, vector<96x64xf32>, vector<8x64xf32> -> vector<8x64xf32>
    %141 = arith.addf %135, %140 : vector<8x64xf32>
    %c0_126 = arith.constant 0 : index
    %c2_127 = arith.constant 2 : index
    %c96_128 = arith.constant 96 : index
    %142 = vector.load %arg10[%c0_126, %c2_127, %c96_128] : memref<2x10x320xf32, #tpu.memory_space<vmem>>, vector<1x8x96xf32>
    %143 = vector.shape_cast %142 : vector<1x8x96xf32> to vector<8x96xf32>
    %c2_129 = arith.constant 2 : index
    %c0_130 = arith.constant 0 : index
    %c0_131 = arith.constant 0 : index
    %144 = vector.load %arg3[%c2_129, %c0_130, %c0_131] : memref<3x96x64xf32, #tpu.memory_space<vmem>>, vector<1x96x64xf32>
    %145 = vector.shape_cast %144 : vector<1x96x64xf32> to vector<96x64xf32>
    %cst_132 = arith.constant dense<0.000000e+00> : vector<8x64xf32>
    %146 = tpu.matmul %143, %145, %cst_132 {dimension_numbers = #tpu.dot_dimension_numbers<[1], [0], [0], [1], [0, 0, 1, 1], [], []>} : vector<8x96xf32>, vector<96x64xf32>, vector<8x64xf32> -> vector<8x64xf32>
    %147 = arith.addf %141, %146 : vector<8x64xf32>
    %c0_133 = arith.constant 0 : index
    %c0_134 = arith.constant 0 : index
    %148 = vector.load %arg4[%c0_133, %c0_134] : memref<1x64xf32, #tpu.memory_space<vmem>>, vector<1x64xf32>
    %149 = vector.broadcast %148 : vector<1x64xf32> to vector<8x64xf32>
    %150 = arith.addf %147, %149 : vector<8x64xf32>
    %cst_135 = arith.constant 0.000000e+00 : f32
    %151 = vector.broadcast %cst_135 : f32 to vector<8x64xf32>
    %152 = arith.maximumf %150, %151 : vector<8x64xf32>
    %153 = arith.maximumf %130, %152 : vector<8x64xf32>
    %154 = vector.extract_strided_slice %153 {offsets = [0, 0], sizes = [1, 64], strides = [1, 1]} : vector<8x64xf32> to vector<1x64xf32>
    %155 = vector.extract_strided_slice %153 {offsets = [1, 0], sizes = [1, 64], strides = [1, 1]} : vector<8x64xf32> to vector<1x64xf32>
    %156 = arith.maximumf %154, %155 : vector<1x64xf32>
    %c0_136 = arith.constant 0 : index
    %c64_137 = arith.constant 64 : index
    %157 = vector.load %arg11[%c0_136, %c64_137] : memref<2x1024xf32, #tpu.memory_space<vmem>>, vector<1x64xf32>
    tpu.vector_store %arg11[%c0_136, %c64_137], %156 {strides = array<i32>} : memref<2x1024xf32, #tpu.memory_space<vmem>>, vector<1x64xf32>,
    %158 = vector.extract_strided_slice %153 {offsets = [2, 0], sizes = [1, 64], strides = [1, 1]} : vector<8x64xf32> to vector<1x64xf32>
    %159 = vector.extract_strided_slice %153 {offsets = [3, 0], sizes = [1, 64], strides = [1, 1]} : vector<8x64xf32> to vector<1x64xf32>
    %160 = arith.maximumf %158, %159 : vector<1x64xf32>
    %c0_138 = arith.constant 0 : index
    %c320 = arith.constant 320 : index
    %161 = vector.load %arg11[%c0_138, %c320] : memref<2x1024xf32, #tpu.memory_space<vmem>>, vector<1x64xf32>
    tpu.vector_store %arg11[%c0_138, %c320], %160 {strides = array<i32>} : memref<2x1024xf32, #tpu.memory_space<vmem>>, vector<1x64xf32>,
    %162 = vector.extract_strided_slice %153 {offsets = [4, 0], sizes = [1, 64], strides = [1, 1]} : vector<8x64xf32> to vector<1x64xf32>
    %163 = vector.extract_strided_slice %153 {offsets = [5, 0], sizes = [1, 64], strides = [1, 1]} : vector<8x64xf32> to vector<1x64xf32>
    %164 = arith.maximumf %162, %163 : vector<1x64xf32>
    %c0_139 = arith.constant 0 : index
    %c576 = arith.constant 576 : index
    %165 = vector.load %arg11[%c0_139, %c576] : memref<2x1024xf32, #tpu.memory_space<vmem>>, vector<1x64xf32>
    tpu.vector_store %arg11[%c0_139, %c576], %164 {strides = array<i32>} : memref<2x1024xf32, #tpu.memory_space<vmem>>, vector<1x64xf32>,
    %166 = vector.extract_strided_slice %153 {offsets = [6, 0], sizes = [1, 64], strides = [1, 1]} : vector<8x64xf32> to vector<1x64xf32>
    %167 = vector.extract_strided_slice %153 {offsets = [7, 0], sizes = [1, 64], strides = [1, 1]} : vector<8x64xf32> to vector<1x64xf32>
    %168 = arith.maximumf %166, %167 : vector<1x64xf32>
    %c0_140 = arith.constant 0 : index
    %c832 = arith.constant 832 : index
    %169 = vector.load %arg11[%c0_140, %c832] : memref<2x1024xf32, #tpu.memory_space<vmem>>, vector<1x64xf32>
    tpu.vector_store %arg11[%c0_140, %c832], %168 {strides = array<i32>} : memref<2x1024xf32, #tpu.memory_space<vmem>>, vector<1x64xf32>,
    %c0_141 = arith.constant 0 : index
    %c0_142 = arith.constant 0 : index
    %c128 = arith.constant 128 : index
    %170 = vector.load %arg10[%c0_141, %c0_142, %c128] : memref<2x10x320xf32, #tpu.memory_space<vmem>>, vector<1x8x96xf32>
    %171 = vector.shape_cast %170 : vector<1x8x96xf32> to vector<8x96xf32>
    %c0_143 = arith.constant 0 : index
    %c0_144 = arith.constant 0 : index
    %c0_145 = arith.constant 0 : index
    %172 = vector.load %arg3[%c0_143, %c0_144, %c0_145] : memref<3x96x64xf32, #tpu.memory_space<vmem>>, vector<1x96x64xf32>
    %173 = vector.shape_cast %172 : vector<1x96x64xf32> to vector<96x64xf32>
    %cst_146 = arith.constant dense<0.000000e+00> : vector<8x64xf32>
    %174 = tpu.matmul %171, %173, %cst_146 {dimension_numbers = #tpu.dot_dimension_numbers<[1], [0], [0], [1], [0, 0, 1, 1], [], []>} : vector<8x96xf32>, vector<96x64xf32>, vector<8x64xf32> -> vector<8x64xf32>
    %c0_147 = arith.constant 0 : index
    %c1_148 = arith.constant 1 : index
    %c128_149 = arith.constant 128 : index
    %175 = vector.load %arg10[%c0_147, %c1_148, %c128_149] : memref<2x10x320xf32, #tpu.memory_space<vmem>>, vector<1x8x96xf32>
    %176 = vector.shape_cast %175 : vector<1x8x96xf32> to vector<8x96xf32>
    %c1_150 = arith.constant 1 : index
    %c0_151 = arith.constant 0 : index
    %c0_152 = arith.constant 0 : index
    %177 = vector.load %arg3[%c1_150, %c0_151, %c0_152] : memref<3x96x64xf32, #tpu.memory_space<vmem>>, vector<1x96x64xf32>
    %178 = vector.shape_cast %177 : vector<1x96x64xf32> to vector<96x64xf32>
    %cst_153 = arith.constant dense<0.000000e+00> : vector<8x64xf32>
    %179 = tpu.matmul %176, %178, %cst_153 {dimension_numbers = #tpu.dot_dimension_numbers<[1], [0], [0], [1], [0, 0, 1, 1], [], []>} : vector<8x96xf32>, vector<96x64xf32>, vector<8x64xf32> -> vector<8x64xf32>
    %180 = arith.addf %174, %179 : vector<8x64xf32>
    %c0_154 = arith.constant 0 : index
    %c2_155 = arith.constant 2 : index
    %c128_156 = arith.constant 128 : index
    %181 = vector.load %arg10[%c0_154, %c2_155, %c128_156] : memref<2x10x320xf32, #tpu.memory_space<vmem>>, vector<1x8x96xf32>
    %182 = vector.shape_cast %181 : vector<1x8x96xf32> to vector<8x96xf32>
    %c2_157 = arith.constant 2 : index
    %c0_158 = arith.constant 0 : index
    %c0_159 = arith.constant 0 : index
    %183 = vector.load %arg3[%c2_157, %c0_158, %c0_159] : memref<3x96x64xf32, #tpu.memory_space<vmem>>, vector<1x96x64xf32>
    %184 = vector.shape_cast %183 : vector<1x96x64xf32> to vector<96x64xf32>
    %cst_160 = arith.constant dense<0.000000e+00> : vector<8x64xf32>
    %185 = tpu.matmul %182, %184, %cst_160 {dimension_numbers = #tpu.dot_dimension_numbers<[1], [0], [0], [1], [0, 0, 1, 1], [], []>} : vector<8x96xf32>, vector<96x64xf32>, vector<8x64xf32> -> vector<8x64xf32>
    %186 = arith.addf %180, %185 : vector<8x64xf32>
    %c0_161 = arith.constant 0 : index
    %c0_162 = arith.constant 0 : index
    %187 = vector.load %arg4[%c0_161, %c0_162] : memref<1x64xf32, #tpu.memory_space<vmem>>, vector<1x64xf32>
    %188 = vector.broadcast %187 : vector<1x64xf32> to vector<8x64xf32>
    %189 = arith.addf %186, %188 : vector<8x64xf32>
    %cst_163 = arith.constant 0.000000e+00 : f32
    %190 = vector.broadcast %cst_163 : f32 to vector<8x64xf32>
    %191 = arith.maximumf %189, %190 : vector<8x64xf32>
    %c0_164 = arith.constant 0 : index
    %c0_165 = arith.constant 0 : index
    %c160 = arith.constant 160 : index
    %192 = vector.load %arg10[%c0_164, %c0_165, %c160] : memref<2x10x320xf32, #tpu.memory_space<vmem>>, vector<1x8x96xf32>
    %193 = vector.shape_cast %192 : vector<1x8x96xf32> to vector<8x96xf32>
    %c0_166 = arith.constant 0 : index
    %c0_167 = arith.constant 0 : index
    %c0_168 = arith.constant 0 : index
    %194 = vector.load %arg3[%c0_166, %c0_167, %c0_168] : memref<3x96x64xf32, #tpu.memory_space<vmem>>, vector<1x96x64xf32>
    %195 = vector.shape_cast %194 : vector<1x96x64xf32> to vector<96x64xf32>
    %cst_169 = arith.constant dense<0.000000e+00> : vector<8x64xf32>
    %196 = tpu.matmul %193, %195, %cst_169 {dimension_numbers = #tpu.dot_dimension_numbers<[1], [0], [0], [1], [0, 0, 1, 1], [], []>} : vector<8x96xf32>, vector<96x64xf32>, vector<8x64xf32> -> vector<8x64xf32>
    %c0_170 = arith.constant 0 : index
    %c1_171 = arith.constant 1 : index
    %c160_172 = arith.constant 160 : index
    %197 = vector.load %arg10[%c0_170, %c1_171, %c160_172] : memref<2x10x320xf32, #tpu.memory_space<vmem>>, vector<1x8x96xf32>
    %198 = vector.shape_cast %197 : vector<1x8x96xf32> to vector<8x96xf32>
    %c1_173 = arith.constant 1 : index
    %c0_174 = arith.constant 0 : index
    %c0_175 = arith.constant 0 : index
    %199 = vector.load %arg3[%c1_173, %c0_174, %c0_175] : memref<3x96x64xf32, #tpu.memory_space<vmem>>, vector<1x96x64xf32>
    %200 = vector.shape_cast %199 : vector<1x96x64xf32> to vector<96x64xf32>
    %cst_176 = arith.constant dense<0.000000e+00> : vector<8x64xf32>
    %201 = tpu.matmul %198, %200, %cst_176 {dimension_numbers = #tpu.dot_dimension_numbers<[1], [0], [0], [1], [0, 0, 1, 1], [], []>} : vector<8x96xf32>, vector<96x64xf32>, vector<8x64xf32> -> vector<8x64xf32>
    %202 = arith.addf %196, %201 : vector<8x64xf32>
    %c0_177 = arith.constant 0 : index
    %c2_178 = arith.constant 2 : index
    %c160_179 = arith.constant 160 : index
    %203 = vector.load %arg10[%c0_177, %c2_178, %c160_179] : memref<2x10x320xf32, #tpu.memory_space<vmem>>, vector<1x8x96xf32>
    %204 = vector.shape_cast %203 : vector<1x8x96xf32> to vector<8x96xf32>
    %c2_180 = arith.constant 2 : index
    %c0_181 = arith.constant 0 : index
    %c0_182 = arith.constant 0 : index
    %205 = vector.load %arg3[%c2_180, %c0_181, %c0_182] : memref<3x96x64xf32, #tpu.memory_space<vmem>>, vector<1x96x64xf32>
    %206 = vector.shape_cast %205 : vector<1x96x64xf32> to vector<96x64xf32>
    %cst_183 = arith.constant dense<0.000000e+00> : vector<8x64xf32>
    %207 = tpu.matmul %204, %206, %cst_183 {dimension_numbers = #tpu.dot_dimension_numbers<[1], [0], [0], [1], [0, 0, 1, 1], [], []>} : vector<8x96xf32>, vector<96x64xf32>, vector<8x64xf32> -> vector<8x64xf32>
    %208 = arith.addf %202, %207 : vector<8x64xf32>
    %c0_184 = arith.constant 0 : index
    %c0_185 = arith.constant 0 : index
    %209 = vector.load %arg4[%c0_184, %c0_185] : memref<1x64xf32, #tpu.memory_space<vmem>>, vector<1x64xf32>
    %210 = vector.broadcast %209 : vector<1x64xf32> to vector<8x64xf32>
    %211 = arith.addf %208, %210 : vector<8x64xf32>
    %cst_186 = arith.constant 0.000000e+00 : f32
    %212 = vector.broadcast %cst_186 : f32 to vector<8x64xf32>
    %213 = arith.maximumf %211, %212 : vector<8x64xf32>
    %214 = arith.maximumf %191, %213 : vector<8x64xf32>
    %215 = vector.extract_strided_slice %214 {offsets = [0, 0], sizes = [1, 64], strides = [1, 1]} : vector<8x64xf32> to vector<1x64xf32>
    %216 = vector.extract_strided_slice %214 {offsets = [1, 0], sizes = [1, 64], strides = [1, 1]} : vector<8x64xf32> to vector<1x64xf32>
    %217 = arith.maximumf %215, %216 : vector<1x64xf32>
    %c0_187 = arith.constant 0 : index
    %c128_188 = arith.constant 128 : index
    %218 = vector.load %arg11[%c0_187, %c128_188] : memref<2x1024xf32, #tpu.memory_space<vmem>>, vector<1x64xf32>
    tpu.vector_store %arg11[%c0_187, %c128_188], %217 {strides = array<i32>} : memref<2x1024xf32, #tpu.memory_space<vmem>>, vector<1x64xf32>,
    %219 = vector.extract_strided_slice %214 {offsets = [2, 0], sizes = [1, 64], strides = [1, 1]} : vector<8x64xf32> to vector<1x64xf32>
    %220 = vector.extract_strided_slice %214 {offsets = [3, 0], sizes = [1, 64], strides = [1, 1]} : vector<8x64xf32> to vector<1x64xf32>
    %221 = arith.maximumf %219, %220 : vector<1x64xf32>
    %c0_189 = arith.constant 0 : index
    %c384 = arith.constant 384 : index
    %222 = vector.load %arg11[%c0_189, %c384] : memref<2x1024xf32, #tpu.memory_space<vmem>>, vector<1x64xf32>
    tpu.vector_store %arg11[%c0_189, %c384], %221 {strides = array<i32>} : memref<2x1024xf32, #tpu.memory_space<vmem>>, vector<1x64xf32>,
    %223 = vector.extract_strided_slice %214 {offsets = [4, 0], sizes = [1, 64], strides = [1, 1]} : vector<8x64xf32> to vector<1x64xf32>
    %224 = vector.extract_strided_slice %214 {offsets = [5, 0], sizes = [1, 64], strides = [1, 1]} : vector<8x64xf32> to vector<1x64xf32>
    %225 = arith.maximumf %223, %224 : vector<1x64xf32>
    %c0_190 = arith.constant 0 : index
    %c640 = arith.constant 640 : index
    %226 = vector.load %arg11[%c0_190, %c640] : memref<2x1024xf32, #tpu.memory_space<vmem>>, vector<1x64xf32>
    tpu.vector_store %arg11[%c0_190, %c640], %225 {strides = array<i32>} : memref<2x1024xf32, #tpu.memory_space<vmem>>, vector<1x64xf32>,
    %227 = vector.extract_strided_slice %214 {offsets = [6, 0], sizes = [1, 64], strides = [1, 1]} : vector<8x64xf32> to vector<1x64xf32>
    %228 = vector.extract_strided_slice %214 {offsets = [7, 0], sizes = [1, 64], strides = [1, 1]} : vector<8x64xf32> to vector<1x64xf32>
    %229 = arith.maximumf %227, %228 : vector<1x64xf32>
    %c0_191 = arith.constant 0 : index
    %c896 = arith.constant 896 : index
    %230 = vector.load %arg11[%c0_191, %c896] : memref<2x1024xf32, #tpu.memory_space<vmem>>, vector<1x64xf32>
    tpu.vector_store %arg11[%c0_191, %c896], %229 {strides = array<i32>} : memref<2x1024xf32, #tpu.memory_space<vmem>>, vector<1x64xf32>,
    %c0_192 = arith.constant 0 : index
    %c0_193 = arith.constant 0 : index
    %c192 = arith.constant 192 : index
    %231 = vector.load %arg10[%c0_192, %c0_193, %c192] : memref<2x10x320xf32, #tpu.memory_space<vmem>>, vector<1x8x96xf32>
    %232 = vector.shape_cast %231 : vector<1x8x96xf32> to vector<8x96xf32>
    %c0_194 = arith.constant 0 : index
    %c0_195 = arith.constant 0 : index
    %c0_196 = arith.constant 0 : index
    %233 = vector.load %arg3[%c0_194, %c0_195, %c0_196] : memref<3x96x64xf32, #tpu.memory_space<vmem>>, vector<1x96x64xf32>
    %234 = vector.shape_cast %233 : vector<1x96x64xf32> to vector<96x64xf32>
    %cst_197 = arith.constant dense<0.000000e+00> : vector<8x64xf32>
    %235 = tpu.matmul %232, %234, %cst_197 {dimension_numbers = #tpu.dot_dimension_numbers<[1], [0], [0], [1], [0, 0, 1, 1], [], []>} : vector<8x96xf32>, vector<96x64xf32>, vector<8x64xf32> -> vector<8x64xf32>
    %c0_198 = arith.constant 0 : index
    %c1_199 = arith.constant 1 : index
    %c192_200 = arith.constant 192 : index
    %236 = vector.load %arg10[%c0_198, %c1_199, %c192_200] : memref<2x10x320xf32, #tpu.memory_space<vmem>>, vector<1x8x96xf32>
    %237 = vector.shape_cast %236 : vector<1x8x96xf32> to vector<8x96xf32>
    %c1_201 = arith.constant 1 : index
    %c0_202 = arith.constant 0 : index
    %c0_203 = arith.constant 0 : index
    %238 = vector.load %arg3[%c1_201, %c0_202, %c0_203] : memref<3x96x64xf32, #tpu.memory_space<vmem>>, vector<1x96x64xf32>
    %239 = vector.shape_cast %238 : vector<1x96x64xf32> to vector<96x64xf32>
    %cst_204 = arith.constant dense<0.000000e+00> : vector<8x64xf32>
    %240 = tpu.matmul %237, %239, %cst_204 {dimension_numbers = #tpu.dot_dimension_numbers<[1], [0], [0], [1], [0, 0, 1, 1], [], []>} : vector<8x96xf32>, vector<96x64xf32>, vector<8x64xf32> -> vector<8x64xf32>
    %241 = arith.addf %235, %240 : vector<8x64xf32>
    %c0_205 = arith.constant 0 : index
    %c2_206 = arith.constant 2 : index
    %c192_207 = arith.constant 192 : index
    %242 = vector.load %arg10[%c0_205, %c2_206, %c192_207] : memref<2x10x320xf32, #tpu.memory_space<vmem>>, vector<1x8x96xf32>
    %243 = vector.shape_cast %242 : vector<1x8x96xf32> to vector<8x96xf32>
    %c2_208 = arith.constant 2 : index
    %c0_209 = arith.constant 0 : index
    %c0_210 = arith.constant 0 : index
    %244 = vector.load %arg3[%c2_208, %c0_209, %c0_210] : memref<3x96x64xf32, #tpu.memory_space<vmem>>, vector<1x96x64xf32>
    %245 = vector.shape_cast %244 : vector<1x96x64xf32> to vector<96x64xf32>
    %cst_211 = arith.constant dense<0.000000e+00> : vector<8x64xf32>
    %246 = tpu.matmul %243, %245, %cst_211 {dimension_numbers = #tpu.dot_dimension_numbers<[1], [0], [0], [1], [0, 0, 1, 1], [], []>} : vector<8x96xf32>, vector<96x64xf32>, vector<8x64xf32> -> vector<8x64xf32>
    %247 = arith.addf %241, %246 : vector<8x64xf32>
    %c0_212 = arith.constant 0 : index
    %c0_213 = arith.constant 0 : index
    %248 = vector.load %arg4[%c0_212, %c0_213] : memref<1x64xf32, #tpu.memory_space<vmem>>, vector<1x64xf32>
    %249 = vector.broadcast %248 : vector<1x64xf32> to vector<8x64xf32>
    %250 = arith.addf %247, %249 : vector<8x64xf32>
    %cst_214 = arith.constant 0.000000e+00 : f32
    %251 = vector.broadcast %cst_214 : f32 to vector<8x64xf32>
    %252 = arith.maximumf %250, %251 : vector<8x64xf32>
    %c0_215 = arith.constant 0 : index
    %c0_216 = arith.constant 0 : index
    %c224 = arith.constant 224 : index
    %253 = vector.load %arg10[%c0_215, %c0_216, %c224] : memref<2x10x320xf32, #tpu.memory_space<vmem>>, vector<1x8x96xf32>
    %254 = vector.shape_cast %253 : vector<1x8x96xf32> to vector<8x96xf32>
    %c0_217 = arith.constant 0 : index
    %c0_218 = arith.constant 0 : index
    %c0_219 = arith.constant 0 : index
    %255 = vector.load %arg3[%c0_217, %c0_218, %c0_219] : memref<3x96x64xf32, #tpu.memory_space<vmem>>, vector<1x96x64xf32>
    %256 = vector.shape_cast %255 : vector<1x96x64xf32> to vector<96x64xf32>
    %cst_220 = arith.constant dense<0.000000e+00> : vector<8x64xf32>
    %257 = tpu.matmul %254, %256, %cst_220 {dimension_numbers = #tpu.dot_dimension_numbers<[1], [0], [0], [1], [0, 0, 1, 1], [], []>} : vector<8x96xf32>, vector<96x64xf32>, vector<8x64xf32> -> vector<8x64xf32>
    %c0_221 = arith.constant 0 : index
    %c1_222 = arith.constant 1 : index
    %c224_223 = arith.constant 224 : index
    %258 = vector.load %arg10[%c0_221, %c1_222, %c224_223] : memref<2x10x320xf32, #tpu.memory_space<vmem>>, vector<1x8x96xf32>
    %259 = vector.shape_cast %258 : vector<1x8x96xf32> to vector<8x96xf32>
    %c1_224 = arith.constant 1 : index
    %c0_225 = arith.constant 0 : index
    %c0_226 = arith.constant 0 : index
    %260 = vector.load %arg3[%c1_224, %c0_225, %c0_226] : memref<3x96x64xf32, #tpu.memory_space<vmem>>, vector<1x96x64xf32>
    %261 = vector.shape_cast %260 : vector<1x96x64xf32> to vector<96x64xf32>
    %cst_227 = arith.constant dense<0.000000e+00> : vector<8x64xf32>
    %262 = tpu.matmul %259, %261, %cst_227 {dimension_numbers = #tpu.dot_dimension_numbers<[1], [0], [0], [1], [0, 0, 1, 1], [], []>} : vector<8x96xf32>, vector<96x64xf32>, vector<8x64xf32> -> vector<8x64xf32>
    %263 = arith.addf %257, %262 : vector<8x64xf32>
    %c0_228 = arith.constant 0 : index
    %c2_229 = arith.constant 2 : index
    %c224_230 = arith.constant 224 : index
    %264 = vector.load %arg10[%c0_228, %c2_229, %c224_230] : memref<2x10x320xf32, #tpu.memory_space<vmem>>, vector<1x8x96xf32>
    %265 = vector.shape_cast %264 : vector<1x8x96xf32> to vector<8x96xf32>
    %c2_231 = arith.constant 2 : index
    %c0_232 = arith.constant 0 : index
    %c0_233 = arith.constant 0 : index
    %266 = vector.load %arg3[%c2_231, %c0_232, %c0_233] : memref<3x96x64xf32, #tpu.memory_space<vmem>>, vector<1x96x64xf32>
    %267 = vector.shape_cast %266 : vector<1x96x64xf32> to vector<96x64xf32>
    %cst_234 = arith.constant dense<0.000000e+00> : vector<8x64xf32>
    %268 = tpu.matmul %265, %267, %cst_234 {dimension_numbers = #tpu.dot_dimension_numbers<[1], [0], [0], [1], [0, 0, 1, 1], [], []>} : vector<8x96xf32>, vector<96x64xf32>, vector<8x64xf32> -> vector<8x64xf32>
    %269 = arith.addf %263, %268 : vector<8x64xf32>
    %c0_235 = arith.constant 0 : index
    %c0_236 = arith.constant 0 : index
    %270 = vector.load %arg4[%c0_235, %c0_236] : memref<1x64xf32, #tpu.memory_space<vmem>>, vector<1x64xf32>
    %271 = vector.broadcast %270 : vector<1x64xf32> to vector<8x64xf32>
    %272 = arith.addf %269, %271 : vector<8x64xf32>
    %cst_237 = arith.constant 0.000000e+00 : f32
    %273 = vector.broadcast %cst_237 : f32 to vector<8x64xf32>
    %274 = arith.maximumf %272, %273 : vector<8x64xf32>
    %275 = arith.maximumf %252, %274 : vector<8x64xf32>
    %276 = vector.extract_strided_slice %275 {offsets = [0, 0], sizes = [1, 64], strides = [1, 1]} : vector<8x64xf32> to vector<1x64xf32>
    %277 = vector.extract_strided_slice %275 {offsets = [1, 0], sizes = [1, 64], strides = [1, 1]} : vector<8x64xf32> to vector<1x64xf32>
    %278 = arith.maximumf %276, %277 : vector<1x64xf32>
    %c0_238 = arith.constant 0 : index
    %c192_239 = arith.constant 192 : index
    %279 = vector.load %arg11[%c0_238, %c192_239] : memref<2x1024xf32, #tpu.memory_space<vmem>>, vector<1x64xf32>
    tpu.vector_store %arg11[%c0_238, %c192_239], %278 {strides = array<i32>} : memref<2x1024xf32, #tpu.memory_space<vmem>>, vector<1x64xf32>,
    %280 = vector.extract_strided_slice %275 {offsets = [2, 0], sizes = [1, 64], strides = [1, 1]} : vector<8x64xf32> to vector<1x64xf32>
    %281 = vector.extract_strided_slice %275 {offsets = [3, 0], sizes = [1, 64], strides = [1, 1]} : vector<8x64xf32> to vector<1x64xf32>
    %282 = arith.maximumf %280, %281 : vector<1x64xf32>
    %c0_240 = arith.constant 0 : index
    %c448 = arith.constant 448 : index
    %283 = vector.load %arg11[%c0_240, %c448] : memref<2x1024xf32, #tpu.memory_space<vmem>>, vector<1x64xf32>
    tpu.vector_store %arg11[%c0_240, %c448], %282 {strides = array<i32>} : memref<2x1024xf32, #tpu.memory_space<vmem>>, vector<1x64xf32>,
    %284 = vector.extract_strided_slice %275 {offsets = [4, 0], sizes = [1, 64], strides = [1, 1]} : vector<8x64xf32> to vector<1x64xf32>
    %285 = vector.extract_strided_slice %275 {offsets = [5, 0], sizes = [1, 64], strides = [1, 1]} : vector<8x64xf32> to vector<1x64xf32>
    %286 = arith.maximumf %284, %285 : vector<1x64xf32>
    %c0_241 = arith.constant 0 : index
    %c704 = arith.constant 704 : index
    %287 = vector.load %arg11[%c0_241, %c704] : memref<2x1024xf32, #tpu.memory_space<vmem>>, vector<1x64xf32>
    tpu.vector_store %arg11[%c0_241, %c704], %286 {strides = array<i32>} : memref<2x1024xf32, #tpu.memory_space<vmem>>, vector<1x64xf32>,
    %288 = vector.extract_strided_slice %275 {offsets = [6, 0], sizes = [1, 64], strides = [1, 1]} : vector<8x64xf32> to vector<1x64xf32>
    %289 = vector.extract_strided_slice %275 {offsets = [7, 0], sizes = [1, 64], strides = [1, 1]} : vector<8x64xf32> to vector<1x64xf32>
    %290 = arith.maximumf %288, %289 : vector<1x64xf32>
    %c0_242 = arith.constant 0 : index
    %c960 = arith.constant 960 : index
    %291 = vector.load %arg11[%c0_242, %c960] : memref<2x1024xf32, #tpu.memory_space<vmem>>, vector<1x64xf32>
    tpu.vector_store %arg11[%c0_242, %c960], %290 {strides = array<i32>} : memref<2x1024xf32, #tpu.memory_space<vmem>>, vector<1x64xf32>,
    %c1_243 = arith.constant 1 : index
    %c0_244 = arith.constant 0 : index
    %c0_245 = arith.constant 0 : index
    %292 = vector.load %arg10[%c1_243, %c0_244, %c0_245] : memref<2x10x320xf32, #tpu.memory_space<vmem>>, vector<1x8x96xf32>
    %293 = vector.shape_cast %292 : vector<1x8x96xf32> to vector<8x96xf32>
    %c0_246 = arith.constant 0 : index
    %c0_247 = arith.constant 0 : index
    %c0_248 = arith.constant 0 : index
    %294 = vector.load %arg3[%c0_246, %c0_247, %c0_248] : memref<3x96x64xf32, #tpu.memory_space<vmem>>, vector<1x96x64xf32>
    %295 = vector.shape_cast %294 : vector<1x96x64xf32> to vector<96x64xf32>
    %cst_249 = arith.constant dense<0.000000e+00> : vector<8x64xf32>
    %296 = tpu.matmul %293, %295, %cst_249 {dimension_numbers = #tpu.dot_dimension_numbers<[1], [0], [0], [1], [0, 0, 1, 1], [], []>} : vector<8x96xf32>, vector<96x64xf32>, vector<8x64xf32> -> vector<8x64xf32>
    %c1_250 = arith.constant 1 : index
    %c1_251 = arith.constant 1 : index
    %c0_252 = arith.constant 0 : index
    %297 = vector.load %arg10[%c1_250, %c1_251, %c0_252] : memref<2x10x320xf32, #tpu.memory_space<vmem>>, vector<1x8x96xf32>
    %298 = vector.shape_cast %297 : vector<1x8x96xf32> to vector<8x96xf32>
    %c1_253 = arith.constant 1 : index
    %c0_254 = arith.constant 0 : index
    %c0_255 = arith.constant 0 : index
    %299 = vector.load %arg3[%c1_253, %c0_254, %c0_255] : memref<3x96x64xf32, #tpu.memory_space<vmem>>, vector<1x96x64xf32>
    %300 = vector.shape_cast %299 : vector<1x96x64xf32> to vector<96x64xf32>
    %cst_256 = arith.constant dense<0.000000e+00> : vector<8x64xf32>
    %301 = tpu.matmul %298, %300, %cst_256 {dimension_numbers = #tpu.dot_dimension_numbers<[1], [0], [0], [1], [0, 0, 1, 1], [], []>} : vector<8x96xf32>, vector<96x64xf32>, vector<8x64xf32> -> vector<8x64xf32>
    %302 = arith.addf %296, %301 : vector<8x64xf32>
    %c1_257 = arith.constant 1 : index
    %c2_258 = arith.constant 2 : index
    %c0_259 = arith.constant 0 : index
    %303 = vector.load %arg10[%c1_257, %c2_258, %c0_259] : memref<2x10x320xf32, #tpu.memory_space<vmem>>, vector<1x8x96xf32>
    %304 = vector.shape_cast %303 : vector<1x8x96xf32> to vector<8x96xf32>
    %c2_260 = arith.constant 2 : index
    %c0_261 = arith.constant 0 : index
    %c0_262 = arith.constant 0 : index
    %305 = vector.load %arg3[%c2_260, %c0_261, %c0_262] : memref<3x96x64xf32, #tpu.memory_space<vmem>>, vector<1x96x64xf32>
    %306 = vector.shape_cast %305 : vector<1x96x64xf32> to vector<96x64xf32>
    %cst_263 = arith.constant dense<0.000000e+00> : vector<8x64xf32>
    %307 = tpu.matmul %304, %306, %cst_263 {dimension_numbers = #tpu.dot_dimension_numbers<[1], [0], [0], [1], [0, 0, 1, 1], [], []>} : vector<8x96xf32>, vector<96x64xf32>, vector<8x64xf32> -> vector<8x64xf32>
    %308 = arith.addf %302, %307 : vector<8x64xf32>
    %c0_264 = arith.constant 0 : index
    %c0_265 = arith.constant 0 : index
    %309 = vector.load %arg4[%c0_264, %c0_265] : memref<1x64xf32, #tpu.memory_space<vmem>>, vector<1x64xf32>
    %310 = vector.broadcast %309 : vector<1x64xf32> to vector<8x64xf32>
    %311 = arith.addf %308, %310 : vector<8x64xf32>
    %cst_266 = arith.constant 0.000000e+00 : f32
    %312 = vector.broadcast %cst_266 : f32 to vector<8x64xf32>
    %313 = arith.maximumf %311, %312 : vector<8x64xf32>
    %c1_267 = arith.constant 1 : index
    %c0_268 = arith.constant 0 : index
    %c32_269 = arith.constant 32 : index
    %314 = vector.load %arg10[%c1_267, %c0_268, %c32_269] : memref<2x10x320xf32, #tpu.memory_space<vmem>>, vector<1x8x96xf32>
    %315 = vector.shape_cast %314 : vector<1x8x96xf32> to vector<8x96xf32>
    %c0_270 = arith.constant 0 : index
    %c0_271 = arith.constant 0 : index
    %c0_272 = arith.constant 0 : index
    %316 = vector.load %arg3[%c0_270, %c0_271, %c0_272] : memref<3x96x64xf32, #tpu.memory_space<vmem>>, vector<1x96x64xf32>
    %317 = vector.shape_cast %316 : vector<1x96x64xf32> to vector<96x64xf32>
    %cst_273 = arith.constant dense<0.000000e+00> : vector<8x64xf32>
    %318 = tpu.matmul %315, %317, %cst_273 {dimension_numbers = #tpu.dot_dimension_numbers<[1], [0], [0], [1], [0, 0, 1, 1], [], []>} : vector<8x96xf32>, vector<96x64xf32>, vector<8x64xf32> -> vector<8x64xf32>
    %c1_274 = arith.constant 1 : index
    %c1_275 = arith.constant 1 : index
    %c32_276 = arith.constant 32 : index
    %319 = vector.load %arg10[%c1_274, %c1_275, %c32_276] : memref<2x10x320xf32, #tpu.memory_space<vmem>>, vector<1x8x96xf32>
    %320 = vector.shape_cast %319 : vector<1x8x96xf32> to vector<8x96xf32>
    %c1_277 = arith.constant 1 : index
    %c0_278 = arith.constant 0 : index
    %c0_279 = arith.constant 0 : index
    %321 = vector.load %arg3[%c1_277, %c0_278, %c0_279] : memref<3x96x64xf32, #tpu.memory_space<vmem>>, vector<1x96x64xf32>
    %322 = vector.shape_cast %321 : vector<1x96x64xf32> to vector<96x64xf32>
    %cst_280 = arith.constant dense<0.000000e+00> : vector<8x64xf32>
    %323 = tpu.matmul %320, %322, %cst_280 {dimension_numbers = #tpu.dot_dimension_numbers<[1], [0], [0], [1], [0, 0, 1, 1], [], []>} : vector<8x96xf32>, vector<96x64xf32>, vector<8x64xf32> -> vector<8x64xf32>
    %324 = arith.addf %318, %323 : vector<8x64xf32>
    %c1_281 = arith.constant 1 : index
    %c2_282 = arith.constant 2 : index
    %c32_283 = arith.constant 32 : index
    %325 = vector.load %arg10[%c1_281, %c2_282, %c32_283] : memref<2x10x320xf32, #tpu.memory_space<vmem>>, vector<1x8x96xf32>
    %326 = vector.shape_cast %325 : vector<1x8x96xf32> to vector<8x96xf32>
    %c2_284 = arith.constant 2 : index
    %c0_285 = arith.constant 0 : index
    %c0_286 = arith.constant 0 : index
    %327 = vector.load %arg3[%c2_284, %c0_285, %c0_286] : memref<3x96x64xf32, #tpu.memory_space<vmem>>, vector<1x96x64xf32>
    %328 = vector.shape_cast %327 : vector<1x96x64xf32> to vector<96x64xf32>
    %cst_287 = arith.constant dense<0.000000e+00> : vector<8x64xf32>
    %329 = tpu.matmul %326, %328, %cst_287 {dimension_numbers = #tpu.dot_dimension_numbers<[1], [0], [0], [1], [0, 0, 1, 1], [], []>} : vector<8x96xf32>, vector<96x64xf32>, vector<8x64xf32> -> vector<8x64xf32>
    %330 = arith.addf %324, %329 : vector<8x64xf32>
    %c0_288 = arith.constant 0 : index
    %c0_289 = arith.constant 0 : index
    %331 = vector.load %arg4[%c0_288, %c0_289] : memref<1x64xf32, #tpu.memory_space<vmem>>, vector<1x64xf32>
    %332 = vector.broadcast %331 : vector<1x64xf32> to vector<8x64xf32>
    %333 = arith.addf %330, %332 : vector<8x64xf32>
    %cst_290 = arith.constant 0.000000e+00 : f32
    %334 = vector.broadcast %cst_290 : f32 to vector<8x64xf32>
    %335 = arith.maximumf %333, %334 : vector<8x64xf32>
    %336 = arith.maximumf %313, %335 : vector<8x64xf32>
    %337 = vector.extract_strided_slice %336 {offsets = [0, 0], sizes = [1, 64], strides = [1, 1]} : vector<8x64xf32> to vector<1x64xf32>
    %338 = vector.extract_strided_slice %336 {offsets = [1, 0], sizes = [1, 64], strides = [1, 1]} : vector<8x64xf32> to vector<1x64xf32>
    %339 = arith.maximumf %337, %338 : vector<1x64xf32>
    %c1_291 = arith.constant 1 : index
    %c0_292 = arith.constant 0 : index
    %340 = vector.load %arg11[%c1_291, %c0_292] : memref<2x1024xf32, #tpu.memory_space<vmem>>, vector<1x64xf32>
    tpu.vector_store %arg11[%c1_291, %c0_292], %339 {strides = array<i32>} : memref<2x1024xf32, #tpu.memory_space<vmem>>, vector<1x64xf32>,
    %341 = vector.extract_strided_slice %336 {offsets = [2, 0], sizes = [1, 64], strides = [1, 1]} : vector<8x64xf32> to vector<1x64xf32>
    %342 = vector.extract_strided_slice %336 {offsets = [3, 0], sizes = [1, 64], strides = [1, 1]} : vector<8x64xf32> to vector<1x64xf32>
    %343 = arith.maximumf %341, %342 : vector<1x64xf32>
    %c1_293 = arith.constant 1 : index
    %c256_294 = arith.constant 256 : index
    %344 = vector.load %arg11[%c1_293, %c256_294] : memref<2x1024xf32, #tpu.memory_space<vmem>>, vector<1x64xf32>
    tpu.vector_store %arg11[%c1_293, %c256_294], %343 {strides = array<i32>} : memref<2x1024xf32, #tpu.memory_space<vmem>>, vector<1x64xf32>,
    %345 = vector.extract_strided_slice %336 {offsets = [4, 0], sizes = [1, 64], strides = [1, 1]} : vector<8x64xf32> to vector<1x64xf32>
    %346 = vector.extract_strided_slice %336 {offsets = [5, 0], sizes = [1, 64], strides = [1, 1]} : vector<8x64xf32> to vector<1x64xf32>
    %347 = arith.maximumf %345, %346 : vector<1x64xf32>
    %c1_295 = arith.constant 1 : index
    %c512_296 = arith.constant 512 : index
    %348 = vector.load %arg11[%c1_295, %c512_296] : memref<2x1024xf32, #tpu.memory_space<vmem>>, vector<1x64xf32>
    tpu.vector_store %arg11[%c1_295, %c512_296], %347 {strides = array<i32>} : memref<2x1024xf32, #tpu.memory_space<vmem>>, vector<1x64xf32>,
    %349 = vector.extract_strided_slice %336 {offsets = [6, 0], sizes = [1, 64], strides = [1, 1]} : vector<8x64xf32> to vector<1x64xf32>
    %350 = vector.extract_strided_slice %336 {offsets = [7, 0], sizes = [1, 64], strides = [1, 1]} : vector<8x64xf32> to vector<1x64xf32>
    %351 = arith.maximumf %349, %350 : vector<1x64xf32>
    %c1_297 = arith.constant 1 : index
    %c768_298 = arith.constant 768 : index
    %352 = vector.load %arg11[%c1_297, %c768_298] : memref<2x1024xf32, #tpu.memory_space<vmem>>, vector<1x64xf32>
    tpu.vector_store %arg11[%c1_297, %c768_298], %351 {strides = array<i32>} : memref<2x1024xf32, #tpu.memory_space<vmem>>, vector<1x64xf32>,
    %c1_299 = arith.constant 1 : index
    %c0_300 = arith.constant 0 : index
    %c64_301 = arith.constant 64 : index
    %353 = vector.load %arg10[%c1_299, %c0_300, %c64_301] : memref<2x10x320xf32, #tpu.memory_space<vmem>>, vector<1x8x96xf32>
    %354 = vector.shape_cast %353 : vector<1x8x96xf32> to vector<8x96xf32>
    %c0_302 = arith.constant 0 : index
    %c0_303 = arith.constant 0 : index
    %c0_304 = arith.constant 0 : index
    %355 = vector.load %arg3[%c0_302, %c0_303, %c0_304] : memref<3x96x64xf32, #tpu.memory_space<vmem>>, vector<1x96x64xf32>
    %356 = vector.shape_cast %355 : vector<1x96x64xf32> to vector<96x64xf32>
    %cst_305 = arith.constant dense<0.000000e+00> : vector<8x64xf32>
    %357 = tpu.matmul %354, %356, %cst_305 {dimension_numbers = #tpu.dot_dimension_numbers<[1], [0], [0], [1], [0, 0, 1, 1], [], []>} : vector<8x96xf32>, vector<96x64xf32>, vector<8x64xf32> -> vector<8x64xf32>
    %c1_306 = arith.constant 1 : index
    %c1_307 = arith.constant 1 : index
    %c64_308 = arith.constant 64 : index
    %358 = vector.load %arg10[%c1_306, %c1_307, %c64_308] : memref<2x10x320xf32, #tpu.memory_space<vmem>>, vector<1x8x96xf32>
    %359 = vector.shape_cast %358 : vector<1x8x96xf32> to vector<8x96xf32>
    %c1_309 = arith.constant 1 : index
    %c0_310 = arith.constant 0 : index
    %c0_311 = arith.constant 0 : index
    %360 = vector.load %arg3[%c1_309, %c0_310, %c0_311] : memref<3x96x64xf32, #tpu.memory_space<vmem>>, vector<1x96x64xf32>
    %361 = vector.shape_cast %360 : vector<1x96x64xf32> to vector<96x64xf32>
    %cst_312 = arith.constant dense<0.000000e+00> : vector<8x64xf32>
    %362 = tpu.matmul %359, %361, %cst_312 {dimension_numbers = #tpu.dot_dimension_numbers<[1], [0], [0], [1], [0, 0, 1, 1], [], []>} : vector<8x96xf32>, vector<96x64xf32>, vector<8x64xf32> -> vector<8x64xf32>
    %363 = arith.addf %357, %362 : vector<8x64xf32>
    %c1_313 = arith.constant 1 : index
    %c2_314 = arith.constant 2 : index
    %c64_315 = arith.constant 64 : index
    %364 = vector.load %arg10[%c1_313, %c2_314, %c64_315] : memref<2x10x320xf32, #tpu.memory_space<vmem>>, vector<1x8x96xf32>
    %365 = vector.shape_cast %364 : vector<1x8x96xf32> to vector<8x96xf32>
    %c2_316 = arith.constant 2 : index
    %c0_317 = arith.constant 0 : index
    %c0_318 = arith.constant 0 : index
    %366 = vector.load %arg3[%c2_316, %c0_317, %c0_318] : memref<3x96x64xf32, #tpu.memory_space<vmem>>, vector<1x96x64xf32>
    %367 = vector.shape_cast %366 : vector<1x96x64xf32> to vector<96x64xf32>
    %cst_319 = arith.constant dense<0.000000e+00> : vector<8x64xf32>
    %368 = tpu.matmul %365, %367, %cst_319 {dimension_numbers = #tpu.dot_dimension_numbers<[1], [0], [0], [1], [0, 0, 1, 1], [], []>} : vector<8x96xf32>, vector<96x64xf32>, vector<8x64xf32> -> vector<8x64xf32>
    %369 = arith.addf %363, %368 : vector<8x64xf32>
    %c0_320 = arith.constant 0 : index
    %c0_321 = arith.constant 0 : index
    %370 = vector.load %arg4[%c0_320, %c0_321] : memref<1x64xf32, #tpu.memory_space<vmem>>, vector<1x64xf32>
    %371 = vector.broadcast %370 : vector<1x64xf32> to vector<8x64xf32>
    %372 = arith.addf %369, %371 : vector<8x64xf32>
    %cst_322 = arith.constant 0.000000e+00 : f32
    %373 = vector.broadcast %cst_322 : f32 to vector<8x64xf32>
    %374 = arith.maximumf %372, %373 : vector<8x64xf32>
    %c1_323 = arith.constant 1 : index
    %c0_324 = arith.constant 0 : index
    %c96_325 = arith.constant 96 : index
    %375 = vector.load %arg10[%c1_323, %c0_324, %c96_325] : memref<2x10x320xf32, #tpu.memory_space<vmem>>, vector<1x8x96xf32>
    %376 = vector.shape_cast %375 : vector<1x8x96xf32> to vector<8x96xf32>
    %c0_326 = arith.constant 0 : index
    %c0_327 = arith.constant 0 : index
    %c0_328 = arith.constant 0 : index
    %377 = vector.load %arg3[%c0_326, %c0_327, %c0_328] : memref<3x96x64xf32, #tpu.memory_space<vmem>>, vector<1x96x64xf32>
    %378 = vector.shape_cast %377 : vector<1x96x64xf32> to vector<96x64xf32>
    %cst_329 = arith.constant dense<0.000000e+00> : vector<8x64xf32>
    %379 = tpu.matmul %376, %378, %cst_329 {dimension_numbers = #tpu.dot_dimension_numbers<[1], [0], [0], [1], [0, 0, 1, 1], [], []>} : vector<8x96xf32>, vector<96x64xf32>, vector<8x64xf32> -> vector<8x64xf32>
    %c1_330 = arith.constant 1 : index
    %c1_331 = arith.constant 1 : index
    %c96_332 = arith.constant 96 : index
    %380 = vector.load %arg10[%c1_330, %c1_331, %c96_332] : memref<2x10x320xf32, #tpu.memory_space<vmem>>, vector<1x8x96xf32>
    %381 = vector.shape_cast %380 : vector<1x8x96xf32> to vector<8x96xf32>
    %c1_333 = arith.constant 1 : index
    %c0_334 = arith.constant 0 : index
    %c0_335 = arith.constant 0 : index
    %382 = vector.load %arg3[%c1_333, %c0_334, %c0_335] : memref<3x96x64xf32, #tpu.memory_space<vmem>>, vector<1x96x64xf32>
    %383 = vector.shape_cast %382 : vector<1x96x64xf32> to vector<96x64xf32>
    %cst_336 = arith.constant dense<0.000000e+00> : vector<8x64xf32>
    %384 = tpu.matmul %381, %383, %cst_336 {dimension_numbers = #tpu.dot_dimension_numbers<[1], [0], [0], [1], [0, 0, 1, 1], [], []>} : vector<8x96xf32>, vector<96x64xf32>, vector<8x64xf32> -> vector<8x64xf32>
    %385 = arith.addf %379, %384 : vector<8x64xf32>
    %c1_337 = arith.constant 1 : index
    %c2_338 = arith.constant 2 : index
    %c96_339 = arith.constant 96 : index
    %386 = vector.load %arg10[%c1_337, %c2_338, %c96_339] : memref<2x10x320xf32, #tpu.memory_space<vmem>>, vector<1x8x96xf32>
    %387 = vector.shape_cast %386 : vector<1x8x96xf32> to vector<8x96xf32>
    %c2_340 = arith.constant 2 : index
    %c0_341 = arith.constant 0 : index
    %c0_342 = arith.constant 0 : index
    %388 = vector.load %arg3[%c2_340, %c0_341, %c0_342] : memref<3x96x64xf32, #tpu.memory_space<vmem>>, vector<1x96x64xf32>
    %389 = vector.shape_cast %388 : vector<1x96x64xf32> to vector<96x64xf32>
    %cst_343 = arith.constant dense<0.000000e+00> : vector<8x64xf32>
    %390 = tpu.matmul %387, %389, %cst_343 {dimension_numbers = #tpu.dot_dimension_numbers<[1], [0], [0], [1], [0, 0, 1, 1], [], []>} : vector<8x96xf32>, vector<96x64xf32>, vector<8x64xf32> -> vector<8x64xf32>
    %391 = arith.addf %385, %390 : vector<8x64xf32>
    %c0_344 = arith.constant 0 : index
    %c0_345 = arith.constant 0 : index
    %392 = vector.load %arg4[%c0_344, %c0_345] : memref<1x64xf32, #tpu.memory_space<vmem>>, vector<1x64xf32>
    %393 = vector.broadcast %392 : vector<1x64xf32> to vector<8x64xf32>
    %394 = arith.addf %391, %393 : vector<8x64xf32>
    %cst_346 = arith.constant 0.000000e+00 : f32
    %395 = vector.broadcast %cst_346 : f32 to vector<8x64xf32>
    %396 = arith.maximumf %394, %395 : vector<8x64xf32>
    %397 = arith.maximumf %374, %396 : vector<8x64xf32>
    %398 = vector.extract_strided_slice %397 {offsets = [0, 0], sizes = [1, 64], strides = [1, 1]} : vector<8x64xf32> to vector<1x64xf32>
    %399 = vector.extract_strided_slice %397 {offsets = [1, 0], sizes = [1, 64], strides = [1, 1]} : vector<8x64xf32> to vector<1x64xf32>
    %400 = arith.maximumf %398, %399 : vector<1x64xf32>
    %c1_347 = arith.constant 1 : index
    %c64_348 = arith.constant 64 : index
    %401 = vector.load %arg11[%c1_347, %c64_348] : memref<2x1024xf32, #tpu.memory_space<vmem>>, vector<1x64xf32>
    tpu.vector_store %arg11[%c1_347, %c64_348], %400 {strides = array<i32>} : memref<2x1024xf32, #tpu.memory_space<vmem>>, vector<1x64xf32>,
    %402 = vector.extract_strided_slice %397 {offsets = [2, 0], sizes = [1, 64], strides = [1, 1]} : vector<8x64xf32> to vector<1x64xf32>
    %403 = vector.extract_strided_slice %397 {offsets = [3, 0], sizes = [1, 64], strides = [1, 1]} : vector<8x64xf32> to vector<1x64xf32>
    %404 = arith.maximumf %402, %403 : vector<1x64xf32>
    %c1_349 = arith.constant 1 : index
    %c320_350 = arith.constant 320 : index
    %405 = vector.load %arg11[%c1_349, %c320_350] : memref<2x1024xf32, #tpu.memory_space<vmem>>, vector<1x64xf32>
    tpu.vector_store %arg11[%c1_349, %c320_350], %404 {strides = array<i32>} : memref<2x1024xf32, #tpu.memory_space<vmem>>, vector<1x64xf32>,
    %406 = vector.extract_strided_slice %397 {offsets = [4, 0], sizes = [1, 64], strides = [1, 1]} : vector<8x64xf32> to vector<1x64xf32>
    %407 = vector.extract_strided_slice %397 {offsets = [5, 0], sizes = [1, 64], strides = [1, 1]} : vector<8x64xf32> to vector<1x64xf32>
    %408 = arith.maximumf %406, %407 : vector<1x64xf32>
    %c1_351 = arith.constant 1 : index
    %c576_352 = arith.constant 576 : index
    %409 = vector.load %arg11[%c1_351, %c576_352] : memref<2x1024xf32, #tpu.memory_space<vmem>>, vector<1x64xf32>
    tpu.vector_store %arg11[%c1_351, %c576_352], %408 {strides = array<i32>} : memref<2x1024xf32, #tpu.memory_space<vmem>>, vector<1x64xf32>,
    %410 = vector.extract_strided_slice %397 {offsets = [6, 0], sizes = [1, 64], strides = [1, 1]} : vector<8x64xf32> to vector<1x64xf32>
    %411 = vector.extract_strided_slice %397 {offsets = [7, 0], sizes = [1, 64], strides = [1, 1]} : vector<8x64xf32> to vector<1x64xf32>
    %412 = arith.maximumf %410, %411 : vector<1x64xf32>
    %c1_353 = arith.constant 1 : index
    %c832_354 = arith.constant 832 : index
    %413 = vector.load %arg11[%c1_353, %c832_354] : memref<2x1024xf32, #tpu.memory_space<vmem>>, vector<1x64xf32>
    tpu.vector_store %arg11[%c1_353, %c832_354], %412 {strides = array<i32>} : memref<2x1024xf32, #tpu.memory_space<vmem>>, vector<1x64xf32>,
    %c1_355 = arith.constant 1 : index
    %c0_356 = arith.constant 0 : index
    %c128_357 = arith.constant 128 : index
    %414 = vector.load %arg10[%c1_355, %c0_356, %c128_357] : memref<2x10x320xf32, #tpu.memory_space<vmem>>, vector<1x8x96xf32>
    %415 = vector.shape_cast %414 : vector<1x8x96xf32> to vector<8x96xf32>
    %c0_358 = arith.constant 0 : index
    %c0_359 = arith.constant 0 : index
    %c0_360 = arith.constant 0 : index
    %416 = vector.load %arg3[%c0_358, %c0_359, %c0_360] : memref<3x96x64xf32, #tpu.memory_space<vmem>>, vector<1x96x64xf32>
    %417 = vector.shape_cast %416 : vector<1x96x64xf32> to vector<96x64xf32>
    %cst_361 = arith.constant dense<0.000000e+00> : vector<8x64xf32>
    %418 = tpu.matmul %415, %417, %cst_361 {dimension_numbers = #tpu.dot_dimension_numbers<[1], [0], [0], [1], [0, 0, 1, 1], [], []>} : vector<8x96xf32>, vector<96x64xf32>, vector<8x64xf32> -> vector<8x64xf32>
    %c1_362 = arith.constant 1 : index
    %c1_363 = arith.constant 1 : index
    %c128_364 = arith.constant 128 : index
    %419 = vector.load %arg10[%c1_362, %c1_363, %c128_364] : memref<2x10x320xf32, #tpu.memory_space<vmem>>, vector<1x8x96xf32>
    %420 = vector.shape_cast %419 : vector<1x8x96xf32> to vector<8x96xf32>
    %c1_365 = arith.constant 1 : index
    %c0_366 = arith.constant 0 : index
    %c0_367 = arith.constant 0 : index
    %421 = vector.load %arg3[%c1_365, %c0_366, %c0_367] : memref<3x96x64xf32, #tpu.memory_space<vmem>>, vector<1x96x64xf32>
    %422 = vector.shape_cast %421 : vector<1x96x64xf32> to vector<96x64xf32>
    %cst_368 = arith.constant dense<0.000000e+00> : vector<8x64xf32>
    %423 = tpu.matmul %420, %422, %cst_368 {dimension_numbers = #tpu.dot_dimension_numbers<[1], [0], [0], [1], [0, 0, 1, 1], [], []>} : vector<8x96xf32>, vector<96x64xf32>, vector<8x64xf32> -> vector<8x64xf32>
    %424 = arith.addf %418, %423 : vector<8x64xf32>
    %c1_369 = arith.constant 1 : index
    %c2_370 = arith.constant 2 : index
    %c128_371 = arith.constant 128 : index
    %425 = vector.load %arg10[%c1_369, %c2_370, %c128_371] : memref<2x10x320xf32, #tpu.memory_space<vmem>>, vector<1x8x96xf32>
    %426 = vector.shape_cast %425 : vector<1x8x96xf32> to vector<8x96xf32>
    %c2_372 = arith.constant 2 : index
    %c0_373 = arith.constant 0 : index
    %c0_374 = arith.constant 0 : index
    %427 = vector.load %arg3[%c2_372, %c0_373, %c0_374] : memref<3x96x64xf32, #tpu.memory_space<vmem>>, vector<1x96x64xf32>
    %428 = vector.shape_cast %427 : vector<1x96x64xf32> to vector<96x64xf32>
    %cst_375 = arith.constant dense<0.000000e+00> : vector<8x64xf32>
    %429 = tpu.matmul %426, %428, %cst_375 {dimension_numbers = #tpu.dot_dimension_numbers<[1], [0], [0], [1], [0, 0, 1, 1], [], []>} : vector<8x96xf32>, vector<96x64xf32>, vector<8x64xf32> -> vector<8x64xf32>
    %430 = arith.addf %424, %429 : vector<8x64xf32>
    %c0_376 = arith.constant 0 : index
    %c0_377 = arith.constant 0 : index
    %431 = vector.load %arg4[%c0_376, %c0_377] : memref<1x64xf32, #tpu.memory_space<vmem>>, vector<1x64xf32>
    %432 = vector.broadcast %431 : vector<1x64xf32> to vector<8x64xf32>
    %433 = arith.addf %430, %432 : vector<8x64xf32>
    %cst_378 = arith.constant 0.000000e+00 : f32
    %434 = vector.broadcast %cst_378 : f32 to vector<8x64xf32>
    %435 = arith.maximumf %433, %434 : vector<8x64xf32>
    %c1_379 = arith.constant 1 : index
    %c0_380 = arith.constant 0 : index
    %c160_381 = arith.constant 160 : index
    %436 = vector.load %arg10[%c1_379, %c0_380, %c160_381] : memref<2x10x320xf32, #tpu.memory_space<vmem>>, vector<1x8x96xf32>
    %437 = vector.shape_cast %436 : vector<1x8x96xf32> to vector<8x96xf32>
    %c0_382 = arith.constant 0 : index
    %c0_383 = arith.constant 0 : index
    %c0_384 = arith.constant 0 : index
    %438 = vector.load %arg3[%c0_382, %c0_383, %c0_384] : memref<3x96x64xf32, #tpu.memory_space<vmem>>, vector<1x96x64xf32>
    %439 = vector.shape_cast %438 : vector<1x96x64xf32> to vector<96x64xf32>
    %cst_385 = arith.constant dense<0.000000e+00> : vector<8x64xf32>
    %440 = tpu.matmul %437, %439, %cst_385 {dimension_numbers = #tpu.dot_dimension_numbers<[1], [0], [0], [1], [0, 0, 1, 1], [], []>} : vector<8x96xf32>, vector<96x64xf32>, vector<8x64xf32> -> vector<8x64xf32>
    %c1_386 = arith.constant 1 : index
    %c1_387 = arith.constant 1 : index
    %c160_388 = arith.constant 160 : index
    %441 = vector.load %arg10[%c1_386, %c1_387, %c160_388] : memref<2x10x320xf32, #tpu.memory_space<vmem>>, vector<1x8x96xf32>
    %442 = vector.shape_cast %441 : vector<1x8x96xf32> to vector<8x96xf32>
    %c1_389 = arith.constant 1 : index
    %c0_390 = arith.constant 0 : index
    %c0_391 = arith.constant 0 : index
    %443 = vector.load %arg3[%c1_389, %c0_390, %c0_391] : memref<3x96x64xf32, #tpu.memory_space<vmem>>, vector<1x96x64xf32>
    %444 = vector.shape_cast %443 : vector<1x96x64xf32> to vector<96x64xf32>
    %cst_392 = arith.constant dense<0.000000e+00> : vector<8x64xf32>
    %445 = tpu.matmul %442, %444, %cst_392 {dimension_numbers = #tpu.dot_dimension_numbers<[1], [0], [0], [1], [0, 0, 1, 1], [], []>} : vector<8x96xf32>, vector<96x64xf32>, vector<8x64xf32> -> vector<8x64xf32>
    %446 = arith.addf %440, %445 : vector<8x64xf32>
    %c1_393 = arith.constant 1 : index
    %c2_394 = arith.constant 2 : index
    %c160_395 = arith.constant 160 : index
    %447 = vector.load %arg10[%c1_393, %c2_394, %c160_395] : memref<2x10x320xf32, #tpu.memory_space<vmem>>, vector<1x8x96xf32>
    %448 = vector.shape_cast %447 : vector<1x8x96xf32> to vector<8x96xf32>
    %c2_396 = arith.constant 2 : index
    %c0_397 = arith.constant 0 : index
    %c0_398 = arith.constant 0 : index
    %449 = vector.load %arg3[%c2_396, %c0_397, %c0_398] : memref<3x96x64xf32, #tpu.memory_space<vmem>>, vector<1x96x64xf32>
    %450 = vector.shape_cast %449 : vector<1x96x64xf32> to vector<96x64xf32>
    %cst_399 = arith.constant dense<0.000000e+00> : vector<8x64xf32>
    %451 = tpu.matmul %448, %450, %cst_399 {dimension_numbers = #tpu.dot_dimension_numbers<[1], [0], [0], [1], [0, 0, 1, 1], [], []>} : vector<8x96xf32>, vector<96x64xf32>, vector<8x64xf32> -> vector<8x64xf32>
    %452 = arith.addf %446, %451 : vector<8x64xf32>
    %c0_400 = arith.constant 0 : index
    %c0_401 = arith.constant 0 : index
    %453 = vector.load %arg4[%c0_400, %c0_401] : memref<1x64xf32, #tpu.memory_space<vmem>>, vector<1x64xf32>
    %454 = vector.broadcast %453 : vector<1x64xf32> to vector<8x64xf32>
    %455 = arith.addf %452, %454 : vector<8x64xf32>
    %cst_402 = arith.constant 0.000000e+00 : f32
    %456 = vector.broadcast %cst_402 : f32 to vector<8x64xf32>
    %457 = arith.maximumf %455, %456 : vector<8x64xf32>
    %458 = arith.maximumf %435, %457 : vector<8x64xf32>
    %459 = vector.extract_strided_slice %458 {offsets = [0, 0], sizes = [1, 64], strides = [1, 1]} : vector<8x64xf32> to vector<1x64xf32>
    %460 = vector.extract_strided_slice %458 {offsets = [1, 0], sizes = [1, 64], strides = [1, 1]} : vector<8x64xf32> to vector<1x64xf32>
    %461 = arith.maximumf %459, %460 : vector<1x64xf32>
    %c1_403 = arith.constant 1 : index
    %c128_404 = arith.constant 128 : index
    %462 = vector.load %arg11[%c1_403, %c128_404] : memref<2x1024xf32, #tpu.memory_space<vmem>>, vector<1x64xf32>
    tpu.vector_store %arg11[%c1_403, %c128_404], %461 {strides = array<i32>} : memref<2x1024xf32, #tpu.memory_space<vmem>>, vector<1x64xf32>,
    %463 = vector.extract_strided_slice %458 {offsets = [2, 0], sizes = [1, 64], strides = [1, 1]} : vector<8x64xf32> to vector<1x64xf32>
    %464 = vector.extract_strided_slice %458 {offsets = [3, 0], sizes = [1, 64], strides = [1, 1]} : vector<8x64xf32> to vector<1x64xf32>
    %465 = arith.maximumf %463, %464 : vector<1x64xf32>
    %c1_405 = arith.constant 1 : index
    %c384_406 = arith.constant 384 : index
    %466 = vector.load %arg11[%c1_405, %c384_406] : memref<2x1024xf32, #tpu.memory_space<vmem>>, vector<1x64xf32>
    tpu.vector_store %arg11[%c1_405, %c384_406], %465 {strides = array<i32>} : memref<2x1024xf32, #tpu.memory_space<vmem>>, vector<1x64xf32>,
    %467 = vector.extract_strided_slice %458 {offsets = [4, 0], sizes = [1, 64], strides = [1, 1]} : vector<8x64xf32> to vector<1x64xf32>
    %468 = vector.extract_strided_slice %458 {offsets = [5, 0], sizes = [1, 64], strides = [1, 1]} : vector<8x64xf32> to vector<1x64xf32>
    %469 = arith.maximumf %467, %468 : vector<1x64xf32>
    %c1_407 = arith.constant 1 : index
    %c640_408 = arith.constant 640 : index
    %470 = vector.load %arg11[%c1_407, %c640_408] : memref<2x1024xf32, #tpu.memory_space<vmem>>, vector<1x64xf32>
    tpu.vector_store %arg11[%c1_407, %c640_408], %469 {strides = array<i32>} : memref<2x1024xf32, #tpu.memory_space<vmem>>, vector<1x64xf32>,
    %471 = vector.extract_strided_slice %458 {offsets = [6, 0], sizes = [1, 64], strides = [1, 1]} : vector<8x64xf32> to vector<1x64xf32>
    %472 = vector.extract_strided_slice %458 {offsets = [7, 0], sizes = [1, 64], strides = [1, 1]} : vector<8x64xf32> to vector<1x64xf32>
    %473 = arith.maximumf %471, %472 : vector<1x64xf32>
    %c1_409 = arith.constant 1 : index
    %c896_410 = arith.constant 896 : index
    %474 = vector.load %arg11[%c1_409, %c896_410] : memref<2x1024xf32, #tpu.memory_space<vmem>>, vector<1x64xf32>
    tpu.vector_store %arg11[%c1_409, %c896_410], %473 {strides = array<i32>} : memref<2x1024xf32, #tpu.memory_space<vmem>>, vector<1x64xf32>,
    %c1_411 = arith.constant 1 : index
    %c0_412 = arith.constant 0 : index
    %c192_413 = arith.constant 192 : index
    %475 = vector.load %arg10[%c1_411, %c0_412, %c192_413] : memref<2x10x320xf32, #tpu.memory_space<vmem>>, vector<1x8x96xf32>
    %476 = vector.shape_cast %475 : vector<1x8x96xf32> to vector<8x96xf32>
    %c0_414 = arith.constant 0 : index
    %c0_415 = arith.constant 0 : index
    %c0_416 = arith.constant 0 : index
    %477 = vector.load %arg3[%c0_414, %c0_415, %c0_416] : memref<3x96x64xf32, #tpu.memory_space<vmem>>, vector<1x96x64xf32>
    %478 = vector.shape_cast %477 : vector<1x96x64xf32> to vector<96x64xf32>
    %cst_417 = arith.constant dense<0.000000e+00> : vector<8x64xf32>
    %479 = tpu.matmul %476, %478, %cst_417 {dimension_numbers = #tpu.dot_dimension_numbers<[1], [0], [0], [1], [0, 0, 1, 1], [], []>} : vector<8x96xf32>, vector<96x64xf32>, vector<8x64xf32> -> vector<8x64xf32>
    %c1_418 = arith.constant 1 : index
    %c1_419 = arith.constant 1 : index
    %c192_420 = arith.constant 192 : index
    %480 = vector.load %arg10[%c1_418, %c1_419, %c192_420] : memref<2x10x320xf32, #tpu.memory_space<vmem>>, vector<1x8x96xf32>
    %481 = vector.shape_cast %480 : vector<1x8x96xf32> to vector<8x96xf32>
    %c1_421 = arith.constant 1 : index
    %c0_422 = arith.constant 0 : index
    %c0_423 = arith.constant 0 : index
    %482 = vector.load %arg3[%c1_421, %c0_422, %c0_423] : memref<3x96x64xf32, #tpu.memory_space<vmem>>, vector<1x96x64xf32>
    %483 = vector.shape_cast %482 : vector<1x96x64xf32> to vector<96x64xf32>
    %cst_424 = arith.constant dense<0.000000e+00> : vector<8x64xf32>
    %484 = tpu.matmul %481, %483, %cst_424 {dimension_numbers = #tpu.dot_dimension_numbers<[1], [0], [0], [1], [0, 0, 1, 1], [], []>} : vector<8x96xf32>, vector<96x64xf32>, vector<8x64xf32> -> vector<8x64xf32>
    %485 = arith.addf %479, %484 : vector<8x64xf32>
    %c1_425 = arith.constant 1 : index
    %c2_426 = arith.constant 2 : index
    %c192_427 = arith.constant 192 : index
    %486 = vector.load %arg10[%c1_425, %c2_426, %c192_427] : memref<2x10x320xf32, #tpu.memory_space<vmem>>, vector<1x8x96xf32>
    %487 = vector.shape_cast %486 : vector<1x8x96xf32> to vector<8x96xf32>
    %c2_428 = arith.constant 2 : index
    %c0_429 = arith.constant 0 : index
    %c0_430 = arith.constant 0 : index
    %488 = vector.load %arg3[%c2_428, %c0_429, %c0_430] : memref<3x96x64xf32, #tpu.memory_space<vmem>>, vector<1x96x64xf32>
    %489 = vector.shape_cast %488 : vector<1x96x64xf32> to vector<96x64xf32>
    %cst_431 = arith.constant dense<0.000000e+00> : vector<8x64xf32>
    %490 = tpu.matmul %487, %489, %cst_431 {dimension_numbers = #tpu.dot_dimension_numbers<[1], [0], [0], [1], [0, 0, 1, 1], [], []>} : vector<8x96xf32>, vector<96x64xf32>, vector<8x64xf32> -> vector<8x64xf32>
    %491 = arith.addf %485, %490 : vector<8x64xf32>
    %c0_432 = arith.constant 0 : index
    %c0_433 = arith.constant 0 : index
    %492 = vector.load %arg4[%c0_432, %c0_433] : memref<1x64xf32, #tpu.memory_space<vmem>>, vector<1x64xf32>
    %493 = vector.broadcast %492 : vector<1x64xf32> to vector<8x64xf32>
    %494 = arith.addf %491, %493 : vector<8x64xf32>
    %cst_434 = arith.constant 0.000000e+00 : f32
    %495 = vector.broadcast %cst_434 : f32 to vector<8x64xf32>
    %496 = arith.maximumf %494, %495 : vector<8x64xf32>
    %c1_435 = arith.constant 1 : index
    %c0_436 = arith.constant 0 : index
    %c224_437 = arith.constant 224 : index
    %497 = vector.load %arg10[%c1_435, %c0_436, %c224_437] : memref<2x10x320xf32, #tpu.memory_space<vmem>>, vector<1x8x96xf32>
    %498 = vector.shape_cast %497 : vector<1x8x96xf32> to vector<8x96xf32>
    %c0_438 = arith.constant 0 : index
    %c0_439 = arith.constant 0 : index
    %c0_440 = arith.constant 0 : index
    %499 = vector.load %arg3[%c0_438, %c0_439, %c0_440] : memref<3x96x64xf32, #tpu.memory_space<vmem>>, vector<1x96x64xf32>
    %500 = vector.shape_cast %499 : vector<1x96x64xf32> to vector<96x64xf32>
    %cst_441 = arith.constant dense<0.000000e+00> : vector<8x64xf32>
    %501 = tpu.matmul %498, %500, %cst_441 {dimension_numbers = #tpu.dot_dimension_numbers<[1], [0], [0], [1], [0, 0, 1, 1], [], []>} : vector<8x96xf32>, vector<96x64xf32>, vector<8x64xf32> -> vector<8x64xf32>
    %c1_442 = arith.constant 1 : index
    %c1_443 = arith.constant 1 : index
    %c224_444 = arith.constant 224 : index
    %502 = vector.load %arg10[%c1_442, %c1_443, %c224_444] : memref<2x10x320xf32, #tpu.memory_space<vmem>>, vector<1x8x96xf32>
    %503 = vector.shape_cast %502 : vector<1x8x96xf32> to vector<8x96xf32>
    %c1_445 = arith.constant 1 : index
    %c0_446 = arith.constant 0 : index
    %c0_447 = arith.constant 0 : index
    %504 = vector.load %arg3[%c1_445, %c0_446, %c0_447] : memref<3x96x64xf32, #tpu.memory_space<vmem>>, vector<1x96x64xf32>
    %505 = vector.shape_cast %504 : vector<1x96x64xf32> to vector<96x64xf32>
    %cst_448 = arith.constant dense<0.000000e+00> : vector<8x64xf32>
    %506 = tpu.matmul %503, %505, %cst_448 {dimension_numbers = #tpu.dot_dimension_numbers<[1], [0], [0], [1], [0, 0, 1, 1], [], []>} : vector<8x96xf32>, vector<96x64xf32>, vector<8x64xf32> -> vector<8x64xf32>
    %507 = arith.addf %501, %506 : vector<8x64xf32>
    %c1_449 = arith.constant 1 : index
    %c2_450 = arith.constant 2 : index
    %c224_451 = arith.constant 224 : index
    %508 = vector.load %arg10[%c1_449, %c2_450, %c224_451] : memref<2x10x320xf32, #tpu.memory_space<vmem>>, vector<1x8x96xf32>
    %509 = vector.shape_cast %508 : vector<1x8x96xf32> to vector<8x96xf32>
    %c2_452 = arith.constant 2 : index
    %c0_453 = arith.constant 0 : index
    %c0_454 = arith.constant 0 : index
    %510 = vector.load %arg3[%c2_452, %c0_453, %c0_454] : memref<3x96x64xf32, #tpu.memory_space<vmem>>, vector<1x96x64xf32>
    %511 = vector.shape_cast %510 : vector<1x96x64xf32> to vector<96x64xf32>
    %cst_455 = arith.constant dense<0.000000e+00> : vector<8x64xf32>
    %512 = tpu.matmul %509, %511, %cst_455 {dimension_numbers = #tpu.dot_dimension_numbers<[1], [0], [0], [1], [0, 0, 1, 1], [], []>} : vector<8x96xf32>, vector<96x64xf32>, vector<8x64xf32> -> vector<8x64xf32>
    %513 = arith.addf %507, %512 : vector<8x64xf32>
    %c0_456 = arith.constant 0 : index
    %c0_457 = arith.constant 0 : index
    %514 = vector.load %arg4[%c0_456, %c0_457] : memref<1x64xf32, #tpu.memory_space<vmem>>, vector<1x64xf32>
    %515 = vector.broadcast %514 : vector<1x64xf32> to vector<8x64xf32>
    %516 = arith.addf %513, %515 : vector<8x64xf32>
    %cst_458 = arith.constant 0.000000e+00 : f32
    %517 = vector.broadcast %cst_458 : f32 to vector<8x64xf32>
    %518 = arith.maximumf %516, %517 : vector<8x64xf32>
    %519 = arith.maximumf %496, %518 : vector<8x64xf32>
    %520 = vector.extract_strided_slice %519 {offsets = [0, 0], sizes = [1, 64], strides = [1, 1]} : vector<8x64xf32> to vector<1x64xf32>
    %521 = vector.extract_strided_slice %519 {offsets = [1, 0], sizes = [1, 64], strides = [1, 1]} : vector<8x64xf32> to vector<1x64xf32>
    %522 = arith.maximumf %520, %521 : vector<1x64xf32>
    %c1_459 = arith.constant 1 : index
    %c192_460 = arith.constant 192 : index
    %523 = vector.load %arg11[%c1_459, %c192_460] : memref<2x1024xf32, #tpu.memory_space<vmem>>, vector<1x64xf32>
    tpu.vector_store %arg11[%c1_459, %c192_460], %522 {strides = array<i32>} : memref<2x1024xf32, #tpu.memory_space<vmem>>, vector<1x64xf32>,
    %524 = vector.extract_strided_slice %519 {offsets = [2, 0], sizes = [1, 64], strides = [1, 1]} : vector<8x64xf32> to vector<1x64xf32>
    %525 = vector.extract_strided_slice %519 {offsets = [3, 0], sizes = [1, 64], strides = [1, 1]} : vector<8x64xf32> to vector<1x64xf32>
    %526 = arith.maximumf %524, %525 : vector<1x64xf32>
    %c1_461 = arith.constant 1 : index
    %c448_462 = arith.constant 448 : index
    %527 = vector.load %arg11[%c1_461, %c448_462] : memref<2x1024xf32, #tpu.memory_space<vmem>>, vector<1x64xf32>
    tpu.vector_store %arg11[%c1_461, %c448_462], %526 {strides = array<i32>} : memref<2x1024xf32, #tpu.memory_space<vmem>>, vector<1x64xf32>,
    %528 = vector.extract_strided_slice %519 {offsets = [4, 0], sizes = [1, 64], strides = [1, 1]} : vector<8x64xf32> to vector<1x64xf32>
    %529 = vector.extract_strided_slice %519 {offsets = [5, 0], sizes = [1, 64], strides = [1, 1]} : vector<8x64xf32> to vector<1x64xf32>
    %530 = arith.maximumf %528, %529 : vector<1x64xf32>
    %c1_463 = arith.constant 1 : index
    %c704_464 = arith.constant 704 : index
    %531 = vector.load %arg11[%c1_463, %c704_464] : memref<2x1024xf32, #tpu.memory_space<vmem>>, vector<1x64xf32>
    tpu.vector_store %arg11[%c1_463, %c704_464], %530 {strides = array<i32>} : memref<2x1024xf32, #tpu.memory_space<vmem>>, vector<1x64xf32>,
    %532 = vector.extract_strided_slice %519 {offsets = [6, 0], sizes = [1, 64], strides = [1, 1]} : vector<8x64xf32> to vector<1x64xf32>
    %533 = vector.extract_strided_slice %519 {offsets = [7, 0], sizes = [1, 64], strides = [1, 1]} : vector<8x64xf32> to vector<1x64xf32>
    %534 = arith.maximumf %532, %533 : vector<1x64xf32>
    %c1_465 = arith.constant 1 : index
    %c960_466 = arith.constant 960 : index
    %535 = vector.load %arg11[%c1_465, %c960_466] : memref<2x1024xf32, #tpu.memory_space<vmem>>, vector<1x64xf32>
    tpu.vector_store %arg11[%c1_465, %c960_466], %534 {strides = array<i32>} : memref<2x1024xf32, #tpu.memory_space<vmem>>, vector<1x64xf32>,
    %c0_467 = arith.constant 0 : index
    %c0_468 = arith.constant 0 : index
    %536 = vector.load %arg11[%c0_467, %c0_468] : memref<2x1024xf32, #tpu.memory_space<vmem>>, vector<2x1024xf32>
    %c0_469 = arith.constant 0 : index
    %c0_470 = arith.constant 0 : index
    %537 = vector.load %arg5[%c0_469, %c0_470] : memref<1024x128xf32, #tpu.memory_space<vmem>>, vector<1024x128xf32>
    %cst_471 = arith.constant dense<0.000000e+00> : vector<2x128xf32>
    %538 = tpu.matmul %536, %537, %cst_471 {dimension_numbers = #tpu.dot_dimension_numbers<[1], [0], [0], [1], [0, 0, 1, 1], [], []>} : vector<2x1024xf32>, vector<1024x128xf32>, vector<2x128xf32> -> vector<2x128xf32>
    %c0_472 = arith.constant 0 : index
    %c0_473 = arith.constant 0 : index
    %539 = vector.load %arg6[%c0_472, %c0_473] : memref<1x128xf32, #tpu.memory_space<vmem>>, vector<1x128xf32>
    %540 = vector.broadcast %539 : vector<1x128xf32> to vector<2x128xf32>
    %541 = arith.addf %538, %540 : vector<2x128xf32>
    %cst_474 = arith.constant 0.000000e+00 : f32
    %542 = vector.broadcast %cst_474 : f32 to vector<2x128xf32>
    %543 = arith.maximumf %541, %542 : vector<2x128xf32>
    %c0_475 = arith.constant 0 : index
    %c0_476 = arith.constant 0 : index
    %544 = vector.load %arg7[%c0_475, %c0_476] : memref<128x10xf32, #tpu.memory_space<vmem>>, vector<128x10xf32>
    %cst_477 = arith.constant dense<0.000000e+00> : vector<2x10xf32>
    %545 = tpu.matmul %543, %544, %cst_477 {dimension_numbers = #tpu.dot_dimension_numbers<[1], [0], [0], [1], [0, 0, 1, 1], [], []>} : vector<2x128xf32>, vector<128x10xf32>, vector<2x10xf32> -> vector<2x10xf32>
    %c0_478 = arith.constant 0 : index
    %c0_479 = arith.constant 0 : index
    %546 = vector.load %arg8[%c0_478, %c0_479] : memref<1x10xf32, #tpu.memory_space<vmem>>, vector<1x10xf32>
    %547 = vector.broadcast %546 : vector<1x10xf32> to vector<2x10xf32>
    %548 = arith.addf %545, %547 : vector<2x10xf32>
    %cst_480 = arith.constant dense<0xFF800000> : vector<2xf32>
    %549 = vector.multi_reduction <maximumf>, %548, %cst_480 [1] : vector<2x10xf32> to vector<2xf32>
    %550 = vector.shape_cast %549 : vector<2xf32> to vector<2x1xf32>
    %551 = vector.broadcast %550 : vector<2x1xf32> to vector<2x10xf32>
    %552 = arith.subf %548, %551 : vector<2x10xf32>
    %553 = math.exp %552 : vector<2x10xf32>
    %cst_481 = arith.constant dense<0.000000e+00> : vector<2xf32>
    %554 = vector.multi_reduction <add>, %553, %cst_481 [1] : vector<2x10xf32> to vector<2xf32>
    %555 = vector.shape_cast %554 : vector<2xf32> to vector<2x1xf32>
    %556 = math.log %555 : vector<2x1xf32>
    %557 = vector.broadcast %556 : vector<2x1xf32> to vector<2x10xf32>
    %558 = arith.subf %552, %557 : vector<2x10xf32>
    %c0_482 = arith.constant 0 : index
    %c0_483 = arith.constant 0 : index
    %559 = vector.load %arg9[%c0_482, %c0_483] : memref<2x10xf32, #tpu.memory_space<vmem>>, vector<2x10xf32>
    tpu.vector_store %arg9[%c0_482, %c0_483], %558 {strides = array<i32>} : memref<2x10xf32, #tpu.memory_space<vmem>>, vector<2x10xf32>,
    return
  }
}

</mosaic_0001>

<llo_original>
// kernel: net3_forward.1
$region0: #{net3_forward.1}
  #allocation0 [shape = 'u32[]', space=smem, size = 0x4, offset = 0x4, fixed_abs, tag = 'smem constant byte address 0x4 - core index']
  #allocation1 [shape = 'u32[144,128]{1,0:T(1,128)}', space=vmem, size = 0x12000, scoped, tag = 'internal scratch']
  #allocation2 [shape = 'f32[2,10,320]{2,1,0:T(8,128)}', space=vmem, size = 0xc000, scoped, tag = 'scratch operand']
  #allocation3 [shape = 'f32[2,1024]{1,0:T(2,128)}', space=vmem, size = 0x2000, scoped, tag = 'scratch operand']
  %s0 = inlined_call_operand.vmem [shape: f32[2,12,12], index: 0, kind: input, shape index: {}]
  %s1 = inlined_call_operand.vmem [shape: f32[3,12,320], index: 1, kind: input, shape index: {}]
  %s2 = inlined_call_operand.vmem [shape: f32[1,320], index: 2, kind: input, shape index: {}]
  %s3 = inlined_call_operand.vmem [shape: f32[3,96,64], index: 3, kind: input, shape index: {}]
  %s4 = inlined_call_operand.vmem [shape: f32[1,64], index: 4, kind: input, shape index: {}]
  %s5 = inlined_call_operand.hbm [shape: f32[1024,128], index: 5, kind: input, shape index: {}]
  %s6 = inlined_call_operand.vmem [shape: f32[1,128], index: 6, kind: input, shape index: {}]
  %s7 = inlined_call_operand.vmem [shape: f32[128,10], index: 7, kind: input, shape index: {}]
  %s8 = inlined_call_operand.vmem [shape: f32[1,10], index: 8, kind: input, shape index: {}]
  %s9 = inlined_call_operand.hbm [shape: f32[2,10], index: 9, kind: output, shape index: {}]
  %s10 = sld [smem:[#allocation0]]
  $region50: #{net3_forward.1} parent=0
    _
  %s12 = ssub.s32 1, %s10
  %s13 = scalar_select 0, %s12, %s10
  $region1: #{net3_forward.1} parent=0
    #allocation4 [shape = 'u8[524288]{0}', space=vmem, size = 0x80000, scoped, tag = 'input window, operand 5, single buffered']
    #allocation5 [shape = 's32[1]{0}', space=sflag, size = 0x4, scoped, tag = 'scoped memory for net3_forward.1']
    #allocation6 [shape = 's32[1]{0}', space=sflag, size = 0x4, scoped, tag = 'scoped memory for net3_forward.1']
    #allocation7 [shape = 'u8[1024]{0}', space=vmem, size = 0x400, scoped, tag = 'output window, operand 0, single buffered']
    %14 = vsyncpa [#allocation5], 0
    %15 = vsyncpa [#allocation6], 0
    // Predicated region
    $region2: #{net3_forward.1} parent=1 // pred_check
      _
    $region3: #{net3_forward.1} parent=1 // pred_check_branch
      %17 = sbr.rel (0) target = $region5
    $region4: #{net3_forward.1} parent=1 // pred_region
      _
    $region5: #{net3_forward.1} parent=1 // pred_fallthru
      _
    // Predicated region
    $region6: #{net3_forward.1} parent=1 // pred_check
      _
    $region7: #{net3_forward.1} parent=1 // pred_check_branch
      %19 = sbr.rel (0) target = $region9
    $region8: #{net3_forward.1} parent=1 // pred_region
      _
    $region9: #{net3_forward.1} parent=1 // pred_fallthru
      _
    // Predicated region
    $region10: #{net3_forward.1} parent=1 // pred_check
      _
    $region11: #{net3_forward.1} parent=1 // pred_check_branch
      %21 = sbr.rel (0) target = $region13
    $region12: #{net3_forward.1} parent=1 // pred_region
      _
    $region13: #{net3_forward.1} parent=1 // pred_fallthru
      _
    // Predicated region
    $region14: #{net3_forward.1} parent=1 // pred_check
      _
    $region15: #{net3_forward.1} parent=1 // pred_check_branch
      %23 = sbr.rel (0) target = $region17
    $region16: #{net3_forward.1} parent=1 // pred_region
      _
    $region17: #{net3_forward.1} parent=1 // pred_fallthru
      _
    // Predicated region
    $region18: #{net3_forward.1} parent=1 // pred_check
      _
    $region19: #{net3_forward.1} parent=1 // pred_check_branch
      %25 = sbr.rel (0) target = $region21
    $region20: #{net3_forward.1} parent=1 // pred_region
      _
    $region21: #{net3_forward.1} parent=1 // pred_fallthru
      _
    // Predicated region
    $region22: #{net3_forward.1} parent=1 // pred_check
      _
    $region23: #{net3_forward.1} parent=1 // pred_check_branch
      %27 = sbr.rel (0) target = $region25
    $region24: #{net3_forward.1} parent=1 // pred_region
      %s29 = ssub.s32 16384, 16384
      %30 = vsyncadd [#allocation5], %s29
      %s31 = sshll.u32 [#allocation4], 4
      %s32 = int_to_ptr.vmem [resolvable:$true] %s31
      %37 = dma.hbm_to_vmem [thread:$0]  %s5, 16384, %s32, [#allocation5], 128, 128, 8
    $region25: #{net3_forward.1} parent=1 // pred_fallthru
      _
    // Predicated region
    $region26: #{net3_forward.1} parent=1 // pred_check
      _
    $region27: #{net3_forward.1} parent=1 // pred_check_branch
      %39 = sbr.rel (0) target = $region29
    $region28: #{net3_forward.1} parent=1 // pred_region
      _
    $region29: #{net3_forward.1} parent=1 // pred_fallthru
      _
    // Predicated region
    $region30: #{net3_forward.1} parent=1 // pred_check
      _
    $region31: #{net3_forward.1} parent=1 // pred_check_branch
      %41 = sbr.rel (0) target = $region33
    $region32: #{net3_forward.1} parent=1 // pred_region
      _
    $region33: #{net3_forward.1} parent=1 // pred_fallthru
      _
    // Predicated region
    $region34: #{net3_forward.1} parent=1 // pred_check
      _
    $region35: #{net3_forward.1} parent=1 // pred_check_branch
      %43 = sbr.rel (0) target = $region37
    $region36: #{net3_forward.1} parent=1 // pred_region
      _
    $region37: #{net3_forward.1} parent=1 // pred_fallthru
      _
    // Predicated region
    $region38: #{net3_forward.1} parent=1 // pred_check
      _
    $region39: #{net3_forward.1} parent=1 // pred_check_branch
      %45 = sbr.rel (0) target = $region41
    $region40: #{net3_forward.1} parent=1 // pred_region
      %46 = dma.done [#allocation5], 16384
    $region41: #{net3_forward.1} parent=1 // pred_fallthru
      _
    %v47 = vld [vmem:[%s0] sm:$0xff]
    %v48 = vld [vmem:[%s0 + $0x8] sm:$0xf]
    %v49 = vld [vmem:[%s1] sm:$0xff]
    %v50 = vld [vmem:[%s1 + $0x8] sm:$0xff]
    %v51 = vld [vmem:[%s1 + $0x10] sm:$0xff]
    %v52 = vld [vmem:[%s1 + $0x18] sm:$0xf]
    %v53 = vld [vmem:[%s1 + $0x20] sm:$0xf]
    %v54 = vld [vmem:[%s1 + $0x28] sm:$0xf]
    %s55 = scalar_lea.vmem %s1, 48
    %v56 = vld [vmem:[%s55] sm:$0xff]
    %v57 = vld [vmem:[%s55 + $0x8] sm:$0xff]
    %v58 = vld [vmem:[%s55 + $0x10] sm:$0xff]
    %v59 = vld [vmem:[%s55 + $0x18] sm:$0xf]
    %v60 = vld [vmem:[%s55 + $0x20] sm:$0xf]
    %v61 = vld [vmem:[%s55 + $0x28] sm:$0xf]
    %vm64 = vcmask 1046528
    %v65 = vrot.slane %v47, 1
    %v66 = vrot.slane %v48, 1
    %v67 = vsel %vm64, %v65, %v66
    %vm68 = vcmask 97280
    %v69 = vsel %vm68, %v67, 0
    %v71 = vsel %vm68, %v66, 0
    %vm73 = vcmask 1043456
    %v75 = vsel %vm73, %v59, 0
    %v78 = vsel %vm73, %v60, 0
    %v81 = vsel %vm73, %v61, 0
    %83 = vmatprep.subr.mxu0 %v57
    %84 = vmatpush1.msra.mxu0 %v56
    %85 = vmatprep.subr.mxu0 %v78
    %86 = vmatpush1.msra.mxu0 %v75
    %87 = vmatprep.subr.mxu0 0.0
    %88 = vmatpush1.msra.mxu0 0.0
    %89 = vmatprep.subr.mxu0 0.0
    %90 = vmatpush1.msra.mxu0 0.0
    %91 = vmatprep.subr.mxu0 0.0
    %92 = vmatpush1.msra.mxu0 0.0
    %93 = vmatprep.subr.mxu0 0.0
    %94 = vmatpush1.msra.mxu0 0.0
    %95 = vmatprep.subr.mxu0 0.0
    %96 = vmatpush1.msra.mxu0 0.0
    %97 = vmatprep.subr.mxu0 0.0
    %98 = vmatpush1.msra.mxu0 0.0
    %99 = vmatprep.subr.mxu0 0.0
    %100 = vmatpush1.msra.mxu0 0.0
    %101 = vmatprep.subr.mxu0 0.0
    %102 = vmatpush1.msra.mxu0 0.0
    %103 = vmatprep.subr.mxu0 0.0
    %104 = vmatpush1.msra.mxu0 0.0
    %105 = vmatprep.subr.mxu0 0.0
    %106 = vmatpush1.msra.mxu0 0.0
    %107 = vmatprep.subr.mxu0 0.0
    %108 = vmatpush1.msra.mxu0 0.0
    %109 = vmatprep.subr.mxu0 0.0
    %110 = vmatpush1.msra.mxu0 0.0
    %111 = vmatprep.subr.mxu0 0.0
    %112 = vmatpush1.msra.mxu0 0.0
    %113 = vmatprep.subr.mxu0 0.0
    %114 = vmatpush1.msra.mxu0 0.0
    %115 = vmatprep.subr.mxu0 0.0
    %116 = vmatpush1.msra.mxu0 0.0
    %117 = vmatprep.subr.mxu0 0.0
    %118 = vmatpush1.msra.mxu0 0.0
    %119 = vmatprep.subr.mxu0 0.0
    %120 = vmatpush1.msra.mxu0 0.0
    %121 = vmatprep.subr.mxu0 0.0
    %122 = vmatpush1.msra.mxu0 0.0
    %123 = vmatprep.subr.mxu0 0.0
    %124 = vmatpush1.msra.mxu0 0.0
    %125 = vmatprep.subr.mxu0 0.0
    %126 = vmatpush1.msra.mxu0 0.0
    %127 = vmatprep.subr.mxu0 0.0
    %128 = vmatpush1.msra.mxu0 0.0
    %129 = vmatprep.subr.mxu0 0.0
    %130 = vmatpush1.msra.mxu0 0.0
    %131 = vmatprep.subr.mxu0 0.0
    %132 = vmatpush1.msra.mxu0 0.0
    %133 = vmatprep.subr.mxu0 0.0
    %134 = vmatpush1.msra.mxu0 0.0
    %135 = vmatprep.subr.mxu0 0.0
    %136 = vmatpush1.msra.mxu0 0.0
    %137 = vmatprep.subr.mxu0 0.0
    %138 = vmatpush1.msra.mxu0 0.0
    %139 = vmatprep.subr.mxu0 0.0
    %140 = vmatpush1.msra.mxu0 0.0
    %141 = vmatprep.subr.mxu0 0.0
    %142 = vmatpush1.msra.mxu0 0.0
    %143 = vmatprep.subr.mxu0 0.0
    %144 = vmatpush1.msra.mxu0 0.0
    %145 = vmatprep.subr.mxu0 0.0
    %146 = vmatpush1.msra.mxu0 0.0
    %147 = vmatprep.mubr.f32.mxu0 0.0
    %148 = vmatmul.mubr.f32.gmra.mrb[0].mxu0 %v69
    %v149 = vpop.f32.mrb[0].mxu0
    %v150 = vadd.f32 0.0, %v149
    %v151 = vpop.f32.mrb[0].mxu0
    %v152 = vadd.f32 0.0, %v151
    %153 = vmatprep.mubr.f32.mxu0 0.0
    %154 = vmatmul.mubr.f32.gmra.mrb[0].mxu0 %v71
    %v155 = vpop.f32.mrb[0].mxu0
    %v156 = vadd.f32 0.0, %v155
    %v157 = vpop.f32.mrb[0].mxu0
    %v158 = vadd.f32 0.0, %v157
    %159 = vdwg.mxu0
    %160 = vmatprep.subr.mxu0 0.0
    %161 = vmatpush1.msra.mxu0 %v58
    %162 = vmatprep.subr.mxu0 0.0
    %163 = vmatpush1.msra.mxu0 %v81
    %164 = vmatprep.subr.mxu0 0.0
    %165 = vmatpush1.msra.mxu0 0.0
    %166 = vmatprep.subr.mxu0 0.0
    %167 = vmatpush1.msra.mxu0 0.0
    %168 = vmatprep.subr.mxu0 0.0
    %169 = vmatpush1.msra.mxu0 0.0
    %170 = vmatprep.subr.mxu0 0.0
    %171 = vmatpush1.msra.mxu0 0.0
    %172 = vmatprep.subr.mxu0 0.0
    %173 = vmatpush1.msra.mxu0 0.0
    %174 = vmatprep.subr.mxu0 0.0
    %175 = vmatpush1.msra.mxu0 0.0
    %176 = vmatprep.subr.mxu0 0.0
    %177 = vmatpush1.msra.mxu0 0.0
    %178 = vmatprep.subr.mxu0 0.0
    %179 = vmatpush1.msra.mxu0 0.0
    %180 = vmatprep.subr.mxu0 0.0
    %181 = vmatpush1.msra.mxu0 0.0
    %182 = vmatprep.subr.mxu0 0.0
    %183 = vmatpush1.msra.mxu0 0.0
    %184 = vmatprep.subr.mxu0 0.0
    %185 = vmatpush1.msra.mxu0 0.0
    %186 = vmatprep.subr.mxu0 0.0
    %187 = vmatpush1.msra.mxu0 0.0
    %188 = vmatprep.subr.mxu0 0.0
    %189 = vmatpush1.msra.mxu0 0.0
    %190 = vmatprep.subr.mxu0 0.0
    %191 = vmatpush1.msra.mxu0 0.0
    %192 = vmatprep.subr.mxu0 0.0
    %193 = vmatpush1.msra.mxu0 0.0
    %194 = vmatprep.subr.mxu0 0.0
    %195 = vmatpush1.msra.mxu0 0.0
    %196 = vmatprep.subr.mxu0 0.0
    %197 = vmatpush1.msra.mxu0 0.0
    %198 = vmatprep.subr.mxu0 0.0
    %199 = vmatpush1.msra.mxu0 0.0
    %200 = vmatprep.subr.mxu0 0.0
    %201 = vmatpush1.msra.mxu0 0.0
    %202 = vmatprep.subr.mxu0 0.0
    %203 = vmatpush1.msra.mxu0 0.0
    %204 = vmatprep.subr.mxu0 0.0
    %205 = vmatpush1.msra.mxu0 0.0
    %206 = vmatprep.subr.mxu0 0.0
    %207 = vmatpush1.msra.mxu0 0.0
    %208 = vmatprep.subr.mxu0 0.0
    %209 = vmatpush1.msra.mxu0 0.0
    %210 = vmatprep.subr.mxu0 0.0
    %211 = vmatpush1.msra.mxu0 0.0
    %212 = vmatprep.subr.mxu0 0.0
    %213 = vmatpush1.msra.mxu0 0.0
    %214 = vmatprep.subr.mxu0 0.0
    %215 = vmatpush1.msra.mxu0 0.0
    %216 = vmatprep.subr.mxu0 0.0
    %217 = vmatpush1.msra.mxu0 0.0
    %218 = vmatprep.subr.mxu0 0.0
    %219 = vmatpush1.msra.mxu0 0.0
    %220 = vmatprep.subr.mxu0 0.0
    %221 = vmatpush1.msra.mxu0 0.0
    %222 = vmatprep.subr.mxu0 0.0
    %223 = vmatpush1.msra.mxu0 0.0
    %224 = vmatprep.mubr.f32.mxu0 0.0
    %225 = vmatmul.mubr.f32.gmra.mrb[0].mxu0 %v69
    %v226 = vpop.f32.mrb[0].mxu0
    %v227 = vadd.f32 0.0, %v226
    %v228 = vpop.f32.mrb[0].mxu0
    %229 = vmatprep.mubr.f32.mxu0 0.0
    %230 = vmatmul.mubr.f32.gmra.mrb[0].mxu0 %v71
    %v231 = vpop.f32.mrb[0].mxu0
    %v232 = vadd.f32 0.0, %v231
    %v233 = vpop.f32.mrb[0].mxu0
    %234 = vdwg.mxu0
    %v235 = vsel %vm68, %v47, 0
    %v237 = vsel %vm68, %v48, 0
    %v240 = vsel %vm73, %v52, 0
    %v243 = vsel %vm73, %v53, 0
    %v246 = vsel %vm73, %v54, 0
    %248 = vmatprep.subr.mxu0 %v50
    %249 = vmatpush1.msra.mxu0 %v49
    %250 = vmatprep.subr.mxu0 %v243
    %251 = vmatpush1.msra.mxu0 %v240
    %252 = vmatprep.subr.mxu0 0.0
    %253 = vmatpush1.msra.mxu0 0.0
    %254 = vmatprep.subr.mxu0 0.0
    %255 = vmatpush1.msra.mxu0 0.0
    %256 = vmatprep.subr.mxu0 0.0
    %257 = vmatpush1.msra.mxu0 0.0
    %258 = vmatprep.subr.mxu0 0.0
    %259 = vmatpush1.msra.mxu0 0.0
    %260 = vmatprep.subr.mxu0 0.0
    %261 = vmatpush1.msra.mxu0 0.0
    %262 = vmatprep.subr.mxu0 0.0
    %263 = vmatpush1.msra.mxu0 0.0
    %264 = vmatprep.subr.mxu0 0.0
    %265 = vmatpush1.msra.mxu0 0.0
    %266 = vmatprep.subr.mxu0 0.0
    %267 = vmatpush1.msra.mxu0 0.0
    %268 = vmatprep.subr.mxu0 0.0
    %269 = vmatpush1.msra.mxu0 0.0
    %270 = vmatprep.subr.mxu0 0.0
    %271 = vmatpush1.msra.mxu0 0.0
    %272 = vmatprep.subr.mxu0 0.0
    %273 = vmatpush1.msra.mxu0 0.0
    %274 = vmatprep.subr.mxu0 0.0
    %275 = vmatpush1.msra.mxu0 0.0
    %276 = vmatprep.subr.mxu0 0.0
    %277 = vmatpush1.msra.mxu0 0.0
    %278 = vmatprep.subr.mxu0 0.0
    %279 = vmatpush1.msra.mxu0 0.0
    %280 = vmatprep.subr.mxu0 0.0
    %281 = vmatpush1.msra.mxu0 0.0
    %282 = vmatprep.subr.mxu0 0.0
    %283 = vmatpush1.msra.mxu0 0.0
    %284 = vmatprep.subr.mxu0 0.0
    %285 = vmatpush1.msra.mxu0 0.0
    %286 = vmatprep.subr.mxu0 0.0
    %287 = vmatpush1.msra.mxu0 0.0
    %288 = vmatprep.subr.mxu0 0.0
    %289 = vmatpush1.msra.mxu0 0.0
    %290 = vmatprep.subr.mxu0 0.0
    %291 = vmatpush1.msra.mxu0 0.0
    %292 = vmatprep.subr.mxu0 0.0
    %293 = vmatpush1.msra.mxu0 0.0
    %294 = vmatprep.subr.mxu0 0.0
    %295 = vmatpush1.msra.mxu0 0.0
    %296 = vmatprep.subr.mxu0 0.0
    %297 = vmatpush1.msra.mxu0 0.0
    %298 = vmatprep.subr.mxu0 0.0
    %299 = vmatpush1.msra.mxu0 0.0
    %300 = vmatprep.subr.mxu0 0.0
    %301 = vmatpush1.msra.mxu0 0.0
    %302 = vmatprep.subr.mxu0 0.0
    %303 = vmatpush1.msra.mxu0 0.0
    %304 = vmatprep.subr.mxu0 0.0
    %305 = vmatpush1.msra.mxu0 0.0
    %306 = vmatprep.subr.mxu0 0.0
    %307 = vmatpush1.msra.mxu0 0.0
    %308 = vmatprep.subr.mxu0 0.0
    %309 = vmatpush1.msra.mxu0 0.0
    %310 = vmatprep.subr.mxu0 0.0
    %311 = vmatpush1.msra.mxu0 0.0
    %312 = vmatprep.mubr.f32.mxu0 0.0
    %313 = vmatmul.mubr.f32.gmra.mrb[0].mxu0 %v235
    %v314 = vpop.f32.mrb[0].mxu0
    %v315 = vadd.f32 %v150, %v314
    %v316 = vpop.f32.mrb[0].mxu0
    %v317 = vadd.f32 %v152, %v316
    %318 = vmatprep.mubr.f32.mxu0 0.0
    %319 = vmatmul.mubr.f32.gmra.mrb[0].mxu0 %v237
    %v320 = vpop.f32.mrb[0].mxu0
    %v321 = vadd.f32 %v156, %v320
    %v322 = vpop.f32.mrb[0].mxu0
    %v323 = vadd.f32 %v158, %v322
    %324 = vdwg.mxu0
    %325 = vmatprep.subr.mxu0 0.0
    %326 = vmatpush1.msra.mxu0 %v51
    %327 = vmatprep.subr.mxu0 0.0
    %328 = vmatpush1.msra.mxu0 %v246
    %329 = vmatprep.subr.mxu0 0.0
    %330 = vmatpush1.msra.mxu0 0.0
    %331 = vmatprep.subr.mxu0 0.0
    %332 = vmatpush1.msra.mxu0 0.0
    %333 = vmatprep.subr.mxu0 0.0
    %334 = vmatpush1.msra.mxu0 0.0
    %335 = vmatprep.subr.mxu0 0.0
    %336 = vmatpush1.msra.mxu0 0.0
    %337 = vmatprep.subr.mxu0 0.0
    %338 = vmatpush1.msra.mxu0 0.0
    %339 = vmatprep.subr.mxu0 0.0
    %340 = vmatpush1.msra.mxu0 0.0
    %341 = vmatprep.subr.mxu0 0.0
    %342 = vmatpush1.msra.mxu0 0.0
    %343 = vmatprep.subr.mxu0 0.0
    %344 = vmatpush1.msra.mxu0 0.0
    %345 = vmatprep.subr.mxu0 0.0
    %346 = vmatpush1.msra.mxu0 0.0
    %347 = vmatprep.subr.mxu0 0.0
    %348 = vmatpush1.msra.mxu0 0.0
    %349 = vmatprep.subr.mxu0 0.0
    %350 = vmatpush1.msra.mxu0 0.0
    %351 = vmatprep.subr.mxu0 0.0
    %352 = vmatpush1.msra.mxu0 0.0
    %353 = vmatprep.subr.mxu0 0.0
    %354 = vmatpush1.msra.mxu0 0.0
    %355 = vmatprep.subr.mxu0 0.0
    %356 = vmatpush1.msra.mxu0 0.0
    %357 = vmatprep.subr.mxu0 0.0
    %358 = vmatpush1.msra.mxu0 0.0
    %359 = vmatprep.subr.mxu0 0.0
    %360 = vmatpush1.msra.mxu0 0.0
    %361 = vmatprep.subr.mxu0 0.0
    %362 = vmatpush1.msra.mxu0 0.0
    %363 = vmatprep.subr.mxu0 0.0
    %364 = vmatpush1.msra.mxu0 0.0
    %365 = vmatprep.subr.mxu0 0.0
    %366 = vmatpush1.msra.mxu0 0.0
    %367 = vmatprep.subr.mxu0 0.0
    %368 = vmatpush1.msra.mxu0 0.0
    %369 = vmatprep.subr.mxu0 0.0
    %370 = vmatpush1.msra.mxu0 0.0
    %371 = vmatprep.subr.mxu0 0.0
    %372 = vmatpush1.msra.mxu0 0.0
    %373 = vmatprep.subr.mxu0 0.0
    %374 = vmatpush1.msra.mxu0 0.0
    %375 = vmatprep.subr.mxu0 0.0
    %376 = vmatpush1.msra.mxu0 0.0
    %377 = vmatprep.subr.mxu0 0.0
    %378 = vmatpush1.msra.mxu0 0.0
    %379 = vmatprep.subr.mxu0 0.0
    %380 = vmatpush1.msra.mxu0 0.0
    %381 = vmatprep.subr.mxu0 0.0
    %382 = vmatpush1.msra.mxu0 0.0
    %383 = vmatprep.subr.mxu0 0.0
    %384 = vmatpush1.msra.mxu0 0.0
    %385 = vmatprep.subr.mxu0 0.0
    %386 = vmatpush1.msra.mxu0 0.0
    %387 = vmatprep.subr.mxu0 0.0
    %388 = vmatpush1.msra.mxu0 0.0
    %389 = vmatprep.mubr.f32.mxu0 0.0
    %390 = vmatmul.mubr.f32.gmra.mrb[0].mxu0 %v235
    %v391 = vpop.f32.mrb[0].mxu0
    %v392 = vadd.f32 %v227, %v391
    %v393 = vpop.f32.mrb[0].mxu0
    %394 = vmatprep.mubr.f32.mxu0 0.0
    %395 = vmatmul.mubr.f32.gmra.mrb[0].mxu0 %v237
    %v396 = vpop.f32.mrb[0].mxu0
    %v397 = vadd.f32 %v232, %v396
    %v398 = vpop.f32.mrb[0].mxu0
    %399 = vdwg.mxu0
    %s400 = scalar_lea.vmem %s1, 96
    %v401 = vld [vmem:[%s400] sm:$0xff]
    %v402 = vld [vmem:[%s400 + $0x8] sm:$0xff]
    %v403 = vld [vmem:[%s400 + $0x10] sm:$0xff]
    %v404 = vld [vmem:[%s400 + $0x18] sm:$0xf]
    %v405 = vld [vmem:[%s400 + $0x20] sm:$0xf]
    %v406 = vld [vmem:[%s400 + $0x28] sm:$0xf]
    %vm407 = vcmask 1045504
    %v408 = vrot.slane %v47, 2
    %v409 = vrot.slane %v48, 2
    %v410 = vsel %vm407, %v408, %v409
    %v411 = vsel %vm68, %v410, 0
    %v413 = vsel %vm68, %v409, 0
    %v416 = vsel %vm73, %v404, 0
    %v419 = vsel %vm73, %v405, 0
    %v422 = vsel %vm73, %v406, 0
    %424 = vmatprep.subr.mxu0 %v402
    %425 = vmatpush1.msra.mxu0 %v401
    %426 = vmatprep.subr.mxu0 %v419
    %427 = vmatpush1.msra.mxu0 %v416
    %428 = vmatprep.subr.mxu0 0.0
    %429 = vmatpush1.msra.mxu0 0.0
    %430 = vmatprep.subr.mxu0 0.0
    %431 = vmatpush1.msra.mxu0 0.0
    %432 = vmatprep.subr.mxu0 0.0
    %433 = vmatpush1.msra.mxu0 0.0
    %434 = vmatprep.subr.mxu0 0.0
    %435 = vmatpush1.msra.mxu0 0.0
    %436 = vmatprep.subr.mxu0 0.0
    %437 = vmatpush1.msra.mxu0 0.0
    %438 = vmatprep.subr.mxu0 0.0
    %439 = vmatpush1.msra.mxu0 0.0
    %440 = vmatprep.subr.mxu0 0.0
    %441 = vmatpush1.msra.mxu0 0.0
    %442 = vmatprep.subr.mxu0 0.0
    %443 = vmatpush1.msra.mxu0 0.0
    %444 = vmatprep.subr.mxu0 0.0
    %445 = vmatpush1.msra.mxu0 0.0
    %446 = vmatprep.subr.mxu0 0.0
    %447 = vmatpush1.msra.mxu0 0.0
    %448 = vmatprep.subr.mxu0 0.0
    %449 = vmatpush1.msra.mxu0 0.0
    %450 = vmatprep.subr.mxu0 0.0
    %451 = vmatpush1.msra.mxu0 0.0
    %452 = vmatprep.subr.mxu0 0.0
    %453 = vmatpush1.msra.mxu0 0.0
    %454 = vmatprep.subr.mxu0 0.0
    %455 = vmatpush1.msra.mxu0 0.0
    %456 = vmatprep.subr.mxu0 0.0
    %457 = vmatpush1.msra.mxu0 0.0
    %458 = vmatprep.subr.mxu0 0.0
    %459 = vmatpush1.msra.mxu0 0.0
    %460 = vmatprep.subr.mxu0 0.0
    %461 = vmatpush1.msra.mxu0 0.0
    %462 = vmatprep.subr.mxu0 0.0
    %463 = vmatpush1.msra.mxu0 0.0
    %464 = vmatprep.subr.mxu0 0.0
    %465 = vmatpush1.msra.mxu0 0.0
    %466 = vmatprep.subr.mxu0 0.0
    %467 = vmatpush1.msra.mxu0 0.0
    %468 = vmatprep.subr.mxu0 0.0
    %469 = vmatpush1.msra.mxu0 0.0
    %470 = vmatprep.subr.mxu0 0.0
    %471 = vmatpush1.msra.mxu0 0.0
    %472 = vmatprep.subr.mxu0 0.0
    %473 = vmatpush1.msra.mxu0 0.0
    %474 = vmatprep.subr.mxu0 0.0
    %475 = vmatpush1.msra.mxu0 0.0
    %476 = vmatprep.subr.mxu0 0.0
    %477 = vmatpush1.msra.mxu0 0.0
    %478 = vmatprep.subr.mxu0 0.0
    %479 = vmatpush1.msra.mxu0 0.0
    %480 = vmatprep.subr.mxu0 0.0
    %481 = vmatpush1.msra.mxu0 0.0
    %482 = vmatprep.subr.mxu0 0.0
    %483 = vmatpush1.msra.mxu0 0.0
    %484 = vmatprep.subr.mxu0 0.0
    %485 = vmatpush1.msra.mxu0 0.0
    %486 = vmatprep.subr.mxu0 0.0
    %487 = vmatpush1.msra.mxu0 0.0
    %488 = vmatprep.mubr.f32.mxu0 0.0
    %489 = vmatmul.mubr.f32.gmra.mrb[0].mxu0 %v411
    %v490 = vpop.f32.mrb[0].mxu0
    %v491 = vadd.f32 0.0, %v490
    %v492 = vpop.f32.mrb[0].mxu0
    %v493 = vadd.f32 0.0, %v492
    %494 = vmatprep.mubr.f32.mxu0 0.0
    %495 = vmatmul.mubr.f32.gmra.mrb[0].mxu0 %v413
    %v496 = vpop.f32.mrb[0].mxu0
    %v497 = vadd.f32 0.0, %v496
    %v498 = vpop.f32.mrb[0].mxu0
    %v499 = vadd.f32 0.0, %v498
    %500 = vdwg.mxu0
    %501 = vmatprep.subr.mxu0 0.0
    %502 = vmatpush1.msra.mxu0 %v403
    %503 = vmatprep.subr.mxu0 0.0
    %504 = vmatpush1.msra.mxu0 %v422
    %505 = vmatprep.subr.mxu0 0.0
    %506 = vmatpush1.msra.mxu0 0.0
    %507 = vmatprep.subr.mxu0 0.0
    %508 = vmatpush1.msra.mxu0 0.0
    %509 = vmatprep.subr.mxu0 0.0
    %510 = vmatpush1.msra.mxu0 0.0
    %511 = vmatprep.subr.mxu0 0.0
    %512 = vmatpush1.msra.mxu0 0.0
    %513 = vmatprep.subr.mxu0 0.0
    %514 = vmatpush1.msra.mxu0 0.0
    %515 = vmatprep.subr.mxu0 0.0
    %516 = vmatpush1.msra.mxu0 0.0
    %517 = vmatprep.subr.mxu0 0.0
    %518 = vmatpush1.msra.mxu0 0.0
    %519 = vmatprep.subr.mxu0 0.0
    %520 = vmatpush1.msra.mxu0 0.0
    %521 = vmatprep.subr.mxu0 0.0
    %522 = vmatpush1.msra.mxu0 0.0
    %523 = vmatprep.subr.mxu0 0.0
    %524 = vmatpush1.msra.mxu0 0.0
    %525 = vmatprep.subr.mxu0 0.0
    %526 = vmatpush1.msra.mxu0 0.0
    %527 = vmatprep.subr.mxu0 0.0
    %528 = vmatpush1.msra.mxu0 0.0
    %529 = vmatprep.subr.mxu0 0.0
    %530 = vmatpush1.msra.mxu0 0.0
    %531 = vmatprep.subr.mxu0 0.0
    %532 = vmatpush1.msra.mxu0 0.0
    %533 = vmatprep.subr.mxu0 0.0
    %534 = vmatpush1.msra.mxu0 0.0
    %535 = vmatprep.subr.mxu0 0.0
    %536 = vmatpush1.msra.mxu0 0.0
    %537 = vmatprep.subr.mxu0 0.0
    %538 = vmatpush1.msra.mxu0 0.0
    %539 = vmatprep.subr.mxu0 0.0
    %540 = vmatpush1.msra.mxu0 0.0
    %541 = vmatprep.subr.mxu0 0.0
    %542 = vmatpush1.msra.mxu0 0.0
    %543 = vmatprep.subr.mxu0 0.0
    %544 = vmatpush1.msra.mxu0 0.0
    %545 = vmatprep.subr.mxu0 0.0
    %546 = vmatpush1.msra.mxu0 0.0
    %547 = vmatprep.subr.mxu0 0.0
    %548 = vmatpush1.msra.mxu0 0.0
    %549 = vmatprep.subr.mxu0 0.0
    %550 = vmatpush1.msra.mxu0 0.0
    %551 = vmatprep.subr.mxu0 0.0
    %552 = vmatpush1.msra.mxu0 0.0
    %553 = vmatprep.subr.mxu0 0.0
    %554 = vmatpush1.msra.mxu0 0.0
    %555 = vmatprep.subr.mxu0 0.0
    %556 = vmatpush1.msra.mxu0 0.0
    %557 = vmatprep.subr.mxu0 0.0
    %558 = vmatpush1.msra.mxu0 0.0
    %559 = vmatprep.subr.mxu0 0.0
    %560 = vmatpush1.msra.mxu0 0.0
    %561 = vmatprep.subr.mxu0 0.0
    %562 = vmatpush1.msra.mxu0 0.0
    %563 = vmatprep.subr.mxu0 0.0
    %564 = vmatpush1.msra.mxu0 0.0
    %565 = vmatprep.mubr.f32.mxu0 0.0
    %566 = vmatmul.mubr.f32.gmra.mrb[0].mxu0 %v411
    %v567 = vpop.f32.mrb[0].mxu0
    %v568 = vadd.f32 0.0, %v567
    %v569 = vpop.f32.mrb[0].mxu0
    %570 = vmatprep.mubr.f32.mxu0 0.0
    %571 = vmatmul.mubr.f32.gmra.mrb[0].mxu0 %v413
    %v572 = vpop.f32.mrb[0].mxu0
    %v573 = vadd.f32 0.0, %v572
    %v574 = vpop.f32.mrb[0].mxu0
    %575 = vdwg.mxu0
    %v576 = vadd.f32 %v315, %v491
    %v577 = vadd.f32 %v317, %v493
    %v578 = vadd.f32 %v392, %v568
    %v579 = vadd.f32 %v321, %v497
    %v580 = vadd.f32 %v323, %v499
    %v581 = vadd.f32 %v397, %v573
    %v582 = vld [vmem:[%s2] sm:$0x7]
    %v584 = vlaneseq
    %v585 = vshrl.u32 %v584, 7
    %v586 = vsub.s32 0, %v585
    %v587 = vrot.slane %v582, %v586
    %v588 = vlaneseq
    %v589 = vshrl.u32 %v588, 7
    %v590 = vsub.s32 1, %v589
    %v591 = vrot.slane %v582, %v590
    %v592 = vlaneseq
    %v593 = vshrl.u32 %v592, 7
    %v594 = vsub.s32 2, %v593
    %v595 = vrot.slane %v582, %v594
    %v599 = vadd.f32 %v576, %v587
    %v600 = vadd.f32 %v577, %v591
    %v601 = vadd.f32 %v578, %v595
    %v602 = vadd.f32 %v579, %v587
    %v603 = vadd.f32 %v580, %v591
    %v604 = vadd.f32 %v581, %v595
    %v605 = vmax.f32 %v599, 0.0
    %v606 = vmax.f32 %v600, 0.0
    %v607 = vmax.f32 %v601, 0.0
    %v608 = vmax.f32 %v602, 0.0
    %v609 = vmax.f32 %v603, 0.0
    %v610 = vmax.f32 %v604, 0.0
    %611 = vst [vmem:[#allocation2] sm:$0xff] %v605
    %612 = vst [vmem:[#allocation2 + $0x8] sm:$0xff] %v606
    %vm613 = vcmask 523264
    %614 = vst.msk [vmem:[#allocation2 + $0x10] sm:$0xff] %vm613, %v607
    %615 = vst [vmem:[#allocation2 + $0x18] sm:$0x3] %v608
    %616 = vst [vmem:[#allocation2 + $0x20] sm:$0x3] %v609
    %vm617 = vcmask 517120
    %618 = vst.msk [vmem:[#allocation2 + $0x28] sm:$0x3] %vm617, %v610
    %s619 = scalar_lea.vmem %s0, 16
    %v620 = vld [vmem:[%s619] sm:$0xff]
    %v621 = vld [vmem:[%s619 + $0x8] sm:$0xf]
    %v622 = vld [vmem:[%s1] sm:$0xff]
    %v623 = vld [vmem:[%s1 + $0x8] sm:$0xff]
    %v624 = vld [vmem:[%s1 + $0x10] sm:$0xff]
    %v625 = vld [vmem:[%s1 + $0x18] sm:$0xf]
    %v626 = vld [vmem:[%s1 + $0x20] sm:$0xf]
    %v627 = vld [vmem:[%s1 + $0x28] sm:$0xf]
    %v628 = vld [vmem:[%s55] sm:$0xff]
    %v629 = vld [vmem:[%s55 + $0x8] sm:$0xff]
    %v630 = vld [vmem:[%s55 + $0x10] sm:$0xff]
    %v631 = vld [vmem:[%s55 + $0x18] sm:$0xf]
    %v632 = vld [vmem:[%s55 + $0x20] sm:$0xf]
    %v633 = vld [vmem:[%s55 + $0x28] sm:$0xf]
    %v636 = vrot.slane %v620, 1
    %v637 = vrot.slane %v621, 1
    %v638 = vsel %vm64, %v636, %v637
    %v639 = vsel %vm68, %v638, 0
    %v641 = vsel %vm68, %v637, 0
    %v644 = vsel %vm73, %v631, 0
    %v647 = vsel %vm73, %v632, 0
    %v650 = vsel %vm73, %v633, 0
    %652 = vmatprep.subr.mxu0 %v629
    %653 = vmatpush1.msra.mxu0 %v628
    %654 = vmatprep.subr.mxu0 %v647
    %655 = vmatpush1.msra.mxu0 %v644
    %656 = vmatprep.subr.mxu0 0.0
    %657 = vmatpush1.msra.mxu0 0.0
    %658 = vmatprep.subr.mxu0 0.0
    %659 = vmatpush1.msra.mxu0 0.0
    %660 = vmatprep.subr.mxu0 0.0
    %661 = vmatpush1.msra.mxu0 0.0
    %662 = vmatprep.subr.mxu0 0.0
    %663 = vmatpush1.msra.mxu0 0.0
    %664 = vmatprep.subr.mxu0 0.0
    %665 = vmatpush1.msra.mxu0 0.0
    %666 = vmatprep.subr.mxu0 0.0
    %667 = vmatpush1.msra.mxu0 0.0
    %668 = vmatprep.subr.mxu0 0.0
    %669 = vmatpush1.msra.mxu0 0.0
    %670 = vmatprep.subr.mxu0 0.0
    %671 = vmatpush1.msra.mxu0 0.0
    %672 = vmatprep.subr.mxu0 0.0
    %673 = vmatpush1.msra.mxu0 0.0
    %674 = vmatprep.subr.mxu0 0.0
    %675 = vmatpush1.msra.mxu0 0.0
    %676 = vmatprep.subr.mxu0 0.0
    %677 = vmatpush1.msra.mxu0 0.0
    %678 = vmatprep.subr.mxu0 0.0
    %679 = vmatpush1.msra.mxu0 0.0
    %680 = vmatprep.subr.mxu0 0.0
    %681 = vmatpush1.msra.mxu0 0.0
    %682 = vmatprep.subr.mxu0 0.0
    %683 = vmatpush1.msra.mxu0 0.0
    %684 = vmatprep.subr.mxu0 0.0
    %685 = vmatpush1.msra.mxu0 0.0
    %686 = vmatprep.subr.mxu0 0.0
    %687 = vmatpush1.msra.mxu0 0.0
    %688 = vmatprep.subr.mxu0 0.0
    %689 = vmatpush1.msra.mxu0 0.0
    %690 = vmatprep.subr.mxu0 0.0
    %691 = vmatpush1.msra.mxu0 0.0
    %692 = vmatprep.subr.mxu0 0.0
    %693 = vmatpush1.msra.mxu0 0.0
    %694 = vmatprep.subr.mxu0 0.0
    %695 = vmatpush1.msra.mxu0 0.0
    %696 = vmatprep.subr.mxu0 0.0
    %697 = vmatpush1.msra.mxu0 0.0
    %698 = vmatprep.subr.mxu0 0.0
    %699 = vmatpush1.msra.mxu0 0.0
    %700 = vmatprep.subr.mxu0 0.0
    %701 = vmatpush1.msra.mxu0 0.0
    %702 = vmatprep.subr.mxu0 0.0
    %703 = vmatpush1.msra.mxu0 0.0
    %704 = vmatprep.subr.mxu0 0.0
    %705 = vmatpush1.msra.mxu0 0.0
    %706 = vmatprep.subr.mxu0 0.0
    %707 = vmatpush1.msra.mxu0 0.0
    %708 = vmatprep.subr.mxu0 0.0
    %709 = vmatpush1.msra.mxu0 0.0
    %710 = vmatprep.subr.mxu0 0.0
    %711 = vmatpush1.msra.mxu0 0.0
    %712 = vmatprep.subr.mxu0 0.0
    %713 = vmatpush1.msra.mxu0 0.0
    %714 = vmatprep.subr.mxu0 0.0
    %715 = vmatpush1.msra.mxu0 0.0
    %716 = vmatprep.mubr.f32.mxu0 0.0
    %717 = vmatmul.mubr.f32.gmra.mrb[0].mxu0 %v639
    %v718 = vpop.f32.mrb[0].mxu0
    %v719 = vadd.f32 0.0, %v718
    %v720 = vpop.f32.mrb[0].mxu0
    %v721 = vadd.f32 0.0, %v720
    %722 = vmatprep.mubr.f32.mxu0 0.0
    %723 = vmatmul.mubr.f32.gmra.mrb[0].mxu0 %v641
    %v724 = vpop.f32.mrb[0].mxu0
    %v725 = vadd.f32 0.0, %v724
    %v726 = vpop.f32.mrb[0].mxu0
    %v727 = vadd.f32 0.0, %v726
    %728 = vdwg.mxu0
    %729 = vmatprep.subr.mxu0 0.0
    %730 = vmatpush1.msra.mxu0 %v630
    %731 = vmatprep.subr.mxu0 0.0
    %732 = vmatpush1.msra.mxu0 %v650
    %733 = vmatprep.subr.mxu0 0.0
    %734 = vmatpush1.msra.mxu0 0.0
    %735 = vmatprep.subr.mxu0 0.0
    %736 = vmatpush1.msra.mxu0 0.0
    %737 = vmatprep.subr.mxu0 0.0
    %738 = vmatpush1.msra.mxu0 0.0
    %739 = vmatprep.subr.mxu0 0.0
    %740 = vmatpush1.msra.mxu0 0.0
    %741 = vmatprep.subr.mxu0 0.0
    %742 = vmatpush1.msra.mxu0 0.0
    %743 = vmatprep.subr.mxu0 0.0
    %744 = vmatpush1.msra.mxu0 0.0
    %745 = vmatprep.subr.mxu0 0.0
    %746 = vmatpush1.msra.mxu0 0.0
    %747 = vmatprep.subr.mxu0 0.0
    %748 = vmatpush1.msra.mxu0 0.0
    %749 = vmatprep.subr.mxu0 0.0
    %750 = vmatpush1.msra.mxu0 0.0
    %751 = vmatprep.subr.mxu0 0.0
    %752 = vmatpush1.msra.mxu0 0.0
    %753 = vmatprep.subr.mxu0 0.0
    %754 = vmatpush1.msra.mxu0 0.0
    %755 = vmatprep.subr.mxu0 0.0
    %756 = vmatpush1.msra.mxu0 0.0
    %757 = vmatprep.subr.mxu0 0.0
    %758 = vmatpush1.msra.mxu0 0.0
    %759 = vmatprep.subr.mxu0 0.0
    %760 = vmatpush1.msra.mxu0 0.0
    %761 = vmatprep.subr.mxu0 0.0
    %762 = vmatpush1.msra.mxu0 0.0
    %763 = vmatprep.subr.mxu0 0.0
    %764 = vmatpush1.msra.mxu0 0.0
    %765 = vmatprep.subr.mxu0 0.0
    %766 = vmatpush1.msra.mxu0 0.0
    %767 = vmatprep.subr.mxu0 0.0
    %768 = vmatpush1.msra.mxu0 0.0
    %769 = vmatprep.subr.mxu0 0.0
    %770 = vmatpush1.msra.mxu0 0.0
    %771 = vmatprep.subr.mxu0 0.0
    %772 = vmatpush1.msra.mxu0 0.0
    %773 = vmatprep.subr.mxu0 0.0
    %774 = vmatpush1.msra.mxu0 0.0
    %775 = vmatprep.subr.mxu0 0.0
    %776 = vmatpush1.msra.mxu0 0.0
    %777 = vmatprep.subr.mxu0 0.0
    %778 = vmatpush1.msra.mxu0 0.0
    %779 = vmatprep.subr.mxu0 0.0
    %780 = vmatpush1.msra.mxu0 0.0
    %781 = vmatprep.subr.mxu0 0.0
    %782 = vmatpush1.msra.mxu0 0.0
    %783 = vmatprep.subr.mxu0 0.0
    %784 = vmatpush1.msra.mxu0 0.0
    %785 = vmatprep.subr.mxu0 0.0
    %786 = vmatpush1.msra.mxu0 0.0
    %787 = vmatprep.subr.mxu0 0.0
    %788 = vmatpush1.msra.mxu0 0.0
    %789 = vmatprep.subr.mxu0 0.0
    %790 = vmatpush1.msra.mxu0 0.0
    %791 = vmatprep.subr.mxu0 0.0
    %792 = vmatpush1.msra.mxu0 0.0
    %793 = vmatprep.mubr.f32.mxu0 0.0
    %794 = vmatmul.mubr.f32.gmra.mrb[0].mxu0 %v639
    %v795 = vpop.f32.mrb[0].mxu0
    %v796 = vadd.f32 0.0, %v795
    %v797 = vpop.f32.mrb[0].mxu0
    %798 = vmatprep.mubr.f32.mxu0 0.0
    %799 = vmatmul.mubr.f32.gmra.mrb[0].mxu0 %v641
    %v800 = vpop.f32.mrb[0].mxu0
    %v801 = vadd.f32 0.0, %v800
    %v802 = vpop.f32.mrb[0].mxu0
    %803 = vdwg.mxu0
    %v804 = vsel %vm68, %v620, 0
    %v806 = vsel %vm68, %v621, 0
    %v809 = vsel %vm73, %v625, 0
    %v812 = vsel %vm73, %v626, 0
    %v815 = vsel %vm73, %v627, 0
    %817 = vmatprep.subr.mxu0 %v623
    %818 = vmatpush1.msra.mxu0 %v622
    %819 = vmatprep.subr.mxu0 %v812
    %820 = vmatpush1.msra.mxu0 %v809
    %821 = vmatprep.subr.mxu0 0.0
    %822 = vmatpush1.msra.mxu0 0.0
    %823 = vmatprep.subr.mxu0 0.0
    %824 = vmatpush1.msra.mxu0 0.0
    %825 = vmatprep.subr.mxu0 0.0
    %826 = vmatpush1.msra.mxu0 0.0
    %827 = vmatprep.subr.mxu0 0.0
    %828 = vmatpush1.msra.mxu0 0.0
    %829 = vmatprep.subr.mxu0 0.0
    %830 = vmatpush1.msra.mxu0 0.0
    %831 = vmatprep.subr.mxu0 0.0
    %832 = vmatpush1.msra.mxu0 0.0
    %833 = vmatprep.subr.mxu0 0.0
    %834 = vmatpush1.msra.mxu0 0.0
    %835 = vmatprep.subr.mxu0 0.0
    %836 = vmatpush1.msra.mxu0 0.0
    %837 = vmatprep.subr.mxu0 0.0
    %838 = vmatpush1.msra.mxu0 0.0
    %839 = vmatprep.subr.mxu0 0.0
    %840 = vmatpush1.msra.mxu0 0.0
    %841 = vmatprep.subr.mxu0 0.0
    %842 = vmatpush1.msra.mxu0 0.0
    %843 = vmatprep.subr.mxu0 0.0
    %844 = vmatpush1.msra.mxu0 0.0
    %845 = vmatprep.subr.mxu0 0.0
    %846 = vmatpush1.msra.mxu0 0.0
    %847 = vmatprep.subr.mxu0 0.0
    %848 = vmatpush1.msra.mxu0 0.0
    %849 = vmatprep.subr.mxu0 0.0
    %850 = vmatpush1.msra.mxu0 0.0
    %851 = vmatprep.subr.mxu0 0.0
    %852 = vmatpush1.msra.mxu0 0.0
    %853 = vmatprep.subr.mxu0 0.0
    %854 = vmatpush1.msra.mxu0 0.0
    %855 = vmatprep.subr.mxu0 0.0
    %856 = vmatpush1.msra.mxu0 0.0
    %857 = vmatprep.subr.mxu0 0.0
    %858 = vmatpush1.msra.mxu0 0.0
    %859 = vmatprep.subr.mxu0 0.0
    %860 = vmatpush1.msra.mxu0 0.0
    %861 = vmatprep.subr.mxu0 0.0
    %862 = vmatpush1.msra.mxu0 0.0
    %863 = vmatprep.subr.mxu0 0.0
    %864 = vmatpush1.msra.mxu0 0.0
    %865 = vmatprep.subr.mxu0 0.0
    %866 = vmatpush1.msra.mxu0 0.0
    %867 = vmatprep.subr.mxu0 0.0
    %868 = vmatpush1.msra.mxu0 0.0
    %869 = vmatprep.subr.mxu0 0.0
    %870 = vmatpush1.msra.mxu0 0.0
    %871 = vmatprep.subr.mxu0 0.0
    %872 = vmatpush1.msra.mxu0 0.0
    %873 = vmatprep.subr.mxu0 0.0
    %874 = vmatpush1.msra.mxu0 0.0
    %875 = vmatprep.subr.mxu0 0.0
    %876 = vmatpush1.msra.mxu0 0.0
    %877 = vmatprep.subr.mxu0 0.0
    %878 = vmatpush1.msra.mxu0 0.0
    %879 = vmatprep.subr.mxu0 0.0
    %880 = vmatpush1.msra.mxu0 0.0
    %881 = vmatprep.mubr.f32.mxu0 0.0
    %882 = vmatmul.mubr.f32.gmra.mrb[0].mxu0 %v804
    %v883 = vpop.f32.mrb[0].mxu0
    %v884 = vadd.f32 %v719, %v883
    %v885 = vpop.f32.mrb[0].mxu0
    %v886 = vadd.f32 %v721, %v885
    %887 = vmatprep.mubr.f32.mxu0 0.0
    %888 = vmatmul.mubr.f32.gmra.mrb[0].mxu0 %v806
    %v889 = vpop.f32.mrb[0].mxu0
    %v890 = vadd.f32 %v725, %v889
    %v891 = vpop.f32.mrb[0].mxu0
    %v892 = vadd.f32 %v727, %v891
    %893 = vdwg.mxu0
    %894 = vmatprep.subr.mxu0 0.0
    %895 = vmatpush1.msra.mxu0 %v624
    %896 = vmatprep.subr.mxu0 0.0
    %897 = vmatpush1.msra.mxu0 %v815
    %898 = vmatprep.subr.mxu0 0.0
    %899 = vmatpush1.msra.mxu0 0.0
    %900 = vmatprep.subr.mxu0 0.0
    %901 = vmatpush1.msra.mxu0 0.0
    %902 = vmatprep.subr.mxu0 0.0
    %903 = vmatpush1.msra.mxu0 0.0
    %904 = vmatprep.subr.mxu0 0.0
    %905 = vmatpush1.msra.mxu0 0.0
    %906 = vmatprep.subr.mxu0 0.0
    %907 = vmatpush1.msra.mxu0 0.0
    %908 = vmatprep.subr.mxu0 0.0
    %909 = vmatpush1.msra.mxu0 0.0
    %910 = vmatprep.subr.mxu0 0.0
    %911 = vmatpush1.msra.mxu0 0.0
    %912 = vmatprep.subr.mxu0 0.0
    %913 = vmatpush1.msra.mxu0 0.0
    %914 = vmatprep.subr.mxu0 0.0
    %915 = vmatpush1.msra.mxu0 0.0
    %916 = vmatprep.subr.mxu0 0.0
    %917 = vmatpush1.msra.mxu0 0.0
    %918 = vmatprep.subr.mxu0 0.0
    %919 = vmatpush1.msra.mxu0 0.0
    %920 = vmatprep.subr.mxu0 0.0
    %921 = vmatpush1.msra.mxu0 0.0
    %922 = vmatprep.subr.mxu0 0.0
    %923 = vmatpush1.msra.mxu0 0.0
    %924 = vmatprep.subr.mxu0 0.0
    %925 = vmatpush1.msra.mxu0 0.0
    %926 = vmatprep.subr.mxu0 0.0
    %927 = vmatpush1.msra.mxu0 0.0
    %928 = vmatprep.subr.mxu0 0.0
    %929 = vmatpush1.msra.mxu0 0.0
    %930 = vmatprep.subr.mxu0 0.0
    %931 = vmatpush1.msra.mxu0 0.0
    %932 = vmatprep.subr.mxu0 0.0
    %933 = vmatpush1.msra.mxu0 0.0
    %934 = vmatprep.subr.mxu0 0.0
    %935 = vmatpush1.msra.mxu0 0.0
    %936 = vmatprep.subr.mxu0 0.0
    %937 = vmatpush1.msra.mxu0 0.0
    %938 = vmatprep.subr.mxu0 0.0
    %939 = vmatpush1.msra.mxu0 0.0
    %940 = vmatprep.subr.mxu0 0.0
    %941 = vmatpush1.msra.mxu0 0.0
    %942 = vmatprep.subr.mxu0 0.0
    %943 = vmatpush1.msra.mxu0 0.0
    %944 = vmatprep.subr.mxu0 0.0
    %945 = vmatpush1.msra.mxu0 0.0
    %946 = vmatprep.subr.mxu0 0.0
    %947 = vmatpush1.msra.mxu0 0.0
    %948 = vmatprep.subr.mxu0 0.0
    %949 = vmatpush1.msra.mxu0 0.0
    %950 = vmatprep.subr.mxu0 0.0
    %951 = vmatpush1.msra.mxu0 0.0
    %952 = vmatprep.subr.mxu0 0.0
    %953 = vmatpush1.msra.mxu0 0.0
    %954 = vmatprep.subr.mxu0 0.0
    %955 = vmatpush1.msra.mxu0 0.0
    %956 = vmatprep.subr.mxu0 0.0
    %957 = vmatpush1.msra.mxu0 0.0
    %958 = vmatprep.mubr.f32.mxu0 0.0
    %959 = vmatmul.mubr.f32.gmra.mrb[0].mxu0 %v804
    %v960 = vpop.f32.mrb[0].mxu0
    %v961 = vadd.f32 %v796, %v960
    %v962 = vpop.f32.mrb[0].mxu0
    %963 = vmatprep.mubr.f32.mxu0 0.0
    %964 = vmatmul.mubr.f32.gmra.mrb[0].mxu0 %v806
    %v965 = vpop.f32.mrb[0].mxu0
    %v966 = vadd.f32 %v801, %v965
    %v967 = vpop.f32.mrb[0].mxu0
    %968 = vdwg.mxu0
    %v969 = vld [vmem:[%s400] sm:$0xff]
    %v970 = vld [vmem:[%s400 + $0x8] sm:$0xff]
    %v971 = vld [vmem:[%s400 + $0x10] sm:$0xff]
    %v972 = vld [vmem:[%s400 + $0x18] sm:$0xf]
    %v973 = vld [vmem:[%s400 + $0x20] sm:$0xf]
    %v974 = vld [vmem:[%s400 + $0x28] sm:$0xf]
    %v975 = vrot.slane %v620, 2
    %v976 = vrot.slane %v621, 2
    %v977 = vsel %vm407, %v975, %v976
    %v978 = vsel %vm68, %v977, 0
    %v980 = vsel %vm68, %v976, 0
    %v983 = vsel %vm73, %v972, 0
    %v986 = vsel %vm73, %v973, 0
    %v989 = vsel %vm73, %v974, 0
    %991 = vmatprep.subr.mxu0 %v970
    %992 = vmatpush1.msra.mxu0 %v969
    %993 = vmatprep.subr.mxu0 %v986
    %994 = vmatpush1.msra.mxu0 %v983
    %995 = vmatprep.subr.mxu0 0.0
    %996 = vmatpush1.msra.mxu0 0.0
    %997 = vmatprep.subr.mxu0 0.0
    %998 = vmatpush1.msra.mxu0 0.0
    %999 = vmatprep.subr.mxu0 0.0
    %1000 = vmatpush1.msra.mxu0 0.0
    %1001 = vmatprep.subr.mxu0 0.0
    %1002 = vmatpush1.msra.mxu0 0.0
    %1003 = vmatprep.subr.mxu0 0.0
    %1004 = vmatpush1.msra.mxu0 0.0
    %1005 = vmatprep.subr.mxu0 0.0
    %1006 = vmatpush1.msra.mxu0 0.0
    %1007 = vmatprep.subr.mxu0 0.0
    %1008 = vmatpush1.msra.mxu0 0.0
    %1009 = vmatprep.subr.mxu0 0.0
    %1010 = vmatpush1.msra.mxu0 0.0
    %1011 = vmatprep.subr.mxu0 0.0
    %1012 = vmatpush1.msra.mxu0 0.0
    %1013 = vmatprep.subr.mxu0 0.0
    %1014 = vmatpush1.msra.mxu0 0.0
    %1015 = vmatprep.subr.mxu0 0.0
    %1016 = vmatpush1.msra.mxu0 0.0
    %1017 = vmatprep.subr.mxu0 0.0
    %1018 = vmatpush1.msra.mxu0 0.0
    %1019 = vmatprep.subr.mxu0 0.0
    %1020 = vmatpush1.msra.mxu0 0.0
    %1021 = vmatprep.subr.mxu0 0.0
    %1022 = vmatpush1.msra.mxu0 0.0
    %1023 = vmatprep.subr.mxu0 0.0
    %1024 = vmatpush1.msra.mxu0 0.0
    %1025 = vmatprep.subr.mxu0 0.0
    %1026 = vmatpush1.msra.mxu0 0.0
    %1027 = vmatprep.subr.mxu0 0.0
    %1028 = vmatpush1.msra.mxu0 0.0
    %1029 = vmatprep.subr.mxu0 0.0
    %1030 = vmatpush1.msra.mxu0 0.0
    %1031 = vmatprep.subr.mxu0 0.0
    %1032 = vmatpush1.msra.mxu0 0.0
    %1033 = vmatprep.subr.mxu0 0.0
    %1034 = vmatpush1.msra.mxu0 0.0
    %1035 = vmatprep.subr.mxu0 0.0
    %1036 = vmatpush1.msra.mxu0 0.0
    %1037 = vmatprep.subr.mxu0 0.0
    %1038 = vmatpush1.msra.mxu0 0.0
    %1039 = vmatprep.subr.mxu0 0.0
    %1040 = vmatpush1.msra.mxu0 0.0
    %1041 = vmatprep.subr.mxu0 0.0
    %1042 = vmatpush1.msra.mxu0 0.0
    %1043 = vmatprep.subr.mxu0 0.0
    %1044 = vmatpush1.msra.mxu0 0.0
    %1045 = vmatprep.subr.mxu0 0.0
    %1046 = vmatpush1.msra.mxu0 0.0
    %1047 = vmatprep.subr.mxu0 0.0
    %1048 = vmatpush1.msra.mxu0 0.0
    %1049 = vmatprep.subr.mxu0 0.0
    %1050 = vmatpush1.msra.mxu0 0.0
    %1051 = vmatprep.subr.mxu0 0.0
    %1052 = vmatpush1.msra.mxu0 0.0
    %1053 = vmatprep.subr.mxu0 0.0
    %1054 = vmatpush1.msra.mxu0 0.0
    %1055 = vmatprep.mubr.f32.mxu0 0.0
    %1056 = vmatmul.mubr.f32.gmra.mrb[0].mxu0 %v978
    %v1057 = vpop.f32.mrb[0].mxu0
    %v1058 = vadd.f32 0.0, %v1057
    %v1059 = vpop.f32.mrb[0].mxu0
    %v1060 = vadd.f32 0.0, %v1059
    %1061 = vmatprep.mubr.f32.mxu0 0.0
    %1062 = vmatmul.mubr.f32.gmra.mrb[0].mxu0 %v980
    %v1063 = vpop.f32.mrb[0].mxu0
    %v1064 = vadd.f32 0.0, %v1063
    %v1065 = vpop.f32.mrb[0].mxu0
    %v1066 = vadd.f32 0.0, %v1065
    %1067 = vdwg.mxu0
    %1068 = vmatprep.subr.mxu0 0.0
    %1069 = vmatpush1.msra.mxu0 %v971
    %1070 = vmatprep.subr.mxu0 0.0
    %1071 = vmatpush1.msra.mxu0 %v989
    %1072 = vmatprep.subr.mxu0 0.0
    %1073 = vmatpush1.msra.mxu0 0.0
    %1074 = vmatprep.subr.mxu0 0.0
    %1075 = vmatpush1.msra.mxu0 0.0
    %1076 = vmatprep.subr.mxu0 0.0
    %1077 = vmatpush1.msra.mxu0 0.0
    %1078 = vmatprep.subr.mxu0 0.0
    %1079 = vmatpush1.msra.mxu0 0.0
    %1080 = vmatprep.subr.mxu0 0.0
    %1081 = vmatpush1.msra.mxu0 0.0
    %1082 = vmatprep.subr.mxu0 0.0
    %1083 = vmatpush1.msra.mxu0 0.0
    %1084 = vmatprep.subr.mxu0 0.0
    %1085 = vmatpush1.msra.mxu0 0.0
    %1086 = vmatprep.subr.mxu0 0.0
    %1087 = vmatpush1.msra.mxu0 0.0
    %1088 = vmatprep.subr.mxu0 0.0
    %1089 = vmatpush1.msra.mxu0 0.0
    %1090 = vmatprep.subr.mxu0 0.0
    %1091 = vmatpush1.msra.mxu0 0.0
    %1092 = vmatprep.subr.mxu0 0.0
    %1093 = vmatpush1.msra.mxu0 0.0
    %1094 = vmatprep.subr.mxu0 0.0
    %1095 = vmatpush1.msra.mxu0 0.0
    %1096 = vmatprep.subr.mxu0 0.0
    %1097 = vmatpush1.msra.mxu0 0.0
    %1098 = vmatprep.subr.mxu0 0.0
    %1099 = vmatpush1.msra.mxu0 0.0
    %1100 = vmatprep.subr.mxu0 0.0
    %1101 = vmatpush1.msra.mxu0 0.0
    %1102 = vmatprep.subr.mxu0 0.0
    %1103 = vmatpush1.msra.mxu0 0.0
    %1104 = vmatprep.subr.mxu0 0.0
    %1105 = vmatpush1.msra.mxu0 0.0
    %1106 = vmatprep.subr.mxu0 0.0
    %1107 = vmatpush1.msra.mxu0 0.0
    %1108 = vmatprep.subr.mxu0 0.0
    %1109 = vmatpush1.msra.mxu0 0.0
    %1110 = vmatprep.subr.mxu0 0.0
    %1111 = vmatpush1.msra.mxu0 0.0
    %1112 = vmatprep.subr.mxu0 0.0
    %1113 = vmatpush1.msra.mxu0 0.0
    %1114 = vmatprep.subr.mxu0 0.0
    %1115 = vmatpush1.msra.mxu0 0.0
    %1116 = vmatprep.subr.mxu0 0.0
    %1117 = vmatpush1.msra.mxu0 0.0
    %1118 = vmatprep.subr.mxu0 0.0
    %1119 = vmatpush1.msra.mxu0 0.0
    %1120 = vmatprep.subr.mxu0 0.0
    %1121 = vmatpush1.msra.mxu0 0.0
    %1122 = vmatprep.subr.mxu0 0.0
    %1123 = vmatpush1.msra.mxu0 0.0
    %1124 = vmatprep.subr.mxu0 0.0
    %1125 = vmatpush1.msra.mxu0 0.0
    %1126 = vmatprep.subr.mxu0 0.0
    %1127 = vmatpush1.msra.mxu0 0.0
    %1128 = vmatprep.subr.mxu0 0.0
    %1129 = vmatpush1.msra.mxu0 0.0
    %1130 = vmatprep.subr.mxu0 0.0
    %1131 = vmatpush1.msra.mxu0 0.0
    %1132 = vmatprep.mubr.f32.mxu0 0.0
    %1133 = vmatmul.mubr.f32.gmra.mrb[0].mxu0 %v978
    %v1134 = vpop.f32.mrb[0].mxu0
    %v1135 = vadd.f32 0.0, %v1134
    %v1136 = vpop.f32.mrb[0].mxu0
    %1137 = vmatprep.mubr.f32.mxu0 0.0
    %1138 = vmatmul.mubr.f32.gmra.mrb[0].mxu0 %v980
    %v1139 = vpop.f32.mrb[0].mxu0
    %v1140 = vadd.f32 0.0, %v1139
    %v1141 = vpop.f32.mrb[0].mxu0
    %1142 = vdwg.mxu0
    %v1143 = vadd.f32 %v884, %v1058
    %v1144 = vadd.f32 %v886, %v1060
    %v1145 = vadd.f32 %v961, %v1135
    %v1146 = vadd.f32 %v890, %v1064
    %v1147 = vadd.f32 %v892, %v1066
    %v1148 = vadd.f32 %v966, %v1140
    %v1149 = vld [vmem:[%s2] sm:$0x7]
    %v1151 = vlaneseq
    %v1152 = vshrl.u32 %v1151, 7
    %v1153 = vsub.s32 0, %v1152
    %v1154 = vrot.slane %v1149, %v1153
    %v1155 = vlaneseq
    %v1156 = vshrl.u32 %v1155, 7
    %v1157 = vsub.s32 1, %v1156
    %v1158 = vrot.slane %v1149, %v1157
    %v1159 = vlaneseq
    %v1160 = vshrl.u32 %v1159, 7
    %v1161 = vsub.s32 2, %v1160
    %v1162 = vrot.slane %v1149, %v1161
    %v1166 = vadd.f32 %v1143, %v1154
    %v1167 = vadd.f32 %v1144, %v1158
    %v1168 = vadd.f32 %v1145, %v1162
    %v1169 = vadd.f32 %v1146, %v1154
    %v1170 = vadd.f32 %v1147, %v1158
    %v1171 = vadd.f32 %v1148, %v1162
    %v1172 = vmax.f32 %v1166, 0.0
    %v1173 = vmax.f32 %v1167, 0.0
    %v1174 = vmax.f32 %v1168, 0.0
    %v1175 = vmax.f32 %v1169, 0.0
    %v1176 = vmax.f32 %v1170, 0.0
    %v1177 = vmax.f32 %v1171, 0.0
    %s1178 = scalar_lea.vmem [#allocation2], 48
    %1179 = vst [vmem:[%s1178] sm:$0xff] %v1172
    %1180 = vst [vmem:[%s1178 + $0x8] sm:$0xff] %v1173
    %1181 = vst.msk [vmem:[%s1178 + $0x10] sm:$0xff] %vm613, %v1174
    %1182 = vst [vmem:[%s1178 + $0x18] sm:$0x3] %v1175
    %1183 = vst [vmem:[%s1178 + $0x20] sm:$0x3] %v1176
    %1184 = vst.msk [vmem:[%s1178 + $0x28] sm:$0x3] %vm617, %v1177
    %v1185 = vld [vmem:[#allocation2] sm:$0xff]
    %v1186 = vld [vmem:[%s3] sm:$0xff]
    %v1187 = vld [vmem:[%s3 + $0x8] sm:$0xff]
    %v1188 = vld [vmem:[%s3 + $0x10] sm:$0xff]
    %v1189 = vld [vmem:[%s3 + $0x18] sm:$0xff]
    %v1190 = vld [vmem:[%s3 + $0x20] sm:$0xff]
    %v1191 = vld [vmem:[%s3 + $0x28] sm:$0xff]
    %v1192 = vld [vmem:[%s3 + $0x30] sm:$0xff]
    %v1193 = vld [vmem:[%s3 + $0x38] sm:$0xff]
    %v1194 = vld [vmem:[%s3 + $0x40] sm:$0xff]
    %v1195 = vld [vmem:[%s3 + $0x48] sm:$0xff]
    %v1196 = vld [vmem:[%s3 + $0x50] sm:$0xff]
    %v1197 = vld [vmem:[%s3 + $0x58] sm:$0xff]
    %v1198 = vld [vmem:[#allocation2] sm:$0xfe]
    %v1199 = vld [vmem:[#allocation2 + $0x18] sm:$0x1]
    %s1200 = scalar_lea.vmem %s3, 96
    %v1201 = vld [vmem:[%s1200] sm:$0xff]
    %v1202 = vld [vmem:[%s1200 + $0x8] sm:$0xff]
    %v1203 = vld [vmem:[%s1200 + $0x10] sm:$0xff]
    %v1204 = vld [vmem:[%s1200 + $0x18] sm:$0xff]
    %v1205 = vld [vmem:[%s1200 + $0x20] sm:$0xff]
    %v1206 = vld [vmem:[%s1200 + $0x28] sm:$0xff]
    %v1207 = vld [vmem:[%s1200 + $0x30] sm:$0xff]
    %v1208 = vld [vmem:[%s1200 + $0x38] sm:$0xff]
    %v1209 = vld [vmem:[%s1200 + $0x40] sm:$0xff]
    %v1210 = vld [vmem:[%s1200 + $0x48] sm:$0xff]
    %v1211 = vld [vmem:[%s1200 + $0x50] sm:$0xff]
    %v1212 = vld [vmem:[%s1200 + $0x58] sm:$0xff]
    %v1215 = vrot.slane %v1198, 1
    %v1216 = vrot.slane %v1199, 1
    %v1217 = vsel %vm64, %v1215, %v1216
    %vm1218 = vcmask 785408
    %v1219 = vsel %vm1218, %v1217, 0
    %1221 = vmatprep.subr.mxu0 0.0
    %1222 = vmatpush1.msra.mxu0 %v1201
    %1223 = vmatprep.subr.mxu0 0.0
    %1224 = vmatpush1.msra.mxu0 %v1202
    %1225 = vmatprep.subr.mxu0 0.0
    %1226 = vmatpush1.msra.mxu0 %v1203
    %1227 = vmatprep.subr.mxu0 0.0
    %1228 = vmatpush1.msra.mxu0 %v1204
    %1229 = vmatprep.subr.mxu0 0.0
    %1230 = vmatpush1.msra.mxu0 %v1205
    %1231 = vmatprep.subr.mxu0 0.0
    %1232 = vmatpush1.msra.mxu0 %v1206
    %1233 = vmatprep.subr.mxu0 0.0
    %1234 = vmatpush1.msra.mxu0 %v1207
    %1235 = vmatprep.subr.mxu0 0.0
    %1236 = vmatpush1.msra.mxu0 %v1208
    %1237 = vmatprep.subr.mxu0 0.0
    %1238 = vmatpush1.msra.mxu0 %v1209
    %1239 = vmatprep.subr.mxu0 0.0
    %1240 = vmatpush1.msra.mxu0 %v1210
    %1241 = vmatprep.subr.mxu0 0.0
    %1242 = vmatpush1.msra.mxu0 %v1211
    %1243 = vmatprep.subr.mxu0 0.0
    %1244 = vmatpush1.msra.mxu0 %v1212
    %1245 = vmatprep.subr.mxu0 0.0
    %1246 = vmatpush1.msra.mxu0 0.0
    %1247 = vmatprep.subr.mxu0 0.0
    %1248 = vmatpush1.msra.mxu0 0.0
    %1249 = vmatprep.subr.mxu0 0.0
    %1250 = vmatpush1.msra.mxu0 0.0
    %1251 = vmatprep.subr.mxu0 0.0
    %1252 = vmatpush1.msra.mxu0 0.0
    %1253 = vmatprep.subr.mxu0 0.0
    %1254 = vmatpush1.msra.mxu0 0.0
    %1255 = vmatprep.subr.mxu0 0.0
    %1256 = vmatpush1.msra.mxu0 0.0
    %1257 = vmatprep.subr.mxu0 0.0
    %1258 = vmatpush1.msra.mxu0 0.0
    %1259 = vmatprep.subr.mxu0 0.0
    %1260 = vmatpush1.msra.mxu0 0.0
    %1261 = vmatprep.subr.mxu0 0.0
    %1262 = vmatpush1.msra.mxu0 0.0
    %1263 = vmatprep.subr.mxu0 0.0
    %1264 = vmatpush1.msra.mxu0 0.0
    %1265 = vmatprep.subr.mxu0 0.0
    %1266 = vmatpush1.msra.mxu0 0.0
    %1267 = vmatprep.subr.mxu0 0.0
    %1268 = vmatpush1.msra.mxu0 0.0
    %1269 = vmatprep.subr.mxu0 0.0
    %1270 = vmatpush1.msra.mxu0 0.0
    %1271 = vmatprep.subr.mxu0 0.0
    %1272 = vmatpush1.msra.mxu0 0.0
    %1273 = vmatprep.subr.mxu0 0.0
    %1274 = vmatpush1.msra.mxu0 0.0
    %1275 = vmatprep.subr.mxu0 0.0
    %1276 = vmatpush1.msra.mxu0 0.0
    %1277 = vmatprep.subr.mxu0 0.0
    %1278 = vmatpush1.msra.mxu0 0.0
    %1279 = vmatprep.subr.mxu0 0.0
    %1280 = vmatpush1.msra.mxu0 0.0
    %1281 = vmatprep.subr.mxu0 0.0
    %1282 = vmatpush1.msra.mxu0 0.0
    %1283 = vmatprep.subr.mxu0 0.0
    %1284 = vmatpush1.msra.mxu0 0.0
    %1285 = vmatprep.mubr.f32.mxu0 0.0
    %1286 = vmatmul.mubr.f32.gmra.mrb[0].mxu0 %v1219
    %v1287 = vpop.f32.mrb[0].mxu0
    %v1288 = vadd.f32 0.0, %v1287
    %v1289 = vpop.f32.mrb[0].mxu0
    %1290 = vdwg.mxu0
    %v1292 = vsel %vm1218, %v1185, 0
    %1294 = vmatprep.subr.mxu0 0.0
    %1295 = vmatpush1.msra.mxu0 %v1186
    %1296 = vmatprep.subr.mxu0 0.0
    %1297 = vmatpush1.msra.mxu0 %v1187
    %1298 = vmatprep.subr.mxu0 0.0
    %1299 = vmatpush1.msra.mxu0 %v1188
    %1300 = vmatprep.subr.mxu0 0.0
    %1301 = vmatpush1.msra.mxu0 %v1189
    %1302 = vmatprep.subr.mxu0 0.0
    %1303 = vmatpush1.msra.mxu0 %v1190
    %1304 = vmatprep.subr.mxu0 0.0
    %1305 = vmatpush1.msra.mxu0 %v1191
    %1306 = vmatprep.subr.mxu0 0.0
    %1307 = vmatpush1.msra.mxu0 %v1192
    %1308 = vmatprep.subr.mxu0 0.0
    %1309 = vmatpush1.msra.mxu0 %v1193
    %1310 = vmatprep.subr.mxu0 0.0
    %1311 = vmatpush1.msra.mxu0 %v1194
    %1312 = vmatprep.subr.mxu0 0.0
    %1313 = vmatpush1.msra.mxu0 %v1195
    %1314 = vmatprep.subr.mxu0 0.0
    %1315 = vmatpush1.msra.mxu0 %v1196
    %1316 = vmatprep.subr.mxu0 0.0
    %1317 = vmatpush1.msra.mxu0 %v1197
    %1318 = vmatprep.subr.mxu0 0.0
    %1319 = vmatpush1.msra.mxu0 0.0
    %1320 = vmatprep.subr.mxu0 0.0
    %1321 = vmatpush1.msra.mxu0 0.0
    %1322 = vmatprep.subr.mxu0 0.0
    %1323 = vmatpush1.msra.mxu0 0.0
    %1324 = vmatprep.subr.mxu0 0.0
    %1325 = vmatpush1.msra.mxu0 0.0
    %1326 = vmatprep.subr.mxu0 0.0
    %1327 = vmatpush1.msra.mxu0 0.0
    %1328 = vmatprep.subr.mxu0 0.0
    %1329 = vmatpush1.msra.mxu0 0.0
    %1330 = vmatprep.subr.mxu0 0.0
    %1331 = vmatpush1.msra.mxu0 0.0
    %1332 = vmatprep.subr.mxu0 0.0
    %1333 = vmatpush1.msra.mxu0 0.0
    %1334 = vmatprep.subr.mxu0 0.0
    %1335 = vmatpush1.msra.mxu0 0.0
    %1336 = vmatprep.subr.mxu0 0.0
    %1337 = vmatpush1.msra.mxu0 0.0
    %1338 = vmatprep.subr.mxu0 0.0
    %1339 = vmatpush1.msra.mxu0 0.0
    %1340 = vmatprep.subr.mxu0 0.0
    %1341 = vmatpush1.msra.mxu0 0.0
    %1342 = vmatprep.subr.mxu0 0.0
    %1343 = vmatpush1.msra.mxu0 0.0
    %1344 = vmatprep.subr.mxu0 0.0
    %1345 = vmatpush1.msra.mxu0 0.0
    %1346 = vmatprep.subr.mxu0 0.0
    %1347 = vmatpush1.msra.mxu0 0.0
    %1348 = vmatprep.subr.mxu0 0.0
    %1349 = vmatpush1.msra.mxu0 0.0
    %1350 = vmatprep.subr.mxu0 0.0
    %1351 = vmatpush1.msra.mxu0 0.0
    %1352 = vmatprep.subr.mxu0 0.0
    %1353 = vmatpush1.msra.mxu0 0.0
    %1354 = vmatprep.subr.mxu0 0.0
    %1355 = vmatpush1.msra.mxu0 0.0
    %1356 = vmatprep.subr.mxu0 0.0
    %1357 = vmatpush1.msra.mxu0 0.0
    %1358 = vmatprep.mubr.f32.mxu0 0.0
    %1359 = vmatmul.mubr.f32.gmra.mrb[0].mxu0 %v1292
    %v1360 = vpop.f32.mrb[0].mxu0
    %v1361 = vadd.f32 %v1288, %v1360
    %v1362 = vpop.f32.mrb[0].mxu0
    %1363 = vdwg.mxu0
    %v1364 = vld [vmem:[#allocation2] sm:$0xfc]
    %v1365 = vld [vmem:[#allocation2 + $0x18] sm:$0x3]
    %s1366 = scalar_lea.vmem %s3, 192
    %v1367 = vld [vmem:[%s1366] sm:$0xff]
    %v1368 = vld [vmem:[%s1366 + $0x8] sm:$0xff]
    %v1369 = vld [vmem:[%s1366 + $0x10] sm:$0xff]
    %v1370 = vld [vmem:[%s1366 + $0x18] sm:$0xff]
    %v1371 = vld [vmem:[%s1366 + $0x20] sm:$0xff]
    %v1372 = vld [vmem:[%s1366 + $0x28] sm:$0xff]
    %v1373 = vld [vmem:[%s1366 + $0x30] sm:$0xff]
    %v1374 = vld [vmem:[%s1366 + $0x38] sm:$0xff]
    %v1375 = vld [vmem:[%s1366 + $0x40] sm:$0xff]
    %v1376 = vld [vmem:[%s1366 + $0x48] sm:$0xff]
    %v1377 = vld [vmem:[%s1366 + $0x50] sm:$0xff]
    %v1378 = vld [vmem:[%s1366 + $0x58] sm:$0xff]
    %v1381 = vrot.slane %v1364, 2
    %v1382 = vrot.slane %v1365, 2
    %v1383 = vsel %vm407, %v1381, %v1382
    %v1384 = vsel %vm1218, %v1383, 0
    %1386 = vmatprep.subr.mxu0 0.0
    %1387 = vmatpush1.msra.mxu0 %v1367
    %1388 = vmatprep.subr.mxu0 0.0
    %1389 = vmatpush1.msra.mxu0 %v1368
    %1390 = vmatprep.subr.mxu0 0.0
    %1391 = vmatpush1.msra.mxu0 %v1369
    %1392 = vmatprep.subr.mxu0 0.0
    %1393 = vmatpush1.msra.mxu0 %v1370
    %1394 = vmatprep.subr.mxu0 0.0
    %1395 = vmatpush1.msra.mxu0 %v1371
    %1396 = vmatprep.subr.mxu0 0.0
    %1397 = vmatpush1.msra.mxu0 %v1372
    %1398 = vmatprep.subr.mxu0 0.0
    %1399 = vmatpush1.msra.mxu0 %v1373
    %1400 = vmatprep.subr.mxu0 0.0
    %1401 = vmatpush1.msra.mxu0 %v1374
    %1402 = vmatprep.subr.mxu0 0.0
    %1403 = vmatpush1.msra.mxu0 %v1375
    %1404 = vmatprep.subr.mxu0 0.0
    %1405 = vmatpush1.msra.mxu0 %v1376
    %1406 = vmatprep.subr.mxu0 0.0
    %1407 = vmatpush1.msra.mxu0 %v1377
    %1408 = vmatprep.subr.mxu0 0.0
    %1409 = vmatpush1.msra.mxu0 %v1378
    %1410 = vmatprep.subr.mxu0 0.0
    %1411 = vmatpush1.msra.mxu0 0.0
    %1412 = vmatprep.subr.mxu0 0.0
    %1413 = vmatpush1.msra.mxu0 0.0
    %1414 = vmatprep.subr.mxu0 0.0
    %1415 = vmatpush1.msra.mxu0 0.0
    %1416 = vmatprep.subr.mxu0 0.0
    %1417 = vmatpush1.msra.mxu0 0.0
    %1418 = vmatprep.subr.mxu0 0.0
    %1419 = vmatpush1.msra.mxu0 0.0
    %1420 = vmatprep.subr.mxu0 0.0
    %1421 = vmatpush1.msra.mxu0 0.0
    %1422 = vmatprep.subr.mxu0 0.0
    %1423 = vmatpush1.msra.mxu0 0.0
    %1424 = vmatprep.subr.mxu0 0.0
    %1425 = vmatpush1.msra.mxu0 0.0
    %1426 = vmatprep.subr.mxu0 0.0
    %1427 = vmatpush1.msra.mxu0 0.0
    %1428 = vmatprep.subr.mxu0 0.0
    %1429 = vmatpush1.msra.mxu0 0.0
    %1430 = vmatprep.subr.mxu0 0.0
    %1431 = vmatpush1.msra.mxu0 0.0
    %1432 = vmatprep.subr.mxu0 0.0
    %1433 = vmatpush1.msra.mxu0 0.0
    %1434 = vmatprep.subr.mxu0 0.0
    %1435 = vmatpush1.msra.mxu0 0.0
    %1436 = vmatprep.subr.mxu0 0.0
    %1437 = vmatpush1.msra.mxu0 0.0
    %1438 = vmatprep.subr.mxu0 0.0
    %1439 = vmatpush1.msra.mxu0 0.0
    %1440 = vmatprep.subr.mxu0 0.0
    %1441 = vmatpush1.msra.mxu0 0.0
    %1442 = vmatprep.subr.mxu0 0.0
    %1443 = vmatpush1.msra.mxu0 0.0
    %1444 = vmatprep.subr.mxu0 0.0
    %1445 = vmatpush1.msra.mxu0 0.0
    %1446 = vmatprep.subr.mxu0 0.0
    %1447 = vmatpush1.msra.mxu0 0.0
    %1448 = vmatprep.subr.mxu0 0.0
    %1449 = vmatpush1.msra.mxu0 0.0
    %1450 = vmatprep.mubr.f32.mxu0 0.0
    %1451 = vmatmul.mubr.f32.gmra.mrb[0].mxu0 %v1384
    %v1452 = vpop.f32.mrb[0].mxu0
    %v1453 = vadd.f32 0.0, %v1452
    %v1454 = vpop.f32.mrb[0].mxu0
    %1455 = vdwg.mxu0
    %v1456 = vadd.f32 %v1361, %v1453
    %v1457 = vld [vmem:[%s4] sm:$0x1]
    %v1459 = vlaneseq
    %v1460 = vshrl.u32 %v1459, 7
    %v1461 = vsub.s32 0, %v1460
    %v1462 = vrot.slane %v1457, %v1461
    %v1464 = vadd.f32 %v1456, %v1462
    %v1465 = vmax.f32 %v1464, 0.0
    %1466 = vrot.lane.b32.xlu0 %v1217, 96
    %v1467 = vpop.permute.xlu0 %1466
    %v1468 = vsel %vm1218, %v1467, 0
    %1470 = vmatprep.subr.mxu0 0.0
    %1471 = vmatpush1.msra.mxu0 %v1201
    %1472 = vmatprep.subr.mxu0 0.0
    %1473 = vmatpush1.msra.mxu0 %v1202
    %1474 = vmatprep.subr.mxu0 0.0
    %1475 = vmatpush1.msra.mxu0 %v1203
    %1476 = vmatprep.subr.mxu0 0.0
    %1477 = vmatpush1.msra.mxu0 %v1204
    %1478 = vmatprep.subr.mxu0 0.0
    %1479 = vmatpush1.msra.mxu0 %v1205
    %1480 = vmatprep.subr.mxu0 0.0
    %1481 = vmatpush1.msra.mxu0 %v1206
    %1482 = vmatprep.subr.mxu0 0.0
    %1483 = vmatpush1.msra.mxu0 %v1207
    %1484 = vmatprep.subr.mxu0 0.0
    %1485 = vmatpush1.msra.mxu0 %v1208
    %1486 = vmatprep.subr.mxu0 0.0
    %1487 = vmatpush1.msra.mxu0 %v1209
    %1488 = vmatprep.subr.mxu0 0.0
    %1489 = vmatpush1.msra.mxu0 %v1210
    %1490 = vmatprep.subr.mxu0 0.0
    %1491 = vmatpush1.msra.mxu0 %v1211
    %1492 = vmatprep.subr.mxu0 0.0
    %1493 = vmatpush1.msra.mxu0 %v1212
    %1494 = vmatprep.subr.mxu0 0.0
    %1495 = vmatpush1.msra.mxu0 0.0
    %1496 = vmatprep.subr.mxu0 0.0
    %1497 = vmatpush1.msra.mxu0 0.0
    %1498 = vmatprep.subr.mxu0 0.0
    %1499 = vmatpush1.msra.mxu0 0.0
    %1500 = vmatprep.subr.mxu0 0.0
    %1501 = vmatpush1.msra.mxu0 0.0
    %1502 = vmatprep.subr.mxu0 0.0
    %1503 = vmatpush1.msra.mxu0 0.0
    %1504 = vmatprep.subr.mxu0 0.0
    %1505 = vmatpush1.msra.mxu0 0.0
    %1506 = vmatprep.subr.mxu0 0.0
    %1507 = vmatpush1.msra.mxu0 0.0
    %1508 = vmatprep.subr.mxu0 0.0
    %1509 = vmatpush1.msra.mxu0 0.0
    %1510 = vmatprep.subr.mxu0 0.0
    %1511 = vmatpush1.msra.mxu0 0.0
    %1512 = vmatprep.subr.mxu0 0.0
    %1513 = vmatpush1.msra.mxu0 0.0
    %1514 = vmatprep.subr.mxu0 0.0
    %1515 = vmatpush1.msra.mxu0 0.0
    %1516 = vmatprep.subr.mxu0 0.0
    %1517 = vmatpush1.msra.mxu0 0.0
    %1518 = vmatprep.subr.mxu0 0.0
    %1519 = vmatpush1.msra.mxu0 0.0
    %1520 = vmatprep.subr.mxu0 0.0
    %1521 = vmatpush1.msra.mxu0 0.0
    %1522 = vmatprep.subr.mxu0 0.0
    %1523 = vmatpush1.msra.mxu0 0.0
    %1524 = vmatprep.subr.mxu0 0.0
    %1525 = vmatpush1.msra.mxu0 0.0
    %1526 = vmatprep.subr.mxu0 0.0
    %1527 = vmatpush1.msra.mxu0 0.0
    %1528 = vmatprep.subr.mxu0 0.0
    %1529 = vmatpush1.msra.mxu0 0.0
    %1530 = vmatprep.subr.mxu0 0.0
    %1531 = vmatpush1.msra.mxu0 0.0
    %1532 = vmatprep.subr.mxu0 0.0
    %1533 = vmatpush1.msra.mxu0 0.0
    %1534 = vmatprep.mubr.f32.mxu0 0.0
    %1535 = vmatmul.mubr.f32.gmra.mrb[0].mxu0 %v1468
    %v1536 = vpop.f32.mrb[0].mxu0
    %v1537 = vadd.f32 0.0, %v1536
    %v1538 = vpop.f32.mrb[0].mxu0
    %1539 = vdwg.mxu0
    %1540 = vrot.lane.b32.xlu0 %v1185, 96
    %v1541 = vpop.permute.xlu0 %1540
    %v1542 = vsel %vm1218, %v1541, 0
    %1544 = vmatprep.subr.mxu0 0.0
    %1545 = vmatpush1.msra.mxu0 %v1186
    %1546 = vmatprep.subr.mxu0 0.0
    %1547 = vmatpush1.msra.mxu0 %v1187
    %1548 = vmatprep.subr.mxu0 0.0
    %1549 = vmatpush1.msra.mxu0 %v1188
    %1550 = vmatprep.subr.mxu0 0.0
    %1551 = vmatpush1.msra.mxu0 %v1189
    %1552 = vmatprep.subr.mxu0 0.0
    %1553 = vmatpush1.msra.mxu0 %v1190
    %1554 = vmatprep.subr.mxu0 0.0
    %1555 = vmatpush1.msra.mxu0 %v1191
    %1556 = vmatprep.subr.mxu0 0.0
    %1557 = vmatpush1.msra.mxu0 %v1192
    %1558 = vmatprep.subr.mxu0 0.0
    %1559 = vmatpush1.msra.mxu0 %v1193
    %1560 = vmatprep.subr.mxu0 0.0
    %1561 = vmatpush1.msra.mxu0 %v1194
    %1562 = vmatprep.subr.mxu0 0.0
    %1563 = vmatpush1.msra.mxu0 %v1195
    %1564 = vmatprep.subr.mxu0 0.0
    %1565 = vmatpush1.msra.mxu0 %v1196
    %1566 = vmatprep.subr.mxu0 0.0
    %1567 = vmatpush1.msra.mxu0 %v1197
    %1568 = vmatprep.subr.mxu0 0.0
    %1569 = vmatpush1.msra.mxu0 0.0
    %1570 = vmatprep.subr.mxu0 0.0
    %1571 = vmatpush1.msra.mxu0 0.0
    %1572 = vmatprep.subr.mxu0 0.0
    %1573 = vmatpush1.msra.mxu0 0.0
    %1574 = vmatprep.subr.mxu0 0.0
    %1575 = vmatpush1.msra.mxu0 0.0
    %1576 = vmatprep.subr.mxu0 0.0
    %1577 = vmatpush1.msra.mxu0 0.0
    %1578 = vmatprep.subr.mxu0 0.0
    %1579 = vmatpush1.msra.mxu0 0.0
    %1580 = vmatprep.subr.mxu0 0.0
    %1581 = vmatpush1.msra.mxu0 0.0
    %1582 = vmatprep.subr.mxu0 0.0
    %1583 = vmatpush1.msra.mxu0 0.0
    %1584 = vmatprep.subr.mxu0 0.0
    %1585 = vmatpush1.msra.mxu0 0.0
    %1586 = vmatprep.subr.mxu0 0.0
    %1587 = vmatpush1.msra.mxu0 0.0
    %1588 = vmatprep.subr.mxu0 0.0
    %1589 = vmatpush1.msra.mxu0 0.0
    %1590 = vmatprep.subr.mxu0 0.0
    %1591 = vmatpush1.msra.mxu0 0.0
    %1592 = vmatprep.subr.mxu0 0.0
    %1593 = vmatpush1.msra.mxu0 0.0
    %1594 = vmatprep.subr.mxu0 0.0
    %1595 = vmatpush1.msra.mxu0 0.0
    %1596 = vmatprep.subr.mxu0 0.0
    %1597 = vmatpush1.msra.mxu0 0.0
    %1598 = vmatprep.subr.mxu0 0.0
    %1599 = vmatpush1.msra.mxu0 0.0
    %1600 = vmatprep.subr.mxu0 0.0
    %1601 = vmatpush1.msra.mxu0 0.0
    %1602 = vmatprep.subr.mxu0 0.0
    %1603 = vmatpush1.msra.mxu0 0.0
    %1604 = vmatprep.subr.mxu0 0.0
    %1605 = vmatpush1.msra.mxu0 0.0
    %1606 = vmatprep.subr.mxu0 0.0
    %1607 = vmatpush1.msra.mxu0 0.0
    %1608 = vmatprep.mubr.f32.mxu0 0.0
    %1609 = vmatmul.mubr.f32.gmra.mrb[0].mxu0 %v1542
    %v1610 = vpop.f32.mrb[0].mxu0
    %v1611 = vadd.f32 %v1537, %v1610
    %v1612 = vpop.f32.mrb[0].mxu0
    %1613 = vdwg.mxu0
    %1614 = vrot.lane.b32.xlu0 %v1383, 96
    %v1615 = vpop.permute.xlu0 %1614
    %v1616 = vsel %vm1218, %v1615, 0
    %1618 = vmatprep.subr.mxu0 0.0
    %1619 = vmatpush1.msra.mxu0 %v1367
    %1620 = vmatprep.subr.mxu0 0.0
    %1621 = vmatpush1.msra.mxu0 %v1368
    %1622 = vmatprep.subr.mxu0 0.0
    %1623 = vmatpush1.msra.mxu0 %v1369
    %1624 = vmatprep.subr.mxu0 0.0
    %1625 = vmatpush1.msra.mxu0 %v1370
    %1626 = vmatprep.subr.mxu0 0.0
    %1627 = vmatpush1.msra.mxu0 %v1371
    %1628 = vmatprep.subr.mxu0 0.0
    %1629 = vmatpush1.msra.mxu0 %v1372
    %1630 = vmatprep.subr.mxu0 0.0
    %1631 = vmatpush1.msra.mxu0 %v1373
    %1632 = vmatprep.subr.mxu0 0.0
    %1633 = vmatpush1.msra.mxu0 %v1374
    %1634 = vmatprep.subr.mxu0 0.0
    %1635 = vmatpush1.msra.mxu0 %v1375
    %1636 = vmatprep.subr.mxu0 0.0
    %1637 = vmatpush1.msra.mxu0 %v1376
    %1638 = vmatprep.subr.mxu0 0.0
    %1639 = vmatpush1.msra.mxu0 %v1377
    %1640 = vmatprep.subr.mxu0 0.0
    %1641 = vmatpush1.msra.mxu0 %v1378
    %1642 = vmatprep.subr.mxu0 0.0
    %1643 = vmatpush1.msra.mxu0 0.0
    %1644 = vmatprep.subr.mxu0 0.0
    %1645 = vmatpush1.msra.mxu0 0.0
    %1646 = vmatprep.subr.mxu0 0.0
    %1647 = vmatpush1.msra.mxu0 0.0
    %1648 = vmatprep.subr.mxu0 0.0
    %1649 = vmatpush1.msra.mxu0 0.0
    %1650 = vmatprep.subr.mxu0 0.0
    %1651 = vmatpush1.msra.mxu0 0.0
    %1652 = vmatprep.subr.mxu0 0.0
    %1653 = vmatpush1.msra.mxu0 0.0
    %1654 = vmatprep.subr.mxu0 0.0
    %1655 = vmatpush1.msra.mxu0 0.0
    %1656 = vmatprep.subr.mxu0 0.0
    %1657 = vmatpush1.msra.mxu0 0.0
    %1658 = vmatprep.subr.mxu0 0.0
    %1659 = vmatpush1.msra.mxu0 0.0
    %1660 = vmatprep.subr.mxu0 0.0
    %1661 = vmatpush1.msra.mxu0 0.0
    %1662 = vmatprep.subr.mxu0 0.0
    %1663 = vmatpush1.msra.mxu0 0.0
    %1664 = vmatprep.subr.mxu0 0.0
    %1665 = vmatpush1.msra.mxu0 0.0
    %1666 = vmatprep.subr.mxu0 0.0
    %1667 = vmatpush1.msra.mxu0 0.0
    %1668 = vmatprep.subr.mxu0 0.0
    %1669 = vmatpush1.msra.mxu0 0.0
    %1670 = vmatprep.subr.mxu0 0.0
    %1671 = vmatpush1.msra.mxu0 0.0
    %1672 = vmatprep.subr.mxu0 0.0
    %1673 = vmatpush1.msra.mxu0 0.0
    %1674 = vmatprep.subr.mxu0 0.0
    %1675 = vmatpush1.msra.mxu0 0.0
    %1676 = vmatprep.subr.mxu0 0.0
    %1677 = vmatpush1.msra.mxu0 0.0
    %1678 = vmatprep.subr.mxu0 0.0
    %1679 = vmatpush1.msra.mxu0 0.0
    %1680 = vmatprep.subr.mxu0 0.0
    %1681 = vmatpush1.msra.mxu0 0.0
    %1682 = vmatprep.mubr.f32.mxu0 0.0
    %1683 = vmatmul.mubr.f32.gmra.mrb[0].mxu0 %v1616
    %v1684 = vpop.f32.mrb[0].mxu0
    %v1685 = vadd.f32 0.0, %v1684
    %v1686 = vpop.f32.mrb[0].mxu0
    %1687 = vdwg.mxu0
    %v1688 = vadd.f32 %v1611, %v1685
    %v1689 = vadd.f32 %v1688, %v1462
    %v1690 = vmax.f32 %v1689, 0.0
    %v1691 = vmax.f32 %v1465, %v1690
    %v1693 = vrot.slane %v1691, 1
    %v1695 = vmax.f32 %v1691, %v1693
    %vm1696 = vcmask 516096
    %1697 = vst.msk [vmem:[#allocation3] sm:$0x1] %vm1696, %v1695
    %v1700 = vunpack.c.l.s4 1983009808
    %v1701 = vunpack.c.0.s8 %v1700
    %v1702 = vlaneseq
    %v1703 = vshrl.u32 %v1702, 7
    %v1704 = vsub.s32 %v1701, %v1703
    %v1705 = vrot.slane %v1695, %v1704
    %v1706 = vcombine.high %v1705, %v1705
    %1708 = vst.msk [vmem:[#allocation3 + $0x4] sm:$0x1] %vm1696, %v1706
    %v1709 = vcombine.high %v1695, %v1695
    %v1711 = vunpack.c.l.s4 1983009808
    %v1712 = vunpack.c.0.s8 %v1711
    %v1713 = vlaneseq
    %v1714 = vshrl.u32 %v1713, 7
    %v1715 = vsub.s32 %v1712, %v1714
    %v1716 = vrot.slane %v1709, %v1715
    %1718 = vst.msk [vmem:[#allocation3 + $0x8] sm:$0x1] %vm1696, %v1716
    %v1719 = vcombine.high %v1716, %v1716
    %1721 = vst.msk [vmem:[#allocation3 + $0xc] sm:$0x1] %vm1696, %v1719
    %v1722 = vld [vmem:[#allocation2] sm:$0xff]
    %v1723 = vld [vmem:[#allocation2 + $0x8] sm:$0xff]
    %v1724 = vld [vmem:[%s3] sm:$0xff]
    %v1725 = vld [vmem:[%s3 + $0x8] sm:$0xff]
    %v1726 = vld [vmem:[%s3 + $0x10] sm:$0xff]
    %v1727 = vld [vmem:[%s3 + $0x18] sm:$0xff]
    %v1728 = vld [vmem:[%s3 + $0x20] sm:$0xff]
    %v1729 = vld [vmem:[%s3 + $0x28] sm:$0xff]
    %v1730 = vld [vmem:[%s3 + $0x30] sm:$0xff]
    %v1731 = vld [vmem:[%s3 + $0x38] sm:$0xff]
    %v1732 = vld [vmem:[%s3 + $0x40] sm:$0xff]
    %v1733 = vld [vmem:[%s3 + $0x48] sm:$0xff]
    %v1734 = vld [vmem:[%s3 + $0x50] sm:$0xff]
    %v1735 = vld [vmem:[%s3 + $0x58] sm:$0xff]
    %v1736 = vld [vmem:[#allocation2] sm:$0xfe]
    %v1737 = vld [vmem:[#allocation2 + $0x8] sm:$0xfe]
    %v1738 = vld [vmem:[#allocation2 + $0x18] sm:$0x1]
    %v1739 = vld [vmem:[#allocation2 + $0x20] sm:$0x1]
    %v1740 = vld [vmem:[%s1200] sm:$0xff]
    %v1741 = vld [vmem:[%s1200 + $0x8] sm:$0xff]
    %v1742 = vld [vmem:[%s1200 + $0x10] sm:$0xff]
    %v1743 = vld [vmem:[%s1200 + $0x18] sm:$0xff]
    %v1744 = vld [vmem:[%s1200 + $0x20] sm:$0xff]
    %v1745 = vld [vmem:[%s1200 + $0x28] sm:$0xff]
    %v1746 = vld [vmem:[%s1200 + $0x30] sm:$0xff]
    %v1747 = vld [vmem:[%s1200 + $0x38] sm:$0xff]
    %v1748 = vld [vmem:[%s1200 + $0x40] sm:$0xff]
    %v1749 = vld [vmem:[%s1200 + $0x48] sm:$0xff]
    %v1750 = vld [vmem:[%s1200 + $0x50] sm:$0xff]
    %v1751 = vld [vmem:[%s1200 + $0x58] sm:$0xff]
    %v1756 = vrot.slane %v1736, 1
    %v1757 = vrot.slane %v1738, 1
    %v1758 = vsel %vm64, %v1756, %v1757
    %v1759 = vrot.slane %v1737, 1
    %v1760 = vrot.slane %v1739, 1
    %v1761 = vsel %vm64, %v1759, %v1760
    %1762 = vrot.lane.b32.xlu0 %v1758, 64
    %v1763 = vpop.permute.xlu0 %1762
    %1764 = vrot.lane.b32.xlu0 %v1761, 64
    %v1765 = vpop.permute.xlu0 %1764
    %v1766 = vsel %vm613, %v1763, %v1765
    %v1767 = vsel %vm1218, %v1766, 0
    %1769 = vmatprep.subr.mxu0 0.0
    %1770 = vmatpush1.msra.mxu0 %v1740
    %1771 = vmatprep.subr.mxu0 0.0
    %1772 = vmatpush1.msra.mxu0 %v1741
    %1773 = vmatprep.subr.mxu0 0.0
    %1774 = vmatpush1.msra.mxu0 %v1742
    %1775 = vmatprep.subr.mxu0 0.0
    %1776 = vmatpush1.msra.mxu0 %v1743
    %1777 = vmatprep.subr.mxu0 0.0
    %1778 = vmatpush1.msra.mxu0 %v1744
    %1779 = vmatprep.subr.mxu0 0.0
    %1780 = vmatpush1.msra.mxu0 %v1745
    %1781 = vmatprep.subr.mxu0 0.0
    %1782 = vmatpush1.msra.mxu0 %v1746
    %1783 = vmatprep.subr.mxu0 0.0
    %1784 = vmatpush1.msra.mxu0 %v1747
    %1785 = vmatprep.subr.mxu0 0.0
    %1786 = vmatpush1.msra.mxu0 %v1748
    %1787 = vmatprep.subr.mxu0 0.0
    %1788 = vmatpush1.msra.mxu0 %v1749
    %1789 = vmatprep.subr.mxu0 0.0
    %1790 = vmatpush1.msra.mxu0 %v1750
    %1791 = vmatprep.subr.mxu0 0.0
    %1792 = vmatpush1.msra.mxu0 %v1751
    %1793 = vmatprep.subr.mxu0 0.0
    %1794 = vmatpush1.msra.mxu0 0.0
    %1795 = vmatprep.subr.mxu0 0.0
    %1796 = vmatpush1.msra.mxu0 0.0
    %1797 = vmatprep.subr.mxu0 0.0
    %1798 = vmatpush1.msra.mxu0 0.0
    %1799 = vmatprep.subr.mxu0 0.0
    %1800 = vmatpush1.msra.mxu0 0.0
    %1801 = vmatprep.subr.mxu0 0.0
    %1802 = vmatpush1.msra.mxu0 0.0
    %1803 = vmatprep.subr.mxu0 0.0
    %1804 = vmatpush1.msra.mxu0 0.0
    %1805 = vmatprep.subr.mxu0 0.0
    %1806 = vmatpush1.msra.mxu0 0.0
    %1807 = vmatprep.subr.mxu0 0.0
    %1808 = vmatpush1.msra.mxu0 0.0
    %1809 = vmatprep.subr.mxu0 0.0
    %1810 = vmatpush1.msra.mxu0 0.0
    %1811 = vmatprep.subr.mxu0 0.0
    %1812 = vmatpush1.msra.mxu0 0.0
    %1813 = vmatprep.subr.mxu0 0.0
    %1814 = vmatpush1.msra.mxu0 0.0
    %1815 = vmatprep.subr.mxu0 0.0
    %1816 = vmatpush1.msra.mxu0 0.0
    %1817 = vmatprep.subr.mxu0 0.0
    %1818 = vmatpush1.msra.mxu0 0.0
    %1819 = vmatprep.subr.mxu0 0.0
    %1820 = vmatpush1.msra.mxu0 0.0
    %1821 = vmatprep.subr.mxu0 0.0
    %1822 = vmatpush1.msra.mxu0 0.0
    %1823 = vmatprep.subr.mxu0 0.0
    %1824 = vmatpush1.msra.mxu0 0.0
    %1825 = vmatprep.subr.mxu0 0.0
    %1826 = vmatpush1.msra.mxu0 0.0
    %1827 = vmatprep.subr.mxu0 0.0
    %1828 = vmatpush1.msra.mxu0 0.0
    %1829 = vmatprep.subr.mxu0 0.0
    %1830 = vmatpush1.msra.mxu0 0.0
    %1831 = vmatprep.subr.mxu0 0.0
    %1832 = vmatpush1.msra.mxu0 0.0
    %1833 = vmatprep.mubr.f32.mxu0 0.0
    %1834 = vmatmul.mubr.f32.gmra.mrb[0].mxu0 %v1767
    %v1835 = vpop.f32.mrb[0].mxu0
    %v1836 = vadd.f32 0.0, %v1835
    %v1837 = vpop.f32.mrb[0].mxu0
    %1838 = vdwg.mxu0
    %1841 = vrot.lane.b32.xlu0 %v1722, 64
    %v1842 = vpop.permute.xlu0 %1841
    %1843 = vrot.lane.b32.xlu0 %v1723, 64
    %v1844 = vpop.permute.xlu0 %1843
    %v1845 = vsel %vm613, %v1842, %v1844
    %v1846 = vsel %vm1218, %v1845, 0
    %1848 = vmatprep.subr.mxu0 0.0
    %1849 = vmatpush1.msra.mxu0 %v1724
    %1850 = vmatprep.subr.mxu0 0.0
    %1851 = vmatpush1.msra.mxu0 %v1725
    %1852 = vmatprep.subr.mxu0 0.0
    %1853 = vmatpush1.msra.mxu0 %v1726
    %1854 = vmatprep.subr.mxu0 0.0
    %1855 = vmatpush1.msra.mxu0 %v1727
    %1856 = vmatprep.subr.mxu0 0.0
    %1857 = vmatpush1.msra.mxu0 %v1728
    %1858 = vmatprep.subr.mxu0 0.0
    %1859 = vmatpush1.msra.mxu0 %v1729
    %1860 = vmatprep.subr.mxu0 0.0
    %1861 = vmatpush1.msra.mxu0 %v1730
    %1862 = vmatprep.subr.mxu0 0.0
    %1863 = vmatpush1.msra.mxu0 %v1731
    %1864 = vmatprep.subr.mxu0 0.0
    %1865 = vmatpush1.msra.mxu0 %v1732
    %1866 = vmatprep.subr.mxu0 0.0
    %1867 = vmatpush1.msra.mxu0 %v1733
    %1868 = vmatprep.subr.mxu0 0.0
    %1869 = vmatpush1.msra.mxu0 %v1734
    %1870 = vmatprep.subr.mxu0 0.0
    %1871 = vmatpush1.msra.mxu0 %v1735
    %1872 = vmatprep.subr.mxu0 0.0
    %1873 = vmatpush1.msra.mxu0 0.0
    %1874 = vmatprep.subr.mxu0 0.0
    %1875 = vmatpush1.msra.mxu0 0.0
    %1876 = vmatprep.subr.mxu0 0.0
    %1877 = vmatpush1.msra.mxu0 0.0
    %1878 = vmatprep.subr.mxu0 0.0
    %1879 = vmatpush1.msra.mxu0 0.0
    %1880 = vmatprep.subr.mxu0 0.0
    %1881 = vmatpush1.msra.mxu0 0.0
    %1882 = vmatprep.subr.mxu0 0.0
    %1883 = vmatpush1.msra.mxu0 0.0
    %1884 = vmatprep.subr.mxu0 0.0
    %1885 = vmatpush1.msra.mxu0 0.0
    %1886 = vmatprep.subr.mxu0 0.0
    %1887 = vmatpush1.msra.mxu0 0.0
    %1888 = vmatprep.subr.mxu0 0.0
    %1889 = vmatpush1.msra.mxu0 0.0
    %1890 = vmatprep.subr.mxu0 0.0
    %1891 = vmatpush1.msra.mxu0 0.0
    %1892 = vmatprep.subr.mxu0 0.0
    %1893 = vmatpush1.msra.mxu0 0.0
    %1894 = vmatprep.subr.mxu0 0.0
    %1895 = vmatpush1.msra.mxu0 0.0
    %1896 = vmatprep.subr.mxu0 0.0
    %1897 = vmatpush1.msra.mxu0 0.0
    %1898 = vmatprep.subr.mxu0 0.0
    %1899 = vmatpush1.msra.mxu0 0.0
    %1900 = vmatprep.subr.mxu0 0.0
    %1901 = vmatpush1.msra.mxu0 0.0
    %1902 = vmatprep.subr.mxu0 0.0
    %1903 = vmatpush1.msra.mxu0 0.0
    %1904 = vmatprep.subr.mxu0 0.0
    %1905 = vmatpush1.msra.mxu0 0.0
    %1906 = vmatprep.subr.mxu0 0.0
    %1907 = vmatpush1.msra.mxu0 0.0
    %1908 = vmatprep.subr.mxu0 0.0
    %1909 = vmatpush1.msra.mxu0 0.0
    %1910 = vmatprep.subr.mxu0 0.0
    %1911 = vmatpush1.msra.mxu0 0.0
    %1912 = vmatprep.mubr.f32.mxu0 0.0
    %1913 = vmatmul.mubr.f32.gmra.mrb[0].mxu0 %v1846
    %v1914 = vpop.f32.mrb[0].mxu0
    %v1915 = vadd.f32 %v1836, %v1914
    %v1916 = vpop.f32.mrb[0].mxu0
    %1917 = vdwg.mxu0
    %v1918 = vld [vmem:[#allocation2] sm:$0xfc]
    %v1919 = vld [vmem:[#allocation2 + $0x8] sm:$0xfc]
    %v1920 = vld [vmem:[#allocation2 + $0x18] sm:$0x3]
    %v1921 = vld [vmem:[#allocation2 + $0x20] sm:$0x3]
    %v1922 = vld [vmem:[%s1366] sm:$0xff]
    %v1923 = vld [vmem:[%s1366 + $0x8] sm:$0xff]
    %v1924 = vld [vmem:[%s1366 + $0x10] sm:$0xff]
    %v1925 = vld [vmem:[%s1366 + $0x18] sm:$0xff]
    %v1926 = vld [vmem:[%s1366 + $0x20] sm:$0xff]
    %v1927 = vld [vmem:[%s1366 + $0x28] sm:$0xff]
    %v1928 = vld [vmem:[%s1366 + $0x30] sm:$0xff]
    %v1929 = vld [vmem:[%s1366 + $0x38] sm:$0xff]
    %v1930 = vld [vmem:[%s1366 + $0x40] sm:$0xff]
    %v1931 = vld [vmem:[%s1366 + $0x48] sm:$0xff]
    %v1932 = vld [vmem:[%s1366 + $0x50] sm:$0xff]
    %v1933 = vld [vmem:[%s1366 + $0x58] sm:$0xff]
    %v1938 = vrot.slane %v1918, 2
    %v1939 = vrot.slane %v1920, 2
    %v1940 = vsel %vm407, %v1938, %v1939
    %v1941 = vrot.slane %v1919, 2
    %v1942 = vrot.slane %v1921, 2
    %v1943 = vsel %vm407, %v1941, %v1942
    %1944 = vrot.lane.b32.xlu0 %v1940, 64
    %v1945 = vpop.permute.xlu0 %1944
    %1946 = vrot.lane.b32.xlu0 %v1943, 64
    %v1947 = vpop.permute.xlu0 %1946
    %v1948 = vsel %vm613, %v1945, %v1947
    %v1949 = vsel %vm1218, %v1948, 0
    %1951 = vmatprep.subr.mxu0 0.0
    %1952 = vmatpush1.msra.mxu0 %v1922
    %1953 = vmatprep.subr.mxu0 0.0
    %1954 = vmatpush1.msra.mxu0 %v1923
    %1955 = vmatprep.subr.mxu0 0.0
    %1956 = vmatpush1.msra.mxu0 %v1924
    %1957 = vmatprep.subr.mxu0 0.0
    %1958 = vmatpush1.msra.mxu0 %v1925
    %1959 = vmatprep.subr.mxu0 0.0
    %1960 = vmatpush1.msra.mxu0 %v1926
    %1961 = vmatprep.subr.mxu0 0.0
    %1962 = vmatpush1.msra.mxu0 %v1927
    %1963 = vmatprep.subr.mxu0 0.0
    %1964 = vmatpush1.msra.mxu0 %v1928
    %1965 = vmatprep.subr.mxu0 0.0
    %1966 = vmatpush1.msra.mxu0 %v1929
    %1967 = vmatprep.subr.mxu0 0.0
    %1968 = vmatpush1.msra.mxu0 %v1930
    %1969 = vmatprep.subr.mxu0 0.0
    %1970 = vmatpush1.msra.mxu0 %v1931
    %1971 = vmatprep.subr.mxu0 0.0
    %1972 = vmatpush1.msra.mxu0 %v1932
    %1973 = vmatprep.subr.mxu0 0.0
    %1974 = vmatpush1.msra.mxu0 %v1933
    %1975 = vmatprep.subr.mxu0 0.0
    %1976 = vmatpush1.msra.mxu0 0.0
    %1977 = vmatprep.subr.mxu0 0.0
    %1978 = vmatpush1.msra.mxu0 0.0
    %1979 = vmatprep.subr.mxu0 0.0
    %1980 = vmatpush1.msra.mxu0 0.0
    %1981 = vmatprep.subr.mxu0 0.0
    %1982 = vmatpush1.msra.mxu0 0.0
    %1983 = vmatprep.subr.mxu0 0.0
    %1984 = vmatpush1.msra.mxu0 0.0
    %1985 = vmatprep.subr.mxu0 0.0
    %1986 = vmatpush1.msra.mxu0 0.0
    %1987 = vmatprep.subr.mxu0 0.0
    %1988 = vmatpush1.msra.mxu0 0.0
    %1989 = vmatprep.subr.mxu0 0.0
    %1990 = vmatpush1.msra.mxu0 0.0
    %1991 = vmatprep.subr.mxu0 0.0
    %1992 = vmatpush1.msra.mxu0 0.0
    %1993 = vmatprep.subr.mxu0 0.0
    %1994 = vmatpush1.msra.mxu0 0.0
    %1995 = vmatprep.subr.mxu0 0.0
    %1996 = vmatpush1.msra.mxu0 0.0
    %1997 = vmatprep.subr.mxu0 0.0
    %1998 = vmatpush1.msra.mxu0 0.0
    %1999 = vmatprep.subr.mxu0 0.0
    %2000 = vmatpush1.msra.mxu0 0.0
    %2001 = vmatprep.subr.mxu0 0.0
    %2002 = vmatpush1.msra.mxu0 0.0
    %2003 = vmatprep.subr.mxu0 0.0
    %2004 = vmatpush1.msra.mxu0 0.0
    %2005 = vmatprep.subr.mxu0 0.0
    %2006 = vmatpush1.msra.mxu0 0.0
    %2007 = vmatprep.subr.mxu0 0.0
    %2008 = vmatpush1.msra.mxu0 0.0
    %2009 = vmatprep.subr.mxu0 0.0
    %2010 = vmatpush1.msra.mxu0 0.0
    %2011 = vmatprep.subr.mxu0 0.0
    %2012 = vmatpush1.msra.mxu0 0.0
    %2013 = vmatprep.subr.mxu0 0.0
    %2014 = vmatpush1.msra.mxu0 0.0
    %2015 = vmatprep.mubr.f32.mxu0 0.0
    %2016 = vmatmul.mubr.f32.gmra.mrb[0].mxu0 %v1949
    %v2017 = vpop.f32.mrb[0].mxu0
    %v2018 = vadd.f32 0.0, %v2017
    %v2019 = vpop.f32.mrb[0].mxu0
    %2020 = vdwg.mxu0
    %v2021 = vadd.f32 %v1915, %v2018
    %v2022 = vld [vmem:[%s4] sm:$0x1]
    %v2024 = vlaneseq
    %v2025 = vshrl.u32 %v2024, 7
    %v2026 = vsub.s32 0, %v2025
    %v2027 = vrot.slane %v2022, %v2026
    %v2029 = vadd.f32 %v2021, %v2027
    %v2030 = vmax.f32 %v2029, 0.0
    %2031 = vrot.lane.b32.xlu0 %v1758, 32
    %v2032 = vpop.permute.xlu0 %2031
    %2033 = vrot.lane.b32.xlu0 %v1761, 32
    %v2034 = vpop.permute.xlu0 %2033
    %vm2035 = vcmask 261120
    %v2036 = vsel %vm2035, %v2032, %v2034
    %v2037 = vsel %vm1218, %v2036, 0
    %2039 = vmatprep.subr.mxu0 0.0
    %2040 = vmatpush1.msra.mxu0 %v1740
    %2041 = vmatprep.subr.mxu0 0.0
    %2042 = vmatpush1.msra.mxu0 %v1741
    %2043 = vmatprep.subr.mxu0 0.0
    %2044 = vmatpush1.msra.mxu0 %v1742
    %2045 = vmatprep.subr.mxu0 0.0
    %2046 = vmatpush1.msra.mxu0 %v1743
    %2047 = vmatprep.subr.mxu0 0.0
    %2048 = vmatpush1.msra.mxu0 %v1744
    %2049 = vmatprep.subr.mxu0 0.0
    %2050 = vmatpush1.msra.mxu0 %v1745
    %2051 = vmatprep.subr.mxu0 0.0
    %2052 = vmatpush1.msra.mxu0 %v1746
    %2053 = vmatprep.subr.mxu0 0.0
    %2054 = vmatpush1.msra.mxu0 %v1747
    %2055 = vmatprep.subr.mxu0 0.0
    %2056 = vmatpush1.msra.mxu0 %v1748
    %2057 = vmatprep.subr.mxu0 0.0
    %2058 = vmatpush1.msra.mxu0 %v1749
    %2059 = vmatprep.subr.mxu0 0.0
    %2060 = vmatpush1.msra.mxu0 %v1750
    %2061 = vmatprep.subr.mxu0 0.0
    %2062 = vmatpush1.msra.mxu0 %v1751
    %2063 = vmatprep.subr.mxu0 0.0
    %2064 = vmatpush1.msra.mxu0 0.0
    %2065 = vmatprep.subr.mxu0 0.0
    %2066 = vmatpush1.msra.mxu0 0.0
    %2067 = vmatprep.subr.mxu0 0.0
    %2068 = vmatpush1.msra.mxu0 0.0
    %2069 = vmatprep.subr.mxu0 0.0
    %2070 = vmatpush1.msra.mxu0 0.0
    %2071 = vmatprep.subr.mxu0 0.0
    %2072 = vmatpush1.msra.mxu0 0.0
    %2073 = vmatprep.subr.mxu0 0.0
    %2074 = vmatpush1.msra.mxu0 0.0
    %2075 = vmatprep.subr.mxu0 0.0
    %2076 = vmatpush1.msra.mxu0 0.0
    %2077 = vmatprep.subr.mxu0 0.0
    %2078 = vmatpush1.msra.mxu0 0.0
    %2079 = vmatprep.subr.mxu0 0.0
    %2080 = vmatpush1.msra.mxu0 0.0
    %2081 = vmatprep.subr.mxu0 0.0
    %2082 = vmatpush1.msra.mxu0 0.0
    %2083 = vmatprep.subr.mxu0 0.0
    %2084 = vmatpush1.msra.mxu0 0.0
    %2085 = vmatprep.subr.mxu0 0.0
    %2086 = vmatpush1.msra.mxu0 0.0
    %2087 = vmatprep.subr.mxu0 0.0
    %2088 = vmatpush1.msra.mxu0 0.0
    %2089 = vmatprep.subr.mxu0 0.0
    %2090 = vmatpush1.msra.mxu0 0.0
    %2091 = vmatprep.subr.mxu0 0.0
    %2092 = vmatpush1.msra.mxu0 0.0
    %2093 = vmatprep.subr.mxu0 0.0
    %2094 = vmatpush1.msra.mxu0 0.0
    %2095 = vmatprep.subr.mxu0 0.0
    %2096 = vmatpush1.msra.mxu0 0.0
    %2097 = vmatprep.subr.mxu0 0.0
    %2098 = vmatpush1.msra.mxu0 0.0
    %2099 = vmatprep.subr.mxu0 0.0
    %2100 = vmatpush1.msra.mxu0 0.0
    %2101 = vmatprep.subr.mxu0 0.0
    %2102 = vmatpush1.msra.mxu0 0.0
    %2103 = vmatprep.mubr.f32.mxu0 0.0
    %2104 = vmatmul.mubr.f32.gmra.mrb[0].mxu0 %v2037
    %v2105 = vpop.f32.mrb[0].mxu0
    %v2106 = vadd.f32 0.0, %v2105
    %v2107 = vpop.f32.mrb[0].mxu0
    %2108 = vdwg.mxu0
    %2109 = vrot.lane.b32.xlu0 %v1722, 32
    %v2110 = vpop.permute.xlu0 %2109
    %2111 = vrot.lane.b32.xlu0 %v1723, 32
    %v2112 = vpop.permute.xlu0 %2111
    %v2113 = vsel %vm2035, %v2110, %v2112
    %v2114 = vsel %vm1218, %v2113, 0
    %2116 = vmatprep.subr.mxu0 0.0
    %2117 = vmatpush1.msra.mxu0 %v1724
    %2118 = vmatprep.subr.mxu0 0.0
    %2119 = vmatpush1.msra.mxu0 %v1725
    %2120 = vmatprep.subr.mxu0 0.0
    %2121 = vmatpush1.msra.mxu0 %v1726
    %2122 = vmatprep.subr.mxu0 0.0
    %2123 = vmatpush1.msra.mxu0 %v1727
    %2124 = vmatprep.subr.mxu0 0.0
    %2125 = vmatpush1.msra.mxu0 %v1728
    %2126 = vmatprep.subr.mxu0 0.0
    %2127 = vmatpush1.msra.mxu0 %v1729
    %2128 = vmatprep.subr.mxu0 0.0
    %2129 = vmatpush1.msra.mxu0 %v1730
    %2130 = vmatprep.subr.mxu0 0.0
    %2131 = vmatpush1.msra.mxu0 %v1731
    %2132 = vmatprep.subr.mxu0 0.0
    %2133 = vmatpush1.msra.mxu0 %v1732
    %2134 = vmatprep.subr.mxu0 0.0
    %2135 = vmatpush1.msra.mxu0 %v1733
    %2136 = vmatprep.subr.mxu0 0.0
    %2137 = vmatpush1.msra.mxu0 %v1734
    %2138 = vmatprep.subr.mxu0 0.0
    %2139 = vmatpush1.msra.mxu0 %v1735
    %2140 = vmatprep.subr.mxu0 0.0
    %2141 = vmatpush1.msra.mxu0 0.0
    %2142 = vmatprep.subr.mxu0 0.0
    %2143 = vmatpush1.msra.mxu0 0.0
    %2144 = vmatprep.subr.mxu0 0.0
    %2145 = vmatpush1.msra.mxu0 0.0
    %2146 = vmatprep.subr.mxu0 0.0
    %2147 = vmatpush1.msra.mxu0 0.0
    %2148 = vmatprep.subr.mxu0 0.0
    %2149 = vmatpush1.msra.mxu0 0.0
    %2150 = vmatprep.subr.mxu0 0.0
    %2151 = vmatpush1.msra.mxu0 0.0
    %2152 = vmatprep.subr.mxu0 0.0
    %2153 = vmatpush1.msra.mxu0 0.0
    %2154 = vmatprep.subr.mxu0 0.0
    %2155 = vmatpush1.msra.mxu0 0.0
    %2156 = vmatprep.subr.mxu0 0.0
    %2157 = vmatpush1.msra.mxu0 0.0
    %2158 = vmatprep.subr.mxu0 0.0
    %2159 = vmatpush1.msra.mxu0 0.0
    %2160 = vmatprep.subr.mxu0 0.0
    %2161 = vmatpush1.msra.mxu0 0.0
    %2162 = vmatprep.subr.mxu0 0.0
    %2163 = vmatpush1.msra.mxu0 0.0
    %2164 = vmatprep.subr.mxu0 0.0
    %2165 = vmatpush1.msra.mxu0 0.0
    %2166 = vmatprep.subr.mxu0 0.0
    %2167 = vmatpush1.msra.mxu0 0.0
    %2168 = vmatprep.subr.mxu0 0.0
    %2169 = vmatpush1.msra.mxu0 0.0
    %2170 = vmatprep.subr.mxu0 0.0
    %2171 = vmatpush1.msra.mxu0 0.0
    %2172 = vmatprep.subr.mxu0 0.0
    %2173 = vmatpush1.msra.mxu0 0.0
    %2174 = vmatprep.subr.mxu0 0.0
    %2175 = vmatpush1.msra.mxu0 0.0
    %2176 = vmatprep.subr.mxu0 0.0
    %2177 = vmatpush1.msra.mxu0 0.0
    %2178 = vmatprep.subr.mxu0 0.0
    %2179 = vmatpush1.msra.mxu0 0.0
    %2180 = vmatprep.mubr.f32.mxu0 0.0
    %2181 = vmatmul.mubr.f32.gmra.mrb[0].mxu0 %v2114
    %v2182 = vpop.f32.mrb[0].mxu0
    %v2183 = vadd.f32 %v2106, %v2182
    %v2184 = vpop.f32.mrb[0].mxu0
    %2185 = vdwg.mxu0
    %2186 = vrot.lane.b32.xlu0 %v1940, 32
    %v2187 = vpop.permute.xlu0 %2186
    %2188 = vrot.lane.b32.xlu0 %v1943, 32
    %v2189 = vpop.permute.xlu0 %2188
    %v2190 = vsel %vm2035, %v2187, %v2189
    %v2191 = vsel %vm1218, %v2190, 0
    %2193 = vmatprep.subr.mxu0 0.0
    %2194 = vmatpush1.msra.mxu0 %v1922
    %2195 = vmatprep.subr.mxu0 0.0
    %2196 = vmatpush1.msra.mxu0 %v1923
    %2197 = vmatprep.subr.mxu0 0.0
    %2198 = vmatpush1.msra.mxu0 %v1924
    %2199 = vmatprep.subr.mxu0 0.0
    %2200 = vmatpush1.msra.mxu0 %v1925
    %2201 = vmatprep.subr.mxu0 0.0
    %2202 = vmatpush1.msra.mxu0 %v1926
    %2203 = vmatprep.subr.mxu0 0.0
    %2204 = vmatpush1.msra.mxu0 %v1927
    %2205 = vmatprep.subr.mxu0 0.0
    %2206 = vmatpush1.msra.mxu0 %v1928
    %2207 = vmatprep.subr.mxu0 0.0
    %2208 = vmatpush1.msra.mxu0 %v1929
    %2209 = vmatprep.subr.mxu0 0.0
    %2210 = vmatpush1.msra.mxu0 %v1930
    %2211 = vmatprep.subr.mxu0 0.0
    %2212 = vmatpush1.msra.mxu0 %v1931
    %2213 = vmatprep.subr.mxu0 0.0
    %2214 = vmatpush1.msra.mxu0 %v1932
    %2215 = vmatprep.subr.mxu0 0.0
    %2216 = vmatpush1.msra.mxu0 %v1933
    %2217 = vmatprep.subr.mxu0 0.0
    %2218 = vmatpush1.msra.mxu0 0.0
    %2219 = vmatprep.subr.mxu0 0.0
    %2220 = vmatpush1.msra.mxu0 0.0
    %2221 = vmatprep.subr.mxu0 0.0
    %2222 = vmatpush1.msra.mxu0 0.0
    %2223 = vmatprep.subr.mxu0 0.0
    %2224 = vmatpush1.msra.mxu0 0.0
    %2225 = vmatprep.subr.mxu0 0.0
    %2226 = vmatpush1.msra.mxu0 0.0
    %2227 = vmatprep.subr.mxu0 0.0
    %2228 = vmatpush1.msra.mxu0 0.0
    %2229 = vmatprep.subr.mxu0 0.0
    %2230 = vmatpush1.msra.mxu0 0.0
    %2231 = vmatprep.subr.mxu0 0.0
    %2232 = vmatpush1.msra.mxu0 0.0
    %2233 = vmatprep.subr.mxu0 0.0
    %2234 = vmatpush1.msra.mxu0 0.0
    %2235 = vmatprep.subr.mxu0 0.0
    %2236 = vmatpush1.msra.mxu0 0.0
    %2237 = vmatprep.subr.mxu0 0.0
    %2238 = vmatpush1.msra.mxu0 0.0
    %2239 = vmatprep.subr.mxu0 0.0
    %2240 = vmatpush1.msra.mxu0 0.0
    %2241 = vmatprep.subr.mxu0 0.0
    %2242 = vmatpush1.msra.mxu0 0.0
    %2243 = vmatprep.subr.mxu0 0.0
    %2244 = vmatpush1.msra.mxu0 0.0
    %2245 = vmatprep.subr.mxu0 0.0
    %2246 = vmatpush1.msra.mxu0 0.0
    %2247 = vmatprep.subr.mxu0 0.0
    %2248 = vmatpush1.msra.mxu0 0.0
    %2249 = vmatprep.subr.mxu0 0.0
    %2250 = vmatpush1.msra.mxu0 0.0
    %2251 = vmatprep.subr.mxu0 0.0
    %2252 = vmatpush1.msra.mxu0 0.0
    %2253 = vmatprep.subr.mxu0 0.0
    %2254 = vmatpush1.msra.mxu0 0.0
    %2255 = vmatprep.subr.mxu0 0.0
    %2256 = vmatpush1.msra.mxu0 0.0
    %2257 = vmatprep.mubr.f32.mxu0 0.0
    %2258 = vmatmul.mubr.f32.gmra.mrb[0].mxu0 %v2191
    %v2259 = vpop.f32.mrb[0].mxu0
    %v2260 = vadd.f32 0.0, %v2259
    %v2261 = vpop.f32.mrb[0].mxu0
    %2262 = vdwg.mxu0
    %v2263 = vadd.f32 %v2183, %v2260
    %v2264 = vadd.f32 %v2263, %v2027
    %v2265 = vmax.f32 %v2264, 0.0
    %v2266 = vmax.f32 %v2030, %v2265
    %v2268 = vrot.slane %v2266, 1
    %v2270 = vmax.f32 %v2266, %v2268
    %v2273 = vunpack.c.l.s4 1983009808
    %v2274 = vunpack.c.0.s8 %v2273
    %v2275 = vlaneseq
    %v2276 = vshrl.u32 %v2275, 7
    %v2277 = vsub.s32 %v2274, %v2276
    %v2278 = vrot.slane %v2270, %v2277
    %2279 = vrot.lane.b32.xlu0 %v2278, 64
    %v2280 = vpop.permute.xlu0 %2279
    %vm2282 = vcmask 1040896
    %2283 = vst.msk [vmem:[#allocation3] sm:$0x1] %vm2282, %v2280
    %v2284 = vcombine.high %v2278, %v2278
    %2285 = vrot.lane.b32.xlu0 %v2284, 64
    %v2286 = vpop.permute.xlu0 %2285
    %2288 = vst.msk [vmem:[#allocation3 + $0x4] sm:$0x1] %vm2282, %v2286
    %v2289 = vcombine.high %v2270, %v2270
    %v2291 = vunpack.c.l.s4 1983009808
    %v2292 = vunpack.c.0.s8 %v2291
    %v2293 = vlaneseq
    %v2294 = vshrl.u32 %v2293, 7
    %v2295 = vsub.s32 %v2292, %v2294
    %v2296 = vrot.slane %v2289, %v2295
    %2297 = vrot.lane.b32.xlu0 %v2296, 64
    %v2298 = vpop.permute.xlu0 %2297
    %2300 = vst.msk [vmem:[#allocation3 + $0x8] sm:$0x1] %vm2282, %v2298
    %v2301 = vcombine.high %v2296, %v2296
    %2302 = vrot.lane.b32.xlu0 %v2301, 64
    %v2303 = vpop.permute.xlu0 %2302
    %2305 = vst.msk [vmem:[#allocation3 + $0xc] sm:$0x1] %vm2282, %v2303
    %v2306 = vld [vmem:[#allocation2 + $0x8] sm:$0xff]
    %v2307 = vld [vmem:[%s3] sm:$0xff]
    %v2308 = vld [vmem:[%s3 + $0x8] sm:$0xff]
    %v2309 = vld [vmem:[%s3 + $0x10] sm:$0xff]
    %v2310 = vld [vmem:[%s3 + $0x18] sm:$0xff]
    %v2311 = vld [vmem:[%s3 + $0x20] sm:$0xff]
    %v2312 = vld [vmem:[%s3 + $0x28] sm:$0xff]
    %v2313 = vld [vmem:[%s3 + $0x30] sm:$0xff]
    %v2314 = vld [vmem:[%s3 + $0x38] sm:$0xff]
    %v2315 = vld [vmem:[%s3 + $0x40] sm:$0xff]
    %v2316 = vld [vmem:[%s3 + $0x48] sm:$0xff]
    %v2317 = vld [vmem:[%s3 + $0x50] sm:$0xff]
    %v2318 = vld [vmem:[%s3 + $0x58] sm:$0xff]
    %v2319 = vld [vmem:[#allocation2 + $0x8] sm:$0xfe]
    %v2320 = vld [vmem:[#allocation2 + $0x20] sm:$0x1]
    %v2321 = vld [vmem:[%s1200] sm:$0xff]
    %v2322 = vld [vmem:[%s1200 + $0x8] sm:$0xff]
    %v2323 = vld [vmem:[%s1200 + $0x10] sm:$0xff]
    %v2324 = vld [vmem:[%s1200 + $0x18] sm:$0xff]
    %v2325 = vld [vmem:[%s1200 + $0x20] sm:$0xff]
    %v2326 = vld [vmem:[%s1200 + $0x28] sm:$0xff]
    %v2327 = vld [vmem:[%s1200 + $0x30] sm:$0xff]
    %v2328 = vld [vmem:[%s1200 + $0x38] sm:$0xff]
    %v2329 = vld [vmem:[%s1200 + $0x40] sm:$0xff]
    %v2330 = vld [vmem:[%s1200 + $0x48] sm:$0xff]
    %v2331 = vld [vmem:[%s1200 + $0x50] sm:$0xff]
    %v2332 = vld [vmem:[%s1200 + $0x58] sm:$0xff]
    %v2335 = vrot.slane %v2319, 1
    %v2336 = vrot.slane %v2320, 1
    %v2337 = vsel %vm64, %v2335, %v2336
    %v2338 = vsel %vm1218, %v2337, 0
    %2340 = vmatprep.subr.mxu0 0.0
    %2341 = vmatpush1.msra.mxu0 %v2321
    %2342 = vmatprep.subr.mxu0 0.0
    %2343 = vmatpush1.msra.mxu0 %v2322
    %2344 = vmatprep.subr.mxu0 0.0
    %2345 = vmatpush1.msra.mxu0 %v2323
    %2346 = vmatprep.subr.mxu0 0.0
    %2347 = vmatpush1.msra.mxu0 %v2324
    %2348 = vmatprep.subr.mxu0 0.0
    %2349 = vmatpush1.msra.mxu0 %v2325
    %2350 = vmatprep.subr.mxu0 0.0
    %2351 = vmatpush1.msra.mxu0 %v2326
    %2352 = vmatprep.subr.mxu0 0.0
    %2353 = vmatpush1.msra.mxu0 %v2327
    %2354 = vmatprep.subr.mxu0 0.0
    %2355 = vmatpush1.msra.mxu0 %v2328
    %2356 = vmatprep.subr.mxu0 0.0
    %2357 = vmatpush1.msra.mxu0 %v2329
    %2358 = vmatprep.subr.mxu0 0.0
    %2359 = vmatpush1.msra.mxu0 %v2330
    %2360 = vmatprep.subr.mxu0 0.0
    %2361 = vmatpush1.msra.mxu0 %v2331
    %2362 = vmatprep.subr.mxu0 0.0
    %2363 = vmatpush1.msra.mxu0 %v2332
    %2364 = vmatprep.subr.mxu0 0.0
    %2365 = vmatpush1.msra.mxu0 0.0
    %2366 = vmatprep.subr.mxu0 0.0
    %2367 = vmatpush1.msra.mxu0 0.0
    %2368 = vmatprep.subr.mxu0 0.0
    %2369 = vmatpush1.msra.mxu0 0.0
    %2370 = vmatprep.subr.mxu0 0.0
    %2371 = vmatpush1.msra.mxu0 0.0
    %2372 = vmatprep.subr.mxu0 0.0
    %2373 = vmatpush1.msra.mxu0 0.0
    %2374 = vmatprep.subr.mxu0 0.0
    %2375 = vmatpush1.msra.mxu0 0.0
    %2376 = vmatprep.subr.mxu0 0.0
    %2377 = vmatpush1.msra.mxu0 0.0
    %2378 = vmatprep.subr.mxu0 0.0
    %2379 = vmatpush1.msra.mxu0 0.0
    %2380 = vmatprep.subr.mxu0 0.0
    %2381 = vmatpush1.msra.mxu0 0.0
    %2382 = vmatprep.subr.mxu0 0.0
    %2383 = vmatpush1.msra.mxu0 0.0
    %2384 = vmatprep.subr.mxu0 0.0
    %2385 = vmatpush1.msra.mxu0 0.0
    %2386 = vmatprep.subr.mxu0 0.0
    %2387 = vmatpush1.msra.mxu0 0.0
    %2388 = vmatprep.subr.mxu0 0.0
    %2389 = vmatpush1.msra.mxu0 0.0
    %2390 = vmatprep.subr.mxu0 0.0
    %2391 = vmatpush1.msra.mxu0 0.0
    %2392 = vmatprep.subr.mxu0 0.0
    %2393 = vmatpush1.msra.mxu0 0.0
    %2394 = vmatprep.subr.mxu0 0.0
    %2395 = vmatpush1.msra.mxu0 0.0
    %2396 = vmatprep.subr.mxu0 0.0
    %2397 = vmatpush1.msra.mxu0 0.0
    %2398 = vmatprep.subr.mxu0 0.0
    %2399 = vmatpush1.msra.mxu0 0.0
    %2400 = vmatprep.subr.mxu0 0.0
    %2401 = vmatpush1.msra.mxu0 0.0
    %2402 = vmatprep.subr.mxu0 0.0
    %2403 = vmatpush1.msra.mxu0 0.0
    %2404 = vmatprep.mubr.f32.mxu0 0.0
    %2405 = vmatmul.mubr.f32.gmra.mrb[0].mxu0 %v2338
    %v2406 = vpop.f32.mrb[0].mxu0
    %v2407 = vadd.f32 0.0, %v2406
    %v2408 = vpop.f32.mrb[0].mxu0
    %2409 = vdwg.mxu0
    %v2411 = vsel %vm1218, %v2306, 0
    %2413 = vmatprep.subr.mxu0 0.0
    %2414 = vmatpush1.msra.mxu0 %v2307
    %2415 = vmatprep.subr.mxu0 0.0
    %2416 = vmatpush1.msra.mxu0 %v2308
    %2417 = vmatprep.subr.mxu0 0.0
    %2418 = vmatpush1.msra.mxu0 %v2309
    %2419 = vmatprep.subr.mxu0 0.0
    %2420 = vmatpush1.msra.mxu0 %v2310
    %2421 = vmatprep.subr.mxu0 0.0
    %2422 = vmatpush1.msra.mxu0 %v2311
    %2423 = vmatprep.subr.mxu0 0.0
    %2424 = vmatpush1.msra.mxu0 %v2312
    %2425 = vmatprep.subr.mxu0 0.0
    %2426 = vmatpush1.msra.mxu0 %v2313
    %2427 = vmatprep.subr.mxu0 0.0
    %2428 = vmatpush1.msra.mxu0 %v2314
    %2429 = vmatprep.subr.mxu0 0.0
    %2430 = vmatpush1.msra.mxu0 %v2315
    %2431 = vmatprep.subr.mxu0 0.0
    %2432 = vmatpush1.msra.mxu0 %v2316
    %2433 = vmatprep.subr.mxu0 0.0
    %2434 = vmatpush1.msra.mxu0 %v2317
    %2435 = vmatprep.subr.mxu0 0.0
    %2436 = vmatpush1.msra.mxu0 %v2318
    %2437 = vmatprep.subr.mxu0 0.0
    %2438 = vmatpush1.msra.mxu0 0.0
    %2439 = vmatprep.subr.mxu0 0.0
    %2440 = vmatpush1.msra.mxu0 0.0
    %2441 = vmatprep.subr.mxu0 0.0
    %2442 = vmatpush1.msra.mxu0 0.0
    %2443 = vmatprep.subr.mxu0 0.0
    %2444 = vmatpush1.msra.mxu0 0.0
    %2445 = vmatprep.subr.mxu0 0.0
    %2446 = vmatpush1.msra.mxu0 0.0
    %2447 = vmatprep.subr.mxu0 0.0
    %2448 = vmatpush1.msra.mxu0 0.0
    %2449 = vmatprep.subr.mxu0 0.0
    %2450 = vmatpush1.msra.mxu0 0.0
    %2451 = vmatprep.subr.mxu0 0.0
    %2452 = vmatpush1.msra.mxu0 0.0
    %2453 = vmatprep.subr.mxu0 0.0
    %2454 = vmatpush1.msra.mxu0 0.0
    %2455 = vmatprep.subr.mxu0 0.0
    %2456 = vmatpush1.msra.mxu0 0.0
    %2457 = vmatprep.subr.mxu0 0.0
    %2458 = vmatpush1.msra.mxu0 0.0
    %2459 = vmatprep.subr.mxu0 0.0
    %2460 = vmatpush1.msra.mxu0 0.0
    %2461 = vmatprep.subr.mxu0 0.0
    %2462 = vmatpush1.msra.mxu0 0.0
    %2463 = vmatprep.subr.mxu0 0.0
    %2464 = vmatpush1.msra.mxu0 0.0
    %2465 = vmatprep.subr.mxu0 0.0
    %2466 = vmatpush1.msra.mxu0 0.0
    %2467 = vmatprep.subr.mxu0 0.0
    %2468 = vmatpush1.msra.mxu0 0.0
    %2469 = vmatprep.subr.mxu0 0.0
    %2470 = vmatpush1.msra.mxu0 0.0
    %2471 = vmatprep.subr.mxu0 0.0
    %2472 = vmatpush1.msra.mxu0 0.0
    %2473 = vmatprep.subr.mxu0 0.0
    %2474 = vmatpush1.msra.mxu0 0.0
    %2475 = vmatprep.subr.mxu0 0.0
    %2476 = vmatpush1.msra.mxu0 0.0
    %2477 = vmatprep.mubr.f32.mxu0 0.0
    %2478 = vmatmul.mubr.f32.gmra.mrb[0].mxu0 %v2411
    %v2479 = vpop.f32.mrb[0].mxu0
    %v2480 = vadd.f32 %v2407, %v2479
    %v2481 = vpop.f32.mrb[0].mxu0
    %2482 = vdwg.mxu0
    %v2483 = vld [vmem:[#allocation2 + $0x8] sm:$0xfc]
    %v2484 = vld [vmem:[#allocation2 + $0x20] sm:$0x3]
    %v2485 = vld [vmem:[%s1366] sm:$0xff]
    %v2486 = vld [vmem:[%s1366 + $0x8] sm:$0xff]
    %v2487 = vld [vmem:[%s1366 + $0x10] sm:$0xff]
    %v2488 = vld [vmem:[%s1366 + $0x18] sm:$0xff]
    %v2489 = vld [vmem:[%s1366 + $0x20] sm:$0xff]
    %v2490 = vld [vmem:[%s1366 + $0x28] sm:$0xff]
    %v2491 = vld [vmem:[%s1366 + $0x30] sm:$0xff]
    %v2492 = vld [vmem:[%s1366 + $0x38] sm:$0xff]
    %v2493 = vld [vmem:[%s1366 + $0x40] sm:$0xff]
    %v2494 = vld [vmem:[%s1366 + $0x48] sm:$0xff]
    %v2495 = vld [vmem:[%s1366 + $0x50] sm:$0xff]
    %v2496 = vld [vmem:[%s1366 + $0x58] sm:$0xff]
    %v2499 = vrot.slane %v2483, 2
    %v2500 = vrot.slane %v2484, 2
    %v2501 = vsel %vm407, %v2499, %v2500
    %v2502 = vsel %vm1218, %v2501, 0
    %2504 = vmatprep.subr.mxu0 0.0
    %2505 = vmatpush1.msra.mxu0 %v2485
    %2506 = vmatprep.subr.mxu0 0.0
    %2507 = vmatpush1.msra.mxu0 %v2486
    %2508 = vmatprep.subr.mxu0 0.0
    %2509 = vmatpush1.msra.mxu0 %v2487
    %2510 = vmatprep.subr.mxu0 0.0
    %2511 = vmatpush1.msra.mxu0 %v2488
    %2512 = vmatprep.subr.mxu0 0.0
    %2513 = vmatpush1.msra.mxu0 %v2489
    %2514 = vmatprep.subr.mxu0 0.0
    %2515 = vmatpush1.msra.mxu0 %v2490
    %2516 = vmatprep.subr.mxu0 0.0
    %2517 = vmatpush1.msra.mxu0 %v2491
    %2518 = vmatprep.subr.mxu0 0.0
    %2519 = vmatpush1.msra.mxu0 %v2492
    %2520 = vmatprep.subr.mxu0 0.0
    %2521 = vmatpush1.msra.mxu0 %v2493
    %2522 = vmatprep.subr.mxu0 0.0
    %2523 = vmatpush1.msra.mxu0 %v2494
    %2524 = vmatprep.subr.mxu0 0.0
    %2525 = vmatpush1.msra.mxu0 %v2495
    %2526 = vmatprep.subr.mxu0 0.0
    %2527 = vmatpush1.msra.mxu0 %v2496
    %2528 = vmatprep.subr.mxu0 0.0
    %2529 = vmatpush1.msra.mxu0 0.0
    %2530 = vmatprep.subr.mxu0 0.0
    %2531 = vmatpush1.msra.mxu0 0.0
    %2532 = vmatprep.subr.mxu0 0.0
    %2533 = vmatpush1.msra.mxu0 0.0
    %2534 = vmatprep.subr.mxu0 0.0
    %2535 = vmatpush1.msra.mxu0 0.0
    %2536 = vmatprep.subr.mxu0 0.0
    %2537 = vmatpush1.msra.mxu0 0.0
    %2538 = vmatprep.subr.mxu0 0.0
    %2539 = vmatpush1.msra.mxu0 0.0
    %2540 = vmatprep.subr.mxu0 0.0
    %2541 = vmatpush1.msra.mxu0 0.0
    %2542 = vmatprep.subr.mxu0 0.0
    %2543 = vmatpush1.msra.mxu0 0.0
    %2544 = vmatprep.subr.mxu0 0.0
    %2545 = vmatpush1.msra.mxu0 0.0
    %2546 = vmatprep.subr.mxu0 0.0
    %2547 = vmatpush1.msra.mxu0 0.0
    %2548 = vmatprep.subr.mxu0 0.0
    %2549 = vmatpush1.msra.mxu0 0.0
    %2550 = vmatprep.subr.mxu0 0.0
    %2551 = vmatpush1.msra.mxu0 0.0
    %2552 = vmatprep.subr.mxu0 0.0
    %2553 = vmatpush1.msra.mxu0 0.0
    %2554 = vmatprep.subr.mxu0 0.0
    %2555 = vmatpush1.msra.mxu0 0.0
    %2556 = vmatprep.subr.mxu0 0.0
    %2557 = vmatpush1.msra.mxu0 0.0
    %2558 = vmatprep.subr.mxu0 0.0
    %2559 = vmatpush1.msra.mxu0 0.0
    %2560 = vmatprep.subr.mxu0 0.0
    %2561 = vmatpush1.msra.mxu0 0.0
    %2562 = vmatprep.subr.mxu0 0.0
    %2563 = vmatpush1.msra.mxu0 0.0
    %2564 = vmatprep.subr.mxu0 0.0
    %2565 = vmatpush1.msra.mxu0 0.0
    %2566 = vmatprep.subr.mxu0 0.0
    %2567 = vmatpush1.msra.mxu0 0.0
    %2568 = vmatprep.mubr.f32.mxu0 0.0
    %2569 = vmatmul.mubr.f32.gmra.mrb[0].mxu0 %v2502
    %v2570 = vpop.f32.mrb[0].mxu0
    %v2571 = vadd.f32 0.0, %v2570
    %v2572 = vpop.f32.mrb[0].mxu0
    %2573 = vdwg.mxu0
    %v2574 = vadd.f32 %v2480, %v2571
    %v2575 = vld [vmem:[%s4] sm:$0x1]
    %v2577 = vlaneseq
    %v2578 = vshrl.u32 %v2577, 7
    %v2579 = vsub.s32 0, %v2578
    %v2580 = vrot.slane %v2575, %v2579
    %v2582 = vadd.f32 %v2574, %v2580
    %v2583 = vmax.f32 %v2582, 0.0
    %2584 = vrot.lane.b32.xlu0 %v2337, 96
    %v2585 = vpop.permute.xlu0 %2584
    %v2586 = vsel %vm1218, %v2585, 0
    %2588 = vmatprep.subr.mxu0 0.0
    %2589 = vmatpush1.msra.mxu0 %v2321
    %2590 = vmatprep.subr.mxu0 0.0
    %2591 = vmatpush1.msra.mxu0 %v2322
    %2592 = vmatprep.subr.mxu0 0.0
    %2593 = vmatpush1.msra.mxu0 %v2323
    %2594 = vmatprep.subr.mxu0 0.0
    %2595 = vmatpush1.msra.mxu0 %v2324
    %2596 = vmatprep.subr.mxu0 0.0
    %2597 = vmatpush1.msra.mxu0 %v2325
    %2598 = vmatprep.subr.mxu0 0.0
    %2599 = vmatpush1.msra.mxu0 %v2326
    %2600 = vmatprep.subr.mxu0 0.0
    %2601 = vmatpush1.msra.mxu0 %v2327
    %2602 = vmatprep.subr.mxu0 0.0
    %2603 = vmatpush1.msra.mxu0 %v2328
    %2604 = vmatprep.subr.mxu0 0.0
    %2605 = vmatpush1.msra.mxu0 %v2329
    %2606 = vmatprep.subr.mxu0 0.0
    %2607 = vmatpush1.msra.mxu0 %v2330
    %2608 = vmatprep.subr.mxu0 0.0
    %2609 = vmatpush1.msra.mxu0 %v2331
    %2610 = vmatprep.subr.mxu0 0.0
    %2611 = vmatpush1.msra.mxu0 %v2332
    %2612 = vmatprep.subr.mxu0 0.0
    %2613 = vmatpush1.msra.mxu0 0.0
    %2614 = vmatprep.subr.mxu0 0.0
    %2615 = vmatpush1.msra.mxu0 0.0
    %2616 = vmatprep.subr.mxu0 0.0
    %2617 = vmatpush1.msra.mxu0 0.0
    %2618 = vmatprep.subr.mxu0 0.0
    %2619 = vmatpush1.msra.mxu0 0.0
    %2620 = vmatprep.subr.mxu0 0.0
    %2621 = vmatpush1.msra.mxu0 0.0
    %2622 = vmatprep.subr.mxu0 0.0
    %2623 = vmatpush1.msra.mxu0 0.0
    %2624 = vmatprep.subr.mxu0 0.0
    %2625 = vmatpush1.msra.mxu0 0.0
    %2626 = vmatprep.subr.mxu0 0.0
    %2627 = vmatpush1.msra.mxu0 0.0
    %2628 = vmatprep.subr.mxu0 0.0
    %2629 = vmatpush1.msra.mxu0 0.0
    %2630 = vmatprep.subr.mxu0 0.0
    %2631 = vmatpush1.msra.mxu0 0.0
    %2632 = vmatprep.subr.mxu0 0.0
    %2633 = vmatpush1.msra.mxu0 0.0
    %2634 = vmatprep.subr.mxu0 0.0
    %2635 = vmatpush1.msra.mxu0 0.0
    %2636 = vmatprep.subr.mxu0 0.0
    %2637 = vmatpush1.msra.mxu0 0.0
    %2638 = vmatprep.subr.mxu0 0.0
    %2639 = vmatpush1.msra.mxu0 0.0
    %2640 = vmatprep.subr.mxu0 0.0
    %2641 = vmatpush1.msra.mxu0 0.0
    %2642 = vmatprep.subr.mxu0 0.0
    %2643 = vmatpush1.msra.mxu0 0.0
    %2644 = vmatprep.subr.mxu0 0.0
    %2645 = vmatpush1.msra.mxu0 0.0
    %2646 = vmatprep.subr.mxu0 0.0
    %2647 = vmatpush1.msra.mxu0 0.0
    %2648 = vmatprep.subr.mxu0 0.0
    %2649 = vmatpush1.msra.mxu0 0.0
    %2650 = vmatprep.subr.mxu0 0.0
    %2651 = vmatpush1.msra.mxu0 0.0
    %2652 = vmatprep.mubr.f32.mxu0 0.0
    %2653 = vmatmul.mubr.f32.gmra.mrb[0].mxu0 %v2586
    %v2654 = vpop.f32.mrb[0].mxu0
    %v2655 = vadd.f32 0.0, %v2654
    %v2656 = vpop.f32.mrb[0].mxu0
    %2657 = vdwg.mxu0
    %2658 = vrot.lane.b32.xlu0 %v2306, 96
    %v2659 = vpop.permute.xlu0 %2658
    %v2660 = vsel %vm1218, %v2659, 0
    %2662 = vmatprep.subr.mxu0 0.0
    %2663 = vmatpush1.msra.mxu0 %v2307
    %2664 = vmatprep.subr.mxu0 0.0
    %2665 = vmatpush1.msra.mxu0 %v2308
    %2666 = vmatprep.subr.mxu0 0.0
    %2667 = vmatpush1.msra.mxu0 %v2309
    %2668 = vmatprep.subr.mxu0 0.0
    %2669 = vmatpush1.msra.mxu0 %v2310
    %2670 = vmatprep.subr.mxu0 0.0
    %2671 = vmatpush1.msra.mxu0 %v2311
    %2672 = vmatprep.subr.mxu0 0.0
    %2673 = vmatpush1.msra.mxu0 %v2312
    %2674 = vmatprep.subr.mxu0 0.0
    %2675 = vmatpush1.msra.mxu0 %v2313
    %2676 = vmatprep.subr.mxu0 0.0
    %2677 = vmatpush1.msra.mxu0 %v2314
    %2678 = vmatprep.subr.mxu0 0.0
    %2679 = vmatpush1.msra.mxu0 %v2315
    %2680 = vmatprep.subr.mxu0 0.0
    %2681 = vmatpush1.msra.mxu0 %v2316
    %2682 = vmatprep.subr.mxu0 0.0
    %2683 = vmatpush1.msra.mxu0 %v2317
    %2684 = vmatprep.subr.mxu0 0.0
    %2685 = vmatpush1.msra.mxu0 %v2318
    %2686 = vmatprep.subr.mxu0 0.0
    %2687 = vmatpush1.msra.mxu0 0.0
    %2688 = vmatprep.subr.mxu0 0.0
    %2689 = vmatpush1.msra.mxu0 0.0
    %2690 = vmatprep.subr.mxu0 0.0
    %2691 = vmatpush1.msra.mxu0 0.0
    %2692 = vmatprep.subr.mxu0 0.0
    %2693 = vmatpush1.msra.mxu0 0.0
    %2694 = vmatprep.subr.mxu0 0.0
    %2695 = vmatpush1.msra.mxu0 0.0
    %2696 = vmatprep.subr.mxu0 0.0
    %2697 = vmatpush1.msra.mxu0 0.0
    %2698 = vmatprep.subr.mxu0 0.0
    %2699 = vmatpush1.msra.mxu0 0.0
    %2700 = vmatprep.subr.mxu0 0.0
    %2701 = vmatpush1.msra.mxu0 0.0
    %2702 = vmatprep.subr.mxu0 0.0
    %2703 = vmatpush1.msra.mxu0 0.0
    %2704 = vmatprep.subr.mxu0 0.0
    %2705 = vmatpush1.msra.mxu0 0.0
    %2706 = vmatprep.subr.mxu0 0.0
    %2707 = vmatpush1.msra.mxu0 0.0
    %2708 = vmatprep.subr.mxu0 0.0
    %2709 = vmatpush1.msra.mxu0 0.0
    %2710 = vmatprep.subr.mxu0 0.0
    %2711 = vmatpush1.msra.mxu0 0.0
    %2712 = vmatprep.subr.mxu0 0.0
    %2713 = vmatpush1.msra.mxu0 0.0
    %2714 = vmatprep.subr.mxu0 0.0
    %2715 = vmatpush1.msra.mxu0 0.0
    %2716 = vmatprep.subr.mxu0 0.0
    %2717 = vmatpush1.msra.mxu0 0.0
    %2718 = vmatprep.subr.mxu0 0.0
    %2719 = vmatpush1.msra.mxu0 0.0
    %2720 = vmatprep.subr.mxu0 0.0
    %2721 = vmatpush1.msra.mxu0 0.0
    %2722 = vmatprep.subr.mxu0 0.0
    %2723 = vmatpush1.msra.mxu0 0.0
    %2724 = vmatprep.subr.mxu0 0.0
    %2725 = vmatpush1.msra.mxu0 0.0
    %2726 = vmatprep.mubr.f32.mxu0 0.0
    %2727 = vmatmul.mubr.f32.gmra.mrb[0].mxu0 %v2660
    %v2728 = vpop.f32.mrb[0].mxu0
    %v2729 = vadd.f32 %v2655, %v2728
    %v2730 = vpop.f32.mrb[0].mxu0
    %2731 = vdwg.mxu0
    %2732 = vrot.lane.b32.xlu0 %v2501, 96
    %v2733 = vpop.permute.xlu0 %2732
    %v2734 = vsel %vm1218, %v2733, 0
    %2736 = vmatprep.subr.mxu0 0.0
    %2737 = vmatpush1.msra.mxu0 %v2485
    %2738 = vmatprep.subr.mxu0 0.0
    %2739 = vmatpush1.msra.mxu0 %v2486
    %2740 = vmatprep.subr.mxu0 0.0
    %2741 = vmatpush1.msra.mxu0 %v2487
    %2742 = vmatprep.subr.mxu0 0.0
    %2743 = vmatpush1.msra.mxu0 %v2488
    %2744 = vmatprep.subr.mxu0 0.0
    %2745 = vmatpush1.msra.mxu0 %v2489
    %2746 = vmatprep.subr.mxu0 0.0
    %2747 = vmatpush1.msra.mxu0 %v2490
    %2748 = vmatprep.subr.mxu0 0.0
    %2749 = vmatpush1.msra.mxu0 %v2491
    %2750 = vmatprep.subr.mxu0 0.0
    %2751 = vmatpush1.msra.mxu0 %v2492
    %2752 = vmatprep.subr.mxu0 0.0
    %2753 = vmatpush1.msra.mxu0 %v2493
    %2754 = vmatprep.subr.mxu0 0.0
    %2755 = vmatpush1.msra.mxu0 %v2494
    %2756 = vmatprep.subr.mxu0 0.0
    %2757 = vmatpush1.msra.mxu0 %v2495
    %2758 = vmatprep.subr.mxu0 0.0
    %2759 = vmatpush1.msra.mxu0 %v2496
    %2760 = vmatprep.subr.mxu0 0.0
    %2761 = vmatpush1.msra.mxu0 0.0
    %2762 = vmatprep.subr.mxu0 0.0
    %2763 = vmatpush1.msra.mxu0 0.0
    %2764 = vmatprep.subr.mxu0 0.0
    %2765 = vmatpush1.msra.mxu0 0.0
    %2766 = vmatprep.subr.mxu0 0.0
    %2767 = vmatpush1.msra.mxu0 0.0
    %2768 = vmatprep.subr.mxu0 0.0
    %2769 = vmatpush1.msra.mxu0 0.0
    %2770 = vmatprep.subr.mxu0 0.0
    %2771 = vmatpush1.msra.mxu0 0.0
    %2772 = vmatprep.subr.mxu0 0.0
    %2773 = vmatpush1.msra.mxu0 0.0
    %2774 = vmatprep.subr.mxu0 0.0
    %2775 = vmatpush1.msra.mxu0 0.0
    %2776 = vmatprep.subr.mxu0 0.0
    %2777 = vmatpush1.msra.mxu0 0.0
    %2778 = vmatprep.subr.mxu0 0.0
    %2779 = vmatpush1.msra.mxu0 0.0
    %2780 = vmatprep.subr.mxu0 0.0
    %2781 = vmatpush1.msra.mxu0 0.0
    %2782 = vmatprep.subr.mxu0 0.0
    %2783 = vmatpush1.msra.mxu0 0.0
    %2784 = vmatprep.subr.mxu0 0.0
    %2785 = vmatpush1.msra.mxu0 0.0
    %2786 = vmatprep.subr.mxu0 0.0
    %2787 = vmatpush1.msra.mxu0 0.0
    %2788 = vmatprep.subr.mxu0 0.0
    %2789 = vmatpush1.msra.mxu0 0.0
    %2790 = vmatprep.subr.mxu0 0.0
    %2791 = vmatpush1.msra.mxu0 0.0
    %2792 = vmatprep.subr.mxu0 0.0
    %2793 = vmatpush1.msra.mxu0 0.0
    %2794 = vmatprep.subr.mxu0 0.0
    %2795 = vmatpush1.msra.mxu0 0.0
    %2796 = vmatprep.subr.mxu0 0.0
    %2797 = vmatpush1.msra.mxu0 0.0
    %2798 = vmatprep.subr.mxu0 0.0
    %2799 = vmatpush1.msra.mxu0 0.0
    %2800 = vmatprep.mubr.f32.mxu0 0.0
    %2801 = vmatmul.mubr.f32.gmra.mrb[0].mxu0 %v2734
    %v2802 = vpop.f32.mrb[0].mxu0
    %v2803 = vadd.f32 0.0, %v2802
    %v2804 = vpop.f32.mrb[0].mxu0
    %2805 = vdwg.mxu0
    %v2806 = vadd.f32 %v2729, %v2803
    %v2807 = vadd.f32 %v2806, %v2580
    %v2808 = vmax.f32 %v2807, 0.0
    %v2809 = vmax.f32 %v2583, %v2808
    %v2811 = vrot.slane %v2809, 1
    %v2813 = vmax.f32 %v2809, %v2811
    %2814 = vst.msk [vmem:[#allocation3 + $0x2] sm:$0x1] %vm1696, %v2813
    %v2817 = vunpack.c.l.s4 1983009808
    %v2818 = vunpack.c.0.s8 %v2817
    %v2819 = vlaneseq
    %v2820 = vshrl.u32 %v2819, 7
    %v2821 = vsub.s32 %v2818, %v2820
    %v2822 = vrot.slane %v2813, %v2821
    %v2823 = vcombine.high %v2822, %v2822
    %2825 = vst.msk [vmem:[#allocation3 + $0x6] sm:$0x1] %vm1696, %v2823
    %v2826 = vcombine.high %v2813, %v2813
    %v2828 = vunpack.c.l.s4 1983009808
    %v2829 = vunpack.c.0.s8 %v2828
    %v2830 = vlaneseq
    %v2831 = vshrl.u32 %v2830, 7
    %v2832 = vsub.s32 %v2829, %v2831
    %v2833 = vrot.slane %v2826, %v2832
    %2835 = vst.msk [vmem:[#allocation3 + $0xa] sm:$0x1] %vm1696, %v2833
    %v2836 = vcombine.high %v2833, %v2833
    %2838 = vst.msk [vmem:[#allocation3 + $0xe] sm:$0x1] %vm1696, %v2836
    %v2839 = vld [vmem:[#allocation2 + $0x8] sm:$0xff]
    %v2840 = vld [vmem:[#allocation2 + $0x10] sm:$0xff]
    %v2841 = vld [vmem:[%s3] sm:$0xff]
    %v2842 = vld [vmem:[%s3 + $0x8] sm:$0xff]
    %v2843 = vld [vmem:[%s3 + $0x10] sm:$0xff]
    %v2844 = vld [vmem:[%s3 + $0x18] sm:$0xff]
    %v2845 = vld [vmem:[%s3 + $0x20] sm:$0xff]
    %v2846 = vld [vmem:[%s3 + $0x28] sm:$0xff]
    %v2847 = vld [vmem:[%s3 + $0x30] sm:$0xff]
    %v2848 = vld [vmem:[%s3 + $0x38] sm:$0xff]
    %v2849 = vld [vmem:[%s3 + $0x40] sm:$0xff]
    %v2850 = vld [vmem:[%s3 + $0x48] sm:$0xff]
    %v2851 = vld [vmem:[%s3 + $0x50] sm:$0xff]
    %v2852 = vld [vmem:[%s3 + $0x58] sm:$0xff]
    %v2853 = vld [vmem:[#allocation2 + $0x8] sm:$0xfe]
    %v2854 = vld [vmem:[#allocation2 + $0x10] sm:$0xfe]
    %v2855 = vld [vmem:[#allocation2 + $0x20] sm:$0x1]
    %v2856 = vld [vmem:[#allocation2 + $0x28] sm:$0x1]
    %v2857 = vld [vmem:[%s1200] sm:$0xff]
    %v2858 = vld [vmem:[%s1200 + $0x8] sm:$0xff]
    %v2859 = vld [vmem:[%s1200 + $0x10] sm:$0xff]
    %v2860 = vld [vmem:[%s1200 + $0x18] sm:$0xff]
    %v2861 = vld [vmem:[%s1200 + $0x20] sm:$0xff]
    %v2862 = vld [vmem:[%s1200 + $0x28] sm:$0xff]
    %v2863 = vld [vmem:[%s1200 + $0x30] sm:$0xff]
    %v2864 = vld [vmem:[%s1200 + $0x38] sm:$0xff]
    %v2865 = vld [vmem:[%s1200 + $0x40] sm:$0xff]
    %v2866 = vld [vmem:[%s1200 + $0x48] sm:$0xff]
    %v2867 = vld [vmem:[%s1200 + $0x50] sm:$0xff]
    %v2868 = vld [vmem:[%s1200 + $0x58] sm:$0xff]
    %v2873 = vrot.slane %v2853, 1
    %v2874 = vrot.slane %v2855, 1
    %v2875 = vsel %vm64, %v2873, %v2874
    %v2876 = vrot.slane %v2854, 1
    %v2877 = vrot.slane %v2856, 1
    %v2878 = vsel %vm64, %v2876, %v2877
    %2879 = vrot.lane.b32.xlu0 %v2875, 64
    %v2880 = vpop.permute.xlu0 %2879
    %2881 = vrot.lane.b32.xlu0 %v2878, 64
    %v2882 = vpop.permute.xlu0 %2881
    %v2883 = vsel %vm613, %v2880, %v2882
    %v2884 = vsel %vm1218, %v2883, 0
    %2886 = vmatprep.subr.mxu0 0.0
    %2887 = vmatpush1.msra.mxu0 %v2857
    %2888 = vmatprep.subr.mxu0 0.0
    %2889 = vmatpush1.msra.mxu0 %v2858
    %2890 = vmatprep.subr.mxu0 0.0
    %2891 = vmatpush1.msra.mxu0 %v2859
    %2892 = vmatprep.subr.mxu0 0.0
    %2893 = vmatpush1.msra.mxu0 %v2860
    %2894 = vmatprep.subr.mxu0 0.0
    %2895 = vmatpush1.msra.mxu0 %v2861
    %2896 = vmatprep.subr.mxu0 0.0
    %2897 = vmatpush1.msra.mxu0 %v2862
    %2898 = vmatprep.subr.mxu0 0.0
    %2899 = vmatpush1.msra.mxu0 %v2863
    %2900 = vmatprep.subr.mxu0 0.0
    %2901 = vmatpush1.msra.mxu0 %v2864
    %2902 = vmatprep.subr.mxu0 0.0
    %2903 = vmatpush1.msra.mxu0 %v2865
    %2904 = vmatprep.subr.mxu0 0.0
    %2905 = vmatpush1.msra.mxu0 %v2866
    %2906 = vmatprep.subr.mxu0 0.0
    %2907 = vmatpush1.msra.mxu0 %v2867
    %2908 = vmatprep.subr.mxu0 0.0
    %2909 = vmatpush1.msra.mxu0 %v2868
    %2910 = vmatprep.subr.mxu0 0.0
    %2911 = vmatpush1.msra.mxu0 0.0
    %2912 = vmatprep.subr.mxu0 0.0
    %2913 = vmatpush1.msra.mxu0 0.0
    %2914 = vmatprep.subr.mxu0 0.0
    %2915 = vmatpush1.msra.mxu0 0.0
    %2916 = vmatprep.subr.mxu0 0.0
    %2917 = vmatpush1.msra.mxu0 0.0
    %2918 = vmatprep.subr.mxu0 0.0
    %2919 = vmatpush1.msra.mxu0 0.0
    %2920 = vmatprep.subr.mxu0 0.0
    %2921 = vmatpush1.msra.mxu0 0.0
    %2922 = vmatprep.subr.mxu0 0.0
    %2923 = vmatpush1.msra.mxu0 0.0
    %2924 = vmatprep.subr.mxu0 0.0
    %2925 = vmatpush1.msra.mxu0 0.0
    %2926 = vmatprep.subr.mxu0 0.0
    %2927 = vmatpush1.msra.mxu0 0.0
    %2928 = vmatprep.subr.mxu0 0.0
    %2929 = vmatpush1.msra.mxu0 0.0
    %2930 = vmatprep.subr.mxu0 0.0
    %2931 = vmatpush1.msra.mxu0 0.0
    %2932 = vmatprep.subr.mxu0 0.0
    %2933 = vmatpush1.msra.mxu0 0.0
    %2934 = vmatprep.subr.mxu0 0.0
    %2935 = vmatpush1.msra.mxu0 0.0
    %2936 = vmatprep.subr.mxu0 0.0
    %2937 = vmatpush1.msra.mxu0 0.0
    %2938 = vmatprep.subr.mxu0 0.0
    %2939 = vmatpush1.msra.mxu0 0.0
    %2940 = vmatprep.subr.mxu0 0.0
    %2941 = vmatpush1.msra.mxu0 0.0
    %2942 = vmatprep.subr.mxu0 0.0
    %2943 = vmatpush1.msra.mxu0 0.0
    %2944 = vmatprep.subr.mxu0 0.0
    %2945 = vmatpush1.msra.mxu0 0.0
    %2946 = vmatprep.subr.mxu0 0.0
    %2947 = vmatpush1.msra.mxu0 0.0
    %2948 = vmatprep.subr.mxu0 0.0
    %2949 = vmatpush1.msra.mxu0 0.0
    %2950 = vmatprep.mubr.f32.mxu0 0.0
    %2951 = vmatmul.mubr.f32.gmra.mrb[0].mxu0 %v2884
    %v2952 = vpop.f32.mrb[0].mxu0
    %v2953 = vadd.f32 0.0, %v2952
    %v2954 = vpop.f32.mrb[0].mxu0
    %2955 = vdwg.mxu0
    %2958 = vrot.lane.b32.xlu0 %v2839, 64
    %v2959 = vpop.permute.xlu0 %2958
    %2960 = vrot.lane.b32.xlu0 %v2840, 64
    %v2961 = vpop.permute.xlu0 %2960
    %v2962 = vsel %vm613, %v2959, %v2961
    %v2963 = vsel %vm1218, %v2962, 0
    %2965 = vmatprep.subr.mxu0 0.0
    %2966 = vmatpush1.msra.mxu0 %v2841
    %2967 = vmatprep.subr.mxu0 0.0
    %2968 = vmatpush1.msra.mxu0 %v2842
    %2969 = vmatprep.subr.mxu0 0.0
    %2970 = vmatpush1.msra.mxu0 %v2843
    %2971 = vmatprep.subr.mxu0 0.0
    %2972 = vmatpush1.msra.mxu0 %v2844
    %2973 = vmatprep.subr.mxu0 0.0
    %2974 = vmatpush1.msra.mxu0 %v2845
    %2975 = vmatprep.subr.mxu0 0.0
    %2976 = vmatpush1.msra.mxu0 %v2846
    %2977 = vmatprep.subr.mxu0 0.0
    %2978 = vmatpush1.msra.mxu0 %v2847
    %2979 = vmatprep.subr.mxu0 0.0
    %2980 = vmatpush1.msra.mxu0 %v2848
    %2981 = vmatprep.subr.mxu0 0.0
    %2982 = vmatpush1.msra.mxu0 %v2849
    %2983 = vmatprep.subr.mxu0 0.0
    %2984 = vmatpush1.msra.mxu0 %v2850
    %2985 = vmatprep.subr.mxu0 0.0
    %2986 = vmatpush1.msra.mxu0 %v2851
    %2987 = vmatprep.subr.mxu0 0.0
    %2988 = vmatpush1.msra.mxu0 %v2852
    %2989 = vmatprep.subr.mxu0 0.0
    %2990 = vmatpush1.msra.mxu0 0.0
    %2991 = vmatprep.subr.mxu0 0.0
    %2992 = vmatpush1.msra.mxu0 0.0
    %2993 = vmatprep.subr.mxu0 0.0
    %2994 = vmatpush1.msra.mxu0 0.0
    %2995 = vmatprep.subr.mxu0 0.0
    %2996 = vmatpush1.msra.mxu0 0.0
    %2997 = vmatprep.subr.mxu0 0.0
    %2998 = vmatpush1.msra.mxu0 0.0
    %2999 = vmatprep.subr.mxu0 0.0
    %3000 = vmatpush1.msra.mxu0 0.0
    %3001 = vmatprep.subr.mxu0 0.0
    %3002 = vmatpush1.msra.mxu0 0.0
    %3003 = vmatprep.subr.mxu0 0.0
    %3004 = vmatpush1.msra.mxu0 0.0
    %3005 = vmatprep.subr.mxu0 0.0
    %3006 = vmatpush1.msra.mxu0 0.0
    %3007 = vmatprep.subr.mxu0 0.0
    %3008 = vmatpush1.msra.mxu0 0.0
    %3009 = vmatprep.subr.mxu0 0.0
    %3010 = vmatpush1.msra.mxu0 0.0
    %3011 = vmatprep.subr.mxu0 0.0
    %3012 = vmatpush1.msra.mxu0 0.0
    %3013 = vmatprep.subr.mxu0 0.0
    %3014 = vmatpush1.msra.mxu0 0.0
    %3015 = vmatprep.subr.mxu0 0.0
    %3016 = vmatpush1.msra.mxu0 0.0
    %3017 = vmatprep.subr.mxu0 0.0
    %3018 = vmatpush1.msra.mxu0 0.0
    %3019 = vmatprep.subr.mxu0 0.0
    %3020 = vmatpush1.msra.mxu0 0.0
    %3021 = vmatprep.subr.mxu0 0.0
    %3022 = vmatpush1.msra.mxu0 0.0
    %3023 = vmatprep.subr.mxu0 0.0
    %3024 = vmatpush1.msra.mxu0 0.0
    %3025 = vmatprep.subr.mxu0 0.0
    %3026 = vmatpush1.msra.mxu0 0.0
    %3027 = vmatprep.subr.mxu0 0.0
    %3028 = vmatpush1.msra.mxu0 0.0
    %3029 = vmatprep.mubr.f32.mxu0 0.0
    %3030 = vmatmul.mubr.f32.gmra.mrb[0].mxu0 %v2963
    %v3031 = vpop.f32.mrb[0].mxu0
    %v3032 = vadd.f32 %v2953, %v3031
    %v3033 = vpop.f32.mrb[0].mxu0
    %3034 = vdwg.mxu0
    %v3035 = vld [vmem:[#allocation2 + $0x8] sm:$0xfc]
    %v3036 = vld [vmem:[#allocation2 + $0x10] sm:$0xfc]
    %v3037 = vld [vmem:[#allocation2 + $0x20] sm:$0x3]
    %v3038 = vld [vmem:[#allocation2 + $0x28] sm:$0x3]
    %v3039 = vld [vmem:[%s1366] sm:$0xff]
    %v3040 = vld [vmem:[%s1366 + $0x8] sm:$0xff]
    %v3041 = vld [vmem:[%s1366 + $0x10] sm:$0xff]
    %v3042 = vld [vmem:[%s1366 + $0x18] sm:$0xff]
    %v3043 = vld [vmem:[%s1366 + $0x20] sm:$0xff]
    %v3044 = vld [vmem:[%s1366 + $0x28] sm:$0xff]
    %v3045 = vld [vmem:[%s1366 + $0x30] sm:$0xff]
    %v3046 = vld [vmem:[%s1366 + $0x38] sm:$0xff]
    %v3047 = vld [vmem:[%s1366 + $0x40] sm:$0xff]
    %v3048 = vld [vmem:[%s1366 + $0x48] sm:$0xff]
    %v3049 = vld [vmem:[%s1366 + $0x50] sm:$0xff]
    %v3050 = vld [vmem:[%s1366 + $0x58] sm:$0xff]
    %v3055 = vrot.slane %v3035, 2
    %v3056 = vrot.slane %v3037, 2
    %v3057 = vsel %vm407, %v3055, %v3056
    %v3058 = vrot.slane %v3036, 2
    %v3059 = vrot.slane %v3038, 2
    %v3060 = vsel %vm407, %v3058, %v3059
    %3061 = vrot.lane.b32.xlu0 %v3057, 64
    %v3062 = vpop.permute.xlu0 %3061
    %3063 = vrot.lane.b32.xlu0 %v3060, 64
    %v3064 = vpop.permute.xlu0 %3063
    %v3065 = vsel %vm613, %v3062, %v3064
    %v3066 = vsel %vm1218, %v3065, 0
    %3068 = vmatprep.subr.mxu0 0.0
    %3069 = vmatpush1.msra.mxu0 %v3039
    %3070 = vmatprep.subr.mxu0 0.0
    %3071 = vmatpush1.msra.mxu0 %v3040
    %3072 = vmatprep.subr.mxu0 0.0
    %3073 = vmatpush1.msra.mxu0 %v3041
    %3074 = vmatprep.subr.mxu0 0.0
    %3075 = vmatpush1.msra.mxu0 %v3042
    %3076 = vmatprep.subr.mxu0 0.0
    %3077 = vmatpush1.msra.mxu0 %v3043
    %3078 = vmatprep.subr.mxu0 0.0
    %3079 = vmatpush1.msra.mxu0 %v3044
    %3080 = vmatprep.subr.mxu0 0.0
    %3081 = vmatpush1.msra.mxu0 %v3045
    %3082 = vmatprep.subr.mxu0 0.0
    %3083 = vmatpush1.msra.mxu0 %v3046
    %3084 = vmatprep.subr.mxu0 0.0
    %3085 = vmatpush1.msra.mxu0 %v3047
    %3086 = vmatprep.subr.mxu0 0.0
    %3087 = vmatpush1.msra.mxu0 %v3048
    %3088 = vmatprep.subr.mxu0 0.0
    %3089 = vmatpush1.msra.mxu0 %v3049
    %3090 = vmatprep.subr.mxu0 0.0
    %3091 = vmatpush1.msra.mxu0 %v3050
    %3092 = vmatprep.subr.mxu0 0.0
    %3093 = vmatpush1.msra.mxu0 0.0
    %3094 = vmatprep.subr.mxu0 0.0
    %3095 = vmatpush1.msra.mxu0 0.0
    %3096 = vmatprep.subr.mxu0 0.0
    %3097 = vmatpush1.msra.mxu0 0.0
    %3098 = vmatprep.subr.mxu0 0.0
    %3099 = vmatpush1.msra.mxu0 0.0
    %3100 = vmatprep.subr.mxu0 0.0
    %3101 = vmatpush1.msra.mxu0 0.0
    %3102 = vmatprep.subr.mxu0 0.0
    %3103 = vmatpush1.msra.mxu0 0.0
    %3104 = vmatprep.subr.mxu0 0.0
    %3105 = vmatpush1.msra.mxu0 0.0
    %3106 = vmatprep.subr.mxu0 0.0
    %3107 = vmatpush1.msra.mxu0 0.0
    %3108 = vmatprep.subr.mxu0 0.0
    %3109 = vmatpush1.msra.mxu0 0.0
    %3110 = vmatprep.subr.mxu0 0.0
    %3111 = vmatpush1.msra.mxu0 0.0
    %3112 = vmatprep.subr.mxu0 0.0
    %3113 = vmatpush1.msra.mxu0 0.0
    %3114 = vmatprep.subr.mxu0 0.0
    %3115 = vmatpush1.msra.mxu0 0.0
    %3116 = vmatprep.subr.mxu0 0.0
    %3117 = vmatpush1.msra.mxu0 0.0
    %3118 = vmatprep.subr.mxu0 0.0
    %3119 = vmatpush1.msra.mxu0 0.0
    %3120 = vmatprep.subr.mxu0 0.0
    %3121 = vmatpush1.msra.mxu0 0.0
    %3122 = vmatprep.subr.mxu0 0.0
    %3123 = vmatpush1.msra.mxu0 0.0
    %3124 = vmatprep.subr.mxu0 0.0
    %3125 = vmatpush1.msra.mxu0 0.0
    %3126 = vmatprep.subr.mxu0 0.0
    %3127 = vmatpush1.msra.mxu0 0.0
    %3128 = vmatprep.subr.mxu0 0.0
    %3129 = vmatpush1.msra.mxu0 0.0
    %3130 = vmatprep.subr.mxu0 0.0
    %3131 = vmatpush1.msra.mxu0 0.0
    %3132 = vmatprep.mubr.f32.mxu0 0.0
    %3133 = vmatmul.mubr.f32.gmra.mrb[0].mxu0 %v3066
    %v3134 = vpop.f32.mrb[0].mxu0
    %v3135 = vadd.f32 0.0, %v3134
    %v3136 = vpop.f32.mrb[0].mxu0
    %3137 = vdwg.mxu0
    %v3138 = vadd.f32 %v3032, %v3135
    %v3139 = vld [vmem:[%s4] sm:$0x1]
    %v3141 = vlaneseq
    %v3142 = vshrl.u32 %v3141, 7
    %v3143 = vsub.s32 0, %v3142
    %v3144 = vrot.slane %v3139, %v3143
    %v3146 = vadd.f32 %v3138, %v3144
    %v3147 = vmax.f32 %v3146, 0.0
    %3148 = vrot.lane.b32.xlu0 %v2875, 32
    %v3149 = vpop.permute.xlu0 %3148
    %3150 = vrot.lane.b32.xlu0 %v2878, 32
    %v3151 = vpop.permute.xlu0 %3150
    %v3152 = vsel %vm2035, %v3149, %v3151
    %v3153 = vsel %vm1218, %v3152, 0
    %3155 = vmatprep.subr.mxu0 0.0
    %3156 = vmatpush1.msra.mxu0 %v2857
    %3157 = vmatprep.subr.mxu0 0.0
    %3158 = vmatpush1.msra.mxu0 %v2858
    %3159 = vmatprep.subr.mxu0 0.0
    %3160 = vmatpush1.msra.mxu0 %v2859
    %3161 = vmatprep.subr.mxu0 0.0
    %3162 = vmatpush1.msra.mxu0 %v2860
    %3163 = vmatprep.subr.mxu0 0.0
    %3164 = vmatpush1.msra.mxu0 %v2861
    %3165 = vmatprep.subr.mxu0 0.0
    %3166 = vmatpush1.msra.mxu0 %v2862
    %3167 = vmatprep.subr.mxu0 0.0
    %3168 = vmatpush1.msra.mxu0 %v2863
    %3169 = vmatprep.subr.mxu0 0.0
    %3170 = vmatpush1.msra.mxu0 %v2864
    %3171 = vmatprep.subr.mxu0 0.0
    %3172 = vmatpush1.msra.mxu0 %v2865
    %3173 = vmatprep.subr.mxu0 0.0
    %3174 = vmatpush1.msra.mxu0 %v2866
    %3175 = vmatprep.subr.mxu0 0.0
    %3176 = vmatpush1.msra.mxu0 %v2867
    %3177 = vmatprep.subr.mxu0 0.0
    %3178 = vmatpush1.msra.mxu0 %v2868
    %3179 = vmatprep.subr.mxu0 0.0
    %3180 = vmatpush1.msra.mxu0 0.0
    %3181 = vmatprep.subr.mxu0 0.0
    %3182 = vmatpush1.msra.mxu0 0.0
    %3183 = vmatprep.subr.mxu0 0.0
    %3184 = vmatpush1.msra.mxu0 0.0
    %3185 = vmatprep.subr.mxu0 0.0
    %3186 = vmatpush1.msra.mxu0 0.0
    %3187 = vmatprep.subr.mxu0 0.0
    %3188 = vmatpush1.msra.mxu0 0.0
    %3189 = vmatprep.subr.mxu0 0.0
    %3190 = vmatpush1.msra.mxu0 0.0
    %3191 = vmatprep.subr.mxu0 0.0
    %3192 = vmatpush1.msra.mxu0 0.0
    %3193 = vmatprep.subr.mxu0 0.0
    %3194 = vmatpush1.msra.mxu0 0.0
    %3195 = vmatprep.subr.mxu0 0.0
    %3196 = vmatpush1.msra.mxu0 0.0
    %3197 = vmatprep.subr.mxu0 0.0
    %3198 = vmatpush1.msra.mxu0 0.0
    %3199 = vmatprep.subr.mxu0 0.0
    %3200 = vmatpush1.msra.mxu0 0.0
    %3201 = vmatprep.subr.mxu0 0.0
    %3202 = vmatpush1.msra.mxu0 0.0
    %3203 = vmatprep.subr.mxu0 0.0
    %3204 = vmatpush1.msra.mxu0 0.0
    %3205 = vmatprep.subr.mxu0 0.0
    %3206 = vmatpush1.msra.mxu0 0.0
    %3207 = vmatprep.subr.mxu0 0.0
    %3208 = vmatpush1.msra.mxu0 0.0
    %3209 = vmatprep.subr.mxu0 0.0
    %3210 = vmatpush1.msra.mxu0 0.0
    %3211 = vmatprep.subr.mxu0 0.0
    %3212 = vmatpush1.msra.mxu0 0.0
    %3213 = vmatprep.subr.mxu0 0.0
    %3214 = vmatpush1.msra.mxu0 0.0
    %3215 = vmatprep.subr.mxu0 0.0
    %3216 = vmatpush1.msra.mxu0 0.0
    %3217 = vmatprep.subr.mxu0 0.0
    %3218 = vmatpush1.msra.mxu0 0.0
    %3219 = vmatprep.mubr.f32.mxu0 0.0
    %3220 = vmatmul.mubr.f32.gmra.mrb[0].mxu0 %v3153
    %v3221 = vpop.f32.mrb[0].mxu0
    %v3222 = vadd.f32 0.0, %v3221
    %v3223 = vpop.f32.mrb[0].mxu0
    %3224 = vdwg.mxu0
    %3225 = vrot.lane.b32.xlu0 %v2839, 32
    %v3226 = vpop.permute.xlu0 %3225
    %3227 = vrot.lane.b32.xlu0 %v2840, 32
    %v3228 = vpop.permute.xlu0 %3227
    %v3229 = vsel %vm2035, %v3226, %v3228
    %v3230 = vsel %vm1218, %v3229, 0
    %3232 = vmatprep.subr.mxu0 0.0
    %3233 = vmatpush1.msra.mxu0 %v2841
    %3234 = vmatprep.subr.mxu0 0.0
    %3235 = vmatpush1.msra.mxu0 %v2842
    %3236 = vmatprep.subr.mxu0 0.0
    %3237 = vmatpush1.msra.mxu0 %v2843
    %3238 = vmatprep.subr.mxu0 0.0
    %3239 = vmatpush1.msra.mxu0 %v2844
    %3240 = vmatprep.subr.mxu0 0.0
    %3241 = vmatpush1.msra.mxu0 %v2845
    %3242 = vmatprep.subr.mxu0 0.0
    %3243 = vmatpush1.msra.mxu0 %v2846
    %3244 = vmatprep.subr.mxu0 0.0
    %3245 = vmatpush1.msra.mxu0 %v2847
    %3246 = vmatprep.subr.mxu0 0.0
    %3247 = vmatpush1.msra.mxu0 %v2848
    %3248 = vmatprep.subr.mxu0 0.0
    %3249 = vmatpush1.msra.mxu0 %v2849
    %3250 = vmatprep.subr.mxu0 0.0
    %3251 = vmatpush1.msra.mxu0 %v2850
    %3252 = vmatprep.subr.mxu0 0.0
    %3253 = vmatpush1.msra.mxu0 %v2851
    %3254 = vmatprep.subr.mxu0 0.0
    %3255 = vmatpush1.msra.mxu0 %v2852
    %3256 = vmatprep.subr.mxu0 0.0
    %3257 = vmatpush1.msra.mxu0 0.0
    %3258 = vmatprep.subr.mxu0 0.0
    %3259 = vmatpush1.msra.mxu0 0.0
    %3260 = vmatprep.subr.mxu0 0.0
    %3261 = vmatpush1.msra.mxu0 0.0
    %3262 = vmatprep.subr.mxu0 0.0
    %3263 = vmatpush1.msra.mxu0 0.0
    %3264 = vmatprep.subr.mxu0 0.0
    %3265 = vmatpush1.msra.mxu0 0.0
    %3266 = vmatprep.subr.mxu0 0.0
    %3267 = vmatpush1.msra.mxu0 0.0
    %3268 = vmatprep.subr.mxu0 0.0
    %3269 = vmatpush1.msra.mxu0 0.0
    %3270 = vmatprep.subr.mxu0 0.0
    %3271 = vmatpush1.msra.mxu0 0.0
    %3272 = vmatprep.subr.mxu0 0.0
    %3273 = vmatpush1.msra.mxu0 0.0
    %3274 = vmatprep.subr.mxu0 0.0
    %3275 = vmatpush1.msra.mxu0 0.0
    %3276 = vmatprep.subr.mxu0 0.0
    %3277 = vmatpush1.msra.mxu0 0.0
    %3278 = vmatprep.subr.mxu0 0.0
    %3279 = vmatpush1.msra.mxu0 0.0
    %3280 = vmatprep.subr.mxu0 0.0
    %3281 = vmatpush1.msra.mxu0 0.0
    %3282 = vmatprep.subr.mxu0 0.0
    %3283 = vmatpush1.msra.mxu0 0.0
    %3284 = vmatprep.subr.mxu0 0.0
    %3285 = vmatpush1.msra.mxu0 0.0
    %3286 = vmatprep.subr.mxu0 0.0
    %3287 = vmatpush1.msra.mxu0 0.0
    %3288 = vmatprep.subr.mxu0 0.0
    %3289 = vmatpush1.msra.mxu0 0.0
    %3290 = vmatprep.subr.mxu0 0.0
    %3291 = vmatpush1.msra.mxu0 0.0
    %3292 = vmatprep.subr.mxu0 0.0
    %3293 = vmatpush1.msra.mxu0 0.0
    %3294 = vmatprep.subr.mxu0 0.0
    %3295 = vmatpush1.msra.mxu0 0.0
    %3296 = vmatprep.mubr.f32.mxu0 0.0
    %3297 = vmatmul.mubr.f32.gmra.mrb[0].mxu0 %v3230
    %v3298 = vpop.f32.mrb[0].mxu0
    %v3299 = vadd.f32 %v3222, %v3298
    %v3300 = vpop.f32.mrb[0].mxu0
    %3301 = vdwg.mxu0
    %3302 = vrot.lane.b32.xlu0 %v3057, 32
    %v3303 = vpop.permute.xlu0 %3302
    %3304 = vrot.lane.b32.xlu0 %v3060, 32
    %v3305 = vpop.permute.xlu0 %3304
    %v3306 = vsel %vm2035, %v3303, %v3305
    %v3307 = vsel %vm1218, %v3306, 0
    %3309 = vmatprep.subr.mxu0 0.0
    %3310 = vmatpush1.msra.mxu0 %v3039
    %3311 = vmatprep.subr.mxu0 0.0
    %3312 = vmatpush1.msra.mxu0 %v3040
    %3313 = vmatprep.subr.mxu0 0.0
    %3314 = vmatpush1.msra.mxu0 %v3041
    %3315 = vmatprep.subr.mxu0 0.0
    %3316 = vmatpush1.msra.mxu0 %v3042
    %3317 = vmatprep.subr.mxu0 0.0
    %3318 = vmatpush1.msra.mxu0 %v3043
    %3319 = vmatprep.subr.mxu0 0.0
    %3320 = vmatpush1.msra.mxu0 %v3044
    %3321 = vmatprep.subr.mxu0 0.0
    %3322 = vmatpush1.msra.mxu0 %v3045
    %3323 = vmatprep.subr.mxu0 0.0
    %3324 = vmatpush1.msra.mxu0 %v3046
    %3325 = vmatprep.subr.mxu0 0.0
    %3326 = vmatpush1.msra.mxu0 %v3047
    %3327 = vmatprep.subr.mxu0 0.0
    %3328 = vmatpush1.msra.mxu0 %v3048
    %3329 = vmatprep.subr.mxu0 0.0
    %3330 = vmatpush1.msra.mxu0 %v3049
    %3331 = vmatprep.subr.mxu0 0.0
    %3332 = vmatpush1.msra.mxu0 %v3050
    %3333 = vmatprep.subr.mxu0 0.0
    %3334 = vmatpush1.msra.mxu0 0.0
    %3335 = vmatprep.subr.mxu0 0.0
    %3336 = vmatpush1.msra.mxu0 0.0
    %3337 = vmatprep.subr.mxu0 0.0
    %3338 = vmatpush1.msra.mxu0 0.0
    %3339 = vmatprep.subr.mxu0 0.0
    %3340 = vmatpush1.msra.mxu0 0.0
    %3341 = vmatprep.subr.mxu0 0.0
    %3342 = vmatpush1.msra.mxu0 0.0
    %3343 = vmatprep.subr.mxu0 0.0
    %3344 = vmatpush1.msra.mxu0 0.0
    %3345 = vmatprep.subr.mxu0 0.0
    %3346 = vmatpush1.msra.mxu0 0.0
    %3347 = vmatprep.subr.mxu0 0.0
    %3348 = vmatpush1.msra.mxu0 0.0
    %3349 = vmatprep.subr.mxu0 0.0
    %3350 = vmatpush1.msra.mxu0 0.0
    %3351 = vmatprep.subr.mxu0 0.0
    %3352 = vmatpush1.msra.mxu0 0.0
    %3353 = vmatprep.subr.mxu0 0.0
    %3354 = vmatpush1.msra.mxu0 0.0
    %3355 = vmatprep.subr.mxu0 0.0
    %3356 = vmatpush1.msra.mxu0 0.0
    %3357 = vmatprep.subr.mxu0 0.0
    %3358 = vmatpush1.msra.mxu0 0.0
    %3359 = vmatprep.subr.mxu0 0.0
    %3360 = vmatpush1.msra.mxu0 0.0
    %3361 = vmatprep.subr.mxu0 0.0
    %3362 = vmatpush1.msra.mxu0 0.0
    %3363 = vmatprep.subr.mxu0 0.0
    %3364 = vmatpush1.msra.mxu0 0.0
    %3365 = vmatprep.subr.mxu0 0.0
    %3366 = vmatpush1.msra.mxu0 0.0
    %3367 = vmatprep.subr.mxu0 0.0
    %3368 = vmatpush1.msra.mxu0 0.0
    %3369 = vmatprep.subr.mxu0 0.0
    %3370 = vmatpush1.msra.mxu0 0.0
    %3371 = vmatprep.subr.mxu0 0.0
    %3372 = vmatpush1.msra.mxu0 0.0
    %3373 = vmatprep.mubr.f32.mxu0 0.0
    %3374 = vmatmul.mubr.f32.gmra.mrb[0].mxu0 %v3307
    %v3375 = vpop.f32.mrb[0].mxu0
    %v3376 = vadd.f32 0.0, %v3375
    %v3377 = vpop.f32.mrb[0].mxu0
    %3378 = vdwg.mxu0
    %v3379 = vadd.f32 %v3299, %v3376
    %v3380 = vadd.f32 %v3379, %v3144
    %v3381 = vmax.f32 %v3380, 0.0
    %v3382 = vmax.f32 %v3147, %v3381
    %v3384 = vrot.slane %v3382, 1
    %v3386 = vmax.f32 %v3382, %v3384
    %v3389 = vunpack.c.l.s4 1983009808
    %v3390 = vunpack.c.0.s8 %v3389
    %v3391 = vlaneseq
    %v3392 = vshrl.u32 %v3391, 7
    %v3393 = vsub.s32 %v3390, %v3392
    %v3394 = vrot.slane %v3386, %v3393
    %3395 = vrot.lane.b32.xlu0 %v3394, 64
    %v3396 = vpop.permute.xlu0 %3395
    %3398 = vst.msk [vmem:[#allocation3 + $0x2] sm:$0x1] %vm2282, %v3396
    %v3399 = vcombine.high %v3394, %v3394
    %3400 = vrot.lane.b32.xlu0 %v3399, 64
    %v3401 = vpop.permute.xlu0 %3400
    %3403 = vst.msk [vmem:[#allocation3 + $0x6] sm:$0x1] %vm2282, %v3401
    %v3404 = vcombine.high %v3386, %v3386
    %v3406 = vunpack.c.l.s4 1983009808
    %v3407 = vunpack.c.0.s8 %v3406
    %v3408 = vlaneseq
    %v3409 = vshrl.u32 %v3408, 7
    %v3410 = vsub.s32 %v3407, %v3409
    %v3411 = vrot.slane %v3404, %v3410
    %3412 = vrot.lane.b32.xlu0 %v3411, 64
    %v3413 = vpop.permute.xlu0 %3412
    %3415 = vst.msk [vmem:[#allocation3 + $0xa] sm:$0x1] %vm2282, %v3413
    %v3416 = vcombine.high %v3411, %v3411
    %3417 = vrot.lane.b32.xlu0 %v3416, 64
    %v3418 = vpop.permute.xlu0 %3417
    %3420 = vst.msk [vmem:[#allocation3 + $0xe] sm:$0x1] %vm2282, %v3418
    %v3421 = vld [vmem:[%s1178] sm:$0xff]
    %v3422 = vld [vmem:[%s3] sm:$0xff]
    %v3423 = vld [vmem:[%s3 + $0x8] sm:$0xff]
    %v3424 = vld [vmem:[%s3 + $0x10] sm:$0xff]
    %v3425 = vld [vmem:[%s3 + $0x18] sm:$0xff]
    %v3426 = vld [vmem:[%s3 + $0x20] sm:$0xff]
    %v3427 = vld [vmem:[%s3 + $0x28] sm:$0xff]
    %v3428 = vld [vmem:[%s3 + $0x30] sm:$0xff]
    %v3429 = vld [vmem:[%s3 + $0x38] sm:$0xff]
    %v3430 = vld [vmem:[%s3 + $0x40] sm:$0xff]
    %v3431 = vld [vmem:[%s3 + $0x48] sm:$0xff]
    %v3432 = vld [vmem:[%s3 + $0x50] sm:$0xff]
    %v3433 = vld [vmem:[%s3 + $0x58] sm:$0xff]
    %v3434 = vld [vmem:[%s1178] sm:$0xfe]
    %v3435 = vld [vmem:[%s1178 + $0x18] sm:$0x1]
    %v3436 = vld [vmem:[%s1200] sm:$0xff]
    %v3437 = vld [vmem:[%s1200 + $0x8] sm:$0xff]
    %v3438 = vld [vmem:[%s1200 + $0x10] sm:$0xff]
    %v3439 = vld [vmem:[%s1200 + $0x18] sm:$0xff]
    %v3440 = vld [vmem:[%s1200 + $0x20] sm:$0xff]
    %v3441 = vld [vmem:[%s1200 + $0x28] sm:$0xff]
    %v3442 = vld [vmem:[%s1200 + $0x30] sm:$0xff]
    %v3443 = vld [vmem:[%s1200 + $0x38] sm:$0xff]
    %v3444 = vld [vmem:[%s1200 + $0x40] sm:$0xff]
    %v3445 = vld [vmem:[%s1200 + $0x48] sm:$0xff]
    %v3446 = vld [vmem:[%s1200 + $0x50] sm:$0xff]
    %v3447 = vld [vmem:[%s1200 + $0x58] sm:$0xff]
    %v3450 = vrot.slane %v3434, 1
    %v3451 = vrot.slane %v3435, 1
    %v3452 = vsel %vm64, %v3450, %v3451
    %v3453 = vsel %vm1218, %v3452, 0
    %3455 = vmatprep.subr.mxu0 0.0
    %3456 = vmatpush1.msra.mxu0 %v3436
    %3457 = vmatprep.subr.mxu0 0.0
    %3458 = vmatpush1.msra.mxu0 %v3437
    %3459 = vmatprep.subr.mxu0 0.0
    %3460 = vmatpush1.msra.mxu0 %v3438
    %3461 = vmatprep.subr.mxu0 0.0
    %3462 = vmatpush1.msra.mxu0 %v3439
    %3463 = vmatprep.subr.mxu0 0.0
    %3464 = vmatpush1.msra.mxu0 %v3440
    %3465 = vmatprep.subr.mxu0 0.0
    %3466 = vmatpush1.msra.mxu0 %v3441
    %3467 = vmatprep.subr.mxu0 0.0
    %3468 = vmatpush1.msra.mxu0 %v3442
    %3469 = vmatprep.subr.mxu0 0.0
    %3470 = vmatpush1.msra.mxu0 %v3443
    %3471 = vmatprep.subr.mxu0 0.0
    %3472 = vmatpush1.msra.mxu0 %v3444
    %3473 = vmatprep.subr.mxu0 0.0
    %3474 = vmatpush1.msra.mxu0 %v3445
    %3475 = vmatprep.subr.mxu0 0.0
    %3476 = vmatpush1.msra.mxu0 %v3446
    %3477 = vmatprep.subr.mxu0 0.0
    %3478 = vmatpush1.msra.mxu0 %v3447
    %3479 = vmatprep.subr.mxu0 0.0
    %3480 = vmatpush1.msra.mxu0 0.0
    %3481 = vmatprep.subr.mxu0 0.0
    %3482 = vmatpush1.msra.mxu0 0.0
    %3483 = vmatprep.subr.mxu0 0.0
    %3484 = vmatpush1.msra.mxu0 0.0
    %3485 = vmatprep.subr.mxu0 0.0
    %3486 = vmatpush1.msra.mxu0 0.0
    %3487 = vmatprep.subr.mxu0 0.0
    %3488 = vmatpush1.msra.mxu0 0.0
    %3489 = vmatprep.subr.mxu0 0.0
    %3490 = vmatpush1.msra.mxu0 0.0
    %3491 = vmatprep.subr.mxu0 0.0
    %3492 = vmatpush1.msra.mxu0 0.0
    %3493 = vmatprep.subr.mxu0 0.0
    %3494 = vmatpush1.msra.mxu0 0.0
    %3495 = vmatprep.subr.mxu0 0.0
    %3496 = vmatpush1.msra.mxu0 0.0
    %3497 = vmatprep.subr.mxu0 0.0
    %3498 = vmatpush1.msra.mxu0 0.0
    %3499 = vmatprep.subr.mxu0 0.0
    %3500 = vmatpush1.msra.mxu0 0.0
    %3501 = vmatprep.subr.mxu0 0.0
    %3502 = vmatpush1.msra.mxu0 0.0
    %3503 = vmatprep.subr.mxu0 0.0
    %3504 = vmatpush1.msra.mxu0 0.0
    %3505 = vmatprep.subr.mxu0 0.0
    %3506 = vmatpush1.msra.mxu0 0.0
    %3507 = vmatprep.subr.mxu0 0.0
    %3508 = vmatpush1.msra.mxu0 0.0
    %3509 = vmatprep.subr.mxu0 0.0
    %3510 = vmatpush1.msra.mxu0 0.0
    %3511 = vmatprep.subr.mxu0 0.0
    %3512 = vmatpush1.msra.mxu0 0.0
    %3513 = vmatprep.subr.mxu0 0.0
    %3514 = vmatpush1.msra.mxu0 0.0
    %3515 = vmatprep.subr.mxu0 0.0
    %3516 = vmatpush1.msra.mxu0 0.0
    %3517 = vmatprep.subr.mxu0 0.0
    %3518 = vmatpush1.msra.mxu0 0.0
    %3519 = vmatprep.mubr.f32.mxu0 0.0
    %3520 = vmatmul.mubr.f32.gmra.mrb[0].mxu0 %v3453
    %v3521 = vpop.f32.mrb[0].mxu0
    %v3522 = vadd.f32 0.0, %v3521
    %v3523 = vpop.f32.mrb[0].mxu0
    %3524 = vdwg.mxu0
    %v3526 = vsel %vm1218, %v3421, 0
    %3528 = vmatprep.subr.mxu0 0.0
    %3529 = vmatpush1.msra.mxu0 %v3422
    %3530 = vmatprep.subr.mxu0 0.0
    %3531 = vmatpush1.msra.mxu0 %v3423
    %3532 = vmatprep.subr.mxu0 0.0
    %3533 = vmatpush1.msra.mxu0 %v3424
    %3534 = vmatprep.subr.mxu0 0.0
    %3535 = vmatpush1.msra.mxu0 %v3425
    %3536 = vmatprep.subr.mxu0 0.0
    %3537 = vmatpush1.msra.mxu0 %v3426
    %3538 = vmatprep.subr.mxu0 0.0
    %3539 = vmatpush1.msra.mxu0 %v3427
    %3540 = vmatprep.subr.mxu0 0.0
    %3541 = vmatpush1.msra.mxu0 %v3428
    %3542 = vmatprep.subr.mxu0 0.0
    %3543 = vmatpush1.msra.mxu0 %v3429
    %3544 = vmatprep.subr.mxu0 0.0
    %3545 = vmatpush1.msra.mxu0 %v3430
    %3546 = vmatprep.subr.mxu0 0.0
    %3547 = vmatpush1.msra.mxu0 %v3431
    %3548 = vmatprep.subr.mxu0 0.0
    %3549 = vmatpush1.msra.mxu0 %v3432
    %3550 = vmatprep.subr.mxu0 0.0
    %3551 = vmatpush1.msra.mxu0 %v3433
    %3552 = vmatprep.subr.mxu0 0.0
    %3553 = vmatpush1.msra.mxu0 0.0
    %3554 = vmatprep.subr.mxu0 0.0
    %3555 = vmatpush1.msra.mxu0 0.0
    %3556 = vmatprep.subr.mxu0 0.0
    %3557 = vmatpush1.msra.mxu0 0.0
    %3558 = vmatprep.subr.mxu0 0.0
    %3559 = vmatpush1.msra.mxu0 0.0
    %3560 = vmatprep.subr.mxu0 0.0
    %3561 = vmatpush1.msra.mxu0 0.0
    %3562 = vmatprep.subr.mxu0 0.0
    %3563 = vmatpush1.msra.mxu0 0.0
    %3564 = vmatprep.subr.mxu0 0.0
    %3565 = vmatpush1.msra.mxu0 0.0
    %3566 = vmatprep.subr.mxu0 0.0
    %3567 = vmatpush1.msra.mxu0 0.0
    %3568 = vmatprep.subr.mxu0 0.0
    %3569 = vmatpush1.msra.mxu0 0.0
    %3570 = vmatprep.subr.mxu0 0.0
    %3571 = vmatpush1.msra.mxu0 0.0
    %3572 = vmatprep.subr.mxu0 0.0
    %3573 = vmatpush1.msra.mxu0 0.0
    %3574 = vmatprep.subr.mxu0 0.0
    %3575 = vmatpush1.msra.mxu0 0.0
    %3576 = vmatprep.subr.mxu0 0.0
    %3577 = vmatpush1.msra.mxu0 0.0
    %3578 = vmatprep.subr.mxu0 0.0
    %3579 = vmatpush1.msra.mxu0 0.0
    %3580 = vmatprep.subr.mxu0 0.0
    %3581 = vmatpush1.msra.mxu0 0.0
    %3582 = vmatprep.subr.mxu0 0.0
    %3583 = vmatpush1.msra.mxu0 0.0
    %3584 = vmatprep.subr.mxu0 0.0
    %3585 = vmatpush1.msra.mxu0 0.0
    %3586 = vmatprep.subr.mxu0 0.0
    %3587 = vmatpush1.msra.mxu0 0.0
    %3588 = vmatprep.subr.mxu0 0.0
    %3589 = vmatpush1.msra.mxu0 0.0
    %3590 = vmatprep.subr.mxu0 0.0
    %3591 = vmatpush1.msra.mxu0 0.0
    %3592 = vmatprep.mubr.f32.mxu0 0.0
    %3593 = vmatmul.mubr.f32.gmra.mrb[0].mxu0 %v3526
    %v3594 = vpop.f32.mrb[0].mxu0
    %v3595 = vadd.f32 %v3522, %v3594
    %v3596 = vpop.f32.mrb[0].mxu0
    %3597 = vdwg.mxu0
    %v3598 = vld [vmem:[%s1178] sm:$0xfc]
    %v3599 = vld [vmem:[%s1178 + $0x18] sm:$0x3]
    %v3600 = vld [vmem:[%s1366] sm:$0xff]
    %v3601 = vld [vmem:[%s1366 + $0x8] sm:$0xff]
    %v3602 = vld [vmem:[%s1366 + $0x10] sm:$0xff]
    %v3603 = vld [vmem:[%s1366 + $0x18] sm:$0xff]
    %v3604 = vld [vmem:[%s1366 + $0x20] sm:$0xff]
    %v3605 = vld [vmem:[%s1366 + $0x28] sm:$0xff]
    %v3606 = vld [vmem:[%s1366 + $0x30] sm:$0xff]
    %v3607 = vld [vmem:[%s1366 + $0x38] sm:$0xff]
    %v3608 = vld [vmem:[%s1366 + $0x40] sm:$0xff]
    %v3609 = vld [vmem:[%s1366 + $0x48] sm:$0xff]
    %v3610 = vld [vmem:[%s1366 + $0x50] sm:$0xff]
    %v3611 = vld [vmem:[%s1366 + $0x58] sm:$0xff]
    %v3614 = vrot.slane %v3598, 2
    %v3615 = vrot.slane %v3599, 2
    %v3616 = vsel %vm407, %v3614, %v3615
    %v3617 = vsel %vm1218, %v3616, 0
    %3619 = vmatprep.subr.mxu0 0.0
    %3620 = vmatpush1.msra.mxu0 %v3600
    %3621 = vmatprep.subr.mxu0 0.0
    %3622 = vmatpush1.msra.mxu0 %v3601
    %3623 = vmatprep.subr.mxu0 0.0
    %3624 = vmatpush1.msra.mxu0 %v3602
    %3625 = vmatprep.subr.mxu0 0.0
    %3626 = vmatpush1.msra.mxu0 %v3603
    %3627 = vmatprep.subr.mxu0 0.0
    %3628 = vmatpush1.msra.mxu0 %v3604
    %3629 = vmatprep.subr.mxu0 0.0
    %3630 = vmatpush1.msra.mxu0 %v3605
    %3631 = vmatprep.subr.mxu0 0.0
    %3632 = vmatpush1.msra.mxu0 %v3606
    %3633 = vmatprep.subr.mxu0 0.0
    %3634 = vmatpush1.msra.mxu0 %v3607
    %3635 = vmatprep.subr.mxu0 0.0
    %3636 = vmatpush1.msra.mxu0 %v3608
    %3637 = vmatprep.subr.mxu0 0.0
    %3638 = vmatpush1.msra.mxu0 %v3609
    %3639 = vmatprep.subr.mxu0 0.0
    %3640 = vmatpush1.msra.mxu0 %v3610
    %3641 = vmatprep.subr.mxu0 0.0
    %3642 = vmatpush1.msra.mxu0 %v3611
    %3643 = vmatprep.subr.mxu0 0.0
    %3644 = vmatpush1.msra.mxu0 0.0
    %3645 = vmatprep.subr.mxu0 0.0
    %3646 = vmatpush1.msra.mxu0 0.0
    %3647 = vmatprep.subr.mxu0 0.0
    %3648 = vmatpush1.msra.mxu0 0.0
    %3649 = vmatprep.subr.mxu0 0.0
    %3650 = vmatpush1.msra.mxu0 0.0
    %3651 = vmatprep.subr.mxu0 0.0
    %3652 = vmatpush1.msra.mxu0 0.0
    %3653 = vmatprep.subr.mxu0 0.0
    %3654 = vmatpush1.msra.mxu0 0.0
    %3655 = vmatprep.subr.mxu0 0.0
    %3656 = vmatpush1.msra.mxu0 0.0
    %3657 = vmatprep.subr.mxu0 0.0
    %3658 = vmatpush1.msra.mxu0 0.0
    %3659 = vmatprep.subr.mxu0 0.0
    %3660 = vmatpush1.msra.mxu0 0.0
    %3661 = vmatprep.subr.mxu0 0.0
    %3662 = vmatpush1.msra.mxu0 0.0
    %3663 = vmatprep.subr.mxu0 0.0
    %3664 = vmatpush1.msra.mxu0 0.0
    %3665 = vmatprep.subr.mxu0 0.0
    %3666 = vmatpush1.msra.mxu0 0.0
    %3667 = vmatprep.subr.mxu0 0.0
    %3668 = vmatpush1.msra.mxu0 0.0
    %3669 = vmatprep.subr.mxu0 0.0
    %3670 = vmatpush1.msra.mxu0 0.0
    %3671 = vmatprep.subr.mxu0 0.0
    %3672 = vmatpush1.msra.mxu0 0.0
    %3673 = vmatprep.subr.mxu0 0.0
    %3674 = vmatpush1.msra.mxu0 0.0
    %3675 = vmatprep.subr.mxu0 0.0
    %3676 = vmatpush1.msra.mxu0 0.0
    %3677 = vmatprep.subr.mxu0 0.0
    %3678 = vmatpush1.msra.mxu0 0.0
    %3679 = vmatprep.subr.mxu0 0.0
    %3680 = vmatpush1.msra.mxu0 0.0
    %3681 = vmatprep.subr.mxu0 0.0
    %3682 = vmatpush1.msra.mxu0 0.0
    %3683 = vmatprep.mubr.f32.mxu0 0.0
    %3684 = vmatmul.mubr.f32.gmra.mrb[0].mxu0 %v3617
    %v3685 = vpop.f32.mrb[0].mxu0
    %v3686 = vadd.f32 0.0, %v3685
    %v3687 = vpop.f32.mrb[0].mxu0
    %3688 = vdwg.mxu0
    %v3689 = vadd.f32 %v3595, %v3686
    %v3690 = vld [vmem:[%s4] sm:$0x1]
    %v3692 = vlaneseq
    %v3693 = vshrl.u32 %v3692, 7
    %v3694 = vsub.s32 0, %v3693
    %v3695 = vrot.slane %v3690, %v3694
    %v3697 = vadd.f32 %v3689, %v3695
    %v3698 = vmax.f32 %v3697, 0.0
    %3699 = vrot.lane.b32.xlu0 %v3452, 96
    %v3700 = vpop.permute.xlu0 %3699
    %v3701 = vsel %vm1218, %v3700, 0
    %3703 = vmatprep.subr.mxu0 0.0
    %3704 = vmatpush1.msra.mxu0 %v3436
    %3705 = vmatprep.subr.mxu0 0.0
    %3706 = vmatpush1.msra.mxu0 %v3437
    %3707 = vmatprep.subr.mxu0 0.0
    %3708 = vmatpush1.msra.mxu0 %v3438
    %3709 = vmatprep.subr.mxu0 0.0
    %3710 = vmatpush1.msra.mxu0 %v3439
    %3711 = vmatprep.subr.mxu0 0.0
    %3712 = vmatpush1.msra.mxu0 %v3440
    %3713 = vmatprep.subr.mxu0 0.0
    %3714 = vmatpush1.msra.mxu0 %v3441
    %3715 = vmatprep.subr.mxu0 0.0
    %3716 = vmatpush1.msra.mxu0 %v3442
    %3717 = vmatprep.subr.mxu0 0.0
    %3718 = vmatpush1.msra.mxu0 %v3443
    %3719 = vmatprep.subr.mxu0 0.0
    %3720 = vmatpush1.msra.mxu0 %v3444
    %3721 = vmatprep.subr.mxu0 0.0
    %3722 = vmatpush1.msra.mxu0 %v3445
    %3723 = vmatprep.subr.mxu0 0.0
    %3724 = vmatpush1.msra.mxu0 %v3446
    %3725 = vmatprep.subr.mxu0 0.0
    %3726 = vmatpush1.msra.mxu0 %v3447
    %3727 = vmatprep.subr.mxu0 0.0
    %3728 = vmatpush1.msra.mxu0 0.0
    %3729 = vmatprep.subr.mxu0 0.0
    %3730 = vmatpush1.msra.mxu0 0.0
    %3731 = vmatprep.subr.mxu0 0.0
    %3732 = vmatpush1.msra.mxu0 0.0
    %3733 = vmatprep.subr.mxu0 0.0
    %3734 = vmatpush1.msra.mxu0 0.0
    %3735 = vmatprep.subr.mxu0 0.0
    %3736 = vmatpush1.msra.mxu0 0.0
    %3737 = vmatprep.subr.mxu0 0.0
    %3738 = vmatpush1.msra.mxu0 0.0
    %3739 = vmatprep.subr.mxu0 0.0
    %3740 = vmatpush1.msra.mxu0 0.0
    %3741 = vmatprep.subr.mxu0 0.0
    %3742 = vmatpush1.msra.mxu0 0.0
    %3743 = vmatprep.subr.mxu0 0.0
    %3744 = vmatpush1.msra.mxu0 0.0
    %3745 = vmatprep.subr.mxu0 0.0
    %3746 = vmatpush1.msra.mxu0 0.0
    %3747 = vmatprep.subr.mxu0 0.0
    %3748 = vmatpush1.msra.mxu0 0.0
    %3749 = vmatprep.subr.mxu0 0.0
    %3750 = vmatpush1.msra.mxu0 0.0
    %3751 = vmatprep.subr.mxu0 0.0
    %3752 = vmatpush1.msra.mxu0 0.0
    %3753 = vmatprep.subr.mxu0 0.0
    %3754 = vmatpush1.msra.mxu0 0.0
    %3755 = vmatprep.subr.mxu0 0.0
    %3756 = vmatpush1.msra.mxu0 0.0
    %3757 = vmatprep.subr.mxu0 0.0
    %3758 = vmatpush1.msra.mxu0 0.0
    %3759 = vmatprep.subr.mxu0 0.0
    %3760 = vmatpush1.msra.mxu0 0.0
    %3761 = vmatprep.subr.mxu0 0.0
    %3762 = vmatpush1.msra.mxu0 0.0
    %3763 = vmatprep.subr.mxu0 0.0
    %3764 = vmatpush1.msra.mxu0 0.0
    %3765 = vmatprep.subr.mxu0 0.0
    %3766 = vmatpush1.msra.mxu0 0.0
    %3767 = vmatprep.mubr.f32.mxu0 0.0
    %3768 = vmatmul.mubr.f32.gmra.mrb[0].mxu0 %v3701
    %v3769 = vpop.f32.mrb[0].mxu0
    %v3770 = vadd.f32 0.0, %v3769
    %v3771 = vpop.f32.mrb[0].mxu0
    %3772 = vdwg.mxu0
    %3773 = vrot.lane.b32.xlu0 %v3421, 96
    %v3774 = vpop.permute.xlu0 %3773
    %v3775 = vsel %vm1218, %v3774, 0
    %3777 = vmatprep.subr.mxu0 0.0
    %3778 = vmatpush1.msra.mxu0 %v3422
    %3779 = vmatprep.subr.mxu0 0.0
    %3780 = vmatpush1.msra.mxu0 %v3423
    %3781 = vmatprep.subr.mxu0 0.0
    %3782 = vmatpush1.msra.mxu0 %v3424
    %3783 = vmatprep.subr.mxu0 0.0
    %3784 = vmatpush1.msra.mxu0 %v3425
    %3785 = vmatprep.subr.mxu0 0.0
    %3786 = vmatpush1.msra.mxu0 %v3426
    %3787 = vmatprep.subr.mxu0 0.0
    %3788 = vmatpush1.msra.mxu0 %v3427
    %3789 = vmatprep.subr.mxu0 0.0
    %3790 = vmatpush1.msra.mxu0 %v3428
    %3791 = vmatprep.subr.mxu0 0.0
    %3792 = vmatpush1.msra.mxu0 %v3429
    %3793 = vmatprep.subr.mxu0 0.0
    %3794 = vmatpush1.msra.mxu0 %v3430
    %3795 = vmatprep.subr.mxu0 0.0
    %3796 = vmatpush1.msra.mxu0 %v3431
    %3797 = vmatprep.subr.mxu0 0.0
    %3798 = vmatpush1.msra.mxu0 %v3432
    %3799 = vmatprep.subr.mxu0 0.0
    %3800 = vmatpush1.msra.mxu0 %v3433
    %3801 = vmatprep.subr.mxu0 0.0
    %3802 = vmatpush1.msra.mxu0 0.0
    %3803 = vmatprep.subr.mxu0 0.0
    %3804 = vmatpush1.msra.mxu0 0.0
    %3805 = vmatprep.subr.mxu0 0.0
    %3806 = vmatpush1.msra.mxu0 0.0
    %3807 = vmatprep.subr.mxu0 0.0
    %3808 = vmatpush1.msra.mxu0 0.0
    %3809 = vmatprep.subr.mxu0 0.0
    %3810 = vmatpush1.msra.mxu0 0.0
    %3811 = vmatprep.subr.mxu0 0.0
    %3812 = vmatpush1.msra.mxu0 0.0
    %3813 = vmatprep.subr.mxu0 0.0
    %3814 = vmatpush1.msra.mxu0 0.0
    %3815 = vmatprep.subr.mxu0 0.0
    %3816 = vmatpush1.msra.mxu0 0.0
    %3817 = vmatprep.subr.mxu0 0.0
    %3818 = vmatpush1.msra.mxu0 0.0
    %3819 = vmatprep.subr.mxu0 0.0
    %3820 = vmatpush1.msra.mxu0 0.0
    %3821 = vmatprep.subr.mxu0 0.0
    %3822 = vmatpush1.msra.mxu0 0.0
    %3823 = vmatprep.subr.mxu0 0.0
    %3824 = vmatpush1.msra.mxu0 0.0
    %3825 = vmatprep.subr.mxu0 0.0
    %3826 = vmatpush1.msra.mxu0 0.0
    %3827 = vmatprep.subr.mxu0 0.0
    %3828 = vmatpush1.msra.mxu0 0.0
    %3829 = vmatprep.subr.mxu0 0.0
    %3830 = vmatpush1.msra.mxu0 0.0
    %3831 = vmatprep.subr.mxu0 0.0
    %3832 = vmatpush1.msra.mxu0 0.0
    %3833 = vmatprep.subr.mxu0 0.0
    %3834 = vmatpush1.msra.mxu0 0.0
    %3835 = vmatprep.subr.mxu0 0.0
    %3836 = vmatpush1.msra.mxu0 0.0
    %3837 = vmatprep.subr.mxu0 0.0
    %3838 = vmatpush1.msra.mxu0 0.0
    %3839 = vmatprep.subr.mxu0 0.0
    %3840 = vmatpush1.msra.mxu0 0.0
    %3841 = vmatprep.mubr.f32.mxu0 0.0
    %3842 = vmatmul.mubr.f32.gmra.mrb[0].mxu0 %v3775
    %v3843 = vpop.f32.mrb[0].mxu0
    %v3844 = vadd.f32 %v3770, %v3843
    %v3845 = vpop.f32.mrb[0].mxu0
    %3846 = vdwg.mxu0
    %3847 = vrot.lane.b32.xlu0 %v3616, 96
    %v3848 = vpop.permute.xlu0 %3847
    %v3849 = vsel %vm1218, %v3848, 0
    %3851 = vmatprep.subr.mxu0 0.0
    %3852 = vmatpush1.msra.mxu0 %v3600
    %3853 = vmatprep.subr.mxu0 0.0
    %3854 = vmatpush1.msra.mxu0 %v3601
    %3855 = vmatprep.subr.mxu0 0.0
    %3856 = vmatpush1.msra.mxu0 %v3602
    %3857 = vmatprep.subr.mxu0 0.0
    %3858 = vmatpush1.msra.mxu0 %v3603
    %3859 = vmatprep.subr.mxu0 0.0
    %3860 = vmatpush1.msra.mxu0 %v3604
    %3861 = vmatprep.subr.mxu0 0.0
    %3862 = vmatpush1.msra.mxu0 %v3605
    %3863 = vmatprep.subr.mxu0 0.0
    %3864 = vmatpush1.msra.mxu0 %v3606
    %3865 = vmatprep.subr.mxu0 0.0
    %3866 = vmatpush1.msra.mxu0 %v3607
    %3867 = vmatprep.subr.mxu0 0.0
    %3868 = vmatpush1.msra.mxu0 %v3608
    %3869 = vmatprep.subr.mxu0 0.0
    %3870 = vmatpush1.msra.mxu0 %v3609
    %3871 = vmatprep.subr.mxu0 0.0
    %3872 = vmatpush1.msra.mxu0 %v3610
    %3873 = vmatprep.subr.mxu0 0.0
    %3874 = vmatpush1.msra.mxu0 %v3611
    %3875 = vmatprep.subr.mxu0 0.0
    %3876 = vmatpush1.msra.mxu0 0.0
    %3877 = vmatprep.subr.mxu0 0.0
    %3878 = vmatpush1.msra.mxu0 0.0
    %3879 = vmatprep.subr.mxu0 0.0
    %3880 = vmatpush1.msra.mxu0 0.0
    %3881 = vmatprep.subr.mxu0 0.0
    %3882 = vmatpush1.msra.mxu0 0.0
    %3883 = vmatprep.subr.mxu0 0.0
    %3884 = vmatpush1.msra.mxu0 0.0
    %3885 = vmatprep.subr.mxu0 0.0
    %3886 = vmatpush1.msra.mxu0 0.0
    %3887 = vmatprep.subr.mxu0 0.0
    %3888 = vmatpush1.msra.mxu0 0.0
    %3889 = vmatprep.subr.mxu0 0.0
    %3890 = vmatpush1.msra.mxu0 0.0
    %3891 = vmatprep.subr.mxu0 0.0
    %3892 = vmatpush1.msra.mxu0 0.0
    %3893 = vmatprep.subr.mxu0 0.0
    %3894 = vmatpush1.msra.mxu0 0.0
    %3895 = vmatprep.subr.mxu0 0.0
    %3896 = vmatpush1.msra.mxu0 0.0
    %3897 = vmatprep.subr.mxu0 0.0
    %3898 = vmatpush1.msra.mxu0 0.0
    %3899 = vmatprep.subr.mxu0 0.0
    %3900 = vmatpush1.msra.mxu0 0.0
    %3901 = vmatprep.subr.mxu0 0.0
    %3902 = vmatpush1.msra.mxu0 0.0
    %3903 = vmatprep.subr.mxu0 0.0
    %3904 = vmatpush1.msra.mxu0 0.0
    %3905 = vmatprep.subr.mxu0 0.0
    %3906 = vmatpush1.msra.mxu0 0.0
    %3907 = vmatprep.subr.mxu0 0.0
    %3908 = vmatpush1.msra.mxu0 0.0
    %3909 = vmatprep.subr.mxu0 0.0
    %3910 = vmatpush1.msra.mxu0 0.0
    %3911 = vmatprep.subr.mxu0 0.0
    %3912 = vmatpush1.msra.mxu0 0.0
    %3913 = vmatprep.subr.mxu0 0.0
    %3914 = vmatpush1.msra.mxu0 0.0
    %3915 = vmatprep.mubr.f32.mxu0 0.0
    %3916 = vmatmul.mubr.f32.gmra.mrb[0].mxu0 %v3849
    %v3917 = vpop.f32.mrb[0].mxu0
    %v3918 = vadd.f32 0.0, %v3917
    %v3919 = vpop.f32.mrb[0].mxu0
    %3920 = vdwg.mxu0
    %v3921 = vadd.f32 %v3844, %v3918
    %v3922 = vadd.f32 %v3921, %v3695
    %v3923 = vmax.f32 %v3922, 0.0
    %v3924 = vmax.f32 %v3698, %v3923
    %v3926 = vrot.slane %v3924, 1
    %v3928 = vmax.f32 %v3924, %v3926
    %3929 = vst.msk [vmem:[#allocation3 + $0x1] sm:$0x1] %vm1696, %v3928
    %v3932 = vunpack.c.l.s4 1983009808
    %v3933 = vunpack.c.0.s8 %v3932
    %v3934 = vlaneseq
    %v3935 = vshrl.u32 %v3934, 7
    %v3936 = vsub.s32 %v3933, %v3935
    %v3937 = vrot.slane %v3928, %v3936
    %v3938 = vcombine.high %v3937, %v3937
    %3940 = vst.msk [vmem:[#allocation3 + $0x5] sm:$0x1] %vm1696, %v3938
    %v3941 = vcombine.high %v3928, %v3928
    %v3943 = vunpack.c.l.s4 1983009808
    %v3944 = vunpack.c.0.s8 %v3943
    %v3945 = vlaneseq
    %v3946 = vshrl.u32 %v3945, 7
    %v3947 = vsub.s32 %v3944, %v3946
    %v3948 = vrot.slane %v3941, %v3947
    %3950 = vst.msk [vmem:[#allocation3 + $0x9] sm:$0x1] %vm1696, %v3948
    %v3951 = vcombine.high %v3948, %v3948
    %3953 = vst.msk [vmem:[#allocation3 + $0xd] sm:$0x1] %vm1696, %v3951
    %v3954 = vld [vmem:[%s1178] sm:$0xff]
    %v3955 = vld [vmem:[%s1178 + $0x8] sm:$0xff]
    %v3956 = vld [vmem:[%s3] sm:$0xff]
    %v3957 = vld [vmem:[%s3 + $0x8] sm:$0xff]
    %v3958 = vld [vmem:[%s3 + $0x10] sm:$0xff]
    %v3959 = vld [vmem:[%s3 + $0x18] sm:$0xff]
    %v3960 = vld [vmem:[%s3 + $0x20] sm:$0xff]
    %v3961 = vld [vmem:[%s3 + $0x28] sm:$0xff]
    %v3962 = vld [vmem:[%s3 + $0x30] sm:$0xff]
    %v3963 = vld [vmem:[%s3 + $0x38] sm:$0xff]
    %v3964 = vld [vmem:[%s3 + $0x40] sm:$0xff]
    %v3965 = vld [vmem:[%s3 + $0x48] sm:$0xff]
    %v3966 = vld [vmem:[%s3 + $0x50] sm:$0xff]
    %v3967 = vld [vmem:[%s3 + $0x58] sm:$0xff]
    %v3968 = vld [vmem:[%s1178] sm:$0xfe]
    %v3969 = vld [vmem:[%s1178 + $0x8] sm:$0xfe]
    %v3970 = vld [vmem:[%s1178 + $0x18] sm:$0x1]
    %v3971 = vld [vmem:[%s1178 + $0x20] sm:$0x1]
    %v3972 = vld [vmem:[%s1200] sm:$0xff]
    %v3973 = vld [vmem:[%s1200 + $0x8] sm:$0xff]
    %v3974 = vld [vmem:[%s1200 + $0x10] sm:$0xff]
    %v3975 = vld [vmem:[%s1200 + $0x18] sm:$0xff]
    %v3976 = vld [vmem:[%s1200 + $0x20] sm:$0xff]
    %v3977 = vld [vmem:[%s1200 + $0x28] sm:$0xff]
    %v3978 = vld [vmem:[%s1200 + $0x30] sm:$0xff]
    %v3979 = vld [vmem:[%s1200 + $0x38] sm:$0xff]
    %v3980 = vld [vmem:[%s1200 + $0x40] sm:$0xff]
    %v3981 = vld [vmem:[%s1200 + $0x48] sm:$0xff]
    %v3982 = vld [vmem:[%s1200 + $0x50] sm:$0xff]
    %v3983 = vld [vmem:[%s1200 + $0x58] sm:$0xff]
    %v3988 = vrot.slane %v3968, 1
    %v3989 = vrot.slane %v3970, 1
    %v3990 = vsel %vm64, %v3988, %v3989
    %v3991 = vrot.slane %v3969, 1
    %v3992 = vrot.slane %v3971, 1
    %v3993 = vsel %vm64, %v3991, %v3992
    %3994 = vrot.lane.b32.xlu0 %v3990, 64
    %v3995 = vpop.permute.xlu0 %3994
    %3996 = vrot.lane.b32.xlu0 %v3993, 64
    %v3997 = vpop.permute.xlu0 %3996
    %v3998 = vsel %vm613, %v3995, %v3997
    %v3999 = vsel %vm1218, %v3998, 0
    %4001 = vmatprep.subr.mxu0 0.0
    %4002 = vmatpush1.msra.mxu0 %v3972
    %4003 = vmatprep.subr.mxu0 0.0
    %4004 = vmatpush1.msra.mxu0 %v3973
    %4005 = vmatprep.subr.mxu0 0.0
    %4006 = vmatpush1.msra.mxu0 %v3974
    %4007 = vmatprep.subr.mxu0 0.0
    %4008 = vmatpush1.msra.mxu0 %v3975
    %4009 = vmatprep.subr.mxu0 0.0
    %4010 = vmatpush1.msra.mxu0 %v3976
    %4011 = vmatprep.subr.mxu0 0.0
    %4012 = vmatpush1.msra.mxu0 %v3977
    %4013 = vmatprep.subr.mxu0 0.0
    %4014 = vmatpush1.msra.mxu0 %v3978
    %4015 = vmatprep.subr.mxu0 0.0
    %4016 = vmatpush1.msra.mxu0 %v3979
    %4017 = vmatprep.subr.mxu0 0.0
    %4018 = vmatpush1.msra.mxu0 %v3980
    %4019 = vmatprep.subr.mxu0 0.0
    %4020 = vmatpush1.msra.mxu0 %v3981
    %4021 = vmatprep.subr.mxu0 0.0
    %4022 = vmatpush1.msra.mxu0 %v3982
    %4023 = vmatprep.subr.mxu0 0.0
    %4024 = vmatpush1.msra.mxu0 %v3983
    %4025 = vmatprep.subr.mxu0 0.0
    %4026 = vmatpush1.msra.mxu0 0.0
    %4027 = vmatprep.subr.mxu0 0.0
    %4028 = vmatpush1.msra.mxu0 0.0
    %4029 = vmatprep.subr.mxu0 0.0
    %4030 = vmatpush1.msra.mxu0 0.0
    %4031 = vmatprep.subr.mxu0 0.0
    %4032 = vmatpush1.msra.mxu0 0.0
    %4033 = vmatprep.subr.mxu0 0.0
    %4034 = vmatpush1.msra.mxu0 0.0
    %4035 = vmatprep.subr.mxu0 0.0
    %4036 = vmatpush1.msra.mxu0 0.0
    %4037 = vmatprep.subr.mxu0 0.0
    %4038 = vmatpush1.msra.mxu0 0.0
    %4039 = vmatprep.subr.mxu0 0.0
    %4040 = vmatpush1.msra.mxu0 0.0
    %4041 = vmatprep.subr.mxu0 0.0
    %4042 = vmatpush1.msra.mxu0 0.0
    %4043 = vmatprep.subr.mxu0 0.0
    %4044 = vmatpush1.msra.mxu0 0.0
    %4045 = vmatprep.subr.mxu0 0.0
    %4046 = vmatpush1.msra.mxu0 0.0
    %4047 = vmatprep.subr.mxu0 0.0
    %4048 = vmatpush1.msra.mxu0 0.0
    %4049 = vmatprep.subr.mxu0 0.0
    %4050 = vmatpush1.msra.mxu0 0.0
    %4051 = vmatprep.subr.mxu0 0.0
    %4052 = vmatpush1.msra.mxu0 0.0
    %4053 = vmatprep.subr.mxu0 0.0
    %4054 = vmatpush1.msra.mxu0 0.0
    %4055 = vmatprep.subr.mxu0 0.0
    %4056 = vmatpush1.msra.mxu0 0.0
    %4057 = vmatprep.subr.mxu0 0.0
    %4058 = vmatpush1.msra.mxu0 0.0
    %4059 = vmatprep.subr.mxu0 0.0
    %4060 = vmatpush1.msra.mxu0 0.0
    %4061 = vmatprep.subr.mxu0 0.0
    %4062 = vmatpush1.msra.mxu0 0.0
    %4063 = vmatprep.subr.mxu0 0.0
    %4064 = vmatpush1.msra.mxu0 0.0
    %4065 = vmatprep.mubr.f32.mxu0 0.0
    %4066 = vmatmul.mubr.f32.gmra.mrb[0].mxu0 %v3999
    %v4067 = vpop.f32.mrb[0].mxu0
    %v4068 = vadd.f32 0.0, %v4067
    %v4069 = vpop.f32.mrb[0].mxu0
    %4070 = vdwg.mxu0
    %4073 = vrot.lane.b32.xlu0 %v3954, 64
    %v4074 = vpop.permute.xlu0 %4073
    %4075 = vrot.lane.b32.xlu0 %v3955, 64
    %v4076 = vpop.permute.xlu0 %4075
    %v4077 = vsel %vm613, %v4074, %v4076
    %v4078 = vsel %vm1218, %v4077, 0
    %4080 = vmatprep.subr.mxu0 0.0
    %4081 = vmatpush1.msra.mxu0 %v3956
    %4082 = vmatprep.subr.mxu0 0.0
    %4083 = vmatpush1.msra.mxu0 %v3957
    %4084 = vmatprep.subr.mxu0 0.0
    %4085 = vmatpush1.msra.mxu0 %v3958
    %4086 = vmatprep.subr.mxu0 0.0
    %4087 = vmatpush1.msra.mxu0 %v3959
    %4088 = vmatprep.subr.mxu0 0.0
    %4089 = vmatpush1.msra.mxu0 %v3960
    %4090 = vmatprep.subr.mxu0 0.0
    %4091 = vmatpush1.msra.mxu0 %v3961
    %4092 = vmatprep.subr.mxu0 0.0
    %4093 = vmatpush1.msra.mxu0 %v3962
    %4094 = vmatprep.subr.mxu0 0.0
    %4095 = vmatpush1.msra.mxu0 %v3963
    %4096 = vmatprep.subr.mxu0 0.0
    %4097 = vmatpush1.msra.mxu0 %v3964
    %4098 = vmatprep.subr.mxu0 0.0
    %4099 = vmatpush1.msra.mxu0 %v3965
    %4100 = vmatprep.subr.mxu0 0.0
    %4101 = vmatpush1.msra.mxu0 %v3966
    %4102 = vmatprep.subr.mxu0 0.0
    %4103 = vmatpush1.msra.mxu0 %v3967
    %4104 = vmatprep.subr.mxu0 0.0
    %4105 = vmatpush1.msra.mxu0 0.0
    %4106 = vmatprep.subr.mxu0 0.0
    %4107 = vmatpush1.msra.mxu0 0.0
    %4108 = vmatprep.subr.mxu0 0.0
    %4109 = vmatpush1.msra.mxu0 0.0
    %4110 = vmatprep.subr.mxu0 0.0
    %4111 = vmatpush1.msra.mxu0 0.0
    %4112 = vmatprep.subr.mxu0 0.0
    %4113 = vmatpush1.msra.mxu0 0.0
    %4114 = vmatprep.subr.mxu0 0.0
    %4115 = vmatpush1.msra.mxu0 0.0
    %4116 = vmatprep.subr.mxu0 0.0
    %4117 = vmatpush1.msra.mxu0 0.0
    %4118 = vmatprep.subr.mxu0 0.0
    %4119 = vmatpush1.msra.mxu0 0.0
    %4120 = vmatprep.subr.mxu0 0.0
    %4121 = vmatpush1.msra.mxu0 0.0
    %4122 = vmatprep.subr.mxu0 0.0
    %4123 = vmatpush1.msra.mxu0 0.0
    %4124 = vmatprep.subr.mxu0 0.0
    %4125 = vmatpush1.msra.mxu0 0.0
    %4126 = vmatprep.subr.mxu0 0.0
    %4127 = vmatpush1.msra.mxu0 0.0
    %4128 = vmatprep.subr.mxu0 0.0
    %4129 = vmatpush1.msra.mxu0 0.0
    %4130 = vmatprep.subr.mxu0 0.0
    %4131 = vmatpush1.msra.mxu0 0.0
    %4132 = vmatprep.subr.mxu0 0.0
    %4133 = vmatpush1.msra.mxu0 0.0
    %4134 = vmatprep.subr.mxu0 0.0
    %4135 = vmatpush1.msra.mxu0 0.0
    %4136 = vmatprep.subr.mxu0 0.0
    %4137 = vmatpush1.msra.mxu0 0.0
    %4138 = vmatprep.subr.mxu0 0.0
    %4139 = vmatpush1.msra.mxu0 0.0
    %4140 = vmatprep.subr.mxu0 0.0
    %4141 = vmatpush1.msra.mxu0 0.0
    %4142 = vmatprep.subr.mxu0 0.0
    %4143 = vmatpush1.msra.mxu0 0.0
    %4144 = vmatprep.mubr.f32.mxu0 0.0
    %4145 = vmatmul.mubr.f32.gmra.mrb[0].mxu0 %v4078
    %v4146 = vpop.f32.mrb[0].mxu0
    %v4147 = vadd.f32 %v4068, %v4146
    %v4148 = vpop.f32.mrb[0].mxu0
    %4149 = vdwg.mxu0
    %v4150 = vld [vmem:[%s1178] sm:$0xfc]
    %v4151 = vld [vmem:[%s1178 + $0x8] sm:$0xfc]
    %v4152 = vld [vmem:[%s1178 + $0x18] sm:$0x3]
    %v4153 = vld [vmem:[%s1178 + $0x20] sm:$0x3]
    %v4154 = vld [vmem:[%s1366] sm:$0xff]
    %v4155 = vld [vmem:[%s1366 + $0x8] sm:$0xff]
    %v4156 = vld [vmem:[%s1366 + $0x10] sm:$0xff]
    %v4157 = vld [vmem:[%s1366 + $0x18] sm:$0xff]
    %v4158 = vld [vmem:[%s1366 + $0x20] sm:$0xff]
    %v4159 = vld [vmem:[%s1366 + $0x28] sm:$0xff]
    %v4160 = vld [vmem:[%s1366 + $0x30] sm:$0xff]
    %v4161 = vld [vmem:[%s1366 + $0x38] sm:$0xff]
    %v4162 = vld [vmem:[%s1366 + $0x40] sm:$0xff]
    %v4163 = vld [vmem:[%s1366 + $0x48] sm:$0xff]
    %v4164 = vld [vmem:[%s1366 + $0x50] sm:$0xff]
    %v4165 = vld [vmem:[%s1366 + $0x58] sm:$0xff]
    %v4170 = vrot.slane %v4150, 2
    %v4171 = vrot.slane %v4152, 2
    %v4172 = vsel %vm407, %v4170, %v4171
    %v4173 = vrot.slane %v4151, 2
    %v4174 = vrot.slane %v4153, 2
    %v4175 = vsel %vm407, %v4173, %v4174
    %4176 = vrot.lane.b32.xlu0 %v4172, 64
    %v4177 = vpop.permute.xlu0 %4176
    %4178 = vrot.lane.b32.xlu0 %v4175, 64
    %v4179 = vpop.permute.xlu0 %4178
    %v4180 = vsel %vm613, %v4177, %v4179
    %v4181 = vsel %vm1218, %v4180, 0
    %4183 = vmatprep.subr.mxu0 0.0
    %4184 = vmatpush1.msra.mxu0 %v4154
    %4185 = vmatprep.subr.mxu0 0.0
    %4186 = vmatpush1.msra.mxu0 %v4155
    %4187 = vmatprep.subr.mxu0 0.0
    %4188 = vmatpush1.msra.mxu0 %v4156
    %4189 = vmatprep.subr.mxu0 0.0
    %4190 = vmatpush1.msra.mxu0 %v4157
    %4191 = vmatprep.subr.mxu0 0.0
    %4192 = vmatpush1.msra.mxu0 %v4158
    %4193 = vmatprep.subr.mxu0 0.0
    %4194 = vmatpush1.msra.mxu0 %v4159
    %4195 = vmatprep.subr.mxu0 0.0
    %4196 = vmatpush1.msra.mxu0 %v4160
    %4197 = vmatprep.subr.mxu0 0.0
    %4198 = vmatpush1.msra.mxu0 %v4161
    %4199 = vmatprep.subr.mxu0 0.0
    %4200 = vmatpush1.msra.mxu0 %v4162
    %4201 = vmatprep.subr.mxu0 0.0
    %4202 = vmatpush1.msra.mxu0 %v4163
    %4203 = vmatprep.subr.mxu0 0.0
    %4204 = vmatpush1.msra.mxu0 %v4164
    %4205 = vmatprep.subr.mxu0 0.0
    %4206 = vmatpush1.msra.mxu0 %v4165
    %4207 = vmatprep.subr.mxu0 0.0
    %4208 = vmatpush1.msra.mxu0 0.0
    %4209 = vmatprep.subr.mxu0 0.0
    %4210 = vmatpush1.msra.mxu0 0.0
    %4211 = vmatprep.subr.mxu0 0.0
    %4212 = vmatpush1.msra.mxu0 0.0
    %4213 = vmatprep.subr.mxu0 0.0
    %4214 = vmatpush1.msra.mxu0 0.0
    %4215 = vmatprep.subr.mxu0 0.0
    %4216 = vmatpush1.msra.mxu0 0.0
    %4217 = vmatprep.subr.mxu0 0.0
    %4218 = vmatpush1.msra.mxu0 0.0
    %4219 = vmatprep.subr.mxu0 0.0
    %4220 = vmatpush1.msra.mxu0 0.0
    %4221 = vmatprep.subr.mxu0 0.0
    %4222 = vmatpush1.msra.mxu0 0.0
    %4223 = vmatprep.subr.mxu0 0.0
    %4224 = vmatpush1.msra.mxu0 0.0
    %4225 = vmatprep.subr.mxu0 0.0
    %4226 = vmatpush1.msra.mxu0 0.0
    %4227 = vmatprep.subr.mxu0 0.0
    %4228 = vmatpush1.msra.mxu0 0.0
    %4229 = vmatprep.subr.mxu0 0.0
    %4230 = vmatpush1.msra.mxu0 0.0
    %4231 = vmatprep.subr.mxu0 0.0
    %4232 = vmatpush1.msra.mxu0 0.0
    %4233 = vmatprep.subr.mxu0 0.0
    %4234 = vmatpush1.msra.mxu0 0.0
    %4235 = vmatprep.subr.mxu0 0.0
    %4236 = vmatpush1.msra.mxu0 0.0
    %4237 = vmatprep.subr.mxu0 0.0
    %4238 = vmatpush1.msra.mxu0 0.0
    %4239 = vmatprep.subr.mxu0 0.0
    %4240 = vmatpush1.msra.mxu0 0.0
    %4241 = vmatprep.subr.mxu0 0.0
    %4242 = vmatpush1.msra.mxu0 0.0
    %4243 = vmatprep.subr.mxu0 0.0
    %4244 = vmatpush1.msra.mxu0 0.0
    %4245 = vmatprep.subr.mxu0 0.0
    %4246 = vmatpush1.msra.mxu0 0.0
    %4247 = vmatprep.mubr.f32.mxu0 0.0
    %4248 = vmatmul.mubr.f32.gmra.mrb[0].mxu0 %v4181
    %v4249 = vpop.f32.mrb[0].mxu0
    %v4250 = vadd.f32 0.0, %v4249
    %v4251 = vpop.f32.mrb[0].mxu0
    %4252 = vdwg.mxu0
    %v4253 = vadd.f32 %v4147, %v4250
    %v4254 = vld [vmem:[%s4] sm:$0x1]
    %v4256 = vlaneseq
    %v4257 = vshrl.u32 %v4256, 7
    %v4258 = vsub.s32 0, %v4257
    %v4259 = vrot.slane %v4254, %v4258
    %v4261 = vadd.f32 %v4253, %v4259
    %v4262 = vmax.f32 %v4261, 0.0
    %4263 = vrot.lane.b32.xlu0 %v3990, 32
    %v4264 = vpop.permute.xlu0 %4263
    %4265 = vrot.lane.b32.xlu0 %v3993, 32
    %v4266 = vpop.permute.xlu0 %4265
    %v4267 = vsel %vm2035, %v4264, %v4266
    %v4268 = vsel %vm1218, %v4267, 0
    %4270 = vmatprep.subr.mxu0 0.0
    %4271 = vmatpush1.msra.mxu0 %v3972
    %4272 = vmatprep.subr.mxu0 0.0
    %4273 = vmatpush1.msra.mxu0 %v3973
    %4274 = vmatprep.subr.mxu0 0.0
    %4275 = vmatpush1.msra.mxu0 %v3974
    %4276 = vmatprep.subr.mxu0 0.0
    %4277 = vmatpush1.msra.mxu0 %v3975
    %4278 = vmatprep.subr.mxu0 0.0
    %4279 = vmatpush1.msra.mxu0 %v3976
    %4280 = vmatprep.subr.mxu0 0.0
    %4281 = vmatpush1.msra.mxu0 %v3977
    %4282 = vmatprep.subr.mxu0 0.0
    %4283 = vmatpush1.msra.mxu0 %v3978
    %4284 = vmatprep.subr.mxu0 0.0
    %4285 = vmatpush1.msra.mxu0 %v3979
    %4286 = vmatprep.subr.mxu0 0.0
    %4287 = vmatpush1.msra.mxu0 %v3980
    %4288 = vmatprep.subr.mxu0 0.0
    %4289 = vmatpush1.msra.mxu0 %v3981
    %4290 = vmatprep.subr.mxu0 0.0
    %4291 = vmatpush1.msra.mxu0 %v3982
    %4292 = vmatprep.subr.mxu0 0.0
    %4293 = vmatpush1.msra.mxu0 %v3983
    %4294 = vmatprep.subr.mxu0 0.0
    %4295 = vmatpush1.msra.mxu0 0.0
    %4296 = vmatprep.subr.mxu0 0.0
    %4297 = vmatpush1.msra.mxu0 0.0
    %4298 = vmatprep.subr.mxu0 0.0
    %4299 = vmatpush1.msra.mxu0 0.0
    %4300 = vmatprep.subr.mxu0 0.0
    %4301 = vmatpush1.msra.mxu0 0.0
    %4302 = vmatprep.subr.mxu0 0.0
    %4303 = vmatpush1.msra.mxu0 0.0
    %4304 = vmatprep.subr.mxu0 0.0
    %4305 = vmatpush1.msra.mxu0 0.0
    %4306 = vmatprep.subr.mxu0 0.0
    %4307 = vmatpush1.msra.mxu0 0.0
    %4308 = vmatprep.subr.mxu0 0.0
    %4309 = vmatpush1.msra.mxu0 0.0
    %4310 = vmatprep.subr.mxu0 0.0
    %4311 = vmatpush1.msra.mxu0 0.0
    %4312 = vmatprep.subr.mxu0 0.0
    %4313 = vmatpush1.msra.mxu0 0.0
    %4314 = vmatprep.subr.mxu0 0.0
    %4315 = vmatpush1.msra.mxu0 0.0
    %4316 = vmatprep.subr.mxu0 0.0
    %4317 = vmatpush1.msra.mxu0 0.0
    %4318 = vmatprep.subr.mxu0 0.0
    %4319 = vmatpush1.msra.mxu0 0.0
    %4320 = vmatprep.subr.mxu0 0.0
    %4321 = vmatpush1.msra.mxu0 0.0
    %4322 = vmatprep.subr.mxu0 0.0
    %4323 = vmatpush1.msra.mxu0 0.0
    %4324 = vmatprep.subr.mxu0 0.0
    %4325 = vmatpush1.msra.mxu0 0.0
    %4326 = vmatprep.subr.mxu0 0.0
    %4327 = vmatpush1.msra.mxu0 0.0
    %4328 = vmatprep.subr.mxu0 0.0
    %4329 = vmatpush1.msra.mxu0 0.0
    %4330 = vmatprep.subr.mxu0 0.0
    %4331 = vmatpush1.msra.mxu0 0.0
    %4332 = vmatprep.subr.mxu0 0.0
    %4333 = vmatpush1.msra.mxu0 0.0
    %4334 = vmatprep.mubr.f32.mxu0 0.0
    %4335 = vmatmul.mubr.f32.gmra.mrb[0].mxu0 %v4268
    %v4336 = vpop.f32.mrb[0].mxu0
    %v4337 = vadd.f32 0.0, %v4336
    %v4338 = vpop.f32.mrb[0].mxu0
    %4339 = vdwg.mxu0
    %4340 = vrot.lane.b32.xlu0 %v3954, 32
    %v4341 = vpop.permute.xlu0 %4340
    %4342 = vrot.lane.b32.xlu0 %v3955, 32
    %v4343 = vpop.permute.xlu0 %4342
    %v4344 = vsel %vm2035, %v4341, %v4343
    %v4345 = vsel %vm1218, %v4344, 0
    %4347 = vmatprep.subr.mxu0 0.0
    %4348 = vmatpush1.msra.mxu0 %v3956
    %4349 = vmatprep.subr.mxu0 0.0
    %4350 = vmatpush1.msra.mxu0 %v3957
    %4351 = vmatprep.subr.mxu0 0.0
    %4352 = vmatpush1.msra.mxu0 %v3958
    %4353 = vmatprep.subr.mxu0 0.0
    %4354 = vmatpush1.msra.mxu0 %v3959
    %4355 = vmatprep.subr.mxu0 0.0
    %4356 = vmatpush1.msra.mxu0 %v3960
    %4357 = vmatprep.subr.mxu0 0.0
    %4358 = vmatpush1.msra.mxu0 %v3961
    %4359 = vmatprep.subr.mxu0 0.0
    %4360 = vmatpush1.msra.mxu0 %v3962
    %4361 = vmatprep.subr.mxu0 0.0
    %4362 = vmatpush1.msra.mxu0 %v3963
    %4363 = vmatprep.subr.mxu0 0.0
    %4364 = vmatpush1.msra.mxu0 %v3964
    %4365 = vmatprep.subr.mxu0 0.0
    %4366 = vmatpush1.msra.mxu0 %v3965
    %4367 = vmatprep.subr.mxu0 0.0
    %4368 = vmatpush1.msra.mxu0 %v3966
    %4369 = vmatprep.subr.mxu0 0.0
    %4370 = vmatpush1.msra.mxu0 %v3967
    %4371 = vmatprep.subr.mxu0 0.0
    %4372 = vmatpush1.msra.mxu0 0.0
    %4373 = vmatprep.subr.mxu0 0.0
    %4374 = vmatpush1.msra.mxu0 0.0
    %4375 = vmatprep.subr.mxu0 0.0
    %4376 = vmatpush1.msra.mxu0 0.0
    %4377 = vmatprep.subr.mxu0 0.0
    %4378 = vmatpush1.msra.mxu0 0.0
    %4379 = vmatprep.subr.mxu0 0.0
    %4380 = vmatpush1.msra.mxu0 0.0
    %4381 = vmatprep.subr.mxu0 0.0
    %4382 = vmatpush1.msra.mxu0 0.0
    %4383 = vmatprep.subr.mxu0 0.0
    %4384 = vmatpush1.msra.mxu0 0.0
    %4385 = vmatprep.subr.mxu0 0.0
    %4386 = vmatpush1.msra.mxu0 0.0
    %4387 = vmatprep.subr.mxu0 0.0
    %4388 = vmatpush1.msra.mxu0 0.0
    %4389 = vmatprep.subr.mxu0 0.0
    %4390 = vmatpush1.msra.mxu0 0.0
    %4391 = vmatprep.subr.mxu0 0.0
    %4392 = vmatpush1.msra.mxu0 0.0
    %4393 = vmatprep.subr.mxu0 0.0
    %4394 = vmatpush1.msra.mxu0 0.0
    %4395 = vmatprep.subr.mxu0 0.0
    %4396 = vmatpush1.msra.mxu0 0.0
    %4397 = vmatprep.subr.mxu0 0.0
    %4398 = vmatpush1.msra.mxu0 0.0
    %4399 = vmatprep.subr.mxu0 0.0
    %4400 = vmatpush1.msra.mxu0 0.0
    %4401 = vmatprep.subr.mxu0 0.0
    %4402 = vmatpush1.msra.mxu0 0.0
    %4403 = vmatprep.subr.mxu0 0.0
    %4404 = vmatpush1.msra.mxu0 0.0
    %4405 = vmatprep.subr.mxu0 0.0
    %4406 = vmatpush1.msra.mxu0 0.0
    %4407 = vmatprep.subr.mxu0 0.0
    %4408 = vmatpush1.msra.mxu0 0.0
    %4409 = vmatprep.subr.mxu0 0.0
    %4410 = vmatpush1.msra.mxu0 0.0
    %4411 = vmatprep.mubr.f32.mxu0 0.0
    %4412 = vmatmul.mubr.f32.gmra.mrb[0].mxu0 %v4345
    %v4413 = vpop.f32.mrb[0].mxu0
    %v4414 = vadd.f32 %v4337, %v4413
    %v4415 = vpop.f32.mrb[0].mxu0
    %4416 = vdwg.mxu0
    %4417 = vrot.lane.b32.xlu0 %v4172, 32
    %v4418 = vpop.permute.xlu0 %4417
    %4419 = vrot.lane.b32.xlu0 %v4175, 32
    %v4420 = vpop.permute.xlu0 %4419
    %v4421 = vsel %vm2035, %v4418, %v4420
    %v4422 = vsel %vm1218, %v4421, 0
    %4424 = vmatprep.subr.mxu0 0.0
    %4425 = vmatpush1.msra.mxu0 %v4154
    %4426 = vmatprep.subr.mxu0 0.0
    %4427 = vmatpush1.msra.mxu0 %v4155
    %4428 = vmatprep.subr.mxu0 0.0
    %4429 = vmatpush1.msra.mxu0 %v4156
    %4430 = vmatprep.subr.mxu0 0.0
    %4431 = vmatpush1.msra.mxu0 %v4157
    %4432 = vmatprep.subr.mxu0 0.0
    %4433 = vmatpush1.msra.mxu0 %v4158
    %4434 = vmatprep.subr.mxu0 0.0
    %4435 = vmatpush1.msra.mxu0 %v4159
    %4436 = vmatprep.subr.mxu0 0.0
    %4437 = vmatpush1.msra.mxu0 %v4160
    %4438 = vmatprep.subr.mxu0 0.0
    %4439 = vmatpush1.msra.mxu0 %v4161
    %4440 = vmatprep.subr.mxu0 0.0
    %4441 = vmatpush1.msra.mxu0 %v4162
    %4442 = vmatprep.subr.mxu0 0.0
    %4443 = vmatpush1.msra.mxu0 %v4163
    %4444 = vmatprep.subr.mxu0 0.0
    %4445 = vmatpush1.msra.mxu0 %v4164
    %4446 = vmatprep.subr.mxu0 0.0
    %4447 = vmatpush1.msra.mxu0 %v4165
    %4448 = vmatprep.subr.mxu0 0.0
    %4449 = vmatpush1.msra.mxu0 0.0
    %4450 = vmatprep.subr.mxu0 0.0
    %4451 = vmatpush1.msra.mxu0 0.0
    %4452 = vmatprep.subr.mxu0 0.0
    %4453 = vmatpush1.msra.mxu0 0.0
    %4454 = vmatprep.subr.mxu0 0.0
    %4455 = vmatpush1.msra.mxu0 0.0
    %4456 = vmatprep.subr.mxu0 0.0
    %4457 = vmatpush1.msra.mxu0 0.0
    %4458 = vmatprep.subr.mxu0 0.0
    %4459 = vmatpush1.msra.mxu0 0.0
    %4460 = vmatprep.subr.mxu0 0.0
    %4461 = vmatpush1.msra.mxu0 0.0
    %4462 = vmatprep.subr.mxu0 0.0
    %4463 = vmatpush1.msra.mxu0 0.0
    %4464 = vmatprep.subr.mxu0 0.0
    %4465 = vmatpush1.msra.mxu0 0.0
    %4466 = vmatprep.subr.mxu0 0.0
    %4467 = vmatpush1.msra.mxu0 0.0
    %4468 = vmatprep.subr.mxu0 0.0
    %4469 = vmatpush1.msra.mxu0 0.0
    %4470 = vmatprep.subr.mxu0 0.0
    %4471 = vmatpush1.msra.mxu0 0.0
    %4472 = vmatprep.subr.mxu0 0.0
    %4473 = vmatpush1.msra.mxu0 0.0
    %4474 = vmatprep.subr.mxu0 0.0
    %4475 = vmatpush1.msra.mxu0 0.0
    %4476 = vmatprep.subr.mxu0 0.0
    %4477 = vmatpush1.msra.mxu0 0.0
    %4478 = vmatprep.subr.mxu0 0.0
    %4479 = vmatpush1.msra.mxu0 0.0
    %4480 = vmatprep.subr.mxu0 0.0
    %4481 = vmatpush1.msra.mxu0 0.0
    %4482 = vmatprep.subr.mxu0 0.0
    %4483 = vmatpush1.msra.mxu0 0.0
    %4484 = vmatprep.subr.mxu0 0.0
    %4485 = vmatpush1.msra.mxu0 0.0
    %4486 = vmatprep.subr.mxu0 0.0
    %4487 = vmatpush1.msra.mxu0 0.0
    %4488 = vmatprep.mubr.f32.mxu0 0.0
    %4489 = vmatmul.mubr.f32.gmra.mrb[0].mxu0 %v4422
    %v4490 = vpop.f32.mrb[0].mxu0
    %v4491 = vadd.f32 0.0, %v4490
    %v4492 = vpop.f32.mrb[0].mxu0
    %4493 = vdwg.mxu0
    %v4494 = vadd.f32 %v4414, %v4491
    %v4495 = vadd.f32 %v4494, %v4259
    %v4496 = vmax.f32 %v4495, 0.0
    %v4497 = vmax.f32 %v4262, %v4496
    %v4499 = vrot.slane %v4497, 1
    %v4501 = vmax.f32 %v4497, %v4499
    %v4504 = vunpack.c.l.s4 1983009808
    %v4505 = vunpack.c.0.s8 %v4504
    %v4506 = vlaneseq
    %v4507 = vshrl.u32 %v4506, 7
    %v4508 = vsub.s32 %v4505, %v4507
    %v4509 = vrot.slane %v4501, %v4508
    %4510 = vrot.lane.b32.xlu0 %v4509, 64
    %v4511 = vpop.permute.xlu0 %4510
    %4513 = vst.msk [vmem:[#allocation3 + $0x1] sm:$0x1] %vm2282, %v4511
    %v4514 = vcombine.high %v4509, %v4509
    %4515 = vrot.lane.b32.xlu0 %v4514, 64
    %v4516 = vpop.permute.xlu0 %4515
    %4518 = vst.msk [vmem:[#allocation3 + $0x5] sm:$0x1] %vm2282, %v4516
    %v4519 = vcombine.high %v4501, %v4501
    %v4521 = vunpack.c.l.s4 1983009808
    %v4522 = vunpack.c.0.s8 %v4521
    %v4523 = vlaneseq
    %v4524 = vshrl.u32 %v4523, 7
    %v4525 = vsub.s32 %v4522, %v4524
    %v4526 = vrot.slane %v4519, %v4525
    %4527 = vrot.lane.b32.xlu0 %v4526, 64
    %v4528 = vpop.permute.xlu0 %4527
    %4530 = vst.msk [vmem:[#allocation3 + $0x9] sm:$0x1] %vm2282, %v4528
    %v4531 = vcombine.high %v4526, %v4526
    %4532 = vrot.lane.b32.xlu0 %v4531, 64
    %v4533 = vpop.permute.xlu0 %4532
    %4535 = vst.msk [vmem:[#allocation3 + $0xd] sm:$0x1] %vm2282, %v4533
    %v4536 = vld [vmem:[%s1178 + $0x8] sm:$0xff]
    %v4537 = vld [vmem:[%s3] sm:$0xff]
    %v4538 = vld [vmem:[%s3 + $0x8] sm:$0xff]
    %v4539 = vld [vmem:[%s3 + $0x10] sm:$0xff]
    %v4540 = vld [vmem:[%s3 + $0x18] sm:$0xff]
    %v4541 = vld [vmem:[%s3 + $0x20] sm:$0xff]
    %v4542 = vld [vmem:[%s3 + $0x28] sm:$0xff]
    %v4543 = vld [vmem:[%s3 + $0x30] sm:$0xff]
    %v4544 = vld [vmem:[%s3 + $0x38] sm:$0xff]
    %v4545 = vld [vmem:[%s3 + $0x40] sm:$0xff]
    %v4546 = vld [vmem:[%s3 + $0x48] sm:$0xff]
    %v4547 = vld [vmem:[%s3 + $0x50] sm:$0xff]
    %v4548 = vld [vmem:[%s3 + $0x58] sm:$0xff]
    %v4549 = vld [vmem:[%s1178 + $0x8] sm:$0xfe]
    %v4550 = vld [vmem:[%s1178 + $0x20] sm:$0x1]
    %v4551 = vld [vmem:[%s1200] sm:$0xff]
    %v4552 = vld [vmem:[%s1200 + $0x8] sm:$0xff]
    %v4553 = vld [vmem:[%s1200 + $0x10] sm:$0xff]
    %v4554 = vld [vmem:[%s1200 + $0x18] sm:$0xff]
    %v4555 = vld [vmem:[%s1200 + $0x20] sm:$0xff]
    %v4556 = vld [vmem:[%s1200 + $0x28] sm:$0xff]
    %v4557 = vld [vmem:[%s1200 + $0x30] sm:$0xff]
    %v4558 = vld [vmem:[%s1200 + $0x38] sm:$0xff]
    %v4559 = vld [vmem:[%s1200 + $0x40] sm:$0xff]
    %v4560 = vld [vmem:[%s1200 + $0x48] sm:$0xff]
    %v4561 = vld [vmem:[%s1200 + $0x50] sm:$0xff]
    %v4562 = vld [vmem:[%s1200 + $0x58] sm:$0xff]
    %v4565 = vrot.slane %v4549, 1
    %v4566 = vrot.slane %v4550, 1
    %v4567 = vsel %vm64, %v4565, %v4566
    %v4568 = vsel %vm1218, %v4567, 0
    %4570 = vmatprep.subr.mxu0 0.0
    %4571 = vmatpush1.msra.mxu0 %v4551
    %4572 = vmatprep.subr.mxu0 0.0
    %4573 = vmatpush1.msra.mxu0 %v4552
    %4574 = vmatprep.subr.mxu0 0.0
    %4575 = vmatpush1.msra.mxu0 %v4553
    %4576 = vmatprep.subr.mxu0 0.0
    %4577 = vmatpush1.msra.mxu0 %v4554
    %4578 = vmatprep.subr.mxu0 0.0
    %4579 = vmatpush1.msra.mxu0 %v4555
    %4580 = vmatprep.subr.mxu0 0.0
    %4581 = vmatpush1.msra.mxu0 %v4556
    %4582 = vmatprep.subr.mxu0 0.0
    %4583 = vmatpush1.msra.mxu0 %v4557
    %4584 = vmatprep.subr.mxu0 0.0
    %4585 = vmatpush1.msra.mxu0 %v4558
    %4586 = vmatprep.subr.mxu0 0.0
    %4587 = vmatpush1.msra.mxu0 %v4559
    %4588 = vmatprep.subr.mxu0 0.0
    %4589 = vmatpush1.msra.mxu0 %v4560
    %4590 = vmatprep.subr.mxu0 0.0
    %4591 = vmatpush1.msra.mxu0 %v4561
    %4592 = vmatprep.subr.mxu0 0.0
    %4593 = vmatpush1.msra.mxu0 %v4562
    %4594 = vmatprep.subr.mxu0 0.0
    %4595 = vmatpush1.msra.mxu0 0.0
    %4596 = vmatprep.subr.mxu0 0.0
    %4597 = vmatpush1.msra.mxu0 0.0
    %4598 = vmatprep.subr.mxu0 0.0
    %4599 = vmatpush1.msra.mxu0 0.0
    %4600 = vmatprep.subr.mxu0 0.0
    %4601 = vmatpush1.msra.mxu0 0.0
    %4602 = vmatprep.subr.mxu0 0.0
    %4603 = vmatpush1.msra.mxu0 0.0
    %4604 = vmatprep.subr.mxu0 0.0
    %4605 = vmatpush1.msra.mxu0 0.0
    %4606 = vmatprep.subr.mxu0 0.0
    %4607 = vmatpush1.msra.mxu0 0.0
    %4608 = vmatprep.subr.mxu0 0.0
    %4609 = vmatpush1.msra.mxu0 0.0
    %4610 = vmatprep.subr.mxu0 0.0
    %4611 = vmatpush1.msra.mxu0 0.0
    %4612 = vmatprep.subr.mxu0 0.0
    %4613 = vmatpush1.msra.mxu0 0.0
    %4614 = vmatprep.subr.mxu0 0.0
    %4615 = vmatpush1.msra.mxu0 0.0
    %4616 = vmatprep.subr.mxu0 0.0
    %4617 = vmatpush1.msra.mxu0 0.0
    %4618 = vmatprep.subr.mxu0 0.0
    %4619 = vmatpush1.msra.mxu0 0.0
    %4620 = vmatprep.subr.mxu0 0.0
    %4621 = vmatpush1.msra.mxu0 0.0
    %4622 = vmatprep.subr.mxu0 0.0
    %4623 = vmatpush1.msra.mxu0 0.0
    %4624 = vmatprep.subr.mxu0 0.0
    %4625 = vmatpush1.msra.mxu0 0.0
    %4626 = vmatprep.subr.mxu0 0.0
    %4627 = vmatpush1.msra.mxu0 0.0
    %4628 = vmatprep.subr.mxu0 0.0
    %4629 = vmatpush1.msra.mxu0 0.0
    %4630 = vmatprep.subr.mxu0 0.0
    %4631 = vmatpush1.msra.mxu0 0.0
    %4632 = vmatprep.subr.mxu0 0.0
    %4633 = vmatpush1.msra.mxu0 0.0
    %4634 = vmatprep.mubr.f32.mxu0 0.0
    %4635 = vmatmul.mubr.f32.gmra.mrb[0].mxu0 %v4568
    %v4636 = vpop.f32.mrb[0].mxu0
    %v4637 = vadd.f32 0.0, %v4636
    %v4638 = vpop.f32.mrb[0].mxu0
    %4639 = vdwg.mxu0
    %v4641 = vsel %vm1218, %v4536, 0
    %4643 = vmatprep.subr.mxu0 0.0
    %4644 = vmatpush1.msra.mxu0 %v4537
    %4645 = vmatprep.subr.mxu0 0.0
    %4646 = vmatpush1.msra.mxu0 %v4538
    %4647 = vmatprep.subr.mxu0 0.0
    %4648 = vmatpush1.msra.mxu0 %v4539
    %4649 = vmatprep.subr.mxu0 0.0
    %4650 = vmatpush1.msra.mxu0 %v4540
    %4651 = vmatprep.subr.mxu0 0.0
    %4652 = vmatpush1.msra.mxu0 %v4541
    %4653 = vmatprep.subr.mxu0 0.0
    %4654 = vmatpush1.msra.mxu0 %v4542
    %4655 = vmatprep.subr.mxu0 0.0
    %4656 = vmatpush1.msra.mxu0 %v4543
    %4657 = vmatprep.subr.mxu0 0.0
    %4658 = vmatpush1.msra.mxu0 %v4544
    %4659 = vmatprep.subr.mxu0 0.0
    %4660 = vmatpush1.msra.mxu0 %v4545
    %4661 = vmatprep.subr.mxu0 0.0
    %4662 = vmatpush1.msra.mxu0 %v4546
    %4663 = vmatprep.subr.mxu0 0.0
    %4664 = vmatpush1.msra.mxu0 %v4547
    %4665 = vmatprep.subr.mxu0 0.0
    %4666 = vmatpush1.msra.mxu0 %v4548
    %4667 = vmatprep.subr.mxu0 0.0
    %4668 = vmatpush1.msra.mxu0 0.0
    %4669 = vmatprep.subr.mxu0 0.0
    %4670 = vmatpush1.msra.mxu0 0.0
    %4671 = vmatprep.subr.mxu0 0.0
    %4672 = vmatpush1.msra.mxu0 0.0
    %4673 = vmatprep.subr.mxu0 0.0
    %4674 = vmatpush1.msra.mxu0 0.0
    %4675 = vmatprep.subr.mxu0 0.0
    %4676 = vmatpush1.msra.mxu0 0.0
    %4677 = vmatprep.subr.mxu0 0.0
    %4678 = vmatpush1.msra.mxu0 0.0
    %4679 = vmatprep.subr.mxu0 0.0
    %4680 = vmatpush1.msra.mxu0 0.0
    %4681 = vmatprep.subr.mxu0 0.0
    %4682 = vmatpush1.msra.mxu0 0.0
    %4683 = vmatprep.subr.mxu0 0.0
    %4684 = vmatpush1.msra.mxu0 0.0
    %4685 = vmatprep.subr.mxu0 0.0
    %4686 = vmatpush1.msra.mxu0 0.0
    %4687 = vmatprep.subr.mxu0 0.0
    %4688 = vmatpush1.msra.mxu0 0.0
    %4689 = vmatprep.subr.mxu0 0.0
    %4690 = vmatpush1.msra.mxu0 0.0
    %4691 = vmatprep.subr.mxu0 0.0
    %4692 = vmatpush1.msra.mxu0 0.0
    %4693 = vmatprep.subr.mxu0 0.0
    %4694 = vmatpush1.msra.mxu0 0.0
    %4695 = vmatprep.subr.mxu0 0.0
    %4696 = vmatpush1.msra.mxu0 0.0
    %4697 = vmatprep.subr.mxu0 0.0
    %4698 = vmatpush1.msra.mxu0 0.0
    %4699 = vmatprep.subr.mxu0 0.0
    %4700 = vmatpush1.msra.mxu0 0.0
    %4701 = vmatprep.subr.mxu0 0.0
    %4702 = vmatpush1.msra.mxu0 0.0
    %4703 = vmatprep.subr.mxu0 0.0
    %4704 = vmatpush1.msra.mxu0 0.0
    %4705 = vmatprep.subr.mxu0 0.0
    %4706 = vmatpush1.msra.mxu0 0.0
    %4707 = vmatprep.mubr.f32.mxu0 0.0
    %4708 = vmatmul.mubr.f32.gmra.mrb[0].mxu0 %v4641
    %v4709 = vpop.f32.mrb[0].mxu0
    %v4710 = vadd.f32 %v4637, %v4709
    %v4711 = vpop.f32.mrb[0].mxu0
    %4712 = vdwg.mxu0
    %v4713 = vld [vmem:[%s1178 + $0x8] sm:$0xfc]
    %v4714 = vld [vmem:[%s1178 + $0x20] sm:$0x3]
    %v4715 = vld [vmem:[%s1366] sm:$0xff]
    %v4716 = vld [vmem:[%s1366 + $0x8] sm:$0xff]
    %v4717 = vld [vmem:[%s1366 + $0x10] sm:$0xff]
    %v4718 = vld [vmem:[%s1366 + $0x18] sm:$0xff]
    %v4719 = vld [vmem:[%s1366 + $0x20] sm:$0xff]
    %v4720 = vld [vmem:[%s1366 + $0x28] sm:$0xff]
    %v4721 = vld [vmem:[%s1366 + $0x30] sm:$0xff]
    %v4722 = vld [vmem:[%s1366 + $0x38] sm:$0xff]
    %v4723 = vld [vmem:[%s1366 + $0x40] sm:$0xff]
    %v4724 = vld [vmem:[%s1366 + $0x48] sm:$0xff]
    %v4725 = vld [vmem:[%s1366 + $0x50] sm:$0xff]
    %v4726 = vld [vmem:[%s1366 + $0x58] sm:$0xff]
    %v4729 = vrot.slane %v4713, 2
    %v4730 = vrot.slane %v4714, 2
    %v4731 = vsel %vm407, %v4729, %v4730
    %v4732 = vsel %vm1218, %v4731, 0
    %4734 = vmatprep.subr.mxu0 0.0
    %4735 = vmatpush1.msra.mxu0 %v4715
    %4736 = vmatprep.subr.mxu0 0.0
    %4737 = vmatpush1.msra.mxu0 %v4716
    %4738 = vmatprep.subr.mxu0 0.0
    %4739 = vmatpush1.msra.mxu0 %v4717
    %4740 = vmatprep.subr.mxu0 0.0
    %4741 = vmatpush1.msra.mxu0 %v4718
    %4742 = vmatprep.subr.mxu0 0.0
    %4743 = vmatpush1.msra.mxu0 %v4719
    %4744 = vmatprep.subr.mxu0 0.0
    %4745 = vmatpush1.msra.mxu0 %v4720
    %4746 = vmatprep.subr.mxu0 0.0
    %4747 = vmatpush1.msra.mxu0 %v4721
    %4748 = vmatprep.subr.mxu0 0.0
    %4749 = vmatpush1.msra.mxu0 %v4722
    %4750 = vmatprep.subr.mxu0 0.0
    %4751 = vmatpush1.msra.mxu0 %v4723
    %4752 = vmatprep.subr.mxu0 0.0
    %4753 = vmatpush1.msra.mxu0 %v4724
    %4754 = vmatprep.subr.mxu0 0.0
    %4755 = vmatpush1.msra.mxu0 %v4725
    %4756 = vmatprep.subr.mxu0 0.0
    %4757 = vmatpush1.msra.mxu0 %v4726
    %4758 = vmatprep.subr.mxu0 0.0
    %4759 = vmatpush1.msra.mxu0 0.0
    %4760 = vmatprep.subr.mxu0 0.0
    %4761 = vmatpush1.msra.mxu0 0.0
    %4762 = vmatprep.subr.mxu0 0.0
    %4763 = vmatpush1.msra.mxu0 0.0
    %4764 = vmatprep.subr.mxu0 0.0
    %4765 = vmatpush1.msra.mxu0 0.0
    %4766 = vmatprep.subr.mxu0 0.0
    %4767 = vmatpush1.msra.mxu0 0.0
    %4768 = vmatprep.subr.mxu0 0.0
    %4769 = vmatpush1.msra.mxu0 0.0
    %4770 = vmatprep.subr.mxu0 0.0
    %4771 = vmatpush1.msra.mxu0 0.0
    %4772 = vmatprep.subr.mxu0 0.0
    %4773 = vmatpush1.msra.mxu0 0.0
    %4774 = vmatprep.subr.mxu0 0.0
    %4775 = vmatpush1.msra.mxu0 0.0
    %4776 = vmatprep.subr.mxu0 0.0
    %4777 = vmatpush1.msra.mxu0 0.0
    %4778 = vmatprep.subr.mxu0 0.0
    %4779 = vmatpush1.msra.mxu0 0.0
    %4780 = vmatprep.subr.mxu0 0.0
    %4781 = vmatpush1.msra.mxu0 0.0
    %4782 = vmatprep.subr.mxu0 0.0
    %4783 = vmatpush1.msra.mxu0 0.0
    %4784 = vmatprep.subr.mxu0 0.0
    %4785 = vmatpush1.msra.mxu0 0.0
    %4786 = vmatprep.subr.mxu0 0.0
    %4787 = vmatpush1.msra.mxu0 0.0
    %4788 = vmatprep.subr.mxu0 0.0
    %4789 = vmatpush1.msra.mxu0 0.0
    %4790 = vmatprep.subr.mxu0 0.0
    %4791 = vmatpush1.msra.mxu0 0.0
    %4792 = vmatprep.subr.mxu0 0.0
    %4793 = vmatpush1.msra.mxu0 0.0
    %4794 = vmatprep.subr.mxu0 0.0
    %4795 = vmatpush1.msra.mxu0 0.0
    %4796 = vmatprep.subr.mxu0 0.0
    %4797 = vmatpush1.msra.mxu0 0.0
    %4798 = vmatprep.mubr.f32.mxu0 0.0
    %4799 = vmatmul.mubr.f32.gmra.mrb[0].mxu0 %v4732
    %v4800 = vpop.f32.mrb[0].mxu0
    %v4801 = vadd.f32 0.0, %v4800
    %v4802 = vpop.f32.mrb[0].mxu0
    %4803 = vdwg.mxu0
    %v4804 = vadd.f32 %v4710, %v4801
    %v4805 = vld [vmem:[%s4] sm:$0x1]
    %v4807 = vlaneseq
    %v4808 = vshrl.u32 %v4807, 7
    %v4809 = vsub.s32 0, %v4808
    %v4810 = vrot.slane %v4805, %v4809
    %v4812 = vadd.f32 %v4804, %v4810
    %v4813 = vmax.f32 %v4812, 0.0
    %4814 = vrot.lane.b32.xlu0 %v4567, 96
    %v4815 = vpop.permute.xlu0 %4814
    %v4816 = vsel %vm1218, %v4815, 0
    %4818 = vmatprep.subr.mxu0 0.0
    %4819 = vmatpush1.msra.mxu0 %v4551
    %4820 = vmatprep.subr.mxu0 0.0
    %4821 = vmatpush1.msra.mxu0 %v4552
    %4822 = vmatprep.subr.mxu0 0.0
    %4823 = vmatpush1.msra.mxu0 %v4553
    %4824 = vmatprep.subr.mxu0 0.0
    %4825 = vmatpush1.msra.mxu0 %v4554
    %4826 = vmatprep.subr.mxu0 0.0
    %4827 = vmatpush1.msra.mxu0 %v4555
    %4828 = vmatprep.subr.mxu0 0.0
    %4829 = vmatpush1.msra.mxu0 %v4556
    %4830 = vmatprep.subr.mxu0 0.0
    %4831 = vmatpush1.msra.mxu0 %v4557
    %4832 = vmatprep.subr.mxu0 0.0
    %4833 = vmatpush1.msra.mxu0 %v4558
    %4834 = vmatprep.subr.mxu0 0.0
    %4835 = vmatpush1.msra.mxu0 %v4559
    %4836 = vmatprep.subr.mxu0 0.0
    %4837 = vmatpush1.msra.mxu0 %v4560
    %4838 = vmatprep.subr.mxu0 0.0
    %4839 = vmatpush1.msra.mxu0 %v4561
    %4840 = vmatprep.subr.mxu0 0.0
    %4841 = vmatpush1.msra.mxu0 %v4562
    %4842 = vmatprep.subr.mxu0 0.0
    %4843 = vmatpush1.msra.mxu0 0.0
    %4844 = vmatprep.subr.mxu0 0.0
    %4845 = vmatpush1.msra.mxu0 0.0
    %4846 = vmatprep.subr.mxu0 0.0
    %4847 = vmatpush1.msra.mxu0 0.0
    %4848 = vmatprep.subr.mxu0 0.0
    %4849 = vmatpush1.msra.mxu0 0.0
    %4850 = vmatprep.subr.mxu0 0.0
    %4851 = vmatpush1.msra.mxu0 0.0
    %4852 = vmatprep.subr.mxu0 0.0
    %4853 = vmatpush1.msra.mxu0 0.0
    %4854 = vmatprep.subr.mxu0 0.0
    %4855 = vmatpush1.msra.mxu0 0.0
    %4856 = vmatprep.subr.mxu0 0.0
    %4857 = vmatpush1.msra.mxu0 0.0
    %4858 = vmatprep.subr.mxu0 0.0
    %4859 = vmatpush1.msra.mxu0 0.0
    %4860 = vmatprep.subr.mxu0 0.0
    %4861 = vmatpush1.msra.mxu0 0.0
    %4862 = vmatprep.subr.mxu0 0.0
    %4863 = vmatpush1.msra.mxu0 0.0
    %4864 = vmatprep.subr.mxu0 0.0
    %4865 = vmatpush1.msra.mxu0 0.0
    %4866 = vmatprep.subr.mxu0 0.0
    %4867 = vmatpush1.msra.mxu0 0.0
    %4868 = vmatprep.subr.mxu0 0.0
    %4869 = vmatpush1.msra.mxu0 0.0
    %4870 = vmatprep.subr.mxu0 0.0
    %4871 = vmatpush1.msra.mxu0 0.0
    %4872 = vmatprep.subr.mxu0 0.0
    %4873 = vmatpush1.msra.mxu0 0.0
    %4874 = vmatprep.subr.mxu0 0.0
    %4875 = vmatpush1.msra.mxu0 0.0
    %4876 = vmatprep.subr.mxu0 0.0
    %4877 = vmatpush1.msra.mxu0 0.0
    %4878 = vmatprep.subr.mxu0 0.0
    %4879 = vmatpush1.msra.mxu0 0.0
    %4880 = vmatprep.subr.mxu0 0.0
    %4881 = vmatpush1.msra.mxu0 0.0
    %4882 = vmatprep.mubr.f32.mxu0 0.0
    %4883 = vmatmul.mubr.f32.gmra.mrb[0].mxu0 %v4816
    %v4884 = vpop.f32.mrb[0].mxu0
    %v4885 = vadd.f32 0.0, %v4884
    %v4886 = vpop.f32.mrb[0].mxu0
    %4887 = vdwg.mxu0
    %4888 = vrot.lane.b32.xlu0 %v4536, 96
    %v4889 = vpop.permute.xlu0 %4888
    %v4890 = vsel %vm1218, %v4889, 0
    %4892 = vmatprep.subr.mxu0 0.0
    %4893 = vmatpush1.msra.mxu0 %v4537
    %4894 = vmatprep.subr.mxu0 0.0
    %4895 = vmatpush1.msra.mxu0 %v4538
    %4896 = vmatprep.subr.mxu0 0.0
    %4897 = vmatpush1.msra.mxu0 %v4539
    %4898 = vmatprep.subr.mxu0 0.0
    %4899 = vmatpush1.msra.mxu0 %v4540
    %4900 = vmatprep.subr.mxu0 0.0
    %4901 = vmatpush1.msra.mxu0 %v4541
    %4902 = vmatprep.subr.mxu0 0.0
    %4903 = vmatpush1.msra.mxu0 %v4542
    %4904 = vmatprep.subr.mxu0 0.0
    %4905 = vmatpush1.msra.mxu0 %v4543
    %4906 = vmatprep.subr.mxu0 0.0
    %4907 = vmatpush1.msra.mxu0 %v4544
    %4908 = vmatprep.subr.mxu0 0.0
    %4909 = vmatpush1.msra.mxu0 %v4545
    %4910 = vmatprep.subr.mxu0 0.0
    %4911 = vmatpush1.msra.mxu0 %v4546
    %4912 = vmatprep.subr.mxu0 0.0
    %4913 = vmatpush1.msra.mxu0 %v4547
    %4914 = vmatprep.subr.mxu0 0.0
    %4915 = vmatpush1.msra.mxu0 %v4548
    %4916 = vmatprep.subr.mxu0 0.0
    %4917 = vmatpush1.msra.mxu0 0.0
    %4918 = vmatprep.subr.mxu0 0.0
    %4919 = vmatpush1.msra.mxu0 0.0
    %4920 = vmatprep.subr.mxu0 0.0
    %4921 = vmatpush1.msra.mxu0 0.0
    %4922 = vmatprep.subr.mxu0 0.0
    %4923 = vmatpush1.msra.mxu0 0.0
    %4924 = vmatprep.subr.mxu0 0.0
    %4925 = vmatpush1.msra.mxu0 0.0
    %4926 = vmatprep.subr.mxu0 0.0
    %4927 = vmatpush1.msra.mxu0 0.0
    %4928 = vmatprep.subr.mxu0 0.0
    %4929 = vmatpush1.msra.mxu0 0.0
    %4930 = vmatprep.subr.mxu0 0.0
    %4931 = vmatpush1.msra.mxu0 0.0
    %4932 = vmatprep.subr.mxu0 0.0
    %4933 = vmatpush1.msra.mxu0 0.0
    %4934 = vmatprep.subr.mxu0 0.0
    %4935 = vmatpush1.msra.mxu0 0.0
    %4936 = vmatprep.subr.mxu0 0.0
    %4937 = vmatpush1.msra.mxu0 0.0
    %4938 = vmatprep.subr.mxu0 0.0
    %4939 = vmatpush1.msra.mxu0 0.0
    %4940 = vmatprep.subr.mxu0 0.0
    %4941 = vmatpush1.msra.mxu0 0.0
    %4942 = vmatprep.subr.mxu0 0.0
    %4943 = vmatpush1.msra.mxu0 0.0
    %4944 = vmatprep.subr.mxu0 0.0
    %4945 = vmatpush1.msra.mxu0 0.0
    %4946 = vmatprep.subr.mxu0 0.0
    %4947 = vmatpush1.msra.mxu0 0.0
    %4948 = vmatprep.subr.mxu0 0.0
    %4949 = vmatpush1.msra.mxu0 0.0
    %4950 = vmatprep.subr.mxu0 0.0
    %4951 = vmatpush1.msra.mxu0 0.0
    %4952 = vmatprep.subr.mxu0 0.0
    %4953 = vmatpush1.msra.mxu0 0.0
    %4954 = vmatprep.subr.mxu0 0.0
    %4955 = vmatpush1.msra.mxu0 0.0
    %4956 = vmatprep.mubr.f32.mxu0 0.0
    %4957 = vmatmul.mubr.f32.gmra.mrb[0].mxu0 %v4890
    %v4958 = vpop.f32.mrb[0].mxu0
    %v4959 = vadd.f32 %v4885, %v4958
    %v4960 = vpop.f32.mrb[0].mxu0
    %4961 = vdwg.mxu0
    %4962 = vrot.lane.b32.xlu0 %v4731, 96
    %v4963 = vpop.permute.xlu0 %4962
    %v4964 = vsel %vm1218, %v4963, 0
    %4966 = vmatprep.subr.mxu0 0.0
    %4967 = vmatpush1.msra.mxu0 %v4715
    %4968 = vmatprep.subr.mxu0 0.0
    %4969 = vmatpush1.msra.mxu0 %v4716
    %4970 = vmatprep.subr.mxu0 0.0
    %4971 = vmatpush1.msra.mxu0 %v4717
    %4972 = vmatprep.subr.mxu0 0.0
    %4973 = vmatpush1.msra.mxu0 %v4718
    %4974 = vmatprep.subr.mxu0 0.0
    %4975 = vmatpush1.msra.mxu0 %v4719
    %4976 = vmatprep.subr.mxu0 0.0
    %4977 = vmatpush1.msra.mxu0 %v4720
    %4978 = vmatprep.subr.mxu0 0.0
    %4979 = vmatpush1.msra.mxu0 %v4721
    %4980 = vmatprep.subr.mxu0 0.0
    %4981 = vmatpush1.msra.mxu0 %v4722
    %4982 = vmatprep.subr.mxu0 0.0
    %4983 = vmatpush1.msra.mxu0 %v4723
    %4984 = vmatprep.subr.mxu0 0.0
    %4985 = vmatpush1.msra.mxu0 %v4724
    %4986 = vmatprep.subr.mxu0 0.0
    %4987 = vmatpush1.msra.mxu0 %v4725
    %4988 = vmatprep.subr.mxu0 0.0
    %4989 = vmatpush1.msra.mxu0 %v4726
    %4990 = vmatprep.subr.mxu0 0.0
    %4991 = vmatpush1.msra.mxu0 0.0
    %4992 = vmatprep.subr.mxu0 0.0
    %4993 = vmatpush1.msra.mxu0 0.0
    %4994 = vmatprep.subr.mxu0 0.0
    %4995 = vmatpush1.msra.mxu0 0.0
    %4996 = vmatprep.subr.mxu0 0.0
    %4997 = vmatpush1.msra.mxu0 0.0
    %4998 = vmatprep.subr.mxu0 0.0
    %4999 = vmatpush1.msra.mxu0 0.0
    %5000 = vmatprep.subr.mxu0 0.0
    %5001 = vmatpush1.msra.mxu0 0.0
    %5002 = vmatprep.subr.mxu0 0.0
    %5003 = vmatpush1.msra.mxu0 0.0
    %5004 = vmatprep.subr.mxu0 0.0
    %5005 = vmatpush1.msra.mxu0 0.0
    %5006 = vmatprep.subr.mxu0 0.0
    %5007 = vmatpush1.msra.mxu0 0.0
    %5008 = vmatprep.subr.mxu0 0.0
    %5009 = vmatpush1.msra.mxu0 0.0
    %5010 = vmatprep.subr.mxu0 0.0
    %5011 = vmatpush1.msra.mxu0 0.0
    %5012 = vmatprep.subr.mxu0 0.0
    %5013 = vmatpush1.msra.mxu0 0.0
    %5014 = vmatprep.subr.mxu0 0.0
    %5015 = vmatpush1.msra.mxu0 0.0
    %5016 = vmatprep.subr.mxu0 0.0
    %5017 = vmatpush1.msra.mxu0 0.0
    %5018 = vmatprep.subr.mxu0 0.0
    %5019 = vmatpush1.msra.mxu0 0.0
    %5020 = vmatprep.subr.mxu0 0.0
    %5021 = vmatpush1.msra.mxu0 0.0
    %5022 = vmatprep.subr.mxu0 0.0
    %5023 = vmatpush1.msra.mxu0 0.0
    %5024 = vmatprep.subr.mxu0 0.0
    %5025 = vmatpush1.msra.mxu0 0.0
    %5026 = vmatprep.subr.mxu0 0.0
    %5027 = vmatpush1.msra.mxu0 0.0
    %5028 = vmatprep.subr.mxu0 0.0
    %5029 = vmatpush1.msra.mxu0 0.0
    %5030 = vmatprep.mubr.f32.mxu0 0.0
    %5031 = vmatmul.mubr.f32.gmra.mrb[0].mxu0 %v4964
    %v5032 = vpop.f32.mrb[0].mxu0
    %v5033 = vadd.f32 0.0, %v5032
    %v5034 = vpop.f32.mrb[0].mxu0
    %5035 = vdwg.mxu0
    %v5036 = vadd.f32 %v4959, %v5033
    %v5037 = vadd.f32 %v5036, %v4810
    %v5038 = vmax.f32 %v5037, 0.0
    %v5039 = vmax.f32 %v4813, %v5038
    %v5041 = vrot.slane %v5039, 1
    %v5043 = vmax.f32 %v5039, %v5041
    %5044 = vst.msk [vmem:[#allocation3 + $0x3] sm:$0x1] %vm1696, %v5043
    %v5047 = vunpack.c.l.s4 1983009808
    %v5048 = vunpack.c.0.s8 %v5047
    %v5049 = vlaneseq
    %v5050 = vshrl.u32 %v5049, 7
    %v5051 = vsub.s32 %v5048, %v5050
    %v5052 = vrot.slane %v5043, %v5051
    %v5053 = vcombine.high %v5052, %v5052
    %5055 = vst.msk [vmem:[#allocation3 + $0x7] sm:$0x1] %vm1696, %v5053
    %v5056 = vcombine.high %v5043, %v5043
    %v5058 = vunpack.c.l.s4 1983009808
    %v5059 = vunpack.c.0.s8 %v5058
    %v5060 = vlaneseq
    %v5061 = vshrl.u32 %v5060, 7
    %v5062 = vsub.s32 %v5059, %v5061
    %v5063 = vrot.slane %v5056, %v5062
    %5065 = vst.msk [vmem:[#allocation3 + $0xb] sm:$0x1] %vm1696, %v5063
    %v5066 = vcombine.high %v5063, %v5063
    %5068 = vst.msk [vmem:[#allocation3 + $0xf] sm:$0x1] %vm1696, %v5066
    %v5069 = vld [vmem:[%s1178 + $0x8] sm:$0xff]
    %v5070 = vld [vmem:[%s1178 + $0x10] sm:$0xff]
    %v5071 = vld [vmem:[%s3] sm:$0xff]
    %v5072 = vld [vmem:[%s3 + $0x8] sm:$0xff]
    %v5073 = vld [vmem:[%s3 + $0x10] sm:$0xff]
    %v5074 = vld [vmem:[%s3 + $0x18] sm:$0xff]
    %v5075 = vld [vmem:[%s3 + $0x20] sm:$0xff]
    %v5076 = vld [vmem:[%s3 + $0x28] sm:$0xff]
    %v5077 = vld [vmem:[%s3 + $0x30] sm:$0xff]
    %v5078 = vld [vmem:[%s3 + $0x38] sm:$0xff]
    %v5079 = vld [vmem:[%s3 + $0x40] sm:$0xff]
    %v5080 = vld [vmem:[%s3 + $0x48] sm:$0xff]
    %v5081 = vld [vmem:[%s3 + $0x50] sm:$0xff]
    %v5082 = vld [vmem:[%s3 + $0x58] sm:$0xff]
    %v5083 = vld [vmem:[%s1178 + $0x8] sm:$0xfe]
    %v5084 = vld [vmem:[%s1178 + $0x10] sm:$0xfe]
    %v5085 = vld [vmem:[%s1178 + $0x20] sm:$0x1]
    %v5086 = vld [vmem:[%s1178 + $0x28] sm:$0x1]
    %v5087 = vld [vmem:[%s1200] sm:$0xff]
    %v5088 = vld [vmem:[%s1200 + $0x8] sm:$0xff]
    %v5089 = vld [vmem:[%s1200 + $0x10] sm:$0xff]
    %v5090 = vld [vmem:[%s1200 + $0x18] sm:$0xff]
    %v5091 = vld [vmem:[%s1200 + $0x20] sm:$0xff]
    %v5092 = vld [vmem:[%s1200 + $0x28] sm:$0xff]
    %v5093 = vld [vmem:[%s1200 + $0x30] sm:$0xff]
    %v5094 = vld [vmem:[%s1200 + $0x38] sm:$0xff]
    %v5095 = vld [vmem:[%s1200 + $0x40] sm:$0xff]
    %v5096 = vld [vmem:[%s1200 + $0x48] sm:$0xff]
    %v5097 = vld [vmem:[%s1200 + $0x50] sm:$0xff]
    %v5098 = vld [vmem:[%s1200 + $0x58] sm:$0xff]
    %v5103 = vrot.slane %v5083, 1
    %v5104 = vrot.slane %v5085, 1
    %v5105 = vsel %vm64, %v5103, %v5104
    %v5106 = vrot.slane %v5084, 1
    %v5107 = vrot.slane %v5086, 1
    %v5108 = vsel %vm64, %v5106, %v5107
    %5109 = vrot.lane.b32.xlu0 %v5105, 64
    %v5110 = vpop.permute.xlu0 %5109
    %5111 = vrot.lane.b32.xlu0 %v5108, 64
    %v5112 = vpop.permute.xlu0 %5111
    %v5113 = vsel %vm613, %v5110, %v5112
    %v5114 = vsel %vm1218, %v5113, 0
    %5116 = vmatprep.subr.mxu0 0.0
    %5117 = vmatpush1.msra.mxu0 %v5087
    %5118 = vmatprep.subr.mxu0 0.0
    %5119 = vmatpush1.msra.mxu0 %v5088
    %5120 = vmatprep.subr.mxu0 0.0
    %5121 = vmatpush1.msra.mxu0 %v5089
    %5122 = vmatprep.subr.mxu0 0.0
    %5123 = vmatpush1.msra.mxu0 %v5090
    %5124 = vmatprep.subr.mxu0 0.0
    %5125 = vmatpush1.msra.mxu0 %v5091
    %5126 = vmatprep.subr.mxu0 0.0
    %5127 = vmatpush1.msra.mxu0 %v5092
    %5128 = vmatprep.subr.mxu0 0.0
    %5129 = vmatpush1.msra.mxu0 %v5093
    %5130 = vmatprep.subr.mxu0 0.0
    %5131 = vmatpush1.msra.mxu0 %v5094
    %5132 = vmatprep.subr.mxu0 0.0
    %5133 = vmatpush1.msra.mxu0 %v5095
    %5134 = vmatprep.subr.mxu0 0.0
    %5135 = vmatpush1.msra.mxu0 %v5096
    %5136 = vmatprep.subr.mxu0 0.0
    %5137 = vmatpush1.msra.mxu0 %v5097
    %5138 = vmatprep.subr.mxu0 0.0
    %5139 = vmatpush1.msra.mxu0 %v5098
    %5140 = vmatprep.subr.mxu0 0.0
    %5141 = vmatpush1.msra.mxu0 0.0
    %5142 = vmatprep.subr.mxu0 0.0
    %5143 = vmatpush1.msra.mxu0 0.0
    %5144 = vmatprep.subr.mxu0 0.0
    %5145 = vmatpush1.msra.mxu0 0.0
    %5146 = vmatprep.subr.mxu0 0.0
    %5147 = vmatpush1.msra.mxu0 0.0
    %5148 = vmatprep.subr.mxu0 0.0
    %5149 = vmatpush1.msra.mxu0 0.0
    %5150 = vmatprep.subr.mxu0 0.0
    %5151 = vmatpush1.msra.mxu0 0.0
    %5152 = vmatprep.subr.mxu0 0.0
    %5153 = vmatpush1.msra.mxu0 0.0
    %5154 = vmatprep.subr.mxu0 0.0
    %5155 = vmatpush1.msra.mxu0 0.0
    %5156 = vmatprep.subr.mxu0 0.0
    %5157 = vmatpush1.msra.mxu0 0.0
    %5158 = vmatprep.subr.mxu0 0.0
    %5159 = vmatpush1.msra.mxu0 0.0
    %5160 = vmatprep.subr.mxu0 0.0
    %5161 = vmatpush1.msra.mxu0 0.0
    %5162 = vmatprep.subr.mxu0 0.0
    %5163 = vmatpush1.msra.mxu0 0.0
    %5164 = vmatprep.subr.mxu0 0.0
    %5165 = vmatpush1.msra.mxu0 0.0
    %5166 = vmatprep.subr.mxu0 0.0
    %5167 = vmatpush1.msra.mxu0 0.0
    %5168 = vmatprep.subr.mxu0 0.0
    %5169 = vmatpush1.msra.mxu0 0.0
    %5170 = vmatprep.subr.mxu0 0.0
    %5171 = vmatpush1.msra.mxu0 0.0
    %5172 = vmatprep.subr.mxu0 0.0
    %5173 = vmatpush1.msra.mxu0 0.0
    %5174 = vmatprep.subr.mxu0 0.0
    %5175 = vmatpush1.msra.mxu0 0.0
    %5176 = vmatprep.subr.mxu0 0.0
    %5177 = vmatpush1.msra.mxu0 0.0
    %5178 = vmatprep.subr.mxu0 0.0
    %5179 = vmatpush1.msra.mxu0 0.0
    %5180 = vmatprep.mubr.f32.mxu0 0.0
    %5181 = vmatmul.mubr.f32.gmra.mrb[0].mxu0 %v5114
    %v5182 = vpop.f32.mrb[0].mxu0
    %v5183 = vadd.f32 0.0, %v5182
    %v5184 = vpop.f32.mrb[0].mxu0
    %5185 = vdwg.mxu0
    %5188 = vrot.lane.b32.xlu0 %v5069, 64
    %v5189 = vpop.permute.xlu0 %5188
    %5190 = vrot.lane.b32.xlu0 %v5070, 64
    %v5191 = vpop.permute.xlu0 %5190
    %v5192 = vsel %vm613, %v5189, %v5191
    %v5193 = vsel %vm1218, %v5192, 0
    %5195 = vmatprep.subr.mxu0 0.0
    %5196 = vmatpush1.msra.mxu0 %v5071
    %5197 = vmatprep.subr.mxu0 0.0
    %5198 = vmatpush1.msra.mxu0 %v5072
    %5199 = vmatprep.subr.mxu0 0.0
    %5200 = vmatpush1.msra.mxu0 %v5073
    %5201 = vmatprep.subr.mxu0 0.0
    %5202 = vmatpush1.msra.mxu0 %v5074
    %5203 = vmatprep.subr.mxu0 0.0
    %5204 = vmatpush1.msra.mxu0 %v5075
    %5205 = vmatprep.subr.mxu0 0.0
    %5206 = vmatpush1.msra.mxu0 %v5076
    %5207 = vmatprep.subr.mxu0 0.0
    %5208 = vmatpush1.msra.mxu0 %v5077
    %5209 = vmatprep.subr.mxu0 0.0
    %5210 = vmatpush1.msra.mxu0 %v5078
    %5211 = vmatprep.subr.mxu0 0.0
    %5212 = vmatpush1.msra.mxu0 %v5079
    %5213 = vmatprep.subr.mxu0 0.0
    %5214 = vmatpush1.msra.mxu0 %v5080
    %5215 = vmatprep.subr.mxu0 0.0
    %5216 = vmatpush1.msra.mxu0 %v5081
    %5217 = vmatprep.subr.mxu0 0.0
    %5218 = vmatpush1.msra.mxu0 %v5082
    %5219 = vmatprep.subr.mxu0 0.0
    %5220 = vmatpush1.msra.mxu0 0.0
    %5221 = vmatprep.subr.mxu0 0.0
    %5222 = vmatpush1.msra.mxu0 0.0
    %5223 = vmatprep.subr.mxu0 0.0
    %5224 = vmatpush1.msra.mxu0 0.0
    %5225 = vmatprep.subr.mxu0 0.0
    %5226 = vmatpush1.msra.mxu0 0.0
    %5227 = vmatprep.subr.mxu0 0.0
    %5228 = vmatpush1.msra.mxu0 0.0
    %5229 = vmatprep.subr.mxu0 0.0
    %5230 = vmatpush1.msra.mxu0 0.0
    %5231 = vmatprep.subr.mxu0 0.0
    %5232 = vmatpush1.msra.mxu0 0.0
    %5233 = vmatprep.subr.mxu0 0.0
    %5234 = vmatpush1.msra.mxu0 0.0
    %5235 = vmatprep.subr.mxu0 0.0
    %5236 = vmatpush1.msra.mxu0 0.0
    %5237 = vmatprep.subr.mxu0 0.0
    %5238 = vmatpush1.msra.mxu0 0.0
    %5239 = vmatprep.subr.mxu0 0.0
    %5240 = vmatpush1.msra.mxu0 0.0
    %5241 = vmatprep.subr.mxu0 0.0
    %5242 = vmatpush1.msra.mxu0 0.0
    %5243 = vmatprep.subr.mxu0 0.0
    %5244 = vmatpush1.msra.mxu0 0.0
    %5245 = vmatprep.subr.mxu0 0.0
    %5246 = vmatpush1.msra.mxu0 0.0
    %5247 = vmatprep.subr.mxu0 0.0
    %5248 = vmatpush1.msra.mxu0 0.0
    %5249 = vmatprep.subr.mxu0 0.0
    %5250 = vmatpush1.msra.mxu0 0.0
    %5251 = vmatprep.subr.mxu0 0.0
    %5252 = vmatpush1.msra.mxu0 0.0
    %5253 = vmatprep.subr.mxu0 0.0
    %5254 = vmatpush1.msra.mxu0 0.0
    %5255 = vmatprep.subr.mxu0 0.0
    %5256 = vmatpush1.msra.mxu0 0.0
    %5257 = vmatprep.subr.mxu0 0.0
    %5258 = vmatpush1.msra.mxu0 0.0
    %5259 = vmatprep.mubr.f32.mxu0 0.0
    %5260 = vmatmul.mubr.f32.gmra.mrb[0].mxu0 %v5193
    %v5261 = vpop.f32.mrb[0].mxu0
    %v5262 = vadd.f32 %v5183, %v5261
    %v5263 = vpop.f32.mrb[0].mxu0
    %5264 = vdwg.mxu0
    %v5265 = vld [vmem:[%s1178 + $0x8] sm:$0xfc]
    %v5266 = vld [vmem:[%s1178 + $0x10] sm:$0xfc]
    %v5267 = vld [vmem:[%s1178 + $0x20] sm:$0x3]
    %v5268 = vld [vmem:[%s1178 + $0x28] sm:$0x3]
    %v5269 = vld [vmem:[%s1366] sm:$0xff]
    %v5270 = vld [vmem:[%s1366 + $0x8] sm:$0xff]
    %v5271 = vld [vmem:[%s1366 + $0x10] sm:$0xff]
    %v5272 = vld [vmem:[%s1366 + $0x18] sm:$0xff]
    %v5273 = vld [vmem:[%s1366 + $0x20] sm:$0xff]
    %v5274 = vld [vmem:[%s1366 + $0x28] sm:$0xff]
    %v5275 = vld [vmem:[%s1366 + $0x30] sm:$0xff]
    %v5276 = vld [vmem:[%s1366 + $0x38] sm:$0xff]
    %v5277 = vld [vmem:[%s1366 + $0x40] sm:$0xff]
    %v5278 = vld [vmem:[%s1366 + $0x48] sm:$0xff]
    %v5279 = vld [vmem:[%s1366 + $0x50] sm:$0xff]
    %v5280 = vld [vmem:[%s1366 + $0x58] sm:$0xff]
    %v5285 = vrot.slane %v5265, 2
    %v5286 = vrot.slane %v5267, 2
    %v5287 = vsel %vm407, %v5285, %v5286
    %v5288 = vrot.slane %v5266, 2
    %v5289 = vrot.slane %v5268, 2
    %v5290 = vsel %vm407, %v5288, %v5289
    %5291 = vrot.lane.b32.xlu0 %v5287, 64
    %v5292 = vpop.permute.xlu0 %5291
    %5293 = vrot.lane.b32.xlu0 %v5290, 64
    %v5294 = vpop.permute.xlu0 %5293
    %v5295 = vsel %vm613, %v5292, %v5294
    %v5296 = vsel %vm1218, %v5295, 0
    %5298 = vmatprep.subr.mxu0 0.0
    %5299 = vmatpush1.msra.mxu0 %v5269
    %5300 = vmatprep.subr.mxu0 0.0
    %5301 = vmatpush1.msra.mxu0 %v5270
    %5302 = vmatprep.subr.mxu0 0.0
    %5303 = vmatpush1.msra.mxu0 %v5271
    %5304 = vmatprep.subr.mxu0 0.0
    %5305 = vmatpush1.msra.mxu0 %v5272
    %5306 = vmatprep.subr.mxu0 0.0
    %5307 = vmatpush1.msra.mxu0 %v5273
    %5308 = vmatprep.subr.mxu0 0.0
    %5309 = vmatpush1.msra.mxu0 %v5274
    %5310 = vmatprep.subr.mxu0 0.0
    %5311 = vmatpush1.msra.mxu0 %v5275
    %5312 = vmatprep.subr.mxu0 0.0
    %5313 = vmatpush1.msra.mxu0 %v5276
    %5314 = vmatprep.subr.mxu0 0.0
    %5315 = vmatpush1.msra.mxu0 %v5277
    %5316 = vmatprep.subr.mxu0 0.0
    %5317 = vmatpush1.msra.mxu0 %v5278
    %5318 = vmatprep.subr.mxu0 0.0
    %5319 = vmatpush1.msra.mxu0 %v5279
    %5320 = vmatprep.subr.mxu0 0.0
    %5321 = vmatpush1.msra.mxu0 %v5280
    %5322 = vmatprep.subr.mxu0 0.0
    %5323 = vmatpush1.msra.mxu0 0.0
    %5324 = vmatprep.subr.mxu0 0.0
    %5325 = vmatpush1.msra.mxu0 0.0
    %5326 = vmatprep.subr.mxu0 0.0
    %5327 = vmatpush1.msra.mxu0 0.0
    %5328 = vmatprep.subr.mxu0 0.0
    %5329 = vmatpush1.msra.mxu0 0.0
    %5330 = vmatprep.subr.mxu0 0.0
    %5331 = vmatpush1.msra.mxu0 0.0
    %5332 = vmatprep.subr.mxu0 0.0
    %5333 = vmatpush1.msra.mxu0 0.0
    %5334 = vmatprep.subr.mxu0 0.0
    %5335 = vmatpush1.msra.mxu0 0.0
    %5336 = vmatprep.subr.mxu0 0.0
    %5337 = vmatpush1.msra.mxu0 0.0
    %5338 = vmatprep.subr.mxu0 0.0
    %5339 = vmatpush1.msra.mxu0 0.0
    %5340 = vmatprep.subr.mxu0 0.0
    %5341 = vmatpush1.msra.mxu0 0.0
    %5342 = vmatprep.subr.mxu0 0.0
    %5343 = vmatpush1.msra.mxu0 0.0
    %5344 = vmatprep.subr.mxu0 0.0
    %5345 = vmatpush1.msra.mxu0 0.0
    %5346 = vmatprep.subr.mxu0 0.0
    %5347 = vmatpush1.msra.mxu0 0.0
    %5348 = vmatprep.subr.mxu0 0.0
    %5349 = vmatpush1.msra.mxu0 0.0
    %5350 = vmatprep.subr.mxu0 0.0
    %5351 = vmatpush1.msra.mxu0 0.0
    %5352 = vmatprep.subr.mxu0 0.0
    %5353 = vmatpush1.msra.mxu0 0.0
    %5354 = vmatprep.subr.mxu0 0.0
    %5355 = vmatpush1.msra.mxu0 0.0
    %5356 = vmatprep.subr.mxu0 0.0
    %5357 = vmatpush1.msra.mxu0 0.0
    %5358 = vmatprep.subr.mxu0 0.0
    %5359 = vmatpush1.msra.mxu0 0.0
    %5360 = vmatprep.subr.mxu0 0.0
    %5361 = vmatpush1.msra.mxu0 0.0
    %5362 = vmatprep.mubr.f32.mxu0 0.0
    %5363 = vmatmul.mubr.f32.gmra.mrb[0].mxu0 %v5296
    %v5364 = vpop.f32.mrb[0].mxu0
    %v5365 = vadd.f32 0.0, %v5364
    %v5366 = vpop.f32.mrb[0].mxu0
    %5367 = vdwg.mxu0
    %v5368 = vadd.f32 %v5262, %v5365
    %v5369 = vld [vmem:[%s4] sm:$0x1]
    %v5371 = vlaneseq
    %v5372 = vshrl.u32 %v5371, 7
    %v5373 = vsub.s32 0, %v5372
    %v5374 = vrot.slane %v5369, %v5373
    %v5376 = vadd.f32 %v5368, %v5374
    %v5377 = vmax.f32 %v5376, 0.0
    %5378 = vrot.lane.b32.xlu0 %v5105, 32
    %v5379 = vpop.permute.xlu0 %5378
    %5380 = vrot.lane.b32.xlu0 %v5108, 32
    %v5381 = vpop.permute.xlu0 %5380
    %v5382 = vsel %vm2035, %v5379, %v5381
    %v5383 = vsel %vm1218, %v5382, 0
    %5385 = vmatprep.subr.mxu0 0.0
    %5386 = vmatpush1.msra.mxu0 %v5087
    %5387 = vmatprep.subr.mxu0 0.0
    %5388 = vmatpush1.msra.mxu0 %v5088
    %5389 = vmatprep.subr.mxu0 0.0
    %5390 = vmatpush1.msra.mxu0 %v5089
    %5391 = vmatprep.subr.mxu0 0.0
    %5392 = vmatpush1.msra.mxu0 %v5090
    %5393 = vmatprep.subr.mxu0 0.0
    %5394 = vmatpush1.msra.mxu0 %v5091
    %5395 = vmatprep.subr.mxu0 0.0
    %5396 = vmatpush1.msra.mxu0 %v5092
    %5397 = vmatprep.subr.mxu0 0.0
    %5398 = vmatpush1.msra.mxu0 %v5093
    %5399 = vmatprep.subr.mxu0 0.0
    %5400 = vmatpush1.msra.mxu0 %v5094
    %5401 = vmatprep.subr.mxu0 0.0
    %5402 = vmatpush1.msra.mxu0 %v5095
    %5403 = vmatprep.subr.mxu0 0.0
    %5404 = vmatpush1.msra.mxu0 %v5096
    %5405 = vmatprep.subr.mxu0 0.0
    %5406 = vmatpush1.msra.mxu0 %v5097
    %5407 = vmatprep.subr.mxu0 0.0
    %5408 = vmatpush1.msra.mxu0 %v5098
    %5409 = vmatprep.subr.mxu0 0.0
    %5410 = vmatpush1.msra.mxu0 0.0
    %5411 = vmatprep.subr.mxu0 0.0
    %5412 = vmatpush1.msra.mxu0 0.0
    %5413 = vmatprep.subr.mxu0 0.0
    %5414 = vmatpush1.msra.mxu0 0.0
    %5415 = vmatprep.subr.mxu0 0.0
    %5416 = vmatpush1.msra.mxu0 0.0
    %5417 = vmatprep.subr.mxu0 0.0
    %5418 = vmatpush1.msra.mxu0 0.0
    %5419 = vmatprep.subr.mxu0 0.0
    %5420 = vmatpush1.msra.mxu0 0.0
    %5421 = vmatprep.subr.mxu0 0.0
    %5422 = vmatpush1.msra.mxu0 0.0
    %5423 = vmatprep.subr.mxu0 0.0
    %5424 = vmatpush1.msra.mxu0 0.0
    %5425 = vmatprep.subr.mxu0 0.0
    %5426 = vmatpush1.msra.mxu0 0.0
    %5427 = vmatprep.subr.mxu0 0.0
    %5428 = vmatpush1.msra.mxu0 0.0
    %5429 = vmatprep.subr.mxu0 0.0
    %5430 = vmatpush1.msra.mxu0 0.0
    %5431 = vmatprep.subr.mxu0 0.0
    %5432 = vmatpush1.msra.mxu0 0.0
    %5433 = vmatprep.subr.mxu0 0.0
    %5434 = vmatpush1.msra.mxu0 0.0
    %5435 = vmatprep.subr.mxu0 0.0
    %5436 = vmatpush1.msra.mxu0 0.0
    %5437 = vmatprep.subr.mxu0 0.0
    %5438 = vmatpush1.msra.mxu0 0.0
    %5439 = vmatprep.subr.mxu0 0.0
    %5440 = vmatpush1.msra.mxu0 0.0
    %5441 = vmatprep.subr.mxu0 0.0
    %5442 = vmatpush1.msra.mxu0 0.0
    %5443 = vmatprep.subr.mxu0 0.0
    %5444 = vmatpush1.msra.mxu0 0.0
    %5445 = vmatprep.subr.mxu0 0.0
    %5446 = vmatpush1.msra.mxu0 0.0
    %5447 = vmatprep.subr.mxu0 0.0
    %5448 = vmatpush1.msra.mxu0 0.0
    %5449 = vmatprep.mubr.f32.mxu0 0.0
    %5450 = vmatmul.mubr.f32.gmra.mrb[0].mxu0 %v5383
    %v5451 = vpop.f32.mrb[0].mxu0
    %v5452 = vadd.f32 0.0, %v5451
    %v5453 = vpop.f32.mrb[0].mxu0
    %5454 = vdwg.mxu0
    %5455 = vrot.lane.b32.xlu0 %v5069, 32
    %v5456 = vpop.permute.xlu0 %5455
    %5457 = vrot.lane.b32.xlu0 %v5070, 32
    %v5458 = vpop.permute.xlu0 %5457
    %v5459 = vsel %vm2035, %v5456, %v5458
    %v5460 = vsel %vm1218, %v5459, 0
    %5462 = vmatprep.subr.mxu0 0.0
    %5463 = vmatpush1.msra.mxu0 %v5071
    %5464 = vmatprep.subr.mxu0 0.0
    %5465 = vmatpush1.msra.mxu0 %v5072
    %5466 = vmatprep.subr.mxu0 0.0
    %5467 = vmatpush1.msra.mxu0 %v5073
    %5468 = vmatprep.subr.mxu0 0.0
    %5469 = vmatpush1.msra.mxu0 %v5074
    %5470 = vmatprep.subr.mxu0 0.0
    %5471 = vmatpush1.msra.mxu0 %v5075
    %5472 = vmatprep.subr.mxu0 0.0
    %5473 = vmatpush1.msra.mxu0 %v5076
    %5474 = vmatprep.subr.mxu0 0.0
    %5475 = vmatpush1.msra.mxu0 %v5077
    %5476 = vmatprep.subr.mxu0 0.0
    %5477 = vmatpush1.msra.mxu0 %v5078
    %5478 = vmatprep.subr.mxu0 0.0
    %5479 = vmatpush1.msra.mxu0 %v5079
    %5480 = vmatprep.subr.mxu0 0.0
    %5481 = vmatpush1.msra.mxu0 %v5080
    %5482 = vmatprep.subr.mxu0 0.0
    %5483 = vmatpush1.msra.mxu0 %v5081
    %5484 = vmatprep.subr.mxu0 0.0
    %5485 = vmatpush1.msra.mxu0 %v5082
    %5486 = vmatprep.subr.mxu0 0.0
    %5487 = vmatpush1.msra.mxu0 0.0
    %5488 = vmatprep.subr.mxu0 0.0
    %5489 = vmatpush1.msra.mxu0 0.0
    %5490 = vmatprep.subr.mxu0 0.0
    %5491 = vmatpush1.msra.mxu0 0.0
    %5492 = vmatprep.subr.mxu0 0.0
    %5493 = vmatpush1.msra.mxu0 0.0
    %5494 = vmatprep.subr.mxu0 0.0
    %5495 = vmatpush1.msra.mxu0 0.0
    %5496 = vmatprep.subr.mxu0 0.0
    %5497 = vmatpush1.msra.mxu0 0.0
    %5498 = vmatprep.subr.mxu0 0.0
    %5499 = vmatpush1.msra.mxu0 0.0
    %5500 = vmatprep.subr.mxu0 0.0
    %5501 = vmatpush1.msra.mxu0 0.0
    %5502 = vmatprep.subr.mxu0 0.0
    %5503 = vmatpush1.msra.mxu0 0.0
    %5504 = vmatprep.subr.mxu0 0.0
    %5505 = vmatpush1.msra.mxu0 0.0
    %5506 = vmatprep.subr.mxu0 0.0
    %5507 = vmatpush1.msra.mxu0 0.0
    %5508 = vmatprep.subr.mxu0 0.0
    %5509 = vmatpush1.msra.mxu0 0.0
    %5510 = vmatprep.subr.mxu0 0.0
    %5511 = vmatpush1.msra.mxu0 0.0
    %5512 = vmatprep.subr.mxu0 0.0
    %5513 = vmatpush1.msra.mxu0 0.0
    %5514 = vmatprep.subr.mxu0 0.0
    %5515 = vmatpush1.msra.mxu0 0.0
    %5516 = vmatprep.subr.mxu0 0.0
    %5517 = vmatpush1.msra.mxu0 0.0
    %5518 = vmatprep.subr.mxu0 0.0
    %5519 = vmatpush1.msra.mxu0 0.0
    %5520 = vmatprep.subr.mxu0 0.0
    %5521 = vmatpush1.msra.mxu0 0.0
    %5522 = vmatprep.subr.mxu0 0.0
    %5523 = vmatpush1.msra.mxu0 0.0
    %5524 = vmatprep.subr.mxu0 0.0
    %5525 = vmatpush1.msra.mxu0 0.0
    %5526 = vmatprep.mubr.f32.mxu0 0.0
    %5527 = vmatmul.mubr.f32.gmra.mrb[0].mxu0 %v5460
    %v5528 = vpop.f32.mrb[0].mxu0
    %v5529 = vadd.f32 %v5452, %v5528
    %v5530 = vpop.f32.mrb[0].mxu0
    %5531 = vdwg.mxu0
    %5532 = vrot.lane.b32.xlu0 %v5287, 32
    %v5533 = vpop.permute.xlu0 %5532
    %5534 = vrot.lane.b32.xlu0 %v5290, 32
    %v5535 = vpop.permute.xlu0 %5534
    %v5536 = vsel %vm2035, %v5533, %v5535
    %v5537 = vsel %vm1218, %v5536, 0
    %5539 = vmatprep.subr.mxu0 0.0
    %5540 = vmatpush1.msra.mxu0 %v5269
    %5541 = vmatprep.subr.mxu0 0.0
    %5542 = vmatpush1.msra.mxu0 %v5270
    %5543 = vmatprep.subr.mxu0 0.0
    %5544 = vmatpush1.msra.mxu0 %v5271
    %5545 = vmatprep.subr.mxu0 0.0
    %5546 = vmatpush1.msra.mxu0 %v5272
    %5547 = vmatprep.subr.mxu0 0.0
    %5548 = vmatpush1.msra.mxu0 %v5273
    %5549 = vmatprep.subr.mxu0 0.0
    %5550 = vmatpush1.msra.mxu0 %v5274
    %5551 = vmatprep.subr.mxu0 0.0
    %5552 = vmatpush1.msra.mxu0 %v5275
    %5553 = vmatprep.subr.mxu0 0.0
    %5554 = vmatpush1.msra.mxu0 %v5276
    %5555 = vmatprep.subr.mxu0 0.0
    %5556 = vmatpush1.msra.mxu0 %v5277
    %5557 = vmatprep.subr.mxu0 0.0
    %5558 = vmatpush1.msra.mxu0 %v5278
    %5559 = vmatprep.subr.mxu0 0.0
    %5560 = vmatpush1.msra.mxu0 %v5279
    %5561 = vmatprep.subr.mxu0 0.0
    %5562 = vmatpush1.msra.mxu0 %v5280
    %5563 = vmatprep.subr.mxu0 0.0
    %5564 = vmatpush1.msra.mxu0 0.0
    %5565 = vmatprep.subr.mxu0 0.0
    %5566 = vmatpush1.msra.mxu0 0.0
    %5567 = vmatprep.subr.mxu0 0.0
    %5568 = vmatpush1.msra.mxu0 0.0
    %5569 = vmatprep.subr.mxu0 0.0
    %5570 = vmatpush1.msra.mxu0 0.0
    %5571 = vmatprep.subr.mxu0 0.0
    %5572 = vmatpush1.msra.mxu0 0.0
    %5573 = vmatprep.subr.mxu0 0.0
    %5574 = vmatpush1.msra.mxu0 0.0
    %5575 = vmatprep.subr.mxu0 0.0
    %5576 = vmatpush1.msra.mxu0 0.0
    %5577 = vmatprep.subr.mxu0 0.0
    %5578 = vmatpush1.msra.mxu0 0.0
    %5579 = vmatprep.subr.mxu0 0.0
    %5580 = vmatpush1.msra.mxu0 0.0
    %5581 = vmatprep.subr.mxu0 0.0
    %5582 = vmatpush1.msra.mxu0 0.0
    %5583 = vmatprep.subr.mxu0 0.0
    %5584 = vmatpush1.msra.mxu0 0.0
    %5585 = vmatprep.subr.mxu0 0.0
    %5586 = vmatpush1.msra.mxu0 0.0
    %5587 = vmatprep.subr.mxu0 0.0
    %5588 = vmatpush1.msra.mxu0 0.0
    %5589 = vmatprep.subr.mxu0 0.0
    %5590 = vmatpush1.msra.mxu0 0.0
    %5591 = vmatprep.subr.mxu0 0.0
    %5592 = vmatpush1.msra.mxu0 0.0
    %5593 = vmatprep.subr.mxu0 0.0
    %5594 = vmatpush1.msra.mxu0 0.0
    %5595 = vmatprep.subr.mxu0 0.0
    %5596 = vmatpush1.msra.mxu0 0.0
    %5597 = vmatprep.subr.mxu0 0.0
    %5598 = vmatpush1.msra.mxu0 0.0
    %5599 = vmatprep.subr.mxu0 0.0
    %5600 = vmatpush1.msra.mxu0 0.0
    %5601 = vmatprep.subr.mxu0 0.0
    %5602 = vmatpush1.msra.mxu0 0.0
    %5603 = vmatprep.mubr.f32.mxu0 0.0
    %5604 = vmatmul.mubr.f32.gmra.mrb[0].mxu0 %v5537
    %v5605 = vpop.f32.mrb[0].mxu0
    %v5606 = vadd.f32 0.0, %v5605
    %v5607 = vpop.f32.mrb[0].mxu0
    %5608 = vdwg.mxu0
    %v5609 = vadd.f32 %v5529, %v5606
    %v5610 = vadd.f32 %v5609, %v5374
    %v5611 = vmax.f32 %v5610, 0.0
    %v5612 = vmax.f32 %v5377, %v5611
    %v5614 = vrot.slane %v5612, 1
    %v5616 = vmax.f32 %v5612, %v5614
    %v5619 = vunpack.c.l.s4 1983009808
    %v5620 = vunpack.c.0.s8 %v5619
    %v5621 = vlaneseq
    %v5622 = vshrl.u32 %v5621, 7
    %v5623 = vsub.s32 %v5620, %v5622
    %v5624 = vrot.slane %v5616, %v5623
    %5625 = vrot.lane.b32.xlu0 %v5624, 64
    %v5626 = vpop.permute.xlu0 %5625
    %5628 = vst.msk [vmem:[#allocation3 + $0x3] sm:$0x1] %vm2282, %v5626
    %v5629 = vcombine.high %v5624, %v5624
    %5630 = vrot.lane.b32.xlu0 %v5629, 64
    %v5631 = vpop.permute.xlu0 %5630
    %5633 = vst.msk [vmem:[#allocation3 + $0x7] sm:$0x1] %vm2282, %v5631
    %v5634 = vcombine.high %v5616, %v5616
    %v5636 = vunpack.c.l.s4 1983009808
    %v5637 = vunpack.c.0.s8 %v5636
    %v5638 = vlaneseq
    %v5639 = vshrl.u32 %v5638, 7
    %v5640 = vsub.s32 %v5637, %v5639
    %v5641 = vrot.slane %v5634, %v5640
    %5642 = vrot.lane.b32.xlu0 %v5641, 64
    %v5643 = vpop.permute.xlu0 %5642
    %5645 = vst.msk [vmem:[#allocation3 + $0xb] sm:$0x1] %vm2282, %v5643
    %v5646 = vcombine.high %v5641, %v5641
    %5647 = vrot.lane.b32.xlu0 %v5646, 64
    %v5648 = vpop.permute.xlu0 %5647
    %5650 = vst.msk [vmem:[#allocation3 + $0xf] sm:$0x1] %vm2282, %v5648
    %v5651 = vld [vmem:[#allocation3] sm:$0xff]
    %v5652 = vld [vmem:[#allocation3 + $0x8] sm:$0xff]
    %v5653 = vld [vmem:[#allocation4] sm:$0xff]
    %v5654 = vld [vmem:[#allocation4 + $0x8] sm:$0xff]
    %v5655 = vld [vmem:[#allocation4 + $0x10] sm:$0xff]
    %v5656 = vld [vmem:[#allocation4 + $0x18] sm:$0xff]
    %v5657 = vld [vmem:[#allocation4 + $0x20] sm:$0xff]
    %v5658 = vld [vmem:[#allocation4 + $0x28] sm:$0xff]
    %v5659 = vld [vmem:[#allocation4 + $0x30] sm:$0xff]
    %v5660 = vld [vmem:[#allocation4 + $0x38] sm:$0xff]
    %v5661 = vld [vmem:[#allocation4 + $0x40] sm:$0xff]
    %v5662 = vld [vmem:[#allocation4 + $0x48] sm:$0xff]
    %v5663 = vld [vmem:[#allocation4 + $0x50] sm:$0xff]
    %v5664 = vld [vmem:[#allocation4 + $0x58] sm:$0xff]
    %v5665 = vld [vmem:[#allocation4 + $0x60] sm:$0xff]
    %v5666 = vld [vmem:[#allocation4 + $0x68] sm:$0xff]
    %v5667 = vld [vmem:[#allocation4 + $0x70] sm:$0xff]
    %v5668 = vld [vmem:[#allocation4 + $0x78] sm:$0xff]
    %v5669 = vld [vmem:[#allocation4 + $0x80] sm:$0xff]
    %v5670 = vld [vmem:[#allocation4 + $0x88] sm:$0xff]
    %v5671 = vld [vmem:[#allocation4 + $0x90] sm:$0xff]
    %v5672 = vld [vmem:[#allocation4 + $0x98] sm:$0xff]
    %v5673 = vld [vmem:[#allocation4 + $0xa0] sm:$0xff]
    %v5674 = vld [vmem:[#allocation4 + $0xa8] sm:$0xff]
    %v5675 = vld [vmem:[#allocation4 + $0xb0] sm:$0xff]
    %v5676 = vld [vmem:[#allocation4 + $0xb8] sm:$0xff]
    %v5677 = vld [vmem:[#allocation4 + $0xc0] sm:$0xff]
    %v5678 = vld [vmem:[#allocation4 + $0xc8] sm:$0xff]
    %v5679 = vld [vmem:[#allocation4 + $0xd0] sm:$0xff]
    %v5680 = vld [vmem:[#allocation4 + $0xd8] sm:$0xff]
    %v5681 = vld [vmem:[#allocation4 + $0xe0] sm:$0xff]
    %v5682 = vld [vmem:[#allocation4 + $0xe8] sm:$0xff]
    %v5683 = vld [vmem:[#allocation4 + $0xf0] sm:$0xff]
    %v5684 = vld [vmem:[#allocation4 + $0xf8] sm:$0xff]
    %v5685 = vld [vmem:[#allocation4 + $0x100] sm:$0xff]
    %v5686 = vld [vmem:[#allocation4 + $0x108] sm:$0xff]
    %v5687 = vld [vmem:[#allocation4 + $0x110] sm:$0xff]
    %v5688 = vld [vmem:[#allocation4 + $0x118] sm:$0xff]
    %v5689 = vld [vmem:[#allocation4 + $0x120] sm:$0xff]
    %v5690 = vld [vmem:[#allocation4 + $0x128] sm:$0xff]
    %v5691 = vld [vmem:[#allocation4 + $0x130] sm:$0xff]
    %v5692 = vld [vmem:[#allocation4 + $0x138] sm:$0xff]
    %v5693 = vld [vmem:[#allocation4 + $0x140] sm:$0xff]
    %v5694 = vld [vmem:[#allocation4 + $0x148] sm:$0xff]
    %v5695 = vld [vmem:[#allocation4 + $0x150] sm:$0xff]
    %v5696 = vld [vmem:[#allocation4 + $0x158] sm:$0xff]
    %v5697 = vld [vmem:[#allocation4 + $0x160] sm:$0xff]
    %v5698 = vld [vmem:[#allocation4 + $0x168] sm:$0xff]
    %v5699 = vld [vmem:[#allocation4 + $0x170] sm:$0xff]
    %v5700 = vld [vmem:[#allocation4 + $0x178] sm:$0xff]
    %v5701 = vld [vmem:[#allocation4 + $0x180] sm:$0xff]
    %v5702 = vld [vmem:[#allocation4 + $0x188] sm:$0xff]
    %v5703 = vld [vmem:[#allocation4 + $0x190] sm:$0xff]
    %v5704 = vld [vmem:[#allocation4 + $0x198] sm:$0xff]
    %v5705 = vld [vmem:[#allocation4 + $0x1a0] sm:$0xff]
    %v5706 = vld [vmem:[#allocation4 + $0x1a8] sm:$0xff]
    %v5707 = vld [vmem:[#allocation4 + $0x1b0] sm:$0xff]
    %v5708 = vld [vmem:[#allocation4 + $0x1b8] sm:$0xff]
    %v5709 = vld [vmem:[#allocation4 + $0x1c0] sm:$0xff]
    %v5710 = vld [vmem:[#allocation4 + $0x1c8] sm:$0xff]
    %v5711 = vld [vmem:[#allocation4 + $0x1d0] sm:$0xff]
    %v5712 = vld [vmem:[#allocation4 + $0x1d8] sm:$0xff]
    %v5713 = vld [vmem:[#allocation4 + $0x1e0] sm:$0xff]
    %v5714 = vld [vmem:[#allocation4 + $0x1e8] sm:$0xff]
    %v5715 = vld [vmem:[#allocation4 + $0x1f0] sm:$0xff]
    %v5716 = vld [vmem:[#allocation4 + $0x1f8] sm:$0xff]
    %v5717 = vld [vmem:[#allocation4 + $0x200] sm:$0xff]
    %v5718 = vld [vmem:[#allocation4 + $0x208] sm:$0xff]
    %v5719 = vld [vmem:[#allocation4 + $0x210] sm:$0xff]
    %v5720 = vld [vmem:[#allocation4 + $0x218] sm:$0xff]
    %v5721 = vld [vmem:[#allocation4 + $0x220] sm:$0xff]
    %v5722 = vld [vmem:[#allocation4 + $0x228] sm:$0xff]
    %v5723 = vld [vmem:[#allocation4 + $0x230] sm:$0xff]
    %v5724 = vld [vmem:[#allocation4 + $0x238] sm:$0xff]
    %v5725 = vld [vmem:[#allocation4 + $0x240] sm:$0xff]
    %v5726 = vld [vmem:[#allocation4 + $0x248] sm:$0xff]
    %v5727 = vld [vmem:[#allocation4 + $0x250] sm:$0xff]
    %v5728 = vld [vmem:[#allocation4 + $0x258] sm:$0xff]
    %v5729 = vld [vmem:[#allocation4 + $0x260] sm:$0xff]
    %v5730 = vld [vmem:[#allocation4 + $0x268] sm:$0xff]
    %v5731 = vld [vmem:[#allocation4 + $0x270] sm:$0xff]
    %v5732 = vld [vmem:[#allocation4 + $0x278] sm:$0xff]
    %v5733 = vld [vmem:[#allocation4 + $0x280] sm:$0xff]
    %v5734 = vld [vmem:[#allocation4 + $0x288] sm:$0xff]
    %v5735 = vld [vmem:[#allocation4 + $0x290] sm:$0xff]
    %v5736 = vld [vmem:[#allocation4 + $0x298] sm:$0xff]
    %v5737 = vld [vmem:[#allocation4 + $0x2a0] sm:$0xff]
    %v5738 = vld [vmem:[#allocation4 + $0x2a8] sm:$0xff]
    %v5739 = vld [vmem:[#allocation4 + $0x2b0] sm:$0xff]
    %v5740 = vld [vmem:[#allocation4 + $0x2b8] sm:$0xff]
    %v5741 = vld [vmem:[#allocation4 + $0x2c0] sm:$0xff]
    %v5742 = vld [vmem:[#allocation4 + $0x2c8] sm:$0xff]
    %v5743 = vld [vmem:[#allocation4 + $0x2d0] sm:$0xff]
    %v5744 = vld [vmem:[#allocation4 + $0x2d8] sm:$0xff]
    %v5745 = vld [vmem:[#allocation4 + $0x2e0] sm:$0xff]
    %v5746 = vld [vmem:[#allocation4 + $0x2e8] sm:$0xff]
    %v5747 = vld [vmem:[#allocation4 + $0x2f0] sm:$0xff]
    %v5748 = vld [vmem:[#allocation4 + $0x2f8] sm:$0xff]
    %v5749 = vld [vmem:[#allocation4 + $0x300] sm:$0xff]
    %v5750 = vld [vmem:[#allocation4 + $0x308] sm:$0xff]
    %v5751 = vld [vmem:[#allocation4 + $0x310] sm:$0xff]
    %v5752 = vld [vmem:[#allocation4 + $0x318] sm:$0xff]
    %v5753 = vld [vmem:[#allocation4 + $0x320] sm:$0xff]
    %v5754 = vld [vmem:[#allocation4 + $0x328] sm:$0xff]
    %v5755 = vld [vmem:[#allocation4 + $0x330] sm:$0xff]
    %v5756 = vld [vmem:[#allocation4 + $0x338] sm:$0xff]
    %v5757 = vld [vmem:[#allocation4 + $0x340] sm:$0xff]
    %v5758 = vld [vmem:[#allocation4 + $0x348] sm:$0xff]
    %v5759 = vld [vmem:[#allocation4 + $0x350] sm:$0xff]
    %v5760 = vld [vmem:[#allocation4 + $0x358] sm:$0xff]
    %v5761 = vld [vmem:[#allocation4 + $0x360] sm:$0xff]
    %v5762 = vld [vmem:[#allocation4 + $0x368] sm:$0xff]
    %v5763 = vld [vmem:[#allocation4 + $0x370] sm:$0xff]
    %v5764 = vld [vmem:[#allocation4 + $0x378] sm:$0xff]
    %v5765 = vld [vmem:[#allocation4 + $0x380] sm:$0xff]
    %v5766 = vld [vmem:[#allocation4 + $0x388] sm:$0xff]
    %v5767 = vld [vmem:[#allocation4 + $0x390] sm:$0xff]
    %v5768 = vld [vmem:[#allocation4 + $0x398] sm:$0xff]
    %v5769 = vld [vmem:[#allocation4 + $0x3a0] sm:$0xff]
    %v5770 = vld [vmem:[#allocation4 + $0x3a8] sm:$0xff]
    %v5771 = vld [vmem:[#allocation4 + $0x3b0] sm:$0xff]
    %v5772 = vld [vmem:[#allocation4 + $0x3b8] sm:$0xff]
    %v5773 = vld [vmem:[#allocation4 + $0x3c0] sm:$0xff]
    %v5774 = vld [vmem:[#allocation4 + $0x3c8] sm:$0xff]
    %v5775 = vld [vmem:[#allocation4 + $0x3d0] sm:$0xff]
    %v5776 = vld [vmem:[#allocation4 + $0x3d8] sm:$0xff]
    %v5777 = vld [vmem:[#allocation4 + $0x3e0] sm:$0xff]
    %v5778 = vld [vmem:[#allocation4 + $0x3e8] sm:$0xff]
    %v5779 = vld [vmem:[#allocation4 + $0x3f0] sm:$0xff]
    %v5780 = vld [vmem:[#allocation4 + $0x3f8] sm:$0xff]
    %v5781 = vld [vmem:[%s6] sm:$0x1]
    %v5783 = vlaneseq
    %v5784 = vshrl.u32 %v5783, 7
    %v5785 = vsub.s32 0, %v5784
    %v5786 = vrot.slane %v5781, %v5785
    %v5790 = vcombine.high %v5651, %v5651
    %v5792 = vunpack.c.l.s4 1983009808
    %v5793 = vunpack.c.0.s8 %v5792
    %v5794 = vlaneseq
    %v5795 = vshrl.u32 %v5794, 7
    %v5796 = vsub.s32 %v5793, %v5795
    %v5797 = vrot.slane %v5651, %v5796
    %v5799 = vunpack.c.l.s4 1983009808
    %v5800 = vunpack.c.0.s8 %v5799
    %v5801 = vlaneseq
    %v5802 = vshrl.u32 %v5801, 7
    %v5803 = vsub.s32 %v5800, %v5802
    %v5804 = vrot.slane %v5790, %v5803
    %v5805 = vcombine.high %v5797, %v5797
    %v5806 = vcombine.high %v5804, %v5804
    %v5807 = vcombine.high %v5652, %v5652
    %v5809 = vunpack.c.l.s4 1983009808
    %v5810 = vunpack.c.0.s8 %v5809
    %v5811 = vlaneseq
    %v5812 = vshrl.u32 %v5811, 7
    %v5813 = vsub.s32 %v5810, %v5812
    %v5814 = vrot.slane %v5652, %v5813
    %v5816 = vunpack.c.l.s4 1983009808
    %v5817 = vunpack.c.0.s8 %v5816
    %v5818 = vlaneseq
    %v5819 = vshrl.u32 %v5818, 7
    %v5820 = vsub.s32 %v5817, %v5819
    %v5821 = vrot.slane %v5807, %v5820
    %v5822 = vcombine.high %v5814, %v5814
    %v5823 = vcombine.high %v5821, %v5821
    %5832 = vmatprep.subr.mxu0 0.0
    %5833 = vmatpush1.msra.mxu0 %v5653
    %5834 = vmatprep.subr.mxu0 0.0
    %5835 = vmatpush1.msra.mxu0 %v5654
    %5836 = vmatprep.subr.mxu0 0.0
    %5837 = vmatpush1.msra.mxu0 %v5655
    %5838 = vmatprep.subr.mxu0 0.0
    %5839 = vmatpush1.msra.mxu0 %v5656
    %5840 = vmatprep.subr.mxu0 0.0
    %5841 = vmatpush1.msra.mxu0 %v5657
    %5842 = vmatprep.subr.mxu0 0.0
    %5843 = vmatpush1.msra.mxu0 %v5658
    %5844 = vmatprep.subr.mxu0 0.0
    %5845 = vmatpush1.msra.mxu0 %v5659
    %5846 = vmatprep.subr.mxu0 0.0
    %5847 = vmatpush1.msra.mxu0 %v5660
    %5848 = vmatprep.subr.mxu0 0.0
    %5849 = vmatpush1.msra.mxu0 %v5661
    %5850 = vmatprep.subr.mxu0 0.0
    %5851 = vmatpush1.msra.mxu0 %v5662
    %5852 = vmatprep.subr.mxu0 0.0
    %5853 = vmatpush1.msra.mxu0 %v5663
    %5854 = vmatprep.subr.mxu0 0.0
    %5855 = vmatpush1.msra.mxu0 %v5664
    %5856 = vmatprep.subr.mxu0 0.0
    %5857 = vmatpush1.msra.mxu0 %v5665
    %5858 = vmatprep.subr.mxu0 0.0
    %5859 = vmatpush1.msra.mxu0 %v5666
    %5860 = vmatprep.subr.mxu0 0.0
    %5861 = vmatpush1.msra.mxu0 %v5667
    %5862 = vmatprep.subr.mxu0 0.0
    %5863 = vmatpush1.msra.mxu0 %v5668
    %5864 = vmatprep.subr.mxu0 0.0
    %5865 = vmatpush1.msra.mxu0 %v5669
    %5866 = vmatprep.subr.mxu0 0.0
    %5867 = vmatpush1.msra.mxu0 %v5670
    %5868 = vmatprep.subr.mxu0 0.0
    %5869 = vmatpush1.msra.mxu0 %v5671
    %5870 = vmatprep.subr.mxu0 0.0
    %5871 = vmatpush1.msra.mxu0 %v5672
    %5872 = vmatprep.subr.mxu0 0.0
    %5873 = vmatpush1.msra.mxu0 %v5673
    %5874 = vmatprep.subr.mxu0 0.0
    %5875 = vmatpush1.msra.mxu0 %v5674
    %5876 = vmatprep.subr.mxu0 0.0
    %5877 = vmatpush1.msra.mxu0 %v5675
    %5878 = vmatprep.subr.mxu0 0.0
    %5879 = vmatpush1.msra.mxu0 %v5676
    %5880 = vmatprep.subr.mxu0 0.0
    %5881 = vmatpush1.msra.mxu0 %v5677
    %5882 = vmatprep.subr.mxu0 0.0
    %5883 = vmatpush1.msra.mxu0 %v5678
    %5884 = vmatprep.subr.mxu0 0.0
    %5885 = vmatpush1.msra.mxu0 %v5679
    %5886 = vmatprep.subr.mxu0 0.0
    %5887 = vmatpush1.msra.mxu0 %v5680
    %5888 = vmatprep.subr.mxu0 0.0
    %5889 = vmatpush1.msra.mxu0 %v5681
    %5890 = vmatprep.subr.mxu0 0.0
    %5891 = vmatpush1.msra.mxu0 %v5682
    %5892 = vmatprep.subr.mxu0 0.0
    %5893 = vmatpush1.msra.mxu0 %v5683
    %5894 = vmatprep.subr.mxu0 0.0
    %5895 = vmatpush1.msra.mxu0 %v5684
    %5896 = vmatprep.mubr.f32.mxu0 %v5805
    %5897 = vmatmul.mubr.f32.gmra.mrb[0].mxu0 %v5797
    %v5898 = vpop.f32.mrb[0].mxu0
    %v5899 = vadd.f32 %v5786, %v5898
    %v5900 = vpop.f32.mrb[0].mxu0
    %5901 = vdwg.mxu0
    %5902 = vmatprep.subr.mxu0 0.0
    %5903 = vmatpush1.msra.mxu0 %v5685
    %5904 = vmatprep.subr.mxu0 0.0
    %5905 = vmatpush1.msra.mxu0 %v5686
    %5906 = vmatprep.subr.mxu0 0.0
    %5907 = vmatpush1.msra.mxu0 %v5687
    %5908 = vmatprep.subr.mxu0 0.0
    %5909 = vmatpush1.msra.mxu0 %v5688
    %5910 = vmatprep.subr.mxu0 0.0
    %5911 = vmatpush1.msra.mxu0 %v5689
    %5912 = vmatprep.subr.mxu0 0.0
    %5913 = vmatpush1.msra.mxu0 %v5690
    %5914 = vmatprep.subr.mxu0 0.0
    %5915 = vmatpush1.msra.mxu0 %v5691
    %5916 = vmatprep.subr.mxu0 0.0
    %5917 = vmatpush1.msra.mxu0 %v5692
    %5918 = vmatprep.subr.mxu0 0.0
    %5919 = vmatpush1.msra.mxu0 %v5693
    %5920 = vmatprep.subr.mxu0 0.0
    %5921 = vmatpush1.msra.mxu0 %v5694
    %5922 = vmatprep.subr.mxu0 0.0
    %5923 = vmatpush1.msra.mxu0 %v5695
    %5924 = vmatprep.subr.mxu0 0.0
    %5925 = vmatpush1.msra.mxu0 %v5696
    %5926 = vmatprep.subr.mxu0 0.0
    %5927 = vmatpush1.msra.mxu0 %v5697
    %5928 = vmatprep.subr.mxu0 0.0
    %5929 = vmatpush1.msra.mxu0 %v5698
    %5930 = vmatprep.subr.mxu0 0.0
    %5931 = vmatpush1.msra.mxu0 %v5699
    %5932 = vmatprep.subr.mxu0 0.0
    %5933 = vmatpush1.msra.mxu0 %v5700
    %5934 = vmatprep.subr.mxu0 0.0
    %5935 = vmatpush1.msra.mxu0 %v5701
    %5936 = vmatprep.subr.mxu0 0.0
    %5937 = vmatpush1.msra.mxu0 %v5702
    %5938 = vmatprep.subr.mxu0 0.0
    %5939 = vmatpush1.msra.mxu0 %v5703
    %5940 = vmatprep.subr.mxu0 0.0
    %5941 = vmatpush1.msra.mxu0 %v5704
    %5942 = vmatprep.subr.mxu0 0.0
    %5943 = vmatpush1.msra.mxu0 %v5705
    %5944 = vmatprep.subr.mxu0 0.0
    %5945 = vmatpush1.msra.mxu0 %v5706
    %5946 = vmatprep.subr.mxu0 0.0
    %5947 = vmatpush1.msra.mxu0 %v5707
    %5948 = vmatprep.subr.mxu0 0.0
    %5949 = vmatpush1.msra.mxu0 %v5708
    %5950 = vmatprep.subr.mxu0 0.0
    %5951 = vmatpush1.msra.mxu0 %v5709
    %5952 = vmatprep.subr.mxu0 0.0
    %5953 = vmatpush1.msra.mxu0 %v5710
    %5954 = vmatprep.subr.mxu0 0.0
    %5955 = vmatpush1.msra.mxu0 %v5711
    %5956 = vmatprep.subr.mxu0 0.0
    %5957 = vmatpush1.msra.mxu0 %v5712
    %5958 = vmatprep.subr.mxu0 0.0
    %5959 = vmatpush1.msra.mxu0 %v5713
    %5960 = vmatprep.subr.mxu0 0.0
    %5961 = vmatpush1.msra.mxu0 %v5714
    %5962 = vmatprep.subr.mxu0 0.0
    %5963 = vmatpush1.msra.mxu0 %v5715
    %5964 = vmatprep.subr.mxu0 0.0
    %5965 = vmatpush1.msra.mxu0 %v5716
    %5966 = vmatprep.mubr.f32.mxu0 %v5806
    %5967 = vmatmul.mubr.f32.gmra.mrb[0].mxu0 %v5804
    %v5968 = vpop.f32.mrb[0].mxu0
    %v5969 = vadd.f32 %v5899, %v5968
    %v5970 = vpop.f32.mrb[0].mxu0
    %5971 = vdwg.mxu0
    %5972 = vmatprep.subr.mxu0 0.0
    %5973 = vmatpush1.msra.mxu0 %v5717
    %5974 = vmatprep.subr.mxu0 0.0
    %5975 = vmatpush1.msra.mxu0 %v5718
    %5976 = vmatprep.subr.mxu0 0.0
    %5977 = vmatpush1.msra.mxu0 %v5719
    %5978 = vmatprep.subr.mxu0 0.0
    %5979 = vmatpush1.msra.mxu0 %v5720
    %5980 = vmatprep.subr.mxu0 0.0
    %5981 = vmatpush1.msra.mxu0 %v5721
    %5982 = vmatprep.subr.mxu0 0.0
    %5983 = vmatpush1.msra.mxu0 %v5722
    %5984 = vmatprep.subr.mxu0 0.0
    %5985 = vmatpush1.msra.mxu0 %v5723
    %5986 = vmatprep.subr.mxu0 0.0
    %5987 = vmatpush1.msra.mxu0 %v5724
    %5988 = vmatprep.subr.mxu0 0.0
    %5989 = vmatpush1.msra.mxu0 %v5725
    %5990 = vmatprep.subr.mxu0 0.0
    %5991 = vmatpush1.msra.mxu0 %v5726
    %5992 = vmatprep.subr.mxu0 0.0
    %5993 = vmatpush1.msra.mxu0 %v5727
    %5994 = vmatprep.subr.mxu0 0.0
    %5995 = vmatpush1.msra.mxu0 %v5728
    %5996 = vmatprep.subr.mxu0 0.0
    %5997 = vmatpush1.msra.mxu0 %v5729
    %5998 = vmatprep.subr.mxu0 0.0
    %5999 = vmatpush1.msra.mxu0 %v5730
    %6000 = vmatprep.subr.mxu0 0.0
    %6001 = vmatpush1.msra.mxu0 %v5731
    %6002 = vmatprep.subr.mxu0 0.0
    %6003 = vmatpush1.msra.mxu0 %v5732
    %6004 = vmatprep.subr.mxu0 0.0
    %6005 = vmatpush1.msra.mxu0 %v5733
    %6006 = vmatprep.subr.mxu0 0.0
    %6007 = vmatpush1.msra.mxu0 %v5734
    %6008 = vmatprep.subr.mxu0 0.0
    %6009 = vmatpush1.msra.mxu0 %v5735
    %6010 = vmatprep.subr.mxu0 0.0
    %6011 = vmatpush1.msra.mxu0 %v5736
    %6012 = vmatprep.subr.mxu0 0.0
    %6013 = vmatpush1.msra.mxu0 %v5737
    %6014 = vmatprep.subr.mxu0 0.0
    %6015 = vmatpush1.msra.mxu0 %v5738
    %6016 = vmatprep.subr.mxu0 0.0
    %6017 = vmatpush1.msra.mxu0 %v5739
    %6018 = vmatprep.subr.mxu0 0.0
    %6019 = vmatpush1.msra.mxu0 %v5740
    %6020 = vmatprep.subr.mxu0 0.0
    %6021 = vmatpush1.msra.mxu0 %v5741
    %6022 = vmatprep.subr.mxu0 0.0
    %6023 = vmatpush1.msra.mxu0 %v5742
    %6024 = vmatprep.subr.mxu0 0.0
    %6025 = vmatpush1.msra.mxu0 %v5743
    %6026 = vmatprep.subr.mxu0 0.0
    %6027 = vmatpush1.msra.mxu0 %v5744
    %6028 = vmatprep.subr.mxu0 0.0
    %6029 = vmatpush1.msra.mxu0 %v5745
    %6030 = vmatprep.subr.mxu0 0.0
    %6031 = vmatpush1.msra.mxu0 %v5746
    %6032 = vmatprep.subr.mxu0 0.0
    %6033 = vmatpush1.msra.mxu0 %v5747
    %6034 = vmatprep.subr.mxu0 0.0
    %6035 = vmatpush1.msra.mxu0 %v5748
    %6036 = vmatprep.mubr.f32.mxu0 %v5822
    %6037 = vmatmul.mubr.f32.gmra.mrb[0].mxu0 %v5814
    %v6038 = vpop.f32.mrb[0].mxu0
    %v6039 = vadd.f32 %v5969, %v6038
    %v6040 = vpop.f32.mrb[0].mxu0
    %6041 = vdwg.mxu0
    %6042 = vmatprep.subr.mxu0 0.0
    %6043 = vmatpush1.msra.mxu0 %v5749
    %6044 = vmatprep.subr.mxu0 0.0
    %6045 = vmatpush1.msra.mxu0 %v5750
    %6046 = vmatprep.subr.mxu0 0.0
    %6047 = vmatpush1.msra.mxu0 %v5751
    %6048 = vmatprep.subr.mxu0 0.0
    %6049 = vmatpush1.msra.mxu0 %v5752
    %6050 = vmatprep.subr.mxu0 0.0
    %6051 = vmatpush1.msra.mxu0 %v5753
    %6052 = vmatprep.subr.mxu0 0.0
    %6053 = vmatpush1.msra.mxu0 %v5754
    %6054 = vmatprep.subr.mxu0 0.0
    %6055 = vmatpush1.msra.mxu0 %v5755
    %6056 = vmatprep.subr.mxu0 0.0
    %6057 = vmatpush1.msra.mxu0 %v5756
    %6058 = vmatprep.subr.mxu0 0.0
    %6059 = vmatpush1.msra.mxu0 %v5757
    %6060 = vmatprep.subr.mxu0 0.0
    %6061 = vmatpush1.msra.mxu0 %v5758
    %6062 = vmatprep.subr.mxu0 0.0
    %6063 = vmatpush1.msra.mxu0 %v5759
    %6064 = vmatprep.subr.mxu0 0.0
    %6065 = vmatpush1.msra.mxu0 %v5760
    %6066 = vmatprep.subr.mxu0 0.0
    %6067 = vmatpush1.msra.mxu0 %v5761
    %6068 = vmatprep.subr.mxu0 0.0
    %6069 = vmatpush1.msra.mxu0 %v5762
    %6070 = vmatprep.subr.mxu0 0.0
    %6071 = vmatpush1.msra.mxu0 %v5763
    %6072 = vmatprep.subr.mxu0 0.0
    %6073 = vmatpush1.msra.mxu0 %v5764
    %6074 = vmatprep.subr.mxu0 0.0
    %6075 = vmatpush1.msra.mxu0 %v5765
    %6076 = vmatprep.subr.mxu0 0.0
    %6077 = vmatpush1.msra.mxu0 %v5766
    %6078 = vmatprep.subr.mxu0 0.0
    %6079 = vmatpush1.msra.mxu0 %v5767
    %6080 = vmatprep.subr.mxu0 0.0
    %6081 = vmatpush1.msra.mxu0 %v5768
    %6082 = vmatprep.subr.mxu0 0.0
    %6083 = vmatpush1.msra.mxu0 %v5769
    %6084 = vmatprep.subr.mxu0 0.0
    %6085 = vmatpush1.msra.mxu0 %v5770
    %6086 = vmatprep.subr.mxu0 0.0
    %6087 = vmatpush1.msra.mxu0 %v5771
    %6088 = vmatprep.subr.mxu0 0.0
    %6089 = vmatpush1.msra.mxu0 %v5772
    %6090 = vmatprep.subr.mxu0 0.0
    %6091 = vmatpush1.msra.mxu0 %v5773
    %6092 = vmatprep.subr.mxu0 0.0
    %6093 = vmatpush1.msra.mxu0 %v5774
    %6094 = vmatprep.subr.mxu0 0.0
    %6095 = vmatpush1.msra.mxu0 %v5775
    %6096 = vmatprep.subr.mxu0 0.0
    %6097 = vmatpush1.msra.mxu0 %v5776
    %6098 = vmatprep.subr.mxu0 0.0
    %6099 = vmatpush1.msra.mxu0 %v5777
    %6100 = vmatprep.subr.mxu0 0.0
    %6101 = vmatpush1.msra.mxu0 %v5778
    %6102 = vmatprep.subr.mxu0 0.0
    %6103 = vmatpush1.msra.mxu0 %v5779
    %6104 = vmatprep.subr.mxu0 0.0
    %6105 = vmatpush1.msra.mxu0 %v5780
    %6106 = vmatprep.mubr.f32.mxu0 %v5823
    %6107 = vmatmul.mubr.f32.gmra.mrb[0].mxu0 %v5821
    %v6108 = vpop.f32.mrb[0].mxu0
    %v6109 = vadd.f32 %v6039, %v6108
    %v6110 = vpop.f32.mrb[0].mxu0
    %6111 = vdwg.mxu0
    %v6112 = vmax.f32 %v6109, 0.0
    %v6113 = vld [vmem:[%s7] sm:$0xff]
    %v6114 = vld [vmem:[%s7 + $0x8] sm:$0xff]
    %v6115 = vld [vmem:[%s7 + $0x10] sm:$0xff]
    %v6116 = vld [vmem:[%s7 + $0x18] sm:$0xff]
    %v6117 = vld [vmem:[%s7 + $0x20] sm:$0xff]
    %v6118 = vld [vmem:[%s7 + $0x28] sm:$0xff]
    %v6119 = vld [vmem:[%s7 + $0x30] sm:$0xff]
    %v6120 = vld [vmem:[%s7 + $0x38] sm:$0xff]
    %v6121 = vld [vmem:[%s7 + $0x40] sm:$0xff]
    %v6122 = vld [vmem:[%s7 + $0x48] sm:$0xff]
    %v6123 = vld [vmem:[%s7 + $0x50] sm:$0xff]
    %v6124 = vld [vmem:[%s7 + $0x58] sm:$0xff]
    %v6125 = vld [vmem:[%s7 + $0x60] sm:$0xff]
    %v6126 = vld [vmem:[%s7 + $0x68] sm:$0xff]
    %v6127 = vld [vmem:[%s7 + $0x70] sm:$0xff]
    %v6128 = vld [vmem:[%s7 + $0x78] sm:$0xff]
    %v6129 = vld [vmem:[%s8] sm:$0x1]
    %v6131 = vlaneseq
    %v6132 = vshrl.u32 %v6131, 7
    %v6133 = vsub.s32 0, %v6132
    %v6134 = vrot.slane %v6129, %v6133
    %6136 = vmatprep.subr.mxu0 0.0
    %6137 = vmatpush1.msra.mxu0 %v6113
    %6138 = vmatprep.subr.mxu0 0.0
    %6139 = vmatpush1.msra.mxu0 %v6114
    %6140 = vmatprep.subr.mxu0 0.0
    %6141 = vmatpush1.msra.mxu0 %v6115
    %6142 = vmatprep.subr.mxu0 0.0
    %6143 = vmatpush1.msra.mxu0 %v6116
    %6144 = vmatprep.subr.mxu0 0.0
    %6145 = vmatpush1.msra.mxu0 %v6117
    %6146 = vmatprep.subr.mxu0 0.0
    %6147 = vmatpush1.msra.mxu0 %v6118
    %6148 = vmatprep.subr.mxu0 0.0
    %6149 = vmatpush1.msra.mxu0 %v6119
    %6150 = vmatprep.subr.mxu0 0.0
    %6151 = vmatpush1.msra.mxu0 %v6120
    %6152 = vmatprep.subr.mxu0 0.0
    %6153 = vmatpush1.msra.mxu0 %v6121
    %6154 = vmatprep.subr.mxu0 0.0
    %6155 = vmatpush1.msra.mxu0 %v6122
    %6156 = vmatprep.subr.mxu0 0.0
    %6157 = vmatpush1.msra.mxu0 %v6123
    %6158 = vmatprep.subr.mxu0 0.0
    %6159 = vmatpush1.msra.mxu0 %v6124
    %6160 = vmatprep.subr.mxu0 0.0
    %6161 = vmatpush1.msra.mxu0 %v6125
    %6162 = vmatprep.subr.mxu0 0.0
    %6163 = vmatpush1.msra.mxu0 %v6126
    %6164 = vmatprep.subr.mxu0 0.0
    %6165 = vmatpush1.msra.mxu0 %v6127
    %6166 = vmatprep.subr.mxu0 0.0
    %6167 = vmatpush1.msra.mxu0 %v6128
    %6168 = vmatprep.subr.mxu0 0.0
    %6169 = vmatpush1.msra.mxu0 0.0
    %6170 = vmatprep.subr.mxu0 0.0
    %6171 = vmatpush1.msra.mxu0 0.0
    %6172 = vmatprep.subr.mxu0 0.0
    %6173 = vmatpush1.msra.mxu0 0.0
    %6174 = vmatprep.subr.mxu0 0.0
    %6175 = vmatpush1.msra.mxu0 0.0
    %6176 = vmatprep.subr.mxu0 0.0
    %6177 = vmatpush1.msra.mxu0 0.0
    %6178 = vmatprep.subr.mxu0 0.0
    %6179 = vmatpush1.msra.mxu0 0.0
    %6180 = vmatprep.subr.mxu0 0.0
    %6181 = vmatpush1.msra.mxu0 0.0
    %6182 = vmatprep.subr.mxu0 0.0
    %6183 = vmatpush1.msra.mxu0 0.0
    %6184 = vmatprep.subr.mxu0 0.0
    %6185 = vmatpush1.msra.mxu0 0.0
    %6186 = vmatprep.subr.mxu0 0.0
    %6187 = vmatpush1.msra.mxu0 0.0
    %6188 = vmatprep.subr.mxu0 0.0
    %6189 = vmatpush1.msra.mxu0 0.0
    %6190 = vmatprep.subr.mxu0 0.0
    %6191 = vmatpush1.msra.mxu0 0.0
    %6192 = vmatprep.subr.mxu0 0.0
    %6193 = vmatpush1.msra.mxu0 0.0
    %6194 = vmatprep.subr.mxu0 0.0
    %6195 = vmatpush1.msra.mxu0 0.0
    %6196 = vmatprep.subr.mxu0 0.0
    %6197 = vmatpush1.msra.mxu0 0.0
    %6198 = vmatprep.subr.mxu0 0.0
    %6199 = vmatpush1.msra.mxu0 0.0
    %6200 = vmatprep.mubr.f32.mxu0 0.0
    %6201 = vmatmul.mubr.f32.gmra.mrb[0].mxu0 %v6112
    %v6202 = vpop.f32.mrb[0].mxu0
    %v6203 = vadd.f32 %v6134, %v6202
    %v6204 = vpop.f32.mrb[0].mxu0
    %6205 = vdwg.mxu0
    %vm6206 = vcmask 74752
    %v6207 = vsel %vm6206, %v6203, -inf
    %6208 = vmax.xlane.f32.xlu0 %v6207
    %v6209 = vpop.xlane.xlu0 %6208
    %v6210 = vsub.f32 %v6203, %v6209
    %v6211 = vmul.f32 %v6210, 1.442695
    %v6212 = vpow.pop %v6211
    %v6213 = vsel %vm6206, %v6212, 0.0
    %6214 = vadd.xlane.f32.xlu0 %v6213
    %v6215 = vpop.xlane.xlu0 %6214
    %v6216 = vlog2.pop %v6215
    %v6217 = vmul.f32 %v6216, 0.6931472
    %v6218 = vsub.f32 %v6210, %v6217
    %6219 = vst.msk [vmem:[#allocation7] sm:$0x3] %vm6206, %v6218
    // Predicated region
    $region42: #{net3_forward.1} parent=1 // pred_check
      _
    $region43: #{net3_forward.1} parent=1 // pred_check_branch
      %6221 = sbr.rel (0) target = $region45
    $region44: #{net3_forward.1} parent=1 // pred_region
      %s6223 = ssub.s32 32, 32
      %6224 = vsyncadd [#allocation6], %s6223
      %s6226 = sshll.u32 [#allocation7], 4
      %s6227 = int_to_ptr.vmem [resolvable:$true] %s6226
      %6229 = dma.vmem_to_hbm [thread:$0]  %s6227, 32, %s9, [#allocation6]
    $region45: #{net3_forward.1} parent=1 // pred_fallthru
      _
    // Predicated region
    $region46: #{net3_forward.1} parent=1 // pred_check
      _
    $region47: #{net3_forward.1} parent=1 // pred_check_branch
      %6231 = sbr.rel (0) target = $region49
    $region48: #{net3_forward.1} parent=1 // pred_region
      %6232 = dma.done [#allocation6], 32
    $region49: #{net3_forward.1} parent=1 // pred_fallthru
      _
    %6233 = vsyncpa [#allocation5], 1
    %6234 = vsyncpa [#allocation6], 1

</llo_original>
